<compile_context>
chip_gen: v7x
topology: tpu7x:2x2x1
jax: 0.10.0
libtpu: 0.0.40
codegen_flags: <defaults>
</compile_context>

<pallas_src>
import functools
import math

import jax
import jax.numpy as jnp
from jax import lax
from jax.experimental import pallas as pl
from jax.experimental.pallas import tpu as pltpu

# Flip to jnp.bfloat16 on v6e/v7x for MXU-peak matmuls (accumulation stays
# f32 via preferred_element_type); relax the self-check tolerance if you do.
MATMUL_DTYPE = jnp.float32
LN_EPS = 1e-5   # torch.nn.LayerNorm default


def _mm(a, b):
    """Matmul with f32 accumulation and configurable operand dtype."""
    return jnp.dot(a.astype(MATMUL_DTYPE), b.astype(MATMUL_DTYPE),
                   preferred_element_type=jnp.float32)


def _layernorm(x, w, b):
    mu = jnp.mean(x, axis=-1, keepdims=True)
    xc = x - mu
    var = jnp.mean(xc * xc, axis=-1, keepdims=True)
    return xc * lax.rsqrt(var + LN_EPS) * w + b


def _attention(q2, k2, v2, *, batch, lq, lk, num_heads, head_dim):
    """Multi-head attention core (no masks). q/k/v are flat (batch*len, E);
    the 1/sqrt(head_dim) scale is already folded into the q projection."""
    e = num_heads * head_dim
    q3 = q2.reshape(batch, lq, e)
    k3 = k2.reshape(batch, lk, e)
    v3 = v2.reshape(batch, lk, e)
    outs = []
    # Heads are contiguous lane slices; batched over B with 3-D einsums.
    for h in range(num_heads):
        sl = slice(h * head_dim, (h + 1) * head_dim)
        s = jnp.einsum('bld,bmd->blm', q3[:, :, sl], k3[:, :, sl],
                       preferred_element_type=jnp.float32)
        s = s - jnp.max(s, axis=-1, keepdims=True)
        p = jnp.exp(s)
        p = p * pl.reciprocal(jnp.sum(p, axis=-1, keepdims=True), approx=True)
        outs.append(jnp.einsum('blm,bmd->bld', p.astype(MATMUL_DTYPE),
                               v3[:, :, sl].astype(MATMUL_DTYPE),
                               preferred_element_type=jnp.float32))
    return jnp.concatenate(outs, axis=-1).reshape(batch * lq, e)


def _cot_kernel(ids_ref, emb_ref, ccat_ref, ssgn_ref, mem_ref,
                w_sa_in_ref, b_sa_in_ref, w_sa_out_ref, b_sa_out_ref,
                ln1_w_ref, ln1_b_ref,
                w_ca_q_ref, b_ca_q_ref, w_ca_kv_ref, b_ca_kv_ref,
                w_ca_out_ref, b_ca_out_ref,
                ln2_w_ref, ln2_b_ref,
                w_ff1_ref, b_ff1_ref, w_ff2_ref, b_ff2_ref,
                ln3_w_ref, ln3_b_ref,
                w_fc_ref, b_fc_ref,
                out_ref, *, num_layers, num_heads, B, L, M, V):
    # TODO(synk): tgt_mask / memory_mask are not supported (the module's
    # generate path calls forward with None); add additive score masks if needed.
    E = emb_ref.shape[1]
    D = E // num_heads

    # ---- Embedding lookup as a one-hot matmul (exact, MXU-friendly at toy
    # vocab). TODO(synk): use a row gather (DMA / jnp.take) at production vocab.
    ids = ids_ref[...]                                             # (B*L, 1) i32
    onehot = (ids == lax.broadcasted_iota(jnp.int32, (B * L, V), 1))
    x = _mm(onehot.astype(jnp.float32), emb_ref[...])              # (B*L, E)

    # ---- Rotary positional encoding.  The even/odd de-interleave is folded
    # into the (wrapper-side) column permutation of the embedding table, so
    # here it is x*cos_cat + swap_halves(x)*sin_signed (pltpu.roll would also
    # work; static lane slices lower identically at this width).
    swapped = jnp.concatenate([x[:, E // 2:], x[:, :E // 2]], axis=1)
    x = x * ccat_ref[...] + swapped * ssgn_ref[...]

    mem = mem_ref[...]                                             # (B*M, E)

    for l in range(num_layers):
        # -- self attention (packed QKV projection, scale folded into q) --
        qkv = _mm(x, w_sa_in_ref[l]) + b_sa_in_ref[l]
        sa = _attention(qkv[:, :E], qkv[:, E:2 * E], qkv[:, 2 * E:],
                        batch=B, lq=L, lk=L, num_heads=num_heads, head_dim=D)
        sa = _mm(sa, w_sa_out_ref[l]) + b_sa_out_ref[l]
        x = _layernorm(x + sa, ln1_w_ref[l], ln1_b_ref[l])

        # -- cross attention over the encoder memory (packed K|V) --
        qc = _mm(x, w_ca_q_ref[l]) + b_ca_q_ref[l]
        kv = _mm(mem, w_ca_kv_ref[l]) + b_ca_kv_ref[l]
        ca = _attention(qc, kv[:, :E], kv[:, E:],
                        batch=B, lq=L, lk=M, num_heads=num_heads, head_dim=D)
        ca = _mm(ca, w_ca_out_ref[l]) + b_ca_out_ref[l]
        x = _layernorm(x + ca, ln2_w_ref[l], ln2_b_ref[l])

        # -- position-wise feed forward (ReLU, eval mode -> no dropout) --
        h1 = jnp.maximum(_mm(x, w_ff1_ref[l]) + b_ff1_ref[l], 0.0)
        ff = _mm(h1, w_ff2_ref[l]) + b_ff2_ref[l]
        x = _layernorm(x + ff, ln3_w_ref[l], ln3_b_ref[l])

    # -- output head: V is a multiple of 128 -> lane-dense unmasked store --
    out_ref[...] = (_mm(x, w_fc_ref[...]) + b_fc_ref[...]).astype(out_ref.dtype)


# ----------------------------------------------------------------------------
# Wrapper-side layout plumbing (pre-transpose / pack / scale-fold the weights)
# ----------------------------------------------------------------------------
def _rotary_tables(B, L, E):
    inv_freq = 1.0 / (10000.0 ** (jnp.arange(0, E, 2, dtype=jnp.float32) / E))
    pos = jnp.arange(L, dtype=jnp.float32)
    sinusoid = pos[:, None] * inv_freq[None, :]                    # (L, E/2)
    cos, sin = jnp.cos(sinusoid), jnp.sin(sinusoid)
    ccat = jnp.concatenate([cos, cos], axis=-1)                    # (L, E)
    ssgn = jnp.concatenate([-sin, sin], axis=-1)                   # (L, E)
    return jnp.tile(ccat, (B, 1)), jnp.tile(ssgn, (B, 1))          # (B*L, E)


def pack_params(raw, num_heads):
    """Pre-transpose / pack PyTorch-convention weights for the kernel."""
    E = raw['embed'].shape[1]
    D = E // num_heads
    scale = 1.0 / math.sqrt(D)
    # Even columns first, odd columns second -> matches the RoPE half-split.
    perm = jnp.concatenate([jnp.arange(0, E, 2), jnp.arange(1, E, 2)])

    def per_layer(fn):
        return jnp.stack([fn(l) for l in raw['layers']])

    return {
        'emb': raw['embed'][:, perm],
        'w_sa_in': per_layer(lambda l: jnp.concatenate(
            [l['sa_w_in'][:E].T * scale, l['sa_w_in'][E:].T], axis=1)),
        'b_sa_in': per_layer(lambda l: jnp.concatenate(
            [l['sa_b_in'][:E] * scale, l['sa_b_in'][E:]]).reshape(1, 3 * E)),
        'w_sa_out': per_layer(lambda l: l['sa_w_out'].T),
        'b_sa_out': per_layer(lambda l: l['sa_b_out'].reshape(1, E)),
        'ln1_w': per_layer(lambda l: l['ln1_w'].reshape(1, E)),
        'ln1_b': per_layer(lambda l: l['ln1_b'].reshape(1, E)),
        'w_ca_q': per_layer(lambda l: l['ca_w_in'][:E].T * scale),
        'b_ca_q': per_layer(lambda l: (l['ca_b_in'][:E] * scale).reshape(1, E)),
        'w_ca_kv': per_layer(lambda l: l['ca_w_in'][E:].T),
        'b_ca_kv': per_layer(lambda l: l['ca_b_in'][E:].reshape(1, 2 * E)),
        'w_ca_out': per_layer(lambda l: l['ca_w_out'].T),
        'b_ca_out': per_layer(lambda l: l['ca_b_out'].reshape(1, E)),
        'ln2_w': per_layer(lambda l: l['ln2_w'].reshape(1, E)),
        'ln2_b': per_layer(lambda l: l['ln2_b'].reshape(1, E)),
        'w_ff1': per_layer(lambda l: l['ff_w1'].T),
        'b_ff1': per_layer(lambda l: l['ff_b1'].reshape(1, -1)),
        'w_ff2': per_layer(lambda l: l['ff_w2'].T),
        'b_ff2': per_layer(lambda l: l['ff_b2'].reshape(1, E)),
        'ln3_w': per_layer(lambda l: l['ln3_w'].reshape(1, E)),
        'ln3_b': per_layer(lambda l: l['ln3_b'].reshape(1, E)),
        'w_fc': raw['fc_w'].T,
        'b_fc': raw['fc_b'].reshape(1, -1),
    }


def cot_forward(tgt_ids, memory, raw_params, *, num_heads):
    B, L = tgt_ids.shape
    _, M, E = memory.shape
    V = raw_params['embed'].shape[0]
    num_layers = len(raw_params['layers'])

    p = pack_params(raw_params, num_heads)
    ccat, ssgn = _rotary_tables(B, L, E)
    ids2d = tgt_ids.reshape(B * L, 1).astype(jnp.int32)
    mem_flat = memory.reshape(B * M, E).astype(jnp.float32)

    args = (ids2d, p['emb'], ccat, ssgn, mem_flat,
            p['w_sa_in'], p['b_sa_in'], p['w_sa_out'], p['b_sa_out'],
            p['ln1_w'], p['ln1_b'],
            p['w_ca_q'], p['b_ca_q'], p['w_ca_kv'], p['b_ca_kv'],
            p['w_ca_out'], p['b_ca_out'],
            p['ln2_w'], p['ln2_b'],
            p['w_ff1'], p['b_ff1'], p['w_ff2'], p['b_ff2'],
            p['ln3_w'], p['ln3_b'],
            p['w_fc'], p['b_fc'])

    kernel = functools.partial(_cot_kernel, num_layers=num_layers,
                               num_heads=num_heads, B=B, L=L, M=M, V=V)
    vmem = pl.BlockSpec(memory_space=pltpu.MemorySpace.VMEM)
    # TODO(synk): at production sizes use a batch-parallel grid
    # (PrefetchScalarGridSpec, dimension_semantics=("parallel",)) with
    # weight index_maps pinned to block 0 and bf16 matmul operands.
    logits_flat = pl.pallas_call(
        kernel,
        out_shape=jax.ShapeDtypeStruct((B * L, V), jnp.float32),
        in_specs=[vmem] * len(args),
        out_specs=vmem,
    )(*args)
    return logits_flat.reshape(B, L, V)


# ----------------------------------------------------------------------------
# Pure-JAX reference mirroring the PyTorch module (eval mode, masks=None)
# ----------------------------------------------------------------------------
def _rope_ref(x):
    dim = x.shape[-1]
    inv_freq = 1.0 / (10000.0 ** (jnp.arange(0, dim, 2, dtype=jnp.float32) / dim))
    pos = jnp.arange(x.shape[1], dtype=jnp.float32)
    sinusoid = jnp.einsum('i,j->ij', pos, inv_freq)
    sin, cos = jnp.sin(sinusoid)[None], jnp.cos(sinusoid)[None]
    x1, x2 = x[..., 0::2], x[..., 1::2]
    return jnp.concatenate([x1 * cos - x2 * sin, x1 * sin + x2 * cos], axis=-1)


def _ln_ref(x, w, b):
    mu = x.mean(-1, keepdims=True)
    var = ((x - mu) ** 2).mean(-1, keepdims=True)
    return (x - mu) / jnp.sqrt(var + LN_EPS) * w + b


def _mha_ref(q_in, kv_in, w_in, b_in, w_out, b_out, num_heads):
    E = q_in.shape[-1]
    D = E // num_heads
    q = q_in @ w_in[:E].T + b_in[:E]
    k = kv_in @ w_in[E:2 * E].T + b_in[E:2 * E]
    v = kv_in @ w_in[2 * E:].T + b_in[2 * E:]
    B, Lq, _ = q.shape
    Lk = k.shape[1]
    qh = q.reshape(B, Lq, num_heads, D).transpose(0, 2, 1, 3)
    kh = k.reshape(B, Lk, num_heads, D).transpose(0, 2, 1, 3)
    vh = v.reshape(B, Lk, num_heads, D).transpose(0, 2, 1, 3)
    s = jnp.einsum('bhld,bhmd->bhlm', qh, kh) / math.sqrt(D)
    p = jax.nn.softmax(s, axis=-1)
    o = jnp.einsum('bhlm,bhmd->bhld', p, vh).transpose(0, 2, 1, 3).reshape(B, Lq, E)
    return o @ w_out.T + b_out


def reference_forward(tgt_ids, memory, raw, *, num_heads):
    x = jnp.take(raw['embed'], tgt_ids, axis=0)
    x = _rope_ref(x)
    for l in raw['layers']:
        sa = _mha_ref(x, x, l['sa_w_in'], l['sa_b_in'],
                      l['sa_w_out'], l['sa_b_out'], num_heads)
        x = _ln_ref(x + sa, l['ln1_w'], l['ln1_b'])
        ca = _mha_ref(x, memory, l['ca_w_in'], l['ca_b_in'],
                      l['ca_w_out'], l['ca_b_out'], num_heads)
        x = _ln_ref(x + ca, l['ln2_w'], l['ln2_b'])
        ff = jax.nn.relu(x @ l['ff_w1'].T + l['ff_b1']) @ l['ff_w2'].T + l['ff_b2']
        x = _ln_ref(x + ff, l['ln3_w'], l['ln3_b'])
    return x @ raw['fc_w'].T + raw['fc_b']


def init_params(key, *, vocab_size, embed_dim, num_layers, ff_dim):
    E, F, V = embed_dim, ff_dim, vocab_size

    def uni(k, shape, fan_in):
        bound = 1.0 / math.sqrt(fan_in)
        return jax.random.uniform(k, shape, jnp.float32, -bound, bound)

    keys = jax.random.split(key, 3 + num_layers)
    raw = {'embed': jax.random.normal(keys[0], (V, E), jnp.float32),
           'fc_w': uni(keys[1], (V, E), E),
           'fc_b': uni(keys[2], (V,), E),
           'layers': []}
    for i in range(num_layers):
        ks = jax.random.split(keys[3 + i], 12)
        raw['layers'].append({
            'sa_w_in': uni(ks[0], (3 * E, E), E), 'sa_b_in': uni(ks[1], (3 * E,), E),
            'sa_w_out': uni(ks[2], (E, E), E), 'sa_b_out': uni(ks[3], (E,), E),
            'ca_w_in': uni(ks[4], (3 * E, E), E), 'ca_b_in': uni(ks[5], (3 * E,), E),
            'ca_w_out': uni(ks[6], (E, E), E), 'ca_b_out': uni(ks[7], (E,), E),
            'ff_w1': uni(ks[8], (F, E), E), 'ff_b1': uni(ks[9], (F,), E),
            'ff_w2': uni(ks[10], (E, F), F), 'ff_b2': uni(ks[11], (E,), F),
            'ln1_w': jnp.ones((E,), jnp.float32), 'ln1_b': jnp.zeros((E,), jnp.float32),
            'ln2_w': jnp.ones((E,), jnp.float32), 'ln2_b': jnp.zeros((E,), jnp.float32),
            'ln3_w': jnp.ones((E,), jnp.float32), 'ln3_b': jnp.zeros((E,), jnp.float32),
        })
    return raw


if __name__ == "__main__":
    VOCAB, EMBED, LAYERS, HEADS, FF = 128, 64, 2, 4, 128   # vocab lane-dense
    B, L, M = 2, 8, 8

    key = jax.random.PRNGKey(0)
    k_ids, k_mem, k_par = jax.random.split(key, 3)
    tgt_ids = jax.random.randint(k_ids, (B, L), 1, VOCAB, dtype=jnp.int32)
    memory = jax.random.normal(k_mem, (B, M, EMBED), jnp.float32)
    raw = init_params(k_par, vocab_size=VOCAB, embed_dim=EMBED,
                      num_layers=LAYERS, ff_dim=FF)

    logits = cot_forward(tgt_ids, memory, raw, num_heads=HEADS)
    logits = jax.block_until_ready(logits)
    assert logits.shape == (B, L, VOCAB)

    ref = reference_forward(tgt_ids, memory, raw, num_heads=HEADS)
    # approx-reciprocal softmax + packed-matmul reassociation -> loose-ish tol.
    assert jnp.allclose(logits, ref, atol=2e-2, rtol=2e-2), \
        "kernel output mismatch vs pure-JAX reference"

    print("KERNEL_OK")
</pallas_src>

<mosaic_0001>
module attributes {stable_mosaic.version = 11 : i64} {
  func.func @_cot_kernel(%arg0: memref<16x1xi32, #tpu.memory_space<vmem>>, %arg1: memref<128x64xf32, #tpu.memory_space<vmem>>, %arg2: memref<16x64xf32, #tpu.memory_space<vmem>>, %arg3: memref<16x64xf32, #tpu.memory_space<vmem>>, %arg4: memref<16x64xf32, #tpu.memory_space<vmem>>, %arg5: memref<2x64x192xf32, #tpu.memory_space<vmem>>, %arg6: memref<2x1x192xf32, #tpu.memory_space<vmem>>, %arg7: memref<2x64x64xf32, #tpu.memory_space<vmem>>, %arg8: memref<2x1x64xf32, #tpu.memory_space<vmem>>, %arg9: memref<2x1x64xf32, #tpu.memory_space<vmem>>, %arg10: memref<2x1x64xf32, #tpu.memory_space<vmem>>, %arg11: memref<2x64x64xf32, #tpu.memory_space<vmem>>, %arg12: memref<2x1x64xf32, #tpu.memory_space<vmem>>, %arg13: memref<2x64x128xf32, #tpu.memory_space<vmem>>, %arg14: memref<2x1x128xf32, #tpu.memory_space<vmem>>, %arg15: memref<2x64x64xf32, #tpu.memory_space<vmem>>, %arg16: memref<2x1x64xf32, #tpu.memory_space<vmem>>, %arg17: memref<2x1x64xf32, #tpu.memory_space<vmem>>, %arg18: memref<2x1x64xf32, #tpu.memory_space<vmem>>, %arg19: memref<2x64x128xf32, #tpu.memory_space<vmem>>, %arg20: memref<2x1x128xf32, #tpu.memory_space<vmem>>, %arg21: memref<2x128x64xf32, #tpu.memory_space<vmem>>, %arg22: memref<2x1x64xf32, #tpu.memory_space<vmem>>, %arg23: memref<2x1x64xf32, #tpu.memory_space<vmem>>, %arg24: memref<2x1x64xf32, #tpu.memory_space<vmem>>, %arg25: memref<64x128xf32, #tpu.memory_space<vmem>>, %arg26: memref<1x128xf32, #tpu.memory_space<vmem>>, %arg27: memref<16x128xf32, #tpu.memory_space<vmem>>) attributes {dimension_semantics = [], scalar_prefetch = 0 : i64, scratch_operands = 0 : i64, tpu.core_type = #tpu.core_type<tc>} {
    %c0 = arith.constant 0 : index
    %c0_0 = arith.constant 0 : index
    %0 = vector.load %arg0[%c0, %c0_0] : memref<16x1xi32, #tpu.memory_space<vmem>>, vector<16x1xi32>
    %1 = tpu.iota {dimensions = array<i32: 1>} : vector<16x128xi32>
    %2 = vector.broadcast %0 : vector<16x1xi32> to vector<16x128xi32>
    %3 = arith.cmpi eq, %2, %1 : vector<16x128xi32>
    %4 = arith.extui %3 : vector<16x128xi1> to vector<16x128xi32>
    %5 = arith.sitofp %4 : vector<16x128xi32> to vector<16x128xf32>
    %c0_1 = arith.constant 0 : index
    %c0_2 = arith.constant 0 : index
    %6 = vector.load %arg1[%c0_1, %c0_2] : memref<128x64xf32, #tpu.memory_space<vmem>>, vector<128x64xf32>
    %cst = arith.constant dense<0.000000e+00> : vector<16x64xf32>
    %7 = tpu.matmul %5, %6, %cst {dimension_numbers = #tpu.dot_dimension_numbers<[1], [0], [0], [1], [0, 0, 1, 1], [], []>} : vector<16x128xf32>, vector<128x64xf32>, vector<16x64xf32> -> vector<16x64xf32>
    %8 = vector.extract_strided_slice %7 {offsets = [0, 32], sizes = [16, 32], strides = [1, 1]} : vector<16x64xf32> to vector<16x32xf32>
    %9 = vector.extract_strided_slice %7 {offsets = [0, 0], sizes = [16, 32], strides = [1, 1]} : vector<16x64xf32> to vector<16x32xf32>
    %10 = tpu.concatenate %8, %9 in 1 : vector<16x32xf32>, vector<16x32xf32> -> vector<16x64xf32>
    %c0_3 = arith.constant 0 : index
    %c0_4 = arith.constant 0 : index
    %11 = vector.load %arg2[%c0_3, %c0_4] : memref<16x64xf32, #tpu.memory_space<vmem>>, vector<16x64xf32>
    %12 = arith.mulf %7, %11 : vector<16x64xf32>
    %c0_5 = arith.constant 0 : index
    %c0_6 = arith.constant 0 : index
    %13 = vector.load %arg3[%c0_5, %c0_6] : memref<16x64xf32, #tpu.memory_space<vmem>>, vector<16x64xf32>
    %14 = arith.mulf %10, %13 : vector<16x64xf32>
    %15 = arith.addf %12, %14 : vector<16x64xf32>
    %c0_7 = arith.constant 0 : index
    %c0_8 = arith.constant 0 : index
    %16 = vector.load %arg4[%c0_7, %c0_8] : memref<16x64xf32, #tpu.memory_space<vmem>>, vector<16x64xf32>
    %c0_9 = arith.constant 0 : index
    %c0_10 = arith.constant 0 : index
    %c0_11 = arith.constant 0 : index
    %17 = vector.load %arg5[%c0_9, %c0_10, %c0_11] : memref<2x64x192xf32, #tpu.memory_space<vmem>>, vector<1x64x192xf32>
    %18 = vector.shape_cast %17 : vector<1x64x192xf32> to vector<64x192xf32>
    %cst_12 = arith.constant dense<0.000000e+00> : vector<16x192xf32>
    %19 = tpu.matmul %15, %18, %cst_12 {dimension_numbers = #tpu.dot_dimension_numbers<[1], [0], [0], [1], [0, 0, 1, 1], [], []>} : vector<16x64xf32>, vector<64x192xf32>, vector<16x192xf32> -> vector<16x192xf32>
    %c0_13 = arith.constant 0 : index
    %c0_14 = arith.constant 0 : index
    %c0_15 = arith.constant 0 : index
    %20 = vector.load %arg6[%c0_13, %c0_14, %c0_15] : memref<2x1x192xf32, #tpu.memory_space<vmem>>, vector<1x1x192xf32>
    %21 = vector.shape_cast %20 : vector<1x1x192xf32> to vector<1x192xf32>
    %22 = vector.broadcast %21 : vector<1x192xf32> to vector<16x192xf32>
    %23 = arith.addf %19, %22 : vector<16x192xf32>
    %24 = vector.extract_strided_slice %23 {offsets = [0, 0], sizes = [16, 64], strides = [1, 1]} : vector<16x192xf32> to vector<16x64xf32>
    %25 = vector.extract_strided_slice %23 {offsets = [0, 64], sizes = [16, 64], strides = [1, 1]} : vector<16x192xf32> to vector<16x64xf32>
    %26 = vector.extract_strided_slice %23 {offsets = [0, 128], sizes = [16, 64], strides = [1, 1]} : vector<16x192xf32> to vector<16x64xf32>
    %27 = vector.shape_cast %24 : vector<16x64xf32> to vector<2x8x64xf32>
    %28 = vector.shape_cast %25 : vector<16x64xf32> to vector<2x8x64xf32>
    %29 = vector.shape_cast %26 : vector<16x64xf32> to vector<2x8x64xf32>
    %30 = vector.extract_strided_slice %27 {offsets = [0, 0, 0], sizes = [2, 8, 16], strides = [1, 1, 1]} : vector<2x8x64xf32> to vector<2x8x16xf32>
    %31 = vector.extract_strided_slice %28 {offsets = [0, 0, 0], sizes = [2, 8, 16], strides = [1, 1, 1]} : vector<2x8x64xf32> to vector<2x8x16xf32>
    "tpu.trace_start"() <{level = 10 : i32, message = "bld,bmd->blm"}> : () -> ()
    %cst_16 = arith.constant dense<0.000000e+00> : vector<2x8x8xf32>
    %32 = tpu.matmul %30, %31, %cst_16 {dimension_numbers = #tpu.dot_dimension_numbers<[2], [2], [1], [1], [0, 0, 0, 1, 1, 1], [0], [0]>} : vector<2x8x16xf32>, vector<2x8x16xf32>, vector<2x8x8xf32> -> vector<2x8x8xf32>
    "tpu.trace_stop"() : () -> ()
    %cst_17 = arith.constant dense<0xFF800000> : vector<2x8xf32>
    %33 = vector.multi_reduction <maximumf>, %32, %cst_17 [2] : vector<2x8x8xf32> to vector<2x8xf32>
    %34 = vector.shape_cast %33 : vector<2x8xf32> to vector<2x8x1xf32>
    %35 = vector.broadcast %34 : vector<2x8x1xf32> to vector<2x8x8xf32>
    %36 = arith.subf %32, %35 : vector<2x8x8xf32>
    %37 = math.exp %36 : vector<2x8x8xf32>
    %cst_18 = arith.constant dense<0.000000e+00> : vector<2x8xf32>
    %38 = vector.multi_reduction <add>, %37, %cst_18 [2] : vector<2x8x8xf32> to vector<2x8xf32>
    %39 = vector.shape_cast %38 : vector<2x8xf32> to vector<2x8x1xf32>
    %40 = tpu.reciprocal %39 {approx = true} : vector<2x8x1xf32> -> vector<2x8x1xf32>
    %41 = vector.broadcast %40 : vector<2x8x1xf32> to vector<2x8x8xf32>
    %42 = arith.mulf %37, %41 : vector<2x8x8xf32>
    %43 = vector.extract_strided_slice %29 {offsets = [0, 0, 0], sizes = [2, 8, 16], strides = [1, 1, 1]} : vector<2x8x64xf32> to vector<2x8x16xf32>
    "tpu.trace_start"() <{level = 10 : i32, message = "blm,bmd->bld"}> : () -> ()
    %cst_19 = arith.constant dense<0.000000e+00> : vector<2x8x16xf32>
    %44 = tpu.matmul %42, %43, %cst_19 {dimension_numbers = #tpu.dot_dimension_numbers<[2], [1], [1], [2], [0, 0, 0, 1, 1, 2], [0], [0]>} : vector<2x8x8xf32>, vector<2x8x16xf32>, vector<2x8x16xf32> -> vector<2x8x16xf32>
    "tpu.trace_stop"() : () -> ()
    %45 = vector.extract_strided_slice %27 {offsets = [0, 0, 16], sizes = [2, 8, 16], strides = [1, 1, 1]} : vector<2x8x64xf32> to vector<2x8x16xf32>
    %46 = vector.extract_strided_slice %28 {offsets = [0, 0, 16], sizes = [2, 8, 16], strides = [1, 1, 1]} : vector<2x8x64xf32> to vector<2x8x16xf32>
    "tpu.trace_start"() <{level = 10 : i32, message = "bld,bmd->blm"}> : () -> ()
    %cst_20 = arith.constant dense<0.000000e+00> : vector<2x8x8xf32>
    %47 = tpu.matmul %45, %46, %cst_20 {dimension_numbers = #tpu.dot_dimension_numbers<[2], [2], [1], [1], [0, 0, 0, 1, 1, 1], [0], [0]>} : vector<2x8x16xf32>, vector<2x8x16xf32>, vector<2x8x8xf32> -> vector<2x8x8xf32>
    "tpu.trace_stop"() : () -> ()
    %cst_21 = arith.constant dense<0xFF800000> : vector<2x8xf32>
    %48 = vector.multi_reduction <maximumf>, %47, %cst_21 [2] : vector<2x8x8xf32> to vector<2x8xf32>
    %49 = vector.shape_cast %48 : vector<2x8xf32> to vector<2x8x1xf32>
    %50 = vector.broadcast %49 : vector<2x8x1xf32> to vector<2x8x8xf32>
    %51 = arith.subf %47, %50 : vector<2x8x8xf32>
    %52 = math.exp %51 : vector<2x8x8xf32>
    %cst_22 = arith.constant dense<0.000000e+00> : vector<2x8xf32>
    %53 = vector.multi_reduction <add>, %52, %cst_22 [2] : vector<2x8x8xf32> to vector<2x8xf32>
    %54 = vector.shape_cast %53 : vector<2x8xf32> to vector<2x8x1xf32>
    %55 = tpu.reciprocal %54 {approx = true} : vector<2x8x1xf32> -> vector<2x8x1xf32>
    %56 = vector.broadcast %55 : vector<2x8x1xf32> to vector<2x8x8xf32>
    %57 = arith.mulf %52, %56 : vector<2x8x8xf32>
    %58 = vector.extract_strided_slice %29 {offsets = [0, 0, 16], sizes = [2, 8, 16], strides = [1, 1, 1]} : vector<2x8x64xf32> to vector<2x8x16xf32>
    "tpu.trace_start"() <{level = 10 : i32, message = "blm,bmd->bld"}> : () -> ()
    %cst_23 = arith.constant dense<0.000000e+00> : vector<2x8x16xf32>
    %59 = tpu.matmul %57, %58, %cst_23 {dimension_numbers = #tpu.dot_dimension_numbers<[2], [1], [1], [2], [0, 0, 0, 1, 1, 2], [0], [0]>} : vector<2x8x8xf32>, vector<2x8x16xf32>, vector<2x8x16xf32> -> vector<2x8x16xf32>
    "tpu.trace_stop"() : () -> ()
    %60 = vector.extract_strided_slice %27 {offsets = [0, 0, 32], sizes = [2, 8, 16], strides = [1, 1, 1]} : vector<2x8x64xf32> to vector<2x8x16xf32>
    %61 = vector.extract_strided_slice %28 {offsets = [0, 0, 32], sizes = [2, 8, 16], strides = [1, 1, 1]} : vector<2x8x64xf32> to vector<2x8x16xf32>
    "tpu.trace_start"() <{level = 10 : i32, message = "bld,bmd->blm"}> : () -> ()
    %cst_24 = arith.constant dense<0.000000e+00> : vector<2x8x8xf32>
    %62 = tpu.matmul %60, %61, %cst_24 {dimension_numbers = #tpu.dot_dimension_numbers<[2], [2], [1], [1], [0, 0, 0, 1, 1, 1], [0], [0]>} : vector<2x8x16xf32>, vector<2x8x16xf32>, vector<2x8x8xf32> -> vector<2x8x8xf32>
    "tpu.trace_stop"() : () -> ()
    %cst_25 = arith.constant dense<0xFF800000> : vector<2x8xf32>
    %63 = vector.multi_reduction <maximumf>, %62, %cst_25 [2] : vector<2x8x8xf32> to vector<2x8xf32>
    %64 = vector.shape_cast %63 : vector<2x8xf32> to vector<2x8x1xf32>
    %65 = vector.broadcast %64 : vector<2x8x1xf32> to vector<2x8x8xf32>
    %66 = arith.subf %62, %65 : vector<2x8x8xf32>
    %67 = math.exp %66 : vector<2x8x8xf32>
    %cst_26 = arith.constant dense<0.000000e+00> : vector<2x8xf32>
    %68 = vector.multi_reduction <add>, %67, %cst_26 [2] : vector<2x8x8xf32> to vector<2x8xf32>
    %69 = vector.shape_cast %68 : vector<2x8xf32> to vector<2x8x1xf32>
    %70 = tpu.reciprocal %69 {approx = true} : vector<2x8x1xf32> -> vector<2x8x1xf32>
    %71 = vector.broadcast %70 : vector<2x8x1xf32> to vector<2x8x8xf32>
    %72 = arith.mulf %67, %71 : vector<2x8x8xf32>
    %73 = vector.extract_strided_slice %29 {offsets = [0, 0, 32], sizes = [2, 8, 16], strides = [1, 1, 1]} : vector<2x8x64xf32> to vector<2x8x16xf32>
    "tpu.trace_start"() <{level = 10 : i32, message = "blm,bmd->bld"}> : () -> ()
    %cst_27 = arith.constant dense<0.000000e+00> : vector<2x8x16xf32>
    %74 = tpu.matmul %72, %73, %cst_27 {dimension_numbers = #tpu.dot_dimension_numbers<[2], [1], [1], [2], [0, 0, 0, 1, 1, 2], [0], [0]>} : vector<2x8x8xf32>, vector<2x8x16xf32>, vector<2x8x16xf32> -> vector<2x8x16xf32>
    "tpu.trace_stop"() : () -> ()
    %75 = vector.extract_strided_slice %27 {offsets = [0, 0, 48], sizes = [2, 8, 16], strides = [1, 1, 1]} : vector<2x8x64xf32> to vector<2x8x16xf32>
    %76 = vector.extract_strided_slice %28 {offsets = [0, 0, 48], sizes = [2, 8, 16], strides = [1, 1, 1]} : vector<2x8x64xf32> to vector<2x8x16xf32>
    "tpu.trace_start"() <{level = 10 : i32, message = "bld,bmd->blm"}> : () -> ()
    %cst_28 = arith.constant dense<0.000000e+00> : vector<2x8x8xf32>
    %77 = tpu.matmul %75, %76, %cst_28 {dimension_numbers = #tpu.dot_dimension_numbers<[2], [2], [1], [1], [0, 0, 0, 1, 1, 1], [0], [0]>} : vector<2x8x16xf32>, vector<2x8x16xf32>, vector<2x8x8xf32> -> vector<2x8x8xf32>
    "tpu.trace_stop"() : () -> ()
    %cst_29 = arith.constant dense<0xFF800000> : vector<2x8xf32>
    %78 = vector.multi_reduction <maximumf>, %77, %cst_29 [2] : vector<2x8x8xf32> to vector<2x8xf32>
    %79 = vector.shape_cast %78 : vector<2x8xf32> to vector<2x8x1xf32>
    %80 = vector.broadcast %79 : vector<2x8x1xf32> to vector<2x8x8xf32>
    %81 = arith.subf %77, %80 : vector<2x8x8xf32>
    %82 = math.exp %81 : vector<2x8x8xf32>
    %cst_30 = arith.constant dense<0.000000e+00> : vector<2x8xf32>
    %83 = vector.multi_reduction <add>, %82, %cst_30 [2] : vector<2x8x8xf32> to vector<2x8xf32>
    %84 = vector.shape_cast %83 : vector<2x8xf32> to vector<2x8x1xf32>
    %85 = tpu.reciprocal %84 {approx = true} : vector<2x8x1xf32> -> vector<2x8x1xf32>
    %86 = vector.broadcast %85 : vector<2x8x1xf32> to vector<2x8x8xf32>
    %87 = arith.mulf %82, %86 : vector<2x8x8xf32>
    %88 = vector.extract_strided_slice %29 {offsets = [0, 0, 48], sizes = [2, 8, 16], strides = [1, 1, 1]} : vector<2x8x64xf32> to vector<2x8x16xf32>
    "tpu.trace_start"() <{level = 10 : i32, message = "blm,bmd->bld"}> : () -> ()
    %cst_31 = arith.constant dense<0.000000e+00> : vector<2x8x16xf32>
    %89 = tpu.matmul %87, %88, %cst_31 {dimension_numbers = #tpu.dot_dimension_numbers<[2], [1], [1], [2], [0, 0, 0, 1, 1, 2], [0], [0]>} : vector<2x8x8xf32>, vector<2x8x16xf32>, vector<2x8x16xf32> -> vector<2x8x16xf32>
    "tpu.trace_stop"() : () -> ()
    %90 = tpu.concatenate %44, %59, %74, %89 in 2 : vector<2x8x16xf32>, vector<2x8x16xf32>, vector<2x8x16xf32>, vector<2x8x16xf32> -> vector<2x8x64xf32>
    %91 = vector.shape_cast %90 : vector<2x8x64xf32> to vector<16x64xf32>
    %c0_32 = arith.constant 0 : index
    %c0_33 = arith.constant 0 : index
    %c0_34 = arith.constant 0 : index
    %92 = vector.load %arg7[%c0_32, %c0_33, %c0_34] : memref<2x64x64xf32, #tpu.memory_space<vmem>>, vector<1x64x64xf32>
    %93 = vector.shape_cast %92 : vector<1x64x64xf32> to vector<64x64xf32>
    %cst_35 = arith.constant dense<0.000000e+00> : vector<16x64xf32>
    %94 = tpu.matmul %91, %93, %cst_35 {dimension_numbers = #tpu.dot_dimension_numbers<[1], [0], [0], [1], [0, 0, 1, 1], [], []>} : vector<16x64xf32>, vector<64x64xf32>, vector<16x64xf32> -> vector<16x64xf32>
    %c0_36 = arith.constant 0 : index
    %c0_37 = arith.constant 0 : index
    %c0_38 = arith.constant 0 : index
    %95 = vector.load %arg8[%c0_36, %c0_37, %c0_38] : memref<2x1x64xf32, #tpu.memory_space<vmem>>, vector<1x1x64xf32>
    %96 = vector.shape_cast %95 : vector<1x1x64xf32> to vector<1x64xf32>
    %97 = vector.broadcast %96 : vector<1x64xf32> to vector<16x64xf32>
    %98 = arith.addf %94, %97 : vector<16x64xf32>
    %99 = arith.addf %15, %98 : vector<16x64xf32>
    %c0_39 = arith.constant 0 : index
    %c0_40 = arith.constant 0 : index
    %c0_41 = arith.constant 0 : index
    %100 = vector.load %arg9[%c0_39, %c0_40, %c0_41] : memref<2x1x64xf32, #tpu.memory_space<vmem>>, vector<1x1x64xf32>
    %101 = vector.shape_cast %100 : vector<1x1x64xf32> to vector<1x64xf32>
    %c0_42 = arith.constant 0 : index
    %c0_43 = arith.constant 0 : index
    %c0_44 = arith.constant 0 : index
    %102 = vector.load %arg10[%c0_42, %c0_43, %c0_44] : memref<2x1x64xf32, #tpu.memory_space<vmem>>, vector<1x1x64xf32>
    %103 = vector.shape_cast %102 : vector<1x1x64xf32> to vector<1x64xf32>
    %cst_45 = arith.constant dense<0.000000e+00> : vector<16xf32>
    %104 = vector.multi_reduction <add>, %99, %cst_45 [1] : vector<16x64xf32> to vector<16xf32>
    %105 = vector.shape_cast %104 : vector<16xf32> to vector<16x1xf32>
    %cst_46 = arith.constant 6.400000e+01 : f32
    %106 = vector.broadcast %cst_46 : f32 to vector<16x1xf32>
    %107 = arith.divf %105, %106 : vector<16x1xf32>
    %108 = vector.broadcast %107 : vector<16x1xf32> to vector<16x64xf32>
    %109 = arith.subf %99, %108 : vector<16x64xf32>
    %110 = arith.mulf %109, %109 : vector<16x64xf32>
    %cst_47 = arith.constant dense<0.000000e+00> : vector<16xf32>
    %111 = vector.multi_reduction <add>, %110, %cst_47 [1] : vector<16x64xf32> to vector<16xf32>
    %112 = vector.shape_cast %111 : vector<16xf32> to vector<16x1xf32>
    %cst_48 = arith.constant 6.400000e+01 : f32
    %113 = vector.broadcast %cst_48 : f32 to vector<16x1xf32>
    %114 = arith.divf %112, %113 : vector<16x1xf32>
    %cst_49 = arith.constant 9.99999974E-6 : f32
    %115 = vector.broadcast %cst_49 : f32 to vector<16x1xf32>
    %116 = arith.addf %114, %115 : vector<16x1xf32>
    %117 = math.rsqrt %116 : vector<16x1xf32>
    %118 = vector.broadcast %117 : vector<16x1xf32> to vector<16x64xf32>
    %119 = arith.mulf %109, %118 : vector<16x64xf32>
    %120 = vector.broadcast %101 : vector<1x64xf32> to vector<16x64xf32>
    %121 = arith.mulf %119, %120 : vector<16x64xf32>
    %122 = vector.broadcast %103 : vector<1x64xf32> to vector<16x64xf32>
    %123 = arith.addf %121, %122 : vector<16x64xf32>
    %c0_50 = arith.constant 0 : index
    %c0_51 = arith.constant 0 : index
    %c0_52 = arith.constant 0 : index
    %124 = vector.load %arg11[%c0_50, %c0_51, %c0_52] : memref<2x64x64xf32, #tpu.memory_space<vmem>>, vector<1x64x64xf32>
    %125 = vector.shape_cast %124 : vector<1x64x64xf32> to vector<64x64xf32>
    %cst_53 = arith.constant dense<0.000000e+00> : vector<16x64xf32>
    %126 = tpu.matmul %123, %125, %cst_53 {dimension_numbers = #tpu.dot_dimension_numbers<[1], [0], [0], [1], [0, 0, 1, 1], [], []>} : vector<16x64xf32>, vector<64x64xf32>, vector<16x64xf32> -> vector<16x64xf32>
    %c0_54 = arith.constant 0 : index
    %c0_55 = arith.constant 0 : index
    %c0_56 = arith.constant 0 : index
    %127 = vector.load %arg12[%c0_54, %c0_55, %c0_56] : memref<2x1x64xf32, #tpu.memory_space<vmem>>, vector<1x1x64xf32>
    %128 = vector.shape_cast %127 : vector<1x1x64xf32> to vector<1x64xf32>
    %129 = vector.broadcast %128 : vector<1x64xf32> to vector<16x64xf32>
    %130 = arith.addf %126, %129 : vector<16x64xf32>
    %c0_57 = arith.constant 0 : index
    %c0_58 = arith.constant 0 : index
    %c0_59 = arith.constant 0 : index
    %131 = vector.load %arg13[%c0_57, %c0_58, %c0_59] : memref<2x64x128xf32, #tpu.memory_space<vmem>>, vector<1x64x128xf32>
    %132 = vector.shape_cast %131 : vector<1x64x128xf32> to vector<64x128xf32>
    %cst_60 = arith.constant dense<0.000000e+00> : vector<16x128xf32>
    %133 = tpu.matmul %16, %132, %cst_60 {dimension_numbers = #tpu.dot_dimension_numbers<[1], [0], [0], [1], [0, 0, 1, 1], [], []>} : vector<16x64xf32>, vector<64x128xf32>, vector<16x128xf32> -> vector<16x128xf32>
    %c0_61 = arith.constant 0 : index
    %c0_62 = arith.constant 0 : index
    %c0_63 = arith.constant 0 : index
    %134 = vector.load %arg14[%c0_61, %c0_62, %c0_63] : memref<2x1x128xf32, #tpu.memory_space<vmem>>, vector<1x1x128xf32>
    %135 = vector.shape_cast %134 : vector<1x1x128xf32> to vector<1x128xf32>
    %136 = vector.broadcast %135 : vector<1x128xf32> to vector<16x128xf32>
    %137 = arith.addf %133, %136 : vector<16x128xf32>
    %138 = vector.extract_strided_slice %137 {offsets = [0, 0], sizes = [16, 64], strides = [1, 1]} : vector<16x128xf32> to vector<16x64xf32>
    %139 = vector.extract_strided_slice %137 {offsets = [0, 64], sizes = [16, 64], strides = [1, 1]} : vector<16x128xf32> to vector<16x64xf32>
    %140 = vector.shape_cast %130 : vector<16x64xf32> to vector<2x8x64xf32>
    %141 = vector.shape_cast %138 : vector<16x64xf32> to vector<2x8x64xf32>
    %142 = vector.shape_cast %139 : vector<16x64xf32> to vector<2x8x64xf32>
    %143 = vector.extract_strided_slice %140 {offsets = [0, 0, 0], sizes = [2, 8, 16], strides = [1, 1, 1]} : vector<2x8x64xf32> to vector<2x8x16xf32>
    %144 = vector.extract_strided_slice %141 {offsets = [0, 0, 0], sizes = [2, 8, 16], strides = [1, 1, 1]} : vector<2x8x64xf32> to vector<2x8x16xf32>
    "tpu.trace_start"() <{level = 10 : i32, message = "bld,bmd->blm"}> : () -> ()
    %cst_64 = arith.constant dense<0.000000e+00> : vector<2x8x8xf32>
    %145 = tpu.matmul %143, %144, %cst_64 {dimension_numbers = #tpu.dot_dimension_numbers<[2], [2], [1], [1], [0, 0, 0, 1, 1, 1], [0], [0]>} : vector<2x8x16xf32>, vector<2x8x16xf32>, vector<2x8x8xf32> -> vector<2x8x8xf32>
    "tpu.trace_stop"() : () -> ()
    %cst_65 = arith.constant dense<0xFF800000> : vector<2x8xf32>
    %146 = vector.multi_reduction <maximumf>, %145, %cst_65 [2] : vector<2x8x8xf32> to vector<2x8xf32>
    %147 = vector.shape_cast %146 : vector<2x8xf32> to vector<2x8x1xf32>
    %148 = vector.broadcast %147 : vector<2x8x1xf32> to vector<2x8x8xf32>
    %149 = arith.subf %145, %148 : vector<2x8x8xf32>
    %150 = math.exp %149 : vector<2x8x8xf32>
    %cst_66 = arith.constant dense<0.000000e+00> : vector<2x8xf32>
    %151 = vector.multi_reduction <add>, %150, %cst_66 [2] : vector<2x8x8xf32> to vector<2x8xf32>
    %152 = vector.shape_cast %151 : vector<2x8xf32> to vector<2x8x1xf32>
    %153 = tpu.reciprocal %152 {approx = true} : vector<2x8x1xf32> -> vector<2x8x1xf32>
    %154 = vector.broadcast %153 : vector<2x8x1xf32> to vector<2x8x8xf32>
    %155 = arith.mulf %150, %154 : vector<2x8x8xf32>
    %156 = vector.extract_strided_slice %142 {offsets = [0, 0, 0], sizes = [2, 8, 16], strides = [1, 1, 1]} : vector<2x8x64xf32> to vector<2x8x16xf32>
    "tpu.trace_start"() <{level = 10 : i32, message = "blm,bmd->bld"}> : () -> ()
    %cst_67 = arith.constant dense<0.000000e+00> : vector<2x8x16xf32>
    %157 = tpu.matmul %155, %156, %cst_67 {dimension_numbers = #tpu.dot_dimension_numbers<[2], [1], [1], [2], [0, 0, 0, 1, 1, 2], [0], [0]>} : vector<2x8x8xf32>, vector<2x8x16xf32>, vector<2x8x16xf32> -> vector<2x8x16xf32>
    "tpu.trace_stop"() : () -> ()
    %158 = vector.extract_strided_slice %140 {offsets = [0, 0, 16], sizes = [2, 8, 16], strides = [1, 1, 1]} : vector<2x8x64xf32> to vector<2x8x16xf32>
    %159 = vector.extract_strided_slice %141 {offsets = [0, 0, 16], sizes = [2, 8, 16], strides = [1, 1, 1]} : vector<2x8x64xf32> to vector<2x8x16xf32>
    "tpu.trace_start"() <{level = 10 : i32, message = "bld,bmd->blm"}> : () -> ()
    %cst_68 = arith.constant dense<0.000000e+00> : vector<2x8x8xf32>
    %160 = tpu.matmul %158, %159, %cst_68 {dimension_numbers = #tpu.dot_dimension_numbers<[2], [2], [1], [1], [0, 0, 0, 1, 1, 1], [0], [0]>} : vector<2x8x16xf32>, vector<2x8x16xf32>, vector<2x8x8xf32> -> vector<2x8x8xf32>
    "tpu.trace_stop"() : () -> ()
    %cst_69 = arith.constant dense<0xFF800000> : vector<2x8xf32>
    %161 = vector.multi_reduction <maximumf>, %160, %cst_69 [2] : vector<2x8x8xf32> to vector<2x8xf32>
    %162 = vector.shape_cast %161 : vector<2x8xf32> to vector<2x8x1xf32>
    %163 = vector.broadcast %162 : vector<2x8x1xf32> to vector<2x8x8xf32>
    %164 = arith.subf %160, %163 : vector<2x8x8xf32>
    %165 = math.exp %164 : vector<2x8x8xf32>
    %cst_70 = arith.constant dense<0.000000e+00> : vector<2x8xf32>
    %166 = vector.multi_reduction <add>, %165, %cst_70 [2] : vector<2x8x8xf32> to vector<2x8xf32>
    %167 = vector.shape_cast %166 : vector<2x8xf32> to vector<2x8x1xf32>
    %168 = tpu.reciprocal %167 {approx = true} : vector<2x8x1xf32> -> vector<2x8x1xf32>
    %169 = vector.broadcast %168 : vector<2x8x1xf32> to vector<2x8x8xf32>
    %170 = arith.mulf %165, %169 : vector<2x8x8xf32>
    %171 = vector.extract_strided_slice %142 {offsets = [0, 0, 16], sizes = [2, 8, 16], strides = [1, 1, 1]} : vector<2x8x64xf32> to vector<2x8x16xf32>
    "tpu.trace_start"() <{level = 10 : i32, message = "blm,bmd->bld"}> : () -> ()
    %cst_71 = arith.constant dense<0.000000e+00> : vector<2x8x16xf32>
    %172 = tpu.matmul %170, %171, %cst_71 {dimension_numbers = #tpu.dot_dimension_numbers<[2], [1], [1], [2], [0, 0, 0, 1, 1, 2], [0], [0]>} : vector<2x8x8xf32>, vector<2x8x16xf32>, vector<2x8x16xf32> -> vector<2x8x16xf32>
    "tpu.trace_stop"() : () -> ()
    %173 = vector.extract_strided_slice %140 {offsets = [0, 0, 32], sizes = [2, 8, 16], strides = [1, 1, 1]} : vector<2x8x64xf32> to vector<2x8x16xf32>
    %174 = vector.extract_strided_slice %141 {offsets = [0, 0, 32], sizes = [2, 8, 16], strides = [1, 1, 1]} : vector<2x8x64xf32> to vector<2x8x16xf32>
    "tpu.trace_start"() <{level = 10 : i32, message = "bld,bmd->blm"}> : () -> ()
    %cst_72 = arith.constant dense<0.000000e+00> : vector<2x8x8xf32>
    %175 = tpu.matmul %173, %174, %cst_72 {dimension_numbers = #tpu.dot_dimension_numbers<[2], [2], [1], [1], [0, 0, 0, 1, 1, 1], [0], [0]>} : vector<2x8x16xf32>, vector<2x8x16xf32>, vector<2x8x8xf32> -> vector<2x8x8xf32>
    "tpu.trace_stop"() : () -> ()
    %cst_73 = arith.constant dense<0xFF800000> : vector<2x8xf32>
    %176 = vector.multi_reduction <maximumf>, %175, %cst_73 [2] : vector<2x8x8xf32> to vector<2x8xf32>
    %177 = vector.shape_cast %176 : vector<2x8xf32> to vector<2x8x1xf32>
    %178 = vector.broadcast %177 : vector<2x8x1xf32> to vector<2x8x8xf32>
    %179 = arith.subf %175, %178 : vector<2x8x8xf32>
    %180 = math.exp %179 : vector<2x8x8xf32>
    %cst_74 = arith.constant dense<0.000000e+00> : vector<2x8xf32>
    %181 = vector.multi_reduction <add>, %180, %cst_74 [2] : vector<2x8x8xf32> to vector<2x8xf32>
    %182 = vector.shape_cast %181 : vector<2x8xf32> to vector<2x8x1xf32>
    %183 = tpu.reciprocal %182 {approx = true} : vector<2x8x1xf32> -> vector<2x8x1xf32>
    %184 = vector.broadcast %183 : vector<2x8x1xf32> to vector<2x8x8xf32>
    %185 = arith.mulf %180, %184 : vector<2x8x8xf32>
    %186 = vector.extract_strided_slice %142 {offsets = [0, 0, 32], sizes = [2, 8, 16], strides = [1, 1, 1]} : vector<2x8x64xf32> to vector<2x8x16xf32>
    "tpu.trace_start"() <{level = 10 : i32, message = "blm,bmd->bld"}> : () -> ()
    %cst_75 = arith.constant dense<0.000000e+00> : vector<2x8x16xf32>
    %187 = tpu.matmul %185, %186, %cst_75 {dimension_numbers = #tpu.dot_dimension_numbers<[2], [1], [1], [2], [0, 0, 0, 1, 1, 2], [0], [0]>} : vector<2x8x8xf32>, vector<2x8x16xf32>, vector<2x8x16xf32> -> vector<2x8x16xf32>
    "tpu.trace_stop"() : () -> ()
    %188 = vector.extract_strided_slice %140 {offsets = [0, 0, 48], sizes = [2, 8, 16], strides = [1, 1, 1]} : vector<2x8x64xf32> to vector<2x8x16xf32>
    %189 = vector.extract_strided_slice %141 {offsets = [0, 0, 48], sizes = [2, 8, 16], strides = [1, 1, 1]} : vector<2x8x64xf32> to vector<2x8x16xf32>
    "tpu.trace_start"() <{level = 10 : i32, message = "bld,bmd->blm"}> : () -> ()
    %cst_76 = arith.constant dense<0.000000e+00> : vector<2x8x8xf32>
    %190 = tpu.matmul %188, %189, %cst_76 {dimension_numbers = #tpu.dot_dimension_numbers<[2], [2], [1], [1], [0, 0, 0, 1, 1, 1], [0], [0]>} : vector<2x8x16xf32>, vector<2x8x16xf32>, vector<2x8x8xf32> -> vector<2x8x8xf32>
    "tpu.trace_stop"() : () -> ()
    %cst_77 = arith.constant dense<0xFF800000> : vector<2x8xf32>
    %191 = vector.multi_reduction <maximumf>, %190, %cst_77 [2] : vector<2x8x8xf32> to vector<2x8xf32>
    %192 = vector.shape_cast %191 : vector<2x8xf32> to vector<2x8x1xf32>
    %193 = vector.broadcast %192 : vector<2x8x1xf32> to vector<2x8x8xf32>
    %194 = arith.subf %190, %193 : vector<2x8x8xf32>
    %195 = math.exp %194 : vector<2x8x8xf32>
    %cst_78 = arith.constant dense<0.000000e+00> : vector<2x8xf32>
    %196 = vector.multi_reduction <add>, %195, %cst_78 [2] : vector<2x8x8xf32> to vector<2x8xf32>
    %197 = vector.shape_cast %196 : vector<2x8xf32> to vector<2x8x1xf32>
    %198 = tpu.reciprocal %197 {approx = true} : vector<2x8x1xf32> -> vector<2x8x1xf32>
    %199 = vector.broadcast %198 : vector<2x8x1xf32> to vector<2x8x8xf32>
    %200 = arith.mulf %195, %199 : vector<2x8x8xf32>
    %201 = vector.extract_strided_slice %142 {offsets = [0, 0, 48], sizes = [2, 8, 16], strides = [1, 1, 1]} : vector<2x8x64xf32> to vector<2x8x16xf32>
    "tpu.trace_start"() <{level = 10 : i32, message = "blm,bmd->bld"}> : () -> ()
    %cst_79 = arith.constant dense<0.000000e+00> : vector<2x8x16xf32>
    %202 = tpu.matmul %200, %201, %cst_79 {dimension_numbers = #tpu.dot_dimension_numbers<[2], [1], [1], [2], [0, 0, 0, 1, 1, 2], [0], [0]>} : vector<2x8x8xf32>, vector<2x8x16xf32>, vector<2x8x16xf32> -> vector<2x8x16xf32>
    "tpu.trace_stop"() : () -> ()
    %203 = tpu.concatenate %157, %172, %187, %202 in 2 : vector<2x8x16xf32>, vector<2x8x16xf32>, vector<2x8x16xf32>, vector<2x8x16xf32> -> vector<2x8x64xf32>
    %204 = vector.shape_cast %203 : vector<2x8x64xf32> to vector<16x64xf32>
    %c0_80 = arith.constant 0 : index
    %c0_81 = arith.constant 0 : index
    %c0_82 = arith.constant 0 : index
    %205 = vector.load %arg15[%c0_80, %c0_81, %c0_82] : memref<2x64x64xf32, #tpu.memory_space<vmem>>, vector<1x64x64xf32>
    %206 = vector.shape_cast %205 : vector<1x64x64xf32> to vector<64x64xf32>
    %cst_83 = arith.constant dense<0.000000e+00> : vector<16x64xf32>
    %207 = tpu.matmul %204, %206, %cst_83 {dimension_numbers = #tpu.dot_dimension_numbers<[1], [0], [0], [1], [0, 0, 1, 1], [], []>} : vector<16x64xf32>, vector<64x64xf32>, vector<16x64xf32> -> vector<16x64xf32>
    %c0_84 = arith.constant 0 : index
    %c0_85 = arith.constant 0 : index
    %c0_86 = arith.constant 0 : index
    %208 = vector.load %arg16[%c0_84, %c0_85, %c0_86] : memref<2x1x64xf32, #tpu.memory_space<vmem>>, vector<1x1x64xf32>
    %209 = vector.shape_cast %208 : vector<1x1x64xf32> to vector<1x64xf32>
    %210 = vector.broadcast %209 : vector<1x64xf32> to vector<16x64xf32>
    %211 = arith.addf %207, %210 : vector<16x64xf32>
    %212 = arith.addf %123, %211 : vector<16x64xf32>
    %c0_87 = arith.constant 0 : index
    %c0_88 = arith.constant 0 : index
    %c0_89 = arith.constant 0 : index
    %213 = vector.load %arg17[%c0_87, %c0_88, %c0_89] : memref<2x1x64xf32, #tpu.memory_space<vmem>>, vector<1x1x64xf32>
    %214 = vector.shape_cast %213 : vector<1x1x64xf32> to vector<1x64xf32>
    %c0_90 = arith.constant 0 : index
    %c0_91 = arith.constant 0 : index
    %c0_92 = arith.constant 0 : index
    %215 = vector.load %arg18[%c0_90, %c0_91, %c0_92] : memref<2x1x64xf32, #tpu.memory_space<vmem>>, vector<1x1x64xf32>
    %216 = vector.shape_cast %215 : vector<1x1x64xf32> to vector<1x64xf32>
    %cst_93 = arith.constant dense<0.000000e+00> : vector<16xf32>
    %217 = vector.multi_reduction <add>, %212, %cst_93 [1] : vector<16x64xf32> to vector<16xf32>
    %218 = vector.shape_cast %217 : vector<16xf32> to vector<16x1xf32>
    %cst_94 = arith.constant 6.400000e+01 : f32
    %219 = vector.broadcast %cst_94 : f32 to vector<16x1xf32>
    %220 = arith.divf %218, %219 : vector<16x1xf32>
    %221 = vector.broadcast %220 : vector<16x1xf32> to vector<16x64xf32>
    %222 = arith.subf %212, %221 : vector<16x64xf32>
    %223 = arith.mulf %222, %222 : vector<16x64xf32>
    %cst_95 = arith.constant dense<0.000000e+00> : vector<16xf32>
    %224 = vector.multi_reduction <add>, %223, %cst_95 [1] : vector<16x64xf32> to vector<16xf32>
    %225 = vector.shape_cast %224 : vector<16xf32> to vector<16x1xf32>
    %cst_96 = arith.constant 6.400000e+01 : f32
    %226 = vector.broadcast %cst_96 : f32 to vector<16x1xf32>
    %227 = arith.divf %225, %226 : vector<16x1xf32>
    %cst_97 = arith.constant 9.99999974E-6 : f32
    %228 = vector.broadcast %cst_97 : f32 to vector<16x1xf32>
    %229 = arith.addf %227, %228 : vector<16x1xf32>
    %230 = math.rsqrt %229 : vector<16x1xf32>
    %231 = vector.broadcast %230 : vector<16x1xf32> to vector<16x64xf32>
    %232 = arith.mulf %222, %231 : vector<16x64xf32>
    %233 = vector.broadcast %214 : vector<1x64xf32> to vector<16x64xf32>
    %234 = arith.mulf %232, %233 : vector<16x64xf32>
    %235 = vector.broadcast %216 : vector<1x64xf32> to vector<16x64xf32>
    %236 = arith.addf %234, %235 : vector<16x64xf32>
    %c0_98 = arith.constant 0 : index
    %c0_99 = arith.constant 0 : index
    %c0_100 = arith.constant 0 : index
    %237 = vector.load %arg19[%c0_98, %c0_99, %c0_100] : memref<2x64x128xf32, #tpu.memory_space<vmem>>, vector<1x64x128xf32>
    %238 = vector.shape_cast %237 : vector<1x64x128xf32> to vector<64x128xf32>
    %cst_101 = arith.constant dense<0.000000e+00> : vector<16x128xf32>
    %239 = tpu.matmul %236, %238, %cst_101 {dimension_numbers = #tpu.dot_dimension_numbers<[1], [0], [0], [1], [0, 0, 1, 1], [], []>} : vector<16x64xf32>, vector<64x128xf32>, vector<16x128xf32> -> vector<16x128xf32>
    %c0_102 = arith.constant 0 : index
    %c0_103 = arith.constant 0 : index
    %c0_104 = arith.constant 0 : index
    %240 = vector.load %arg20[%c0_102, %c0_103, %c0_104] : memref<2x1x128xf32, #tpu.memory_space<vmem>>, vector<1x1x128xf32>
    %241 = vector.shape_cast %240 : vector<1x1x128xf32> to vector<1x128xf32>
    %242 = vector.broadcast %241 : vector<1x128xf32> to vector<16x128xf32>
    %243 = arith.addf %239, %242 : vector<16x128xf32>
    %cst_105 = arith.constant 0.000000e+00 : f32
    %244 = vector.broadcast %cst_105 : f32 to vector<16x128xf32>
    %245 = arith.maximumf %243, %244 : vector<16x128xf32>
    %c0_106 = arith.constant 0 : index
    %c0_107 = arith.constant 0 : index
    %c0_108 = arith.constant 0 : index
    %246 = vector.load %arg21[%c0_106, %c0_107, %c0_108] : memref<2x128x64xf32, #tpu.memory_space<vmem>>, vector<1x128x64xf32>
    %247 = vector.shape_cast %246 : vector<1x128x64xf32> to vector<128x64xf32>
    %cst_109 = arith.constant dense<0.000000e+00> : vector<16x64xf32>
    %248 = tpu.matmul %245, %247, %cst_109 {dimension_numbers = #tpu.dot_dimension_numbers<[1], [0], [0], [1], [0, 0, 1, 1], [], []>} : vector<16x128xf32>, vector<128x64xf32>, vector<16x64xf32> -> vector<16x64xf32>
    %c0_110 = arith.constant 0 : index
    %c0_111 = arith.constant 0 : index
    %c0_112 = arith.constant 0 : index
    %249 = vector.load %arg22[%c0_110, %c0_111, %c0_112] : memref<2x1x64xf32, #tpu.memory_space<vmem>>, vector<1x1x64xf32>
    %250 = vector.shape_cast %249 : vector<1x1x64xf32> to vector<1x64xf32>
    %251 = vector.broadcast %250 : vector<1x64xf32> to vector<16x64xf32>
    %252 = arith.addf %248, %251 : vector<16x64xf32>
    %253 = arith.addf %236, %252 : vector<16x64xf32>
    %c0_113 = arith.constant 0 : index
    %c0_114 = arith.constant 0 : index
    %c0_115 = arith.constant 0 : index
    %254 = vector.load %arg23[%c0_113, %c0_114, %c0_115] : memref<2x1x64xf32, #tpu.memory_space<vmem>>, vector<1x1x64xf32>
    %255 = vector.shape_cast %254 : vector<1x1x64xf32> to vector<1x64xf32>
    %c0_116 = arith.constant 0 : index
    %c0_117 = arith.constant 0 : index
    %c0_118 = arith.constant 0 : index
    %256 = vector.load %arg24[%c0_116, %c0_117, %c0_118] : memref<2x1x64xf32, #tpu.memory_space<vmem>>, vector<1x1x64xf32>
    %257 = vector.shape_cast %256 : vector<1x1x64xf32> to vector<1x64xf32>
    %cst_119 = arith.constant dense<0.000000e+00> : vector<16xf32>
    %258 = vector.multi_reduction <add>, %253, %cst_119 [1] : vector<16x64xf32> to vector<16xf32>
    %259 = vector.shape_cast %258 : vector<16xf32> to vector<16x1xf32>
    %cst_120 = arith.constant 6.400000e+01 : f32
    %260 = vector.broadcast %cst_120 : f32 to vector<16x1xf32>
    %261 = arith.divf %259, %260 : vector<16x1xf32>
    %262 = vector.broadcast %261 : vector<16x1xf32> to vector<16x64xf32>
    %263 = arith.subf %253, %262 : vector<16x64xf32>
    %264 = arith.mulf %263, %263 : vector<16x64xf32>
    %cst_121 = arith.constant dense<0.000000e+00> : vector<16xf32>
    %265 = vector.multi_reduction <add>, %264, %cst_121 [1] : vector<16x64xf32> to vector<16xf32>
    %266 = vector.shape_cast %265 : vector<16xf32> to vector<16x1xf32>
    %cst_122 = arith.constant 6.400000e+01 : f32
    %267 = vector.broadcast %cst_122 : f32 to vector<16x1xf32>
    %268 = arith.divf %266, %267 : vector<16x1xf32>
    %cst_123 = arith.constant 9.99999974E-6 : f32
    %269 = vector.broadcast %cst_123 : f32 to vector<16x1xf32>
    %270 = arith.addf %268, %269 : vector<16x1xf32>
    %271 = math.rsqrt %270 : vector<16x1xf32>
    %272 = vector.broadcast %271 : vector<16x1xf32> to vector<16x64xf32>
    %273 = arith.mulf %263, %272 : vector<16x64xf32>
    %274 = vector.broadcast %255 : vector<1x64xf32> to vector<16x64xf32>
    %275 = arith.mulf %273, %274 : vector<16x64xf32>
    %276 = vector.broadcast %257 : vector<1x64xf32> to vector<16x64xf32>
    %277 = arith.addf %275, %276 : vector<16x64xf32>
    %c1 = arith.constant 1 : index
    %c0_124 = arith.constant 0 : index
    %c0_125 = arith.constant 0 : index
    %278 = vector.load %arg5[%c1, %c0_124, %c0_125] : memref<2x64x192xf32, #tpu.memory_space<vmem>>, vector<1x64x192xf32>
    %279 = vector.shape_cast %278 : vector<1x64x192xf32> to vector<64x192xf32>
    %cst_126 = arith.constant dense<0.000000e+00> : vector<16x192xf32>
    %280 = tpu.matmul %277, %279, %cst_126 {dimension_numbers = #tpu.dot_dimension_numbers<[1], [0], [0], [1], [0, 0, 1, 1], [], []>} : vector<16x64xf32>, vector<64x192xf32>, vector<16x192xf32> -> vector<16x192xf32>
    %c1_127 = arith.constant 1 : index
    %c0_128 = arith.constant 0 : index
    %c0_129 = arith.constant 0 : index
    %281 = vector.load %arg6[%c1_127, %c0_128, %c0_129] : memref<2x1x192xf32, #tpu.memory_space<vmem>>, vector<1x1x192xf32>
    %282 = vector.shape_cast %281 : vector<1x1x192xf32> to vector<1x192xf32>
    %283 = vector.broadcast %282 : vector<1x192xf32> to vector<16x192xf32>
    %284 = arith.addf %280, %283 : vector<16x192xf32>
    %285 = vector.extract_strided_slice %284 {offsets = [0, 0], sizes = [16, 64], strides = [1, 1]} : vector<16x192xf32> to vector<16x64xf32>
    %286 = vector.extract_strided_slice %284 {offsets = [0, 64], sizes = [16, 64], strides = [1, 1]} : vector<16x192xf32> to vector<16x64xf32>
    %287 = vector.extract_strided_slice %284 {offsets = [0, 128], sizes = [16, 64], strides = [1, 1]} : vector<16x192xf32> to vector<16x64xf32>
    %288 = vector.shape_cast %285 : vector<16x64xf32> to vector<2x8x64xf32>
    %289 = vector.shape_cast %286 : vector<16x64xf32> to vector<2x8x64xf32>
    %290 = vector.shape_cast %287 : vector<16x64xf32> to vector<2x8x64xf32>
    %291 = vector.extract_strided_slice %288 {offsets = [0, 0, 0], sizes = [2, 8, 16], strides = [1, 1, 1]} : vector<2x8x64xf32> to vector<2x8x16xf32>
    %292 = vector.extract_strided_slice %289 {offsets = [0, 0, 0], sizes = [2, 8, 16], strides = [1, 1, 1]} : vector<2x8x64xf32> to vector<2x8x16xf32>
    "tpu.trace_start"() <{level = 10 : i32, message = "bld,bmd->blm"}> : () -> ()
    %cst_130 = arith.constant dense<0.000000e+00> : vector<2x8x8xf32>
    %293 = tpu.matmul %291, %292, %cst_130 {dimension_numbers = #tpu.dot_dimension_numbers<[2], [2], [1], [1], [0, 0, 0, 1, 1, 1], [0], [0]>} : vector<2x8x16xf32>, vector<2x8x16xf32>, vector<2x8x8xf32> -> vector<2x8x8xf32>
    "tpu.trace_stop"() : () -> ()
    %cst_131 = arith.constant dense<0xFF800000> : vector<2x8xf32>
    %294 = vector.multi_reduction <maximumf>, %293, %cst_131 [2] : vector<2x8x8xf32> to vector<2x8xf32>
    %295 = vector.shape_cast %294 : vector<2x8xf32> to vector<2x8x1xf32>
    %296 = vector.broadcast %295 : vector<2x8x1xf32> to vector<2x8x8xf32>
    %297 = arith.subf %293, %296 : vector<2x8x8xf32>
    %298 = math.exp %297 : vector<2x8x8xf32>
    %cst_132 = arith.constant dense<0.000000e+00> : vector<2x8xf32>
    %299 = vector.multi_reduction <add>, %298, %cst_132 [2] : vector<2x8x8xf32> to vector<2x8xf32>
    %300 = vector.shape_cast %299 : vector<2x8xf32> to vector<2x8x1xf32>
    %301 = tpu.reciprocal %300 {approx = true} : vector<2x8x1xf32> -> vector<2x8x1xf32>
    %302 = vector.broadcast %301 : vector<2x8x1xf32> to vector<2x8x8xf32>
    %303 = arith.mulf %298, %302 : vector<2x8x8xf32>
    %304 = vector.extract_strided_slice %290 {offsets = [0, 0, 0], sizes = [2, 8, 16], strides = [1, 1, 1]} : vector<2x8x64xf32> to vector<2x8x16xf32>
    "tpu.trace_start"() <{level = 10 : i32, message = "blm,bmd->bld"}> : () -> ()
    %cst_133 = arith.constant dense<0.000000e+00> : vector<2x8x16xf32>
    %305 = tpu.matmul %303, %304, %cst_133 {dimension_numbers = #tpu.dot_dimension_numbers<[2], [1], [1], [2], [0, 0, 0, 1, 1, 2], [0], [0]>} : vector<2x8x8xf32>, vector<2x8x16xf32>, vector<2x8x16xf32> -> vector<2x8x16xf32>
    "tpu.trace_stop"() : () -> ()
    %306 = vector.extract_strided_slice %288 {offsets = [0, 0, 16], sizes = [2, 8, 16], strides = [1, 1, 1]} : vector<2x8x64xf32> to vector<2x8x16xf32>
    %307 = vector.extract_strided_slice %289 {offsets = [0, 0, 16], sizes = [2, 8, 16], strides = [1, 1, 1]} : vector<2x8x64xf32> to vector<2x8x16xf32>
    "tpu.trace_start"() <{level = 10 : i32, message = "bld,bmd->blm"}> : () -> ()
    %cst_134 = arith.constant dense<0.000000e+00> : vector<2x8x8xf32>
    %308 = tpu.matmul %306, %307, %cst_134 {dimension_numbers = #tpu.dot_dimension_numbers<[2], [2], [1], [1], [0, 0, 0, 1, 1, 1], [0], [0]>} : vector<2x8x16xf32>, vector<2x8x16xf32>, vector<2x8x8xf32> -> vector<2x8x8xf32>
    "tpu.trace_stop"() : () -> ()
    %cst_135 = arith.constant dense<0xFF800000> : vector<2x8xf32>
    %309 = vector.multi_reduction <maximumf>, %308, %cst_135 [2] : vector<2x8x8xf32> to vector<2x8xf32>
    %310 = vector.shape_cast %309 : vector<2x8xf32> to vector<2x8x1xf32>
    %311 = vector.broadcast %310 : vector<2x8x1xf32> to vector<2x8x8xf32>
    %312 = arith.subf %308, %311 : vector<2x8x8xf32>
    %313 = math.exp %312 : vector<2x8x8xf32>
    %cst_136 = arith.constant dense<0.000000e+00> : vector<2x8xf32>
    %314 = vector.multi_reduction <add>, %313, %cst_136 [2] : vector<2x8x8xf32> to vector<2x8xf32>
    %315 = vector.shape_cast %314 : vector<2x8xf32> to vector<2x8x1xf32>
    %316 = tpu.reciprocal %315 {approx = true} : vector<2x8x1xf32> -> vector<2x8x1xf32>
    %317 = vector.broadcast %316 : vector<2x8x1xf32> to vector<2x8x8xf32>
    %318 = arith.mulf %313, %317 : vector<2x8x8xf32>
    %319 = vector.extract_strided_slice %290 {offsets = [0, 0, 16], sizes = [2, 8, 16], strides = [1, 1, 1]} : vector<2x8x64xf32> to vector<2x8x16xf32>
    "tpu.trace_start"() <{level = 10 : i32, message = "blm,bmd->bld"}> : () -> ()
    %cst_137 = arith.constant dense<0.000000e+00> : vector<2x8x16xf32>
    %320 = tpu.matmul %318, %319, %cst_137 {dimension_numbers = #tpu.dot_dimension_numbers<[2], [1], [1], [2], [0, 0, 0, 1, 1, 2], [0], [0]>} : vector<2x8x8xf32>, vector<2x8x16xf32>, vector<2x8x16xf32> -> vector<2x8x16xf32>
    "tpu.trace_stop"() : () -> ()
    %321 = vector.extract_strided_slice %288 {offsets = [0, 0, 32], sizes = [2, 8, 16], strides = [1, 1, 1]} : vector<2x8x64xf32> to vector<2x8x16xf32>
    %322 = vector.extract_strided_slice %289 {offsets = [0, 0, 32], sizes = [2, 8, 16], strides = [1, 1, 1]} : vector<2x8x64xf32> to vector<2x8x16xf32>
    "tpu.trace_start"() <{level = 10 : i32, message = "bld,bmd->blm"}> : () -> ()
    %cst_138 = arith.constant dense<0.000000e+00> : vector<2x8x8xf32>
    %323 = tpu.matmul %321, %322, %cst_138 {dimension_numbers = #tpu.dot_dimension_numbers<[2], [2], [1], [1], [0, 0, 0, 1, 1, 1], [0], [0]>} : vector<2x8x16xf32>, vector<2x8x16xf32>, vector<2x8x8xf32> -> vector<2x8x8xf32>
    "tpu.trace_stop"() : () -> ()
    %cst_139 = arith.constant dense<0xFF800000> : vector<2x8xf32>
    %324 = vector.multi_reduction <maximumf>, %323, %cst_139 [2] : vector<2x8x8xf32> to vector<2x8xf32>
    %325 = vector.shape_cast %324 : vector<2x8xf32> to vector<2x8x1xf32>
    %326 = vector.broadcast %325 : vector<2x8x1xf32> to vector<2x8x8xf32>
    %327 = arith.subf %323, %326 : vector<2x8x8xf32>
    %328 = math.exp %327 : vector<2x8x8xf32>
    %cst_140 = arith.constant dense<0.000000e+00> : vector<2x8xf32>
    %329 = vector.multi_reduction <add>, %328, %cst_140 [2] : vector<2x8x8xf32> to vector<2x8xf32>
    %330 = vector.shape_cast %329 : vector<2x8xf32> to vector<2x8x1xf32>
    %331 = tpu.reciprocal %330 {approx = true} : vector<2x8x1xf32> -> vector<2x8x1xf32>
    %332 = vector.broadcast %331 : vector<2x8x1xf32> to vector<2x8x8xf32>
    %333 = arith.mulf %328, %332 : vector<2x8x8xf32>
    %334 = vector.extract_strided_slice %290 {offsets = [0, 0, 32], sizes = [2, 8, 16], strides = [1, 1, 1]} : vector<2x8x64xf32> to vector<2x8x16xf32>
    "tpu.trace_start"() <{level = 10 : i32, message = "blm,bmd->bld"}> : () -> ()
    %cst_141 = arith.constant dense<0.000000e+00> : vector<2x8x16xf32>
    %335 = tpu.matmul %333, %334, %cst_141 {dimension_numbers = #tpu.dot_dimension_numbers<[2], [1], [1], [2], [0, 0, 0, 1, 1, 2], [0], [0]>} : vector<2x8x8xf32>, vector<2x8x16xf32>, vector<2x8x16xf32> -> vector<2x8x16xf32>
    "tpu.trace_stop"() : () -> ()
    %336 = vector.extract_strided_slice %288 {offsets = [0, 0, 48], sizes = [2, 8, 16], strides = [1, 1, 1]} : vector<2x8x64xf32> to vector<2x8x16xf32>
    %337 = vector.extract_strided_slice %289 {offsets = [0, 0, 48], sizes = [2, 8, 16], strides = [1, 1, 1]} : vector<2x8x64xf32> to vector<2x8x16xf32>
    "tpu.trace_start"() <{level = 10 : i32, message = "bld,bmd->blm"}> : () -> ()
    %cst_142 = arith.constant dense<0.000000e+00> : vector<2x8x8xf32>
    %338 = tpu.matmul %336, %337, %cst_142 {dimension_numbers = #tpu.dot_dimension_numbers<[2], [2], [1], [1], [0, 0, 0, 1, 1, 1], [0], [0]>} : vector<2x8x16xf32>, vector<2x8x16xf32>, vector<2x8x8xf32> -> vector<2x8x8xf32>
    "tpu.trace_stop"() : () -> ()
    %cst_143 = arith.constant dense<0xFF800000> : vector<2x8xf32>
    %339 = vector.multi_reduction <maximumf>, %338, %cst_143 [2] : vector<2x8x8xf32> to vector<2x8xf32>
    %340 = vector.shape_cast %339 : vector<2x8xf32> to vector<2x8x1xf32>
    %341 = vector.broadcast %340 : vector<2x8x1xf32> to vector<2x8x8xf32>
    %342 = arith.subf %338, %341 : vector<2x8x8xf32>
    %343 = math.exp %342 : vector<2x8x8xf32>
    %cst_144 = arith.constant dense<0.000000e+00> : vector<2x8xf32>
    %344 = vector.multi_reduction <add>, %343, %cst_144 [2] : vector<2x8x8xf32> to vector<2x8xf32>
    %345 = vector.shape_cast %344 : vector<2x8xf32> to vector<2x8x1xf32>
    %346 = tpu.reciprocal %345 {approx = true} : vector<2x8x1xf32> -> vector<2x8x1xf32>
    %347 = vector.broadcast %346 : vector<2x8x1xf32> to vector<2x8x8xf32>
    %348 = arith.mulf %343, %347 : vector<2x8x8xf32>
    %349 = vector.extract_strided_slice %290 {offsets = [0, 0, 48], sizes = [2, 8, 16], strides = [1, 1, 1]} : vector<2x8x64xf32> to vector<2x8x16xf32>
    "tpu.trace_start"() <{level = 10 : i32, message = "blm,bmd->bld"}> : () -> ()
    %cst_145 = arith.constant dense<0.000000e+00> : vector<2x8x16xf32>
    %350 = tpu.matmul %348, %349, %cst_145 {dimension_numbers = #tpu.dot_dimension_numbers<[2], [1], [1], [2], [0, 0, 0, 1, 1, 2], [0], [0]>} : vector<2x8x8xf32>, vector<2x8x16xf32>, vector<2x8x16xf32> -> vector<2x8x16xf32>
    "tpu.trace_stop"() : () -> ()
    %351 = tpu.concatenate %305, %320, %335, %350 in 2 : vector<2x8x16xf32>, vector<2x8x16xf32>, vector<2x8x16xf32>, vector<2x8x16xf32> -> vector<2x8x64xf32>
    %352 = vector.shape_cast %351 : vector<2x8x64xf32> to vector<16x64xf32>
    %c1_146 = arith.constant 1 : index
    %c0_147 = arith.constant 0 : index
    %c0_148 = arith.constant 0 : index
    %353 = vector.load %arg7[%c1_146, %c0_147, %c0_148] : memref<2x64x64xf32, #tpu.memory_space<vmem>>, vector<1x64x64xf32>
    %354 = vector.shape_cast %353 : vector<1x64x64xf32> to vector<64x64xf32>
    %cst_149 = arith.constant dense<0.000000e+00> : vector<16x64xf32>
    %355 = tpu.matmul %352, %354, %cst_149 {dimension_numbers = #tpu.dot_dimension_numbers<[1], [0], [0], [1], [0, 0, 1, 1], [], []>} : vector<16x64xf32>, vector<64x64xf32>, vector<16x64xf32> -> vector<16x64xf32>
    %c1_150 = arith.constant 1 : index
    %c0_151 = arith.constant 0 : index
    %c0_152 = arith.constant 0 : index
    %356 = vector.load %arg8[%c1_150, %c0_151, %c0_152] : memref<2x1x64xf32, #tpu.memory_space<vmem>>, vector<1x1x64xf32>
    %357 = vector.shape_cast %356 : vector<1x1x64xf32> to vector<1x64xf32>
    %358 = vector.broadcast %357 : vector<1x64xf32> to vector<16x64xf32>
    %359 = arith.addf %355, %358 : vector<16x64xf32>
    %360 = arith.addf %277, %359 : vector<16x64xf32>
    %c1_153 = arith.constant 1 : index
    %c0_154 = arith.constant 0 : index
    %c0_155 = arith.constant 0 : index
    %361 = vector.load %arg9[%c1_153, %c0_154, %c0_155] : memref<2x1x64xf32, #tpu.memory_space<vmem>>, vector<1x1x64xf32>
    %362 = vector.shape_cast %361 : vector<1x1x64xf32> to vector<1x64xf32>
    %c1_156 = arith.constant 1 : index
    %c0_157 = arith.constant 0 : index
    %c0_158 = arith.constant 0 : index
    %363 = vector.load %arg10[%c1_156, %c0_157, %c0_158] : memref<2x1x64xf32, #tpu.memory_space<vmem>>, vector<1x1x64xf32>
    %364 = vector.shape_cast %363 : vector<1x1x64xf32> to vector<1x64xf32>
    %cst_159 = arith.constant dense<0.000000e+00> : vector<16xf32>
    %365 = vector.multi_reduction <add>, %360, %cst_159 [1] : vector<16x64xf32> to vector<16xf32>
    %366 = vector.shape_cast %365 : vector<16xf32> to vector<16x1xf32>
    %cst_160 = arith.constant 6.400000e+01 : f32
    %367 = vector.broadcast %cst_160 : f32 to vector<16x1xf32>
    %368 = arith.divf %366, %367 : vector<16x1xf32>
    %369 = vector.broadcast %368 : vector<16x1xf32> to vector<16x64xf32>
    %370 = arith.subf %360, %369 : vector<16x64xf32>
    %371 = arith.mulf %370, %370 : vector<16x64xf32>
    %cst_161 = arith.constant dense<0.000000e+00> : vector<16xf32>
    %372 = vector.multi_reduction <add>, %371, %cst_161 [1] : vector<16x64xf32> to vector<16xf32>
    %373 = vector.shape_cast %372 : vector<16xf32> to vector<16x1xf32>
    %cst_162 = arith.constant 6.400000e+01 : f32
    %374 = vector.broadcast %cst_162 : f32 to vector<16x1xf32>
    %375 = arith.divf %373, %374 : vector<16x1xf32>
    %cst_163 = arith.constant 9.99999974E-6 : f32
    %376 = vector.broadcast %cst_163 : f32 to vector<16x1xf32>
    %377 = arith.addf %375, %376 : vector<16x1xf32>
    %378 = math.rsqrt %377 : vector<16x1xf32>
    %379 = vector.broadcast %378 : vector<16x1xf32> to vector<16x64xf32>
    %380 = arith.mulf %370, %379 : vector<16x64xf32>
    %381 = vector.broadcast %362 : vector<1x64xf32> to vector<16x64xf32>
    %382 = arith.mulf %380, %381 : vector<16x64xf32>
    %383 = vector.broadcast %364 : vector<1x64xf32> to vector<16x64xf32>
    %384 = arith.addf %382, %383 : vector<16x64xf32>
    %c1_164 = arith.constant 1 : index
    %c0_165 = arith.constant 0 : index
    %c0_166 = arith.constant 0 : index
    %385 = vector.load %arg11[%c1_164, %c0_165, %c0_166] : memref<2x64x64xf32, #tpu.memory_space<vmem>>, vector<1x64x64xf32>
    %386 = vector.shape_cast %385 : vector<1x64x64xf32> to vector<64x64xf32>
    %cst_167 = arith.constant dense<0.000000e+00> : vector<16x64xf32>
    %387 = tpu.matmul %384, %386, %cst_167 {dimension_numbers = #tpu.dot_dimension_numbers<[1], [0], [0], [1], [0, 0, 1, 1], [], []>} : vector<16x64xf32>, vector<64x64xf32>, vector<16x64xf32> -> vector<16x64xf32>
    %c1_168 = arith.constant 1 : index
    %c0_169 = arith.constant 0 : index
    %c0_170 = arith.constant 0 : index
    %388 = vector.load %arg12[%c1_168, %c0_169, %c0_170] : memref<2x1x64xf32, #tpu.memory_space<vmem>>, vector<1x1x64xf32>
    %389 = vector.shape_cast %388 : vector<1x1x64xf32> to vector<1x64xf32>
    %390 = vector.broadcast %389 : vector<1x64xf32> to vector<16x64xf32>
    %391 = arith.addf %387, %390 : vector<16x64xf32>
    %c1_171 = arith.constant 1 : index
    %c0_172 = arith.constant 0 : index
    %c0_173 = arith.constant 0 : index
    %392 = vector.load %arg13[%c1_171, %c0_172, %c0_173] : memref<2x64x128xf32, #tpu.memory_space<vmem>>, vector<1x64x128xf32>
    %393 = vector.shape_cast %392 : vector<1x64x128xf32> to vector<64x128xf32>
    %cst_174 = arith.constant dense<0.000000e+00> : vector<16x128xf32>
    %394 = tpu.matmul %16, %393, %cst_174 {dimension_numbers = #tpu.dot_dimension_numbers<[1], [0], [0], [1], [0, 0, 1, 1], [], []>} : vector<16x64xf32>, vector<64x128xf32>, vector<16x128xf32> -> vector<16x128xf32>
    %c1_175 = arith.constant 1 : index
    %c0_176 = arith.constant 0 : index
    %c0_177 = arith.constant 0 : index
    %395 = vector.load %arg14[%c1_175, %c0_176, %c0_177] : memref<2x1x128xf32, #tpu.memory_space<vmem>>, vector<1x1x128xf32>
    %396 = vector.shape_cast %395 : vector<1x1x128xf32> to vector<1x128xf32>
    %397 = vector.broadcast %396 : vector<1x128xf32> to vector<16x128xf32>
    %398 = arith.addf %394, %397 : vector<16x128xf32>
    %399 = vector.extract_strided_slice %398 {offsets = [0, 0], sizes = [16, 64], strides = [1, 1]} : vector<16x128xf32> to vector<16x64xf32>
    %400 = vector.extract_strided_slice %398 {offsets = [0, 64], sizes = [16, 64], strides = [1, 1]} : vector<16x128xf32> to vector<16x64xf32>
    %401 = vector.shape_cast %391 : vector<16x64xf32> to vector<2x8x64xf32>
    %402 = vector.shape_cast %399 : vector<16x64xf32> to vector<2x8x64xf32>
    %403 = vector.shape_cast %400 : vector<16x64xf32> to vector<2x8x64xf32>
    %404 = vector.extract_strided_slice %401 {offsets = [0, 0, 0], sizes = [2, 8, 16], strides = [1, 1, 1]} : vector<2x8x64xf32> to vector<2x8x16xf32>
    %405 = vector.extract_strided_slice %402 {offsets = [0, 0, 0], sizes = [2, 8, 16], strides = [1, 1, 1]} : vector<2x8x64xf32> to vector<2x8x16xf32>
    "tpu.trace_start"() <{level = 10 : i32, message = "bld,bmd->blm"}> : () -> ()
    %cst_178 = arith.constant dense<0.000000e+00> : vector<2x8x8xf32>
    %406 = tpu.matmul %404, %405, %cst_178 {dimension_numbers = #tpu.dot_dimension_numbers<[2], [2], [1], [1], [0, 0, 0, 1, 1, 1], [0], [0]>} : vector<2x8x16xf32>, vector<2x8x16xf32>, vector<2x8x8xf32> -> vector<2x8x8xf32>
    "tpu.trace_stop"() : () -> ()
    %cst_179 = arith.constant dense<0xFF800000> : vector<2x8xf32>
    %407 = vector.multi_reduction <maximumf>, %406, %cst_179 [2] : vector<2x8x8xf32> to vector<2x8xf32>
    %408 = vector.shape_cast %407 : vector<2x8xf32> to vector<2x8x1xf32>
    %409 = vector.broadcast %408 : vector<2x8x1xf32> to vector<2x8x8xf32>
    %410 = arith.subf %406, %409 : vector<2x8x8xf32>
    %411 = math.exp %410 : vector<2x8x8xf32>
    %cst_180 = arith.constant dense<0.000000e+00> : vector<2x8xf32>
    %412 = vector.multi_reduction <add>, %411, %cst_180 [2] : vector<2x8x8xf32> to vector<2x8xf32>
    %413 = vector.shape_cast %412 : vector<2x8xf32> to vector<2x8x1xf32>
    %414 = tpu.reciprocal %413 {approx = true} : vector<2x8x1xf32> -> vector<2x8x1xf32>
    %415 = vector.broadcast %414 : vector<2x8x1xf32> to vector<2x8x8xf32>
    %416 = arith.mulf %411, %415 : vector<2x8x8xf32>
    %417 = vector.extract_strided_slice %403 {offsets = [0, 0, 0], sizes = [2, 8, 16], strides = [1, 1, 1]} : vector<2x8x64xf32> to vector<2x8x16xf32>
    "tpu.trace_start"() <{level = 10 : i32, message = "blm,bmd->bld"}> : () -> ()
    %cst_181 = arith.constant dense<0.000000e+00> : vector<2x8x16xf32>
    %418 = tpu.matmul %416, %417, %cst_181 {dimension_numbers = #tpu.dot_dimension_numbers<[2], [1], [1], [2], [0, 0, 0, 1, 1, 2], [0], [0]>} : vector<2x8x8xf32>, vector<2x8x16xf32>, vector<2x8x16xf32> -> vector<2x8x16xf32>
    "tpu.trace_stop"() : () -> ()
    %419 = vector.extract_strided_slice %401 {offsets = [0, 0, 16], sizes = [2, 8, 16], strides = [1, 1, 1]} : vector<2x8x64xf32> to vector<2x8x16xf32>
    %420 = vector.extract_strided_slice %402 {offsets = [0, 0, 16], sizes = [2, 8, 16], strides = [1, 1, 1]} : vector<2x8x64xf32> to vector<2x8x16xf32>
    "tpu.trace_start"() <{level = 10 : i32, message = "bld,bmd->blm"}> : () -> ()
    %cst_182 = arith.constant dense<0.000000e+00> : vector<2x8x8xf32>
    %421 = tpu.matmul %419, %420, %cst_182 {dimension_numbers = #tpu.dot_dimension_numbers<[2], [2], [1], [1], [0, 0, 0, 1, 1, 1], [0], [0]>} : vector<2x8x16xf32>, vector<2x8x16xf32>, vector<2x8x8xf32> -> vector<2x8x8xf32>
    "tpu.trace_stop"() : () -> ()
    %cst_183 = arith.constant dense<0xFF800000> : vector<2x8xf32>
    %422 = vector.multi_reduction <maximumf>, %421, %cst_183 [2] : vector<2x8x8xf32> to vector<2x8xf32>
    %423 = vector.shape_cast %422 : vector<2x8xf32> to vector<2x8x1xf32>
    %424 = vector.broadcast %423 : vector<2x8x1xf32> to vector<2x8x8xf32>
    %425 = arith.subf %421, %424 : vector<2x8x8xf32>
    %426 = math.exp %425 : vector<2x8x8xf32>
    %cst_184 = arith.constant dense<0.000000e+00> : vector<2x8xf32>
    %427 = vector.multi_reduction <add>, %426, %cst_184 [2] : vector<2x8x8xf32> to vector<2x8xf32>
    %428 = vector.shape_cast %427 : vector<2x8xf32> to vector<2x8x1xf32>
    %429 = tpu.reciprocal %428 {approx = true} : vector<2x8x1xf32> -> vector<2x8x1xf32>
    %430 = vector.broadcast %429 : vector<2x8x1xf32> to vector<2x8x8xf32>
    %431 = arith.mulf %426, %430 : vector<2x8x8xf32>
    %432 = vector.extract_strided_slice %403 {offsets = [0, 0, 16], sizes = [2, 8, 16], strides = [1, 1, 1]} : vector<2x8x64xf32> to vector<2x8x16xf32>
    "tpu.trace_start"() <{level = 10 : i32, message = "blm,bmd->bld"}> : () -> ()
    %cst_185 = arith.constant dense<0.000000e+00> : vector<2x8x16xf32>
    %433 = tpu.matmul %431, %432, %cst_185 {dimension_numbers = #tpu.dot_dimension_numbers<[2], [1], [1], [2], [0, 0, 0, 1, 1, 2], [0], [0]>} : vector<2x8x8xf32>, vector<2x8x16xf32>, vector<2x8x16xf32> -> vector<2x8x16xf32>
    "tpu.trace_stop"() : () -> ()
    %434 = vector.extract_strided_slice %401 {offsets = [0, 0, 32], sizes = [2, 8, 16], strides = [1, 1, 1]} : vector<2x8x64xf32> to vector<2x8x16xf32>
    %435 = vector.extract_strided_slice %402 {offsets = [0, 0, 32], sizes = [2, 8, 16], strides = [1, 1, 1]} : vector<2x8x64xf32> to vector<2x8x16xf32>
    "tpu.trace_start"() <{level = 10 : i32, message = "bld,bmd->blm"}> : () -> ()
    %cst_186 = arith.constant dense<0.000000e+00> : vector<2x8x8xf32>
    %436 = tpu.matmul %434, %435, %cst_186 {dimension_numbers = #tpu.dot_dimension_numbers<[2], [2], [1], [1], [0, 0, 0, 1, 1, 1], [0], [0]>} : vector<2x8x16xf32>, vector<2x8x16xf32>, vector<2x8x8xf32> -> vector<2x8x8xf32>
    "tpu.trace_stop"() : () -> ()
    %cst_187 = arith.constant dense<0xFF800000> : vector<2x8xf32>
    %437 = vector.multi_reduction <maximumf>, %436, %cst_187 [2] : vector<2x8x8xf32> to vector<2x8xf32>
    %438 = vector.shape_cast %437 : vector<2x8xf32> to vector<2x8x1xf32>
    %439 = vector.broadcast %438 : vector<2x8x1xf32> to vector<2x8x8xf32>
    %440 = arith.subf %436, %439 : vector<2x8x8xf32>
    %441 = math.exp %440 : vector<2x8x8xf32>
    %cst_188 = arith.constant dense<0.000000e+00> : vector<2x8xf32>
    %442 = vector.multi_reduction <add>, %441, %cst_188 [2] : vector<2x8x8xf32> to vector<2x8xf32>
    %443 = vector.shape_cast %442 : vector<2x8xf32> to vector<2x8x1xf32>
    %444 = tpu.reciprocal %443 {approx = true} : vector<2x8x1xf32> -> vector<2x8x1xf32>
    %445 = vector.broadcast %444 : vector<2x8x1xf32> to vector<2x8x8xf32>
    %446 = arith.mulf %441, %445 : vector<2x8x8xf32>
    %447 = vector.extract_strided_slice %403 {offsets = [0, 0, 32], sizes = [2, 8, 16], strides = [1, 1, 1]} : vector<2x8x64xf32> to vector<2x8x16xf32>
    "tpu.trace_start"() <{level = 10 : i32, message = "blm,bmd->bld"}> : () -> ()
    %cst_189 = arith.constant dense<0.000000e+00> : vector<2x8x16xf32>
    %448 = tpu.matmul %446, %447, %cst_189 {dimension_numbers = #tpu.dot_dimension_numbers<[2], [1], [1], [2], [0, 0, 0, 1, 1, 2], [0], [0]>} : vector<2x8x8xf32>, vector<2x8x16xf32>, vector<2x8x16xf32> -> vector<2x8x16xf32>
    "tpu.trace_stop"() : () -> ()
    %449 = vector.extract_strided_slice %401 {offsets = [0, 0, 48], sizes = [2, 8, 16], strides = [1, 1, 1]} : vector<2x8x64xf32> to vector<2x8x16xf32>
    %450 = vector.extract_strided_slice %402 {offsets = [0, 0, 48], sizes = [2, 8, 16], strides = [1, 1, 1]} : vector<2x8x64xf32> to vector<2x8x16xf32>
    "tpu.trace_start"() <{level = 10 : i32, message = "bld,bmd->blm"}> : () -> ()
    %cst_190 = arith.constant dense<0.000000e+00> : vector<2x8x8xf32>
    %451 = tpu.matmul %449, %450, %cst_190 {dimension_numbers = #tpu.dot_dimension_numbers<[2], [2], [1], [1], [0, 0, 0, 1, 1, 1], [0], [0]>} : vector<2x8x16xf32>, vector<2x8x16xf32>, vector<2x8x8xf32> -> vector<2x8x8xf32>
    "tpu.trace_stop"() : () -> ()
    %cst_191 = arith.constant dense<0xFF800000> : vector<2x8xf32>
    %452 = vector.multi_reduction <maximumf>, %451, %cst_191 [2] : vector<2x8x8xf32> to vector<2x8xf32>
    %453 = vector.shape_cast %452 : vector<2x8xf32> to vector<2x8x1xf32>
    %454 = vector.broadcast %453 : vector<2x8x1xf32> to vector<2x8x8xf32>
    %455 = arith.subf %451, %454 : vector<2x8x8xf32>
    %456 = math.exp %455 : vector<2x8x8xf32>
    %cst_192 = arith.constant dense<0.000000e+00> : vector<2x8xf32>
    %457 = vector.multi_reduction <add>, %456, %cst_192 [2] : vector<2x8x8xf32> to vector<2x8xf32>
    %458 = vector.shape_cast %457 : vector<2x8xf32> to vector<2x8x1xf32>
    %459 = tpu.reciprocal %458 {approx = true} : vector<2x8x1xf32> -> vector<2x8x1xf32>
    %460 = vector.broadcast %459 : vector<2x8x1xf32> to vector<2x8x8xf32>
    %461 = arith.mulf %456, %460 : vector<2x8x8xf32>
    %462 = vector.extract_strided_slice %403 {offsets = [0, 0, 48], sizes = [2, 8, 16], strides = [1, 1, 1]} : vector<2x8x64xf32> to vector<2x8x16xf32>
    "tpu.trace_start"() <{level = 10 : i32, message = "blm,bmd->bld"}> : () -> ()
    %cst_193 = arith.constant dense<0.000000e+00> : vector<2x8x16xf32>
    %463 = tpu.matmul %461, %462, %cst_193 {dimension_numbers = #tpu.dot_dimension_numbers<[2], [1], [1], [2], [0, 0, 0, 1, 1, 2], [0], [0]>} : vector<2x8x8xf32>, vector<2x8x16xf32>, vector<2x8x16xf32> -> vector<2x8x16xf32>
    "tpu.trace_stop"() : () -> ()
    %464 = tpu.concatenate %418, %433, %448, %463 in 2 : vector<2x8x16xf32>, vector<2x8x16xf32>, vector<2x8x16xf32>, vector<2x8x16xf32> -> vector<2x8x64xf32>
    %465 = vector.shape_cast %464 : vector<2x8x64xf32> to vector<16x64xf32>
    %c1_194 = arith.constant 1 : index
    %c0_195 = arith.constant 0 : index
    %c0_196 = arith.constant 0 : index
    %466 = vector.load %arg15[%c1_194, %c0_195, %c0_196] : memref<2x64x64xf32, #tpu.memory_space<vmem>>, vector<1x64x64xf32>
    %467 = vector.shape_cast %466 : vector<1x64x64xf32> to vector<64x64xf32>
    %cst_197 = arith.constant dense<0.000000e+00> : vector<16x64xf32>
    %468 = tpu.matmul %465, %467, %cst_197 {dimension_numbers = #tpu.dot_dimension_numbers<[1], [0], [0], [1], [0, 0, 1, 1], [], []>} : vector<16x64xf32>, vector<64x64xf32>, vector<16x64xf32> -> vector<16x64xf32>
    %c1_198 = arith.constant 1 : index
    %c0_199 = arith.constant 0 : index
    %c0_200 = arith.constant 0 : index
    %469 = vector.load %arg16[%c1_198, %c0_199, %c0_200] : memref<2x1x64xf32, #tpu.memory_space<vmem>>, vector<1x1x64xf32>
    %470 = vector.shape_cast %469 : vector<1x1x64xf32> to vector<1x64xf32>
    %471 = vector.broadcast %470 : vector<1x64xf32> to vector<16x64xf32>
    %472 = arith.addf %468, %471 : vector<16x64xf32>
    %473 = arith.addf %384, %472 : vector<16x64xf32>
    %c1_201 = arith.constant 1 : index
    %c0_202 = arith.constant 0 : index
    %c0_203 = arith.constant 0 : index
    %474 = vector.load %arg17[%c1_201, %c0_202, %c0_203] : memref<2x1x64xf32, #tpu.memory_space<vmem>>, vector<1x1x64xf32>
    %475 = vector.shape_cast %474 : vector<1x1x64xf32> to vector<1x64xf32>
    %c1_204 = arith.constant 1 : index
    %c0_205 = arith.constant 0 : index
    %c0_206 = arith.constant 0 : index
    %476 = vector.load %arg18[%c1_204, %c0_205, %c0_206] : memref<2x1x64xf32, #tpu.memory_space<vmem>>, vector<1x1x64xf32>
    %477 = vector.shape_cast %476 : vector<1x1x64xf32> to vector<1x64xf32>
    %cst_207 = arith.constant dense<0.000000e+00> : vector<16xf32>
    %478 = vector.multi_reduction <add>, %473, %cst_207 [1] : vector<16x64xf32> to vector<16xf32>
    %479 = vector.shape_cast %478 : vector<16xf32> to vector<16x1xf32>
    %cst_208 = arith.constant 6.400000e+01 : f32
    %480 = vector.broadcast %cst_208 : f32 to vector<16x1xf32>
    %481 = arith.divf %479, %480 : vector<16x1xf32>
    %482 = vector.broadcast %481 : vector<16x1xf32> to vector<16x64xf32>
    %483 = arith.subf %473, %482 : vector<16x64xf32>
    %484 = arith.mulf %483, %483 : vector<16x64xf32>
    %cst_209 = arith.constant dense<0.000000e+00> : vector<16xf32>
    %485 = vector.multi_reduction <add>, %484, %cst_209 [1] : vector<16x64xf32> to vector<16xf32>
    %486 = vector.shape_cast %485 : vector<16xf32> to vector<16x1xf32>
    %cst_210 = arith.constant 6.400000e+01 : f32
    %487 = vector.broadcast %cst_210 : f32 to vector<16x1xf32>
    %488 = arith.divf %486, %487 : vector<16x1xf32>
    %cst_211 = arith.constant 9.99999974E-6 : f32
    %489 = vector.broadcast %cst_211 : f32 to vector<16x1xf32>
    %490 = arith.addf %488, %489 : vector<16x1xf32>
    %491 = math.rsqrt %490 : vector<16x1xf32>
    %492 = vector.broadcast %491 : vector<16x1xf32> to vector<16x64xf32>
    %493 = arith.mulf %483, %492 : vector<16x64xf32>
    %494 = vector.broadcast %475 : vector<1x64xf32> to vector<16x64xf32>
    %495 = arith.mulf %493, %494 : vector<16x64xf32>
    %496 = vector.broadcast %477 : vector<1x64xf32> to vector<16x64xf32>
    %497 = arith.addf %495, %496 : vector<16x64xf32>
    %c1_212 = arith.constant 1 : index
    %c0_213 = arith.constant 0 : index
    %c0_214 = arith.constant 0 : index
    %498 = vector.load %arg19[%c1_212, %c0_213, %c0_214] : memref<2x64x128xf32, #tpu.memory_space<vmem>>, vector<1x64x128xf32>
    %499 = vector.shape_cast %498 : vector<1x64x128xf32> to vector<64x128xf32>
    %cst_215 = arith.constant dense<0.000000e+00> : vector<16x128xf32>
    %500 = tpu.matmul %497, %499, %cst_215 {dimension_numbers = #tpu.dot_dimension_numbers<[1], [0], [0], [1], [0, 0, 1, 1], [], []>} : vector<16x64xf32>, vector<64x128xf32>, vector<16x128xf32> -> vector<16x128xf32>
    %c1_216 = arith.constant 1 : index
    %c0_217 = arith.constant 0 : index
    %c0_218 = arith.constant 0 : index
    %501 = vector.load %arg20[%c1_216, %c0_217, %c0_218] : memref<2x1x128xf32, #tpu.memory_space<vmem>>, vector<1x1x128xf32>
    %502 = vector.shape_cast %501 : vector<1x1x128xf32> to vector<1x128xf32>
    %503 = vector.broadcast %502 : vector<1x128xf32> to vector<16x128xf32>
    %504 = arith.addf %500, %503 : vector<16x128xf32>
    %cst_219 = arith.constant 0.000000e+00 : f32
    %505 = vector.broadcast %cst_219 : f32 to vector<16x128xf32>
    %506 = arith.maximumf %504, %505 : vector<16x128xf32>
    %c1_220 = arith.constant 1 : index
    %c0_221 = arith.constant 0 : index
    %c0_222 = arith.constant 0 : index
    %507 = vector.load %arg21[%c1_220, %c0_221, %c0_222] : memref<2x128x64xf32, #tpu.memory_space<vmem>>, vector<1x128x64xf32>
    %508 = vector.shape_cast %507 : vector<1x128x64xf32> to vector<128x64xf32>
    %cst_223 = arith.constant dense<0.000000e+00> : vector<16x64xf32>
    %509 = tpu.matmul %506, %508, %cst_223 {dimension_numbers = #tpu.dot_dimension_numbers<[1], [0], [0], [1], [0, 0, 1, 1], [], []>} : vector<16x128xf32>, vector<128x64xf32>, vector<16x64xf32> -> vector<16x64xf32>
    %c1_224 = arith.constant 1 : index
    %c0_225 = arith.constant 0 : index
    %c0_226 = arith.constant 0 : index
    %510 = vector.load %arg22[%c1_224, %c0_225, %c0_226] : memref<2x1x64xf32, #tpu.memory_space<vmem>>, vector<1x1x64xf32>
    %511 = vector.shape_cast %510 : vector<1x1x64xf32> to vector<1x64xf32>
    %512 = vector.broadcast %511 : vector<1x64xf32> to vector<16x64xf32>
    %513 = arith.addf %509, %512 : vector<16x64xf32>
    %514 = arith.addf %497, %513 : vector<16x64xf32>
    %c1_227 = arith.constant 1 : index
    %c0_228 = arith.constant 0 : index
    %c0_229 = arith.constant 0 : index
    %515 = vector.load %arg23[%c1_227, %c0_228, %c0_229] : memref<2x1x64xf32, #tpu.memory_space<vmem>>, vector<1x1x64xf32>
    %516 = vector.shape_cast %515 : vector<1x1x64xf32> to vector<1x64xf32>
    %c1_230 = arith.constant 1 : index
    %c0_231 = arith.constant 0 : index
    %c0_232 = arith.constant 0 : index
    %517 = vector.load %arg24[%c1_230, %c0_231, %c0_232] : memref<2x1x64xf32, #tpu.memory_space<vmem>>, vector<1x1x64xf32>
    %518 = vector.shape_cast %517 : vector<1x1x64xf32> to vector<1x64xf32>
    %cst_233 = arith.constant dense<0.000000e+00> : vector<16xf32>
    %519 = vector.multi_reduction <add>, %514, %cst_233 [1] : vector<16x64xf32> to vector<16xf32>
    %520 = vector.shape_cast %519 : vector<16xf32> to vector<16x1xf32>
    %cst_234 = arith.constant 6.400000e+01 : f32
    %521 = vector.broadcast %cst_234 : f32 to vector<16x1xf32>
    %522 = arith.divf %520, %521 : vector<16x1xf32>
    %523 = vector.broadcast %522 : vector<16x1xf32> to vector<16x64xf32>
    %524 = arith.subf %514, %523 : vector<16x64xf32>
    %525 = arith.mulf %524, %524 : vector<16x64xf32>
    %cst_235 = arith.constant dense<0.000000e+00> : vector<16xf32>
    %526 = vector.multi_reduction <add>, %525, %cst_235 [1] : vector<16x64xf32> to vector<16xf32>
    %527 = vector.shape_cast %526 : vector<16xf32> to vector<16x1xf32>
    %cst_236 = arith.constant 6.400000e+01 : f32
    %528 = vector.broadcast %cst_236 : f32 to vector<16x1xf32>
    %529 = arith.divf %527, %528 : vector<16x1xf32>
    %cst_237 = arith.constant 9.99999974E-6 : f32
    %530 = vector.broadcast %cst_237 : f32 to vector<16x1xf32>
    %531 = arith.addf %529, %530 : vector<16x1xf32>
    %532 = math.rsqrt %531 : vector<16x1xf32>
    %533 = vector.broadcast %532 : vector<16x1xf32> to vector<16x64xf32>
    %534 = arith.mulf %524, %533 : vector<16x64xf32>
    %535 = vector.broadcast %516 : vector<1x64xf32> to vector<16x64xf32>
    %536 = arith.mulf %534, %535 : vector<16x64xf32>
    %537 = vector.broadcast %518 : vector<1x64xf32> to vector<16x64xf32>
    %538 = arith.addf %536, %537 : vector<16x64xf32>
    %c0_238 = arith.constant 0 : index
    %c0_239 = arith.constant 0 : index
    %539 = vector.load %arg25[%c0_238, %c0_239] : memref<64x128xf32, #tpu.memory_space<vmem>>, vector<64x128xf32>
    %cst_240 = arith.constant dense<0.000000e+00> : vector<16x128xf32>
    %540 = tpu.matmul %538, %539, %cst_240 {dimension_numbers = #tpu.dot_dimension_numbers<[1], [0], [0], [1], [0, 0, 1, 1], [], []>} : vector<16x64xf32>, vector<64x128xf32>, vector<16x128xf32> -> vector<16x128xf32>
    %c0_241 = arith.constant 0 : index
    %c0_242 = arith.constant 0 : index
    %541 = vector.load %arg26[%c0_241, %c0_242] : memref<1x128xf32, #tpu.memory_space<vmem>>, vector<1x128xf32>
    %542 = vector.broadcast %541 : vector<1x128xf32> to vector<16x128xf32>
    %543 = arith.addf %540, %542 : vector<16x128xf32>
    %c0_243 = arith.constant 0 : index
    %c0_244 = arith.constant 0 : index
    %544 = vector.load %arg27[%c0_243, %c0_244] : memref<16x128xf32, #tpu.memory_space<vmem>>, vector<16x128xf32>
    tpu.vector_store %arg27[%c0_243, %c0_244], %543 {strides = array<i32>} : memref<16x128xf32, #tpu.memory_space<vmem>>, vector<16x128xf32>,
    return
  }
}

</mosaic_0001>

<llo_original>
// kernel: tpu_custom_call.1
$region0: #{tpu_custom_call.1}
  #allocation0 [shape = 'u32[]', space=smem, size = 0x4, offset = 0x4, fixed_abs, tag = 'smem constant byte address 0x4 - core index']
  #allocation1 [shape = 'u32[144,128]{1,0:T(1,128)}', space=vmem, size = 0x12000, scoped, tag = 'internal scratch']
  %s0 = inlined_call_operand.vmem [shape: s32[16,1], index: 0, kind: input, shape index: {}]
  %s1 = inlined_call_operand.vmem [shape: f32[128,64], index: 1, kind: input, shape index: {}]
  %s2 = inlined_call_operand.hbm [shape: f32[16,64], index: 2, kind: input, shape index: {}]
  %s3 = inlined_call_operand.hbm [shape: f32[16,64], index: 3, kind: input, shape index: {}]
  %s4 = inlined_call_operand.hbm [shape: f32[16,64], index: 4, kind: input, shape index: {}]
  %s5 = inlined_call_operand.vmem [shape: f32[2,64,192], index: 5, kind: input, shape index: {}]
  %s6 = inlined_call_operand.vmem [shape: f32[2,1,192], index: 6, kind: input, shape index: {}]
  %s7 = inlined_call_operand.vmem [shape: f32[2,64,64], index: 7, kind: input, shape index: {}]
  %s8 = inlined_call_operand.vmem [shape: f32[2,1,64], index: 8, kind: input, shape index: {}]
  %s9 = inlined_call_operand.hbm [shape: f32[2,1,64], index: 9, kind: input, shape index: {}]
  %s10 = inlined_call_operand.hbm [shape: f32[2,1,64], index: 10, kind: input, shape index: {}]
  %s11 = inlined_call_operand.hbm [shape: f32[2,64,64], index: 11, kind: input, shape index: {}]
  %s12 = inlined_call_operand.hbm [shape: f32[2,1,64], index: 12, kind: input, shape index: {}]
  %s13 = inlined_call_operand.hbm [shape: f32[2,64,128], index: 13, kind: input, shape index: {}]
  %s14 = inlined_call_operand.hbm [shape: f32[2,1,128], index: 14, kind: input, shape index: {}]
  %s15 = inlined_call_operand.vmem [shape: f32[2,64,64], index: 15, kind: input, shape index: {}]
  %s16 = inlined_call_operand.vmem [shape: f32[2,1,64], index: 16, kind: input, shape index: {}]
  %s17 = inlined_call_operand.vmem [shape: f32[2,1,64], index: 17, kind: input, shape index: {}]
  %s18 = inlined_call_operand.vmem [shape: f32[2,1,64], index: 18, kind: input, shape index: {}]
  %s19 = inlined_call_operand.hbm [shape: f32[2,64,128], index: 19, kind: input, shape index: {}]
  %s20 = inlined_call_operand.vmem [shape: f32[2,1,128], index: 20, kind: input, shape index: {}]
  %s21 = inlined_call_operand.vmem [shape: f32[2,128,64], index: 21, kind: input, shape index: {}]
  %s22 = inlined_call_operand.vmem [shape: f32[2,1,64], index: 22, kind: input, shape index: {}]
  %s23 = inlined_call_operand.vmem [shape: f32[2,1,64], index: 23, kind: input, shape index: {}]
  %s24 = inlined_call_operand.vmem [shape: f32[2,1,64], index: 24, kind: input, shape index: {}]
  %s25 = inlined_call_operand.hbm [shape: f32[64,128], index: 25, kind: input, shape index: {}]
  %s26 = inlined_call_operand.vmem [shape: f32[1,128], index: 26, kind: input, shape index: {}]
  %s27 = inlined_call_operand.hbm [shape: f32[16,128], index: 27, kind: output, shape index: {}]
  %s28 = sld [smem:[#allocation0]]
  $region162: #{tpu_custom_call.1} parent=0
    _
  %s30 = ssub.s32 1, %s28
  %s31 = scalar_select 0, %s30, %s28
  $region1: #{tpu_custom_call.1} parent=0
    #allocation2 [shape = 'u8[8192]{0}', space=vmem, size = 0x2000, scoped, tag = 'input window, operand 2, single buffered']
    #allocation3 [shape = 's32[1]{0}', space=sflag, size = 0x4, scoped, tag = 'scoped memory for tpu_custom_call.1']
    #allocation4 [shape = 's32[1]{0}', space=sflag, size = 0x4, scoped, tag = 'scoped memory for tpu_custom_call.1']
    #allocation5 [shape = 'u8[8192]{0}', space=vmem, size = 0x2000, scoped, tag = 'input window, operand 3, single buffered']
    #allocation6 [shape = 's32[1]{0}', space=sflag, size = 0x4, scoped, tag = 'scoped memory for tpu_custom_call.1']
    #allocation7 [shape = 'u8[8192]{0}', space=vmem, size = 0x2000, scoped, tag = 'input window, operand 4, single buffered']
    #allocation8 [shape = 'u8[1024]{0}', space=vmem, size = 0x400, scoped, tag = 'input window, operand 9, single buffered']
    #allocation9 [shape = 's32[1]{0}', space=sflag, size = 0x4, scoped, tag = 'scoped memory for tpu_custom_call.1']
    #allocation10 [shape = 'u8[1024]{0}', space=vmem, size = 0x400, scoped, tag = 'input window, operand 10, single buffered']
    #allocation11 [shape = 'u8[65536]{0}', space=vmem, size = 0x10000, scoped, tag = 'input window, operand 11, single buffered']
    #allocation12 [shape = 's32[1]{0}', space=sflag, size = 0x4, scoped, tag = 'scoped memory for tpu_custom_call.1']
    #allocation13 [shape = 'u8[1024]{0}', space=vmem, size = 0x400, scoped, tag = 'input window, operand 12, single buffered']
    #allocation14 [shape = 'u8[65536]{0}', space=vmem, size = 0x10000, scoped, tag = 'input window, operand 13, single buffered']
    #allocation15 [shape = 's32[1]{0}', space=sflag, size = 0x4, scoped, tag = 'scoped memory for tpu_custom_call.1']
    #allocation16 [shape = 'u8[1024]{0}', space=vmem, size = 0x400, scoped, tag = 'input window, operand 14, single buffered']
    #allocation17 [shape = 'u8[65536]{0}', space=vmem, size = 0x10000, scoped, tag = 'input window, operand 19, single buffered']
    #allocation18 [shape = 's32[1]{0}', space=sflag, size = 0x4, scoped, tag = 'scoped memory for tpu_custom_call.1']
    #allocation19 [shape = 'u8[32768]{0}', space=vmem, size = 0x8000, scoped, tag = 'input window, operand 25, single buffered']
    #allocation20 [shape = 'u8[8192]{0}', space=vmem, size = 0x2000, scoped, tag = 'output window, operand 0, single buffered']
    %32 = vsyncpa [#allocation3], 0
    %33 = vsyncpa [#allocation6], 0
    %34 = vsyncpa [#allocation9], 0
    %35 = vsyncpa [#allocation12], 0
    %36 = vsyncpa [#allocation15], 0
    %37 = vsyncpa [#allocation18], 0
    %38 = vsyncpa [#allocation4], 0
    // Predicated region
    $region2: #{tpu_custom_call.1} parent=1 // pred_check
      _
    $region3: #{tpu_custom_call.1} parent=1 // pred_check_branch
      %40 = sbr.rel (0) target = $region5
    $region4: #{tpu_custom_call.1} parent=1 // pred_region
      _
    $region5: #{tpu_custom_call.1} parent=1 // pred_fallthru
      _
    // Predicated region
    $region6: #{tpu_custom_call.1} parent=1 // pred_check
      _
    $region7: #{tpu_custom_call.1} parent=1 // pred_check_branch
      %42 = sbr.rel (0) target = $region9
    $region8: #{tpu_custom_call.1} parent=1 // pred_region
      _
    $region9: #{tpu_custom_call.1} parent=1 // pred_fallthru
      _
    // Predicated region
    $region10: #{tpu_custom_call.1} parent=1 // pred_check
      _
    $region11: #{tpu_custom_call.1} parent=1 // pred_check_branch
      %44 = sbr.rel (0) target = $region13
    $region12: #{tpu_custom_call.1} parent=1 // pred_region
      %s46 = ssub.s32 256, 256
      %47 = vsyncadd [#allocation3], %s46
      %s48 = sshll.u32 [#allocation2], 4
      %s49 = int_to_ptr.vmem [resolvable:$true] %s48
      %54 = dma.hbm_to_vmem [thread:$0]  %s2, 256, %s49, [#allocation3], 128, 128, 8
    $region13: #{tpu_custom_call.1} parent=1 // pred_fallthru
      _
    // Predicated region
    $region14: #{tpu_custom_call.1} parent=1 // pred_check
      _
    $region15: #{tpu_custom_call.1} parent=1 // pred_check_branch
      %56 = sbr.rel (0) target = $region17
    $region16: #{tpu_custom_call.1} parent=1 // pred_region
      %s58 = ssub.s32 256, 256
      %59 = vsyncadd [#allocation6], %s58
      %s60 = sshll.u32 [#allocation5], 4
      %s61 = int_to_ptr.vmem [resolvable:$true] %s60
      %66 = dma.hbm_to_vmem [thread:$0]  %s3, 256, %s61, [#allocation6], 128, 128, 8
    $region17: #{tpu_custom_call.1} parent=1 // pred_fallthru
      _
    // Predicated region
    $region18: #{tpu_custom_call.1} parent=1 // pred_check
      _
    $region19: #{tpu_custom_call.1} parent=1 // pred_check_branch
      %68 = sbr.rel (0) target = $region21
    $region20: #{tpu_custom_call.1} parent=1 // pred_region
      %s70 = ssub.s32 256, 256
      %71 = vsyncadd [#allocation6], %s70
      %s72 = sshll.u32 [#allocation7], 4
      %s73 = int_to_ptr.vmem [resolvable:$true] %s72
      %78 = dma.hbm_to_vmem [thread:$0]  %s4, 256, %s73, [#allocation6], 128, 128, 8
    $region21: #{tpu_custom_call.1} parent=1 // pred_fallthru
      _
    // Predicated region
    $region22: #{tpu_custom_call.1} parent=1 // pred_check
      _
    $region23: #{tpu_custom_call.1} parent=1 // pred_check_branch
      %80 = sbr.rel (0) target = $region25
    $region24: #{tpu_custom_call.1} parent=1 // pred_region
      _
    $region25: #{tpu_custom_call.1} parent=1 // pred_fallthru
      _
    // Predicated region
    $region26: #{tpu_custom_call.1} parent=1 // pred_check
      _
    $region27: #{tpu_custom_call.1} parent=1 // pred_check_branch
      %82 = sbr.rel (0) target = $region29
    $region28: #{tpu_custom_call.1} parent=1 // pred_region
      _
    $region29: #{tpu_custom_call.1} parent=1 // pred_fallthru
      _
    // Predicated region
    $region30: #{tpu_custom_call.1} parent=1 // pred_check
      _
    $region31: #{tpu_custom_call.1} parent=1 // pred_check_branch
      %84 = sbr.rel (0) target = $region33
    $region32: #{tpu_custom_call.1} parent=1 // pred_region
      _
    $region33: #{tpu_custom_call.1} parent=1 // pred_fallthru
      _
    // Predicated region
    $region34: #{tpu_custom_call.1} parent=1 // pred_check
      _
    $region35: #{tpu_custom_call.1} parent=1 // pred_check_branch
      %86 = sbr.rel (0) target = $region37
    $region36: #{tpu_custom_call.1} parent=1 // pred_region
      _
    $region37: #{tpu_custom_call.1} parent=1 // pred_fallthru
      _
    // Predicated region
    $region38: #{tpu_custom_call.1} parent=1 // pred_check
      _
    $region39: #{tpu_custom_call.1} parent=1 // pred_check_branch
      %88 = sbr.rel (0) target = $region41
    $region40: #{tpu_custom_call.1} parent=1 // pred_region
      %s90 = ssub.s32 32, 32
      %91 = vsyncadd [#allocation9], %s90
      %s92 = sshll.u32 [#allocation8], 4
      %s93 = int_to_ptr.vmem [resolvable:$true] %s92
      %98 = dma.hbm_to_vmem [thread:$0]  %s9, 32, %s93, [#allocation9], 16, 16, 1
    $region41: #{tpu_custom_call.1} parent=1 // pred_fallthru
      _
    // Predicated region
    $region42: #{tpu_custom_call.1} parent=1 // pred_check
      _
    $region43: #{tpu_custom_call.1} parent=1 // pred_check_branch
      %100 = sbr.rel (0) target = $region45
    $region44: #{tpu_custom_call.1} parent=1 // pred_region
      %s102 = ssub.s32 32, 32
      %103 = vsyncadd [#allocation9], %s102
      %s104 = sshll.u32 [#allocation10], 4
      %s105 = int_to_ptr.vmem [resolvable:$true] %s104
      %110 = dma.hbm_to_vmem [thread:$0]  %s10, 32, %s105, [#allocation9], 16, 16, 1
    $region45: #{tpu_custom_call.1} parent=1 // pred_fallthru
      _
    // Predicated region
    $region46: #{tpu_custom_call.1} parent=1 // pred_check
      _
    $region47: #{tpu_custom_call.1} parent=1 // pred_check_branch
      %112 = sbr.rel (0) target = $region49
    $region48: #{tpu_custom_call.1} parent=1 // pred_region
      %s114 = ssub.s32 2048, 2048
      %115 = vsyncadd [#allocation12], %s114
      %s116 = sshll.u32 [#allocation11], 4
      %s117 = int_to_ptr.vmem [resolvable:$true] %s116
      %122 = dma.hbm_to_vmem [thread:$0]  %s11, 2048, %s117, [#allocation12], 128, 128, 8
    $region49: #{tpu_custom_call.1} parent=1 // pred_fallthru
      _
    // Predicated region
    $region50: #{tpu_custom_call.1} parent=1 // pred_check
      _
    $region51: #{tpu_custom_call.1} parent=1 // pred_check_branch
      %124 = sbr.rel (0) target = $region53
    $region52: #{tpu_custom_call.1} parent=1 // pred_region
      %s126 = ssub.s32 32, 32
      %127 = vsyncadd [#allocation12], %s126
      %s128 = sshll.u32 [#allocation13], 4
      %s129 = int_to_ptr.vmem [resolvable:$true] %s128
      %134 = dma.hbm_to_vmem [thread:$0]  %s12, 32, %s129, [#allocation12], 16, 16, 1
    $region53: #{tpu_custom_call.1} parent=1 // pred_fallthru
      _
    // Predicated region
    $region54: #{tpu_custom_call.1} parent=1 // pred_check
      _
    $region55: #{tpu_custom_call.1} parent=1 // pred_check_branch
      %136 = sbr.rel (0) target = $region57
    $region56: #{tpu_custom_call.1} parent=1 // pred_region
      %s138 = ssub.s32 2048, 2048
      %139 = vsyncadd [#allocation15], %s138
      %s140 = sshll.u32 [#allocation14], 4
      %s141 = int_to_ptr.vmem [resolvable:$true] %s140
      %146 = dma.hbm_to_vmem [thread:$0]  %s13, 2048, %s141, [#allocation15], 128, 128, 8
    $region57: #{tpu_custom_call.1} parent=1 // pred_fallthru
      _
    // Predicated region
    $region58: #{tpu_custom_call.1} parent=1 // pred_check
      _
    $region59: #{tpu_custom_call.1} parent=1 // pred_check_branch
      %148 = sbr.rel (0) target = $region61
    $region60: #{tpu_custom_call.1} parent=1 // pred_region
      %s150 = ssub.s32 32, 32
      %151 = vsyncadd [#allocation15], %s150
      %s152 = sshll.u32 [#allocation16], 4
      %s153 = int_to_ptr.vmem [resolvable:$true] %s152
      %158 = dma.hbm_to_vmem [thread:$0]  %s14, 32, %s153, [#allocation15], 16, 16, 1
    $region61: #{tpu_custom_call.1} parent=1 // pred_fallthru
      _
    // Predicated region
    $region62: #{tpu_custom_call.1} parent=1 // pred_check
      _
    $region63: #{tpu_custom_call.1} parent=1 // pred_check_branch
      %160 = sbr.rel (0) target = $region65
    $region64: #{tpu_custom_call.1} parent=1 // pred_region
      _
    $region65: #{tpu_custom_call.1} parent=1 // pred_fallthru
      _
    // Predicated region
    $region66: #{tpu_custom_call.1} parent=1 // pred_check
      _
    $region67: #{tpu_custom_call.1} parent=1 // pred_check_branch
      %162 = sbr.rel (0) target = $region69
    $region68: #{tpu_custom_call.1} parent=1 // pred_region
      _
    $region69: #{tpu_custom_call.1} parent=1 // pred_fallthru
      _
    // Predicated region
    $region70: #{tpu_custom_call.1} parent=1 // pred_check
      _
    $region71: #{tpu_custom_call.1} parent=1 // pred_check_branch
      %164 = sbr.rel (0) target = $region73
    $region72: #{tpu_custom_call.1} parent=1 // pred_region
      _
    $region73: #{tpu_custom_call.1} parent=1 // pred_fallthru
      _
    // Predicated region
    $region74: #{tpu_custom_call.1} parent=1 // pred_check
      _
    $region75: #{tpu_custom_call.1} parent=1 // pred_check_branch
      %166 = sbr.rel (0) target = $region77
    $region76: #{tpu_custom_call.1} parent=1 // pred_region
      _
    $region77: #{tpu_custom_call.1} parent=1 // pred_fallthru
      _
    // Predicated region
    $region78: #{tpu_custom_call.1} parent=1 // pred_check
      _
    $region79: #{tpu_custom_call.1} parent=1 // pred_check_branch
      %168 = sbr.rel (0) target = $region81
    $region80: #{tpu_custom_call.1} parent=1 // pred_region
      %s170 = ssub.s32 2048, 2048
      %171 = vsyncadd [#allocation18], %s170
      %s172 = sshll.u32 [#allocation17], 4
      %s173 = int_to_ptr.vmem [resolvable:$true] %s172
      %178 = dma.hbm_to_vmem [thread:$0]  %s19, 2048, %s173, [#allocation18], 128, 128, 8
    $region81: #{tpu_custom_call.1} parent=1 // pred_fallthru
      _
    // Predicated region
    $region82: #{tpu_custom_call.1} parent=1 // pred_check
      _
    $region83: #{tpu_custom_call.1} parent=1 // pred_check_branch
      %180 = sbr.rel (0) target = $region85
    $region84: #{tpu_custom_call.1} parent=1 // pred_region
      _
    $region85: #{tpu_custom_call.1} parent=1 // pred_fallthru
      _
    // Predicated region
    $region86: #{tpu_custom_call.1} parent=1 // pred_check
      _
    $region87: #{tpu_custom_call.1} parent=1 // pred_check_branch
      %182 = sbr.rel (0) target = $region89
    $region88: #{tpu_custom_call.1} parent=1 // pred_region
      _
    $region89: #{tpu_custom_call.1} parent=1 // pred_fallthru
      _
    // Predicated region
    $region90: #{tpu_custom_call.1} parent=1 // pred_check
      _
    $region91: #{tpu_custom_call.1} parent=1 // pred_check_branch
      %184 = sbr.rel (0) target = $region93
    $region92: #{tpu_custom_call.1} parent=1 // pred_region
      _
    $region93: #{tpu_custom_call.1} parent=1 // pred_fallthru
      _
    // Predicated region
    $region94: #{tpu_custom_call.1} parent=1 // pred_check
      _
    $region95: #{tpu_custom_call.1} parent=1 // pred_check_branch
      %186 = sbr.rel (0) target = $region97
    $region96: #{tpu_custom_call.1} parent=1 // pred_region
      _
    $region97: #{tpu_custom_call.1} parent=1 // pred_fallthru
      _
    // Predicated region
    $region98: #{tpu_custom_call.1} parent=1 // pred_check
      _
    $region99: #{tpu_custom_call.1} parent=1 // pred_check_branch
      %188 = sbr.rel (0) target = $region101
    $region100: #{tpu_custom_call.1} parent=1 // pred_region
      _
    $region101: #{tpu_custom_call.1} parent=1 // pred_fallthru
      _
    // Predicated region
    $region102: #{tpu_custom_call.1} parent=1 // pred_check
      _
    $region103: #{tpu_custom_call.1} parent=1 // pred_check_branch
      %190 = sbr.rel (0) target = $region105
    $region104: #{tpu_custom_call.1} parent=1 // pred_region
      %s192 = ssub.s32 1024, 1024
      %193 = vsyncadd [#allocation18], %s192
      %s194 = sshll.u32 [#allocation19], 4
      %s195 = int_to_ptr.vmem [resolvable:$true] %s194
      %200 = dma.hbm_to_vmem [thread:$0]  %s25, 1024, %s195, [#allocation18], 128, 128, 8
    $region105: #{tpu_custom_call.1} parent=1 // pred_fallthru
      _
    // Predicated region
    $region106: #{tpu_custom_call.1} parent=1 // pred_check
      _
    $region107: #{tpu_custom_call.1} parent=1 // pred_check_branch
      %202 = sbr.rel (0) target = $region109
    $region108: #{tpu_custom_call.1} parent=1 // pred_region
      _
    $region109: #{tpu_custom_call.1} parent=1 // pred_fallthru
      _
    // Predicated region
    $region110: #{tpu_custom_call.1} parent=1 // pred_check
      _
    $region111: #{tpu_custom_call.1} parent=1 // pred_check_branch
      %204 = sbr.rel (0) target = $region113
    $region112: #{tpu_custom_call.1} parent=1 // pred_region
      %205 = dma.done [#allocation3], 256
    $region113: #{tpu_custom_call.1} parent=1 // pred_fallthru
      _
    // Predicated region
    $region114: #{tpu_custom_call.1} parent=1 // pred_check
      _
    $region115: #{tpu_custom_call.1} parent=1 // pred_check_branch
      %207 = sbr.rel (0) target = $region117
    $region116: #{tpu_custom_call.1} parent=1 // pred_region
      %208 = dma.done [#allocation6], 256
    $region117: #{tpu_custom_call.1} parent=1 // pred_fallthru
      _
    // Predicated region
    $region118: #{tpu_custom_call.1} parent=1 // pred_check
      _
    $region119: #{tpu_custom_call.1} parent=1 // pred_check_branch
      %210 = sbr.rel (0) target = $region121
    $region120: #{tpu_custom_call.1} parent=1 // pred_region
      %211 = dma.done [#allocation6], 256
    $region121: #{tpu_custom_call.1} parent=1 // pred_fallthru
      _
    // Predicated region
    $region122: #{tpu_custom_call.1} parent=1 // pred_check
      _
    $region123: #{tpu_custom_call.1} parent=1 // pred_check_branch
      %213 = sbr.rel (0) target = $region125
    $region124: #{tpu_custom_call.1} parent=1 // pred_region
      %214 = dma.done [#allocation9], 32
    $region125: #{tpu_custom_call.1} parent=1 // pred_fallthru
      _
    // Predicated region
    $region126: #{tpu_custom_call.1} parent=1 // pred_check
      _
    $region127: #{tpu_custom_call.1} parent=1 // pred_check_branch
      %216 = sbr.rel (0) target = $region129
    $region128: #{tpu_custom_call.1} parent=1 // pred_region
      %217 = dma.done [#allocation9], 32
    $region129: #{tpu_custom_call.1} parent=1 // pred_fallthru
      _
    // Predicated region
    $region130: #{tpu_custom_call.1} parent=1 // pred_check
      _
    $region131: #{tpu_custom_call.1} parent=1 // pred_check_branch
      %219 = sbr.rel (0) target = $region133
    $region132: #{tpu_custom_call.1} parent=1 // pred_region
      %220 = dma.done [#allocation12], 2048
    $region133: #{tpu_custom_call.1} parent=1 // pred_fallthru
      _
    // Predicated region
    $region134: #{tpu_custom_call.1} parent=1 // pred_check
      _
    $region135: #{tpu_custom_call.1} parent=1 // pred_check_branch
      %222 = sbr.rel (0) target = $region137
    $region136: #{tpu_custom_call.1} parent=1 // pred_region
      %223 = dma.done [#allocation12], 32
    $region137: #{tpu_custom_call.1} parent=1 // pred_fallthru
      _
    // Predicated region
    $region138: #{tpu_custom_call.1} parent=1 // pred_check
      _
    $region139: #{tpu_custom_call.1} parent=1 // pred_check_branch
      %225 = sbr.rel (0) target = $region141
    $region140: #{tpu_custom_call.1} parent=1 // pred_region
      %226 = dma.done [#allocation15], 2048
    $region141: #{tpu_custom_call.1} parent=1 // pred_fallthru
      _
    // Predicated region
    $region142: #{tpu_custom_call.1} parent=1 // pred_check
      _
    $region143: #{tpu_custom_call.1} parent=1 // pred_check_branch
      %228 = sbr.rel (0) target = $region145
    $region144: #{tpu_custom_call.1} parent=1 // pred_region
      %229 = dma.done [#allocation15], 32
    $region145: #{tpu_custom_call.1} parent=1 // pred_fallthru
      _
    // Predicated region
    $region146: #{tpu_custom_call.1} parent=1 // pred_check
      _
    $region147: #{tpu_custom_call.1} parent=1 // pred_check_branch
      %231 = sbr.rel (0) target = $region149
    $region148: #{tpu_custom_call.1} parent=1 // pred_region
      %232 = dma.done [#allocation18], 2048
    $region149: #{tpu_custom_call.1} parent=1 // pred_fallthru
      _
    // Predicated region
    $region150: #{tpu_custom_call.1} parent=1 // pred_check
      _
    $region151: #{tpu_custom_call.1} parent=1 // pred_check_branch
      %234 = sbr.rel (0) target = $region153
    $region152: #{tpu_custom_call.1} parent=1 // pred_region
      %235 = dma.done [#allocation18], 1024
    $region153: #{tpu_custom_call.1} parent=1 // pred_fallthru
      _
    %v236 = vld [vmem:[%s0] sm:$0xff]
    %v237 = vld [vmem:[%s0 + $0x8] sm:$0xff]
    %v238 = vlaneseq
    %v239 = vand.u32 %v238, 127
    %240 = vset.pattern.permute.xlu0 0
    %241 = vperm.xlu0 %240, %v236
    %v242 = vpop.permute.xlu0 %241
    %243 = vset.pattern.permute.xlu0 0
    %244 = vperm.xlu0 %243, %v237
    %v245 = vpop.permute.xlu0 %244
    %vm246 = vcmp.eq.s32.totalorder %v242, %v239
    %vm247 = vcmp.eq.s32.totalorder %v245, %v239
    %v248 = vsel %vm246, 1, 0
    %v249 = vsel %vm247, 1, 0
    %v250 = vcvt.s32.f32 %v248
    %v251 = vcvt.s32.f32 %v249
    %v252 = vld [vmem:[%s1] sm:$0xff]
    %v253 = vld [vmem:[%s1 + $0x8] sm:$0xff]
    %v254 = vld [vmem:[%s1 + $0x10] sm:$0xff]
    %v255 = vld [vmem:[%s1 + $0x18] sm:$0xff]
    %v256 = vld [vmem:[%s1 + $0x20] sm:$0xff]
    %v257 = vld [vmem:[%s1 + $0x28] sm:$0xff]
    %v258 = vld [vmem:[%s1 + $0x30] sm:$0xff]
    %v259 = vld [vmem:[%s1 + $0x38] sm:$0xff]
    %v260 = vld [vmem:[%s1 + $0x40] sm:$0xff]
    %v261 = vld [vmem:[%s1 + $0x48] sm:$0xff]
    %v262 = vld [vmem:[%s1 + $0x50] sm:$0xff]
    %v263 = vld [vmem:[%s1 + $0x58] sm:$0xff]
    %v264 = vld [vmem:[%s1 + $0x60] sm:$0xff]
    %v265 = vld [vmem:[%s1 + $0x68] sm:$0xff]
    %v266 = vld [vmem:[%s1 + $0x70] sm:$0xff]
    %v267 = vld [vmem:[%s1 + $0x78] sm:$0xff]
    %268 = vmatprep.subr.mxu0 0.0
    %269 = vmatpush1.msra.mxu0 %v252
    %270 = vmatprep.subr.mxu0 0.0
    %271 = vmatpush1.msra.mxu0 %v253
    %272 = vmatprep.subr.mxu0 0.0
    %273 = vmatpush1.msra.mxu0 %v254
    %274 = vmatprep.subr.mxu0 0.0
    %275 = vmatpush1.msra.mxu0 %v255
    %276 = vmatprep.subr.mxu0 0.0
    %277 = vmatpush1.msra.mxu0 %v256
    %278 = vmatprep.subr.mxu0 0.0
    %279 = vmatpush1.msra.mxu0 %v257
    %280 = vmatprep.subr.mxu0 0.0
    %281 = vmatpush1.msra.mxu0 %v258
    %282 = vmatprep.subr.mxu0 0.0
    %283 = vmatpush1.msra.mxu0 %v259
    %284 = vmatprep.subr.mxu0 0.0
    %285 = vmatpush1.msra.mxu0 %v260
    %286 = vmatprep.subr.mxu0 0.0
    %287 = vmatpush1.msra.mxu0 %v261
    %288 = vmatprep.subr.mxu0 0.0
    %289 = vmatpush1.msra.mxu0 %v262
    %290 = vmatprep.subr.mxu0 0.0
    %291 = vmatpush1.msra.mxu0 %v263
    %292 = vmatprep.subr.mxu0 0.0
    %293 = vmatpush1.msra.mxu0 %v264
    %294 = vmatprep.subr.mxu0 0.0
    %295 = vmatpush1.msra.mxu0 %v265
    %296 = vmatprep.subr.mxu0 0.0
    %297 = vmatpush1.msra.mxu0 %v266
    %298 = vmatprep.subr.mxu0 0.0
    %299 = vmatpush1.msra.mxu0 %v267
    %300 = vmatprep.subr.mxu0 0.0
    %301 = vmatpush1.msra.mxu0 0.0
    %302 = vmatprep.subr.mxu0 0.0
    %303 = vmatpush1.msra.mxu0 0.0
    %304 = vmatprep.subr.mxu0 0.0
    %305 = vmatpush1.msra.mxu0 0.0
    %306 = vmatprep.subr.mxu0 0.0
    %307 = vmatpush1.msra.mxu0 0.0
    %308 = vmatprep.subr.mxu0 0.0
    %309 = vmatpush1.msra.mxu0 0.0
    %310 = vmatprep.subr.mxu0 0.0
    %311 = vmatpush1.msra.mxu0 0.0
    %312 = vmatprep.subr.mxu0 0.0
    %313 = vmatpush1.msra.mxu0 0.0
    %314 = vmatprep.subr.mxu0 0.0
    %315 = vmatpush1.msra.mxu0 0.0
    %316 = vmatprep.subr.mxu0 0.0
    %317 = vmatpush1.msra.mxu0 0.0
    %318 = vmatprep.subr.mxu0 0.0
    %319 = vmatpush1.msra.mxu0 0.0
    %320 = vmatprep.subr.mxu0 0.0
    %321 = vmatpush1.msra.mxu0 0.0
    %322 = vmatprep.subr.mxu0 0.0
    %323 = vmatpush1.msra.mxu0 0.0
    %324 = vmatprep.subr.mxu0 0.0
    %325 = vmatpush1.msra.mxu0 0.0
    %326 = vmatprep.subr.mxu0 0.0
    %327 = vmatpush1.msra.mxu0 0.0
    %328 = vmatprep.subr.mxu0 0.0
    %329 = vmatpush1.msra.mxu0 0.0
    %330 = vmatprep.subr.mxu0 0.0
    %331 = vmatpush1.msra.mxu0 0.0
    %332 = vmatprep.mubr.f32.mxu0 0.0
    %333 = vmatmul.mubr.f32.gmra.mrb[0].mxu0 %v250
    %v334 = vpop.f32.mrb[0].mxu0
    %v335 = vadd.f32 0.0, %v334
    %v336 = vpop.f32.mrb[0].mxu0
    %337 = vmatprep.mubr.f32.mxu0 0.0
    %338 = vmatmul.mubr.f32.gmra.mrb[0].mxu0 %v251
    %v339 = vpop.f32.mrb[0].mxu0
    %v340 = vadd.f32 0.0, %v339
    %v341 = vpop.f32.mrb[0].mxu0
    %342 = vdwg.mxu0
    %345 = vrot.lane.b32.xlu0 %v335, 96
    %v346 = vpop.permute.xlu0 %345
    %347 = vrot.lane.b32.xlu0 %v340, 96
    %v348 = vpop.permute.xlu0 %347
    %351 = vrot.lane.b32.xlu0 %v335, 32
    %v352 = vpop.permute.xlu0 %351
    %353 = vrot.lane.b32.xlu0 %v340, 32
    %v354 = vpop.permute.xlu0 %353
    %vm357 = vcmask 261120
    %v358 = vsel %vm357, %v346, %v352
    %v359 = vsel %vm357, %v348, %v354
    %v360 = vld [vmem:[#allocation2] sm:$0xff]
    %v361 = vld [vmem:[#allocation2 + $0x8] sm:$0xff]
    %v362 = vmul.f32 %v335, %v360
    %v363 = vmul.f32 %v340, %v361
    %v364 = vld [vmem:[#allocation5] sm:$0xff]
    %v365 = vld [vmem:[#allocation5 + $0x8] sm:$0xff]
    %v366 = vmul.f32 %v358, %v364
    %v367 = vmul.f32 %v359, %v365
    %v368 = vadd.f32 %v362, %v366
    %v369 = vadd.f32 %v363, %v367
    %v370 = vld [vmem:[#allocation7] sm:$0xff]
    %v371 = vld [vmem:[#allocation7 + $0x8] sm:$0xff]
    %v372 = vld [vmem:[%s5] sm:$0xff]
    %v373 = vld [vmem:[%s5 + $0x8] sm:$0xff]
    %v374 = vld [vmem:[%s5 + $0x10] sm:$0xff]
    %v375 = vld [vmem:[%s5 + $0x18] sm:$0xff]
    %v376 = vld [vmem:[%s5 + $0x20] sm:$0xff]
    %v377 = vld [vmem:[%s5 + $0x28] sm:$0xff]
    %v378 = vld [vmem:[%s5 + $0x30] sm:$0xff]
    %v379 = vld [vmem:[%s5 + $0x38] sm:$0xff]
    %v380 = vld [vmem:[%s5 + $0x40] sm:$0xff]
    %v381 = vld [vmem:[%s5 + $0x48] sm:$0xff]
    %v382 = vld [vmem:[%s5 + $0x50] sm:$0xff]
    %v383 = vld [vmem:[%s5 + $0x58] sm:$0xff]
    %v384 = vld [vmem:[%s5 + $0x60] sm:$0xff]
    %v385 = vld [vmem:[%s5 + $0x68] sm:$0xff]
    %v386 = vld [vmem:[%s5 + $0x70] sm:$0xff]
    %v387 = vld [vmem:[%s5 + $0x78] sm:$0xff]
    %v388 = vld [vmem:[%s6] sm:$0x3]
    %v390 = vlaneseq
    %v391 = vshrl.u32 %v390, 7
    %v392 = vsub.s32 0, %v391
    %v393 = vrot.slane %v388, %v392
    %v394 = vlaneseq
    %v395 = vshrl.u32 %v394, 7
    %v396 = vsub.s32 1, %v395
    %v397 = vrot.slane %v388, %v396
    %vm400 = vcmask 523264
    %v402 = vsel %vm400, %v368, 0
    %v405 = vsel %vm400, %v369, 0
    %407 = vmatprep.subr.mxu0 %v373
    %408 = vmatpush1.msra.mxu0 %v372
    %409 = vmatprep.subr.mxu0 %v375
    %410 = vmatpush1.msra.mxu0 %v374
    %411 = vmatprep.subr.mxu0 %v377
    %412 = vmatpush1.msra.mxu0 %v376
    %413 = vmatprep.subr.mxu0 %v379
    %414 = vmatpush1.msra.mxu0 %v378
    %415 = vmatprep.subr.mxu0 %v381
    %416 = vmatpush1.msra.mxu0 %v380
    %417 = vmatprep.subr.mxu0 %v383
    %418 = vmatpush1.msra.mxu0 %v382
    %419 = vmatprep.subr.mxu0 %v385
    %420 = vmatpush1.msra.mxu0 %v384
    %421 = vmatprep.subr.mxu0 %v387
    %422 = vmatpush1.msra.mxu0 %v386
    %423 = vmatprep.subr.mxu0 0.0
    %424 = vmatpush1.msra.mxu0 0.0
    %425 = vmatprep.subr.mxu0 0.0
    %426 = vmatpush1.msra.mxu0 0.0
    %427 = vmatprep.subr.mxu0 0.0
    %428 = vmatpush1.msra.mxu0 0.0
    %429 = vmatprep.subr.mxu0 0.0
    %430 = vmatpush1.msra.mxu0 0.0
    %431 = vmatprep.subr.mxu0 0.0
    %432 = vmatpush1.msra.mxu0 0.0
    %433 = vmatprep.subr.mxu0 0.0
    %434 = vmatpush1.msra.mxu0 0.0
    %435 = vmatprep.subr.mxu0 0.0
    %436 = vmatpush1.msra.mxu0 0.0
    %437 = vmatprep.subr.mxu0 0.0
    %438 = vmatpush1.msra.mxu0 0.0
    %439 = vmatprep.subr.mxu0 0.0
    %440 = vmatpush1.msra.mxu0 0.0
    %441 = vmatprep.subr.mxu0 0.0
    %442 = vmatpush1.msra.mxu0 0.0
    %443 = vmatprep.subr.mxu0 0.0
    %444 = vmatpush1.msra.mxu0 0.0
    %445 = vmatprep.subr.mxu0 0.0
    %446 = vmatpush1.msra.mxu0 0.0
    %447 = vmatprep.subr.mxu0 0.0
    %448 = vmatpush1.msra.mxu0 0.0
    %449 = vmatprep.subr.mxu0 0.0
    %450 = vmatpush1.msra.mxu0 0.0
    %451 = vmatprep.subr.mxu0 0.0
    %452 = vmatpush1.msra.mxu0 0.0
    %453 = vmatprep.subr.mxu0 0.0
    %454 = vmatpush1.msra.mxu0 0.0
    %455 = vmatprep.subr.mxu0 0.0
    %456 = vmatpush1.msra.mxu0 0.0
    %457 = vmatprep.subr.mxu0 0.0
    %458 = vmatpush1.msra.mxu0 0.0
    %459 = vmatprep.subr.mxu0 0.0
    %460 = vmatpush1.msra.mxu0 0.0
    %461 = vmatprep.subr.mxu0 0.0
    %462 = vmatpush1.msra.mxu0 0.0
    %463 = vmatprep.subr.mxu0 0.0
    %464 = vmatpush1.msra.mxu0 0.0
    %465 = vmatprep.subr.mxu0 0.0
    %466 = vmatpush1.msra.mxu0 0.0
    %467 = vmatprep.subr.mxu0 0.0
    %468 = vmatpush1.msra.mxu0 0.0
    %469 = vmatprep.subr.mxu0 0.0
    %470 = vmatpush1.msra.mxu0 0.0
    %471 = vmatprep.mubr.f32.mxu0 0.0
    %472 = vmatmul.mubr.f32.gmra.mrb[0].mxu0 %v402
    %v473 = vpop.f32.mrb[0].mxu0
    %v474 = vadd.f32 %v393, %v473
    %v475 = vpop.f32.mrb[0].mxu0
    %v476 = vadd.f32 %v397, %v475
    %477 = vmatprep.mubr.f32.mxu0 0.0
    %478 = vmatmul.mubr.f32.gmra.mrb[0].mxu0 %v405
    %v479 = vpop.f32.mrb[0].mxu0
    %v480 = vadd.f32 %v393, %v479
    %v481 = vpop.f32.mrb[0].mxu0
    %v482 = vadd.f32 %v397, %v481
    %483 = vdwg.mxu0
    %485 = vrot.lane.b32.xlu0 %v474, 64
    %v486 = vpop.permute.xlu0 %485
    %vm487 = vcmask 130048
    %v488 = vsel %vm487, %v474, 0
    %v490 = vsel %vm487, %v486, 0
    %492 = vmatprep.subr.mxu0 0.0
    %493 = vmatpush1.xpose.msra.mxu0 %v490
    %494 = vmatprep.subr.mxu0 0.0
    %495 = vmatpush1.xpose.msra.mxu0 0.0
    %496 = vmatprep.subr.mxu0 0.0
    %497 = vmatpush1.xpose.msra.mxu0 0.0
    %498 = vmatprep.subr.mxu0 0.0
    %499 = vmatpush1.xpose.msra.mxu0 0.0
    %500 = vmatprep.subr.mxu0 0.0
    %501 = vmatpush1.xpose.msra.mxu0 0.0
    %502 = vmatprep.subr.mxu0 0.0
    %503 = vmatpush1.xpose.msra.mxu0 0.0
    %504 = vmatprep.subr.mxu0 0.0
    %505 = vmatpush1.xpose.msra.mxu0 0.0
    %506 = vmatprep.subr.mxu0 0.0
    %507 = vmatpush1.xpose.msra.mxu0 0.0
    %508 = vmatprep.subr.mxu0 0.0
    %509 = vmatpush1.xpose.msra.mxu0 0.0
    %510 = vmatprep.subr.mxu0 0.0
    %511 = vmatpush1.xpose.msra.mxu0 0.0
    %512 = vmatprep.subr.mxu0 0.0
    %513 = vmatpush1.xpose.msra.mxu0 0.0
    %514 = vmatprep.subr.mxu0 0.0
    %515 = vmatpush1.xpose.msra.mxu0 0.0
    %516 = vmatprep.subr.mxu0 0.0
    %517 = vmatpush1.xpose.msra.mxu0 0.0
    %518 = vmatprep.subr.mxu0 0.0
    %519 = vmatpush1.xpose.msra.mxu0 0.0
    %520 = vmatprep.subr.mxu0 0.0
    %521 = vmatpush1.xpose.msra.mxu0 0.0
    %522 = vmatprep.subr.mxu0 0.0
    %523 = vmatpush1.xpose.msra.mxu0 0.0
    %524 = vmatprep.subr.mxu0 0.0
    %525 = vmatpush1.xpose.msra.mxu0 0.0
    %526 = vmatprep.subr.mxu0 0.0
    %527 = vmatpush1.xpose.msra.mxu0 0.0
    %528 = vmatprep.subr.mxu0 0.0
    %529 = vmatpush1.xpose.msra.mxu0 0.0
    %530 = vmatprep.subr.mxu0 0.0
    %531 = vmatpush1.xpose.msra.mxu0 0.0
    %532 = vmatprep.subr.mxu0 0.0
    %533 = vmatpush1.xpose.msra.mxu0 0.0
    %534 = vmatprep.subr.mxu0 0.0
    %535 = vmatpush1.xpose.msra.mxu0 0.0
    %536 = vmatprep.subr.mxu0 0.0
    %537 = vmatpush1.xpose.msra.mxu0 0.0
    %538 = vmatprep.subr.mxu0 0.0
    %539 = vmatpush1.xpose.msra.mxu0 0.0
    %540 = vmatprep.subr.mxu0 0.0
    %541 = vmatpush1.xpose.msra.mxu0 0.0
    %542 = vmatprep.subr.mxu0 0.0
    %543 = vmatpush1.xpose.msra.mxu0 0.0
    %544 = vmatprep.subr.mxu0 0.0
    %545 = vmatpush1.xpose.msra.mxu0 0.0
    %546 = vmatprep.subr.mxu0 0.0
    %547 = vmatpush1.xpose.msra.mxu0 0.0
    %548 = vmatprep.subr.mxu0 0.0
    %549 = vmatpush1.xpose.msra.mxu0 0.0
    %550 = vmatprep.subr.mxu0 0.0
    %551 = vmatpush1.xpose.msra.mxu0 0.0
    %552 = vmatprep.subr.mxu0 0.0
    %553 = vmatpush1.xpose.msra.mxu0 0.0
    %554 = vmatprep.subr.mxu0 0.0
    %555 = vmatpush1.xpose.msra.mxu0 0.0
    %556 = vmatprep.mubr.f32.mxu0 0.0
    %557 = vmatmul.mubr.f32.gmra.mrb[0].mxu0 %v488
    %v558 = vpop.f32.mrb[0].mxu0
    %v559 = vadd.f32 0.0, %v558
    %v560 = vpop.f32.mrb[0].mxu0
    %561 = vdwg.mxu0
    %563 = vrot.lane.b32.xlu0 %v480, 64
    %v564 = vpop.permute.xlu0 %563
    %v565 = vsel %vm487, %v480, 0
    %v567 = vsel %vm487, %v564, 0
    %569 = vmatprep.subr.mxu0 0.0
    %570 = vmatpush1.xpose.msra.mxu0 %v567
    %571 = vmatprep.subr.mxu0 0.0
    %572 = vmatpush1.xpose.msra.mxu0 0.0
    %573 = vmatprep.subr.mxu0 0.0
    %574 = vmatpush1.xpose.msra.mxu0 0.0
    %575 = vmatprep.subr.mxu0 0.0
    %576 = vmatpush1.xpose.msra.mxu0 0.0
    %577 = vmatprep.subr.mxu0 0.0
    %578 = vmatpush1.xpose.msra.mxu0 0.0
    %579 = vmatprep.subr.mxu0 0.0
    %580 = vmatpush1.xpose.msra.mxu0 0.0
    %581 = vmatprep.subr.mxu0 0.0
    %582 = vmatpush1.xpose.msra.mxu0 0.0
    %583 = vmatprep.subr.mxu0 0.0
    %584 = vmatpush1.xpose.msra.mxu0 0.0
    %585 = vmatprep.subr.mxu0 0.0
    %586 = vmatpush1.xpose.msra.mxu0 0.0
    %587 = vmatprep.subr.mxu0 0.0
    %588 = vmatpush1.xpose.msra.mxu0 0.0
    %589 = vmatprep.subr.mxu0 0.0
    %590 = vmatpush1.xpose.msra.mxu0 0.0
    %591 = vmatprep.subr.mxu0 0.0
    %592 = vmatpush1.xpose.msra.mxu0 0.0
    %593 = vmatprep.subr.mxu0 0.0
    %594 = vmatpush1.xpose.msra.mxu0 0.0
    %595 = vmatprep.subr.mxu0 0.0
    %596 = vmatpush1.xpose.msra.mxu0 0.0
    %597 = vmatprep.subr.mxu0 0.0
    %598 = vmatpush1.xpose.msra.mxu0 0.0
    %599 = vmatprep.subr.mxu0 0.0
    %600 = vmatpush1.xpose.msra.mxu0 0.0
    %601 = vmatprep.subr.mxu0 0.0
    %602 = vmatpush1.xpose.msra.mxu0 0.0
    %603 = vmatprep.subr.mxu0 0.0
    %604 = vmatpush1.xpose.msra.mxu0 0.0
    %605 = vmatprep.subr.mxu0 0.0
    %606 = vmatpush1.xpose.msra.mxu0 0.0
    %607 = vmatprep.subr.mxu0 0.0
    %608 = vmatpush1.xpose.msra.mxu0 0.0
    %609 = vmatprep.subr.mxu0 0.0
    %610 = vmatpush1.xpose.msra.mxu0 0.0
    %611 = vmatprep.subr.mxu0 0.0
    %612 = vmatpush1.xpose.msra.mxu0 0.0
    %613 = vmatprep.subr.mxu0 0.0
    %614 = vmatpush1.xpose.msra.mxu0 0.0
    %615 = vmatprep.subr.mxu0 0.0
    %616 = vmatpush1.xpose.msra.mxu0 0.0
    %617 = vmatprep.subr.mxu0 0.0
    %618 = vmatpush1.xpose.msra.mxu0 0.0
    %619 = vmatprep.subr.mxu0 0.0
    %620 = vmatpush1.xpose.msra.mxu0 0.0
    %621 = vmatprep.subr.mxu0 0.0
    %622 = vmatpush1.xpose.msra.mxu0 0.0
    %623 = vmatprep.subr.mxu0 0.0
    %624 = vmatpush1.xpose.msra.mxu0 0.0
    %625 = vmatprep.subr.mxu0 0.0
    %626 = vmatpush1.xpose.msra.mxu0 0.0
    %627 = vmatprep.subr.mxu0 0.0
    %628 = vmatpush1.xpose.msra.mxu0 0.0
    %629 = vmatprep.subr.mxu0 0.0
    %630 = vmatpush1.xpose.msra.mxu0 0.0
    %631 = vmatprep.subr.mxu0 0.0
    %632 = vmatpush1.xpose.msra.mxu0 0.0
    %633 = vmatprep.mubr.f32.mxu0 0.0
    %634 = vmatmul.mubr.f32.gmra.mrb[0].mxu0 %v565
    %v635 = vpop.f32.mrb[0].mxu0
    %v636 = vadd.f32 0.0, %v635
    %v637 = vpop.f32.mrb[0].mxu0
    %638 = vdwg.mxu0
    %vm639 = vcmask 64512
    %v640 = vsel %vm639, %v559, -inf
    %641 = vmax.xlane.f32.xlu0 %v640
    %v642 = vpop.xlane.xlu0 %641
    %v643 = vsel %vm639, %v636, -inf
    %644 = vmax.xlane.f32.xlu0 %v643
    %v645 = vpop.xlane.xlu0 %644
    %v646 = vsub.f32 %v559, %v642
    %v647 = vsub.f32 %v636, %v645
    %v648 = vmul.f32 %v646, 1.442695
    %v649 = vpow.pop %v648
    %v650 = vmul.f32 %v647, 1.442695
    %v651 = vpow.pop %v650
    %v652 = vsel %vm639, %v649, 0.0
    %653 = vadd.xlane.f32.xlu0 %v652
    %v654 = vpop.xlane.xlu0 %653
    %v655 = vsel %vm639, %v651, 0.0
    %656 = vadd.xlane.f32.xlu0 %v655
    %v657 = vpop.xlane.xlu0 %656
    %v658 = vrcp.pop %v654
    %v659 = vrcp.pop %v657
    %v660 = vmul.f32 %v649, %v658
    %v661 = vmul.f32 %v651, %v659
    %v663 = vsel %vm639, %v660, 0
    %665 = vmatprep.subr.mxu0 0.0
    %666 = vmatpush1.msra.mxu0 %v476
    %667 = vmatprep.subr.mxu0 0.0
    %668 = vmatpush1.msra.mxu0 0.0
    %669 = vmatprep.subr.mxu0 0.0
    %670 = vmatpush1.msra.mxu0 0.0
    %671 = vmatprep.subr.mxu0 0.0
    %672 = vmatpush1.msra.mxu0 0.0
    %673 = vmatprep.subr.mxu0 0.0
    %674 = vmatpush1.msra.mxu0 0.0
    %675 = vmatprep.subr.mxu0 0.0
    %676 = vmatpush1.msra.mxu0 0.0
    %677 = vmatprep.subr.mxu0 0.0
    %678 = vmatpush1.msra.mxu0 0.0
    %679 = vmatprep.subr.mxu0 0.0
    %680 = vmatpush1.msra.mxu0 0.0
    %681 = vmatprep.subr.mxu0 0.0
    %682 = vmatpush1.msra.mxu0 0.0
    %683 = vmatprep.subr.mxu0 0.0
    %684 = vmatpush1.msra.mxu0 0.0
    %685 = vmatprep.subr.mxu0 0.0
    %686 = vmatpush1.msra.mxu0 0.0
    %687 = vmatprep.subr.mxu0 0.0
    %688 = vmatpush1.msra.mxu0 0.0
    %689 = vmatprep.subr.mxu0 0.0
    %690 = vmatpush1.msra.mxu0 0.0
    %691 = vmatprep.subr.mxu0 0.0
    %692 = vmatpush1.msra.mxu0 0.0
    %693 = vmatprep.subr.mxu0 0.0
    %694 = vmatpush1.msra.mxu0 0.0
    %695 = vmatprep.subr.mxu0 0.0
    %696 = vmatpush1.msra.mxu0 0.0
    %697 = vmatprep.subr.mxu0 0.0
    %698 = vmatpush1.msra.mxu0 0.0
    %699 = vmatprep.subr.mxu0 0.0
    %700 = vmatpush1.msra.mxu0 0.0
    %701 = vmatprep.subr.mxu0 0.0
    %702 = vmatpush1.msra.mxu0 0.0
    %703 = vmatprep.subr.mxu0 0.0
    %704 = vmatpush1.msra.mxu0 0.0
    %705 = vmatprep.subr.mxu0 0.0
    %706 = vmatpush1.msra.mxu0 0.0
    %707 = vmatprep.subr.mxu0 0.0
    %708 = vmatpush1.msra.mxu0 0.0
    %709 = vmatprep.subr.mxu0 0.0
    %710 = vmatpush1.msra.mxu0 0.0
    %711 = vmatprep.subr.mxu0 0.0
    %712 = vmatpush1.msra.mxu0 0.0
    %713 = vmatprep.subr.mxu0 0.0
    %714 = vmatpush1.msra.mxu0 0.0
    %715 = vmatprep.subr.mxu0 0.0
    %716 = vmatpush1.msra.mxu0 0.0
    %717 = vmatprep.subr.mxu0 0.0
    %718 = vmatpush1.msra.mxu0 0.0
    %719 = vmatprep.subr.mxu0 0.0
    %720 = vmatpush1.msra.mxu0 0.0
    %721 = vmatprep.subr.mxu0 0.0
    %722 = vmatpush1.msra.mxu0 0.0
    %723 = vmatprep.subr.mxu0 0.0
    %724 = vmatpush1.msra.mxu0 0.0
    %725 = vmatprep.subr.mxu0 0.0
    %726 = vmatpush1.msra.mxu0 0.0
    %727 = vmatprep.subr.mxu0 0.0
    %728 = vmatpush1.msra.mxu0 0.0
    %729 = vmatprep.mubr.f32.mxu0 0.0
    %730 = vmatmul.mubr.f32.gmra.mrb[0].mxu0 %v663
    %v731 = vpop.f32.mrb[0].mxu0
    %v732 = vadd.f32 0.0, %v731
    %v733 = vpop.f32.mrb[0].mxu0
    %734 = vdwg.mxu0
    %v736 = vsel %vm639, %v661, 0
    %738 = vmatprep.subr.mxu0 0.0
    %739 = vmatpush1.msra.mxu0 %v482
    %740 = vmatprep.subr.mxu0 0.0
    %741 = vmatpush1.msra.mxu0 0.0
    %742 = vmatprep.subr.mxu0 0.0
    %743 = vmatpush1.msra.mxu0 0.0
    %744 = vmatprep.subr.mxu0 0.0
    %745 = vmatpush1.msra.mxu0 0.0
    %746 = vmatprep.subr.mxu0 0.0
    %747 = vmatpush1.msra.mxu0 0.0
    %748 = vmatprep.subr.mxu0 0.0
    %749 = vmatpush1.msra.mxu0 0.0
    %750 = vmatprep.subr.mxu0 0.0
    %751 = vmatpush1.msra.mxu0 0.0
    %752 = vmatprep.subr.mxu0 0.0
    %753 = vmatpush1.msra.mxu0 0.0
    %754 = vmatprep.subr.mxu0 0.0
    %755 = vmatpush1.msra.mxu0 0.0
    %756 = vmatprep.subr.mxu0 0.0
    %757 = vmatpush1.msra.mxu0 0.0
    %758 = vmatprep.subr.mxu0 0.0
    %759 = vmatpush1.msra.mxu0 0.0
    %760 = vmatprep.subr.mxu0 0.0
    %761 = vmatpush1.msra.mxu0 0.0
    %762 = vmatprep.subr.mxu0 0.0
    %763 = vmatpush1.msra.mxu0 0.0
    %764 = vmatprep.subr.mxu0 0.0
    %765 = vmatpush1.msra.mxu0 0.0
    %766 = vmatprep.subr.mxu0 0.0
    %767 = vmatpush1.msra.mxu0 0.0
    %768 = vmatprep.subr.mxu0 0.0
    %769 = vmatpush1.msra.mxu0 0.0
    %770 = vmatprep.subr.mxu0 0.0
    %771 = vmatpush1.msra.mxu0 0.0
    %772 = vmatprep.subr.mxu0 0.0
    %773 = vmatpush1.msra.mxu0 0.0
    %774 = vmatprep.subr.mxu0 0.0
    %775 = vmatpush1.msra.mxu0 0.0
    %776 = vmatprep.subr.mxu0 0.0
    %777 = vmatpush1.msra.mxu0 0.0
    %778 = vmatprep.subr.mxu0 0.0
    %779 = vmatpush1.msra.mxu0 0.0
    %780 = vmatprep.subr.mxu0 0.0
    %781 = vmatpush1.msra.mxu0 0.0
    %782 = vmatprep.subr.mxu0 0.0
    %783 = vmatpush1.msra.mxu0 0.0
    %784 = vmatprep.subr.mxu0 0.0
    %785 = vmatpush1.msra.mxu0 0.0
    %786 = vmatprep.subr.mxu0 0.0
    %787 = vmatpush1.msra.mxu0 0.0
    %788 = vmatprep.subr.mxu0 0.0
    %789 = vmatpush1.msra.mxu0 0.0
    %790 = vmatprep.subr.mxu0 0.0
    %791 = vmatpush1.msra.mxu0 0.0
    %792 = vmatprep.subr.mxu0 0.0
    %793 = vmatpush1.msra.mxu0 0.0
    %794 = vmatprep.subr.mxu0 0.0
    %795 = vmatpush1.msra.mxu0 0.0
    %796 = vmatprep.subr.mxu0 0.0
    %797 = vmatpush1.msra.mxu0 0.0
    %798 = vmatprep.subr.mxu0 0.0
    %799 = vmatpush1.msra.mxu0 0.0
    %800 = vmatprep.subr.mxu0 0.0
    %801 = vmatpush1.msra.mxu0 0.0
    %802 = vmatprep.mubr.f32.mxu0 0.0
    %803 = vmatmul.mubr.f32.gmra.mrb[0].mxu0 %v736
    %v804 = vpop.f32.mrb[0].mxu0
    %v805 = vadd.f32 0.0, %v804
    %v806 = vpop.f32.mrb[0].mxu0
    %807 = vdwg.mxu0
    %808 = vrot.lane.b32.xlu0 %v474, 112
    %v809 = vpop.permute.xlu0 %808
    %810 = vrot.lane.b32.xlu0 %v474, 48
    %v811 = vpop.permute.xlu0 %810
    %v812 = vsel %vm487, %v809, 0
    %v814 = vsel %vm487, %v811, 0
    %816 = vmatprep.subr.mxu0 0.0
    %817 = vmatpush1.xpose.msra.mxu0 %v814
    %818 = vmatprep.subr.mxu0 0.0
    %819 = vmatpush1.xpose.msra.mxu0 0.0
    %820 = vmatprep.subr.mxu0 0.0
    %821 = vmatpush1.xpose.msra.mxu0 0.0
    %822 = vmatprep.subr.mxu0 0.0
    %823 = vmatpush1.xpose.msra.mxu0 0.0
    %824 = vmatprep.subr.mxu0 0.0
    %825 = vmatpush1.xpose.msra.mxu0 0.0
    %826 = vmatprep.subr.mxu0 0.0
    %827 = vmatpush1.xpose.msra.mxu0 0.0
    %828 = vmatprep.subr.mxu0 0.0
    %829 = vmatpush1.xpose.msra.mxu0 0.0
    %830 = vmatprep.subr.mxu0 0.0
    %831 = vmatpush1.xpose.msra.mxu0 0.0
    %832 = vmatprep.subr.mxu0 0.0
    %833 = vmatpush1.xpose.msra.mxu0 0.0
    %834 = vmatprep.subr.mxu0 0.0
    %835 = vmatpush1.xpose.msra.mxu0 0.0
    %836 = vmatprep.subr.mxu0 0.0
    %837 = vmatpush1.xpose.msra.mxu0 0.0
    %838 = vmatprep.subr.mxu0 0.0
    %839 = vmatpush1.xpose.msra.mxu0 0.0
    %840 = vmatprep.subr.mxu0 0.0
    %841 = vmatpush1.xpose.msra.mxu0 0.0
    %842 = vmatprep.subr.mxu0 0.0
    %843 = vmatpush1.xpose.msra.mxu0 0.0
    %844 = vmatprep.subr.mxu0 0.0
    %845 = vmatpush1.xpose.msra.mxu0 0.0
    %846 = vmatprep.subr.mxu0 0.0
    %847 = vmatpush1.xpose.msra.mxu0 0.0
    %848 = vmatprep.subr.mxu0 0.0
    %849 = vmatpush1.xpose.msra.mxu0 0.0
    %850 = vmatprep.subr.mxu0 0.0
    %851 = vmatpush1.xpose.msra.mxu0 0.0
    %852 = vmatprep.subr.mxu0 0.0
    %853 = vmatpush1.xpose.msra.mxu0 0.0
    %854 = vmatprep.subr.mxu0 0.0
    %855 = vmatpush1.xpose.msra.mxu0 0.0
    %856 = vmatprep.subr.mxu0 0.0
    %857 = vmatpush1.xpose.msra.mxu0 0.0
    %858 = vmatprep.subr.mxu0 0.0
    %859 = vmatpush1.xpose.msra.mxu0 0.0
    %860 = vmatprep.subr.mxu0 0.0
    %861 = vmatpush1.xpose.msra.mxu0 0.0
    %862 = vmatprep.subr.mxu0 0.0
    %863 = vmatpush1.xpose.msra.mxu0 0.0
    %864 = vmatprep.subr.mxu0 0.0
    %865 = vmatpush1.xpose.msra.mxu0 0.0
    %866 = vmatprep.subr.mxu0 0.0
    %867 = vmatpush1.xpose.msra.mxu0 0.0
    %868 = vmatprep.subr.mxu0 0.0
    %869 = vmatpush1.xpose.msra.mxu0 0.0
    %870 = vmatprep.subr.mxu0 0.0
    %871 = vmatpush1.xpose.msra.mxu0 0.0
    %872 = vmatprep.subr.mxu0 0.0
    %873 = vmatpush1.xpose.msra.mxu0 0.0
    %874 = vmatprep.subr.mxu0 0.0
    %875 = vmatpush1.xpose.msra.mxu0 0.0
    %876 = vmatprep.subr.mxu0 0.0
    %877 = vmatpush1.xpose.msra.mxu0 0.0
    %878 = vmatprep.subr.mxu0 0.0
    %879 = vmatpush1.xpose.msra.mxu0 0.0
    %880 = vmatprep.mubr.f32.mxu0 0.0
    %881 = vmatmul.mubr.f32.gmra.mrb[0].mxu0 %v812
    %v882 = vpop.f32.mrb[0].mxu0
    %v883 = vadd.f32 0.0, %v882
    %v884 = vpop.f32.mrb[0].mxu0
    %885 = vdwg.mxu0
    %886 = vrot.lane.b32.xlu0 %v480, 112
    %v887 = vpop.permute.xlu0 %886
    %888 = vrot.lane.b32.xlu0 %v480, 48
    %v889 = vpop.permute.xlu0 %888
    %v890 = vsel %vm487, %v887, 0
    %v892 = vsel %vm487, %v889, 0
    %894 = vmatprep.subr.mxu0 0.0
    %895 = vmatpush1.xpose.msra.mxu0 %v892
    %896 = vmatprep.subr.mxu0 0.0
    %897 = vmatpush1.xpose.msra.mxu0 0.0
    %898 = vmatprep.subr.mxu0 0.0
    %899 = vmatpush1.xpose.msra.mxu0 0.0
    %900 = vmatprep.subr.mxu0 0.0
    %901 = vmatpush1.xpose.msra.mxu0 0.0
    %902 = vmatprep.subr.mxu0 0.0
    %903 = vmatpush1.xpose.msra.mxu0 0.0
    %904 = vmatprep.subr.mxu0 0.0
    %905 = vmatpush1.xpose.msra.mxu0 0.0
    %906 = vmatprep.subr.mxu0 0.0
    %907 = vmatpush1.xpose.msra.mxu0 0.0
    %908 = vmatprep.subr.mxu0 0.0
    %909 = vmatpush1.xpose.msra.mxu0 0.0
    %910 = vmatprep.subr.mxu0 0.0
    %911 = vmatpush1.xpose.msra.mxu0 0.0
    %912 = vmatprep.subr.mxu0 0.0
    %913 = vmatpush1.xpose.msra.mxu0 0.0
    %914 = vmatprep.subr.mxu0 0.0
    %915 = vmatpush1.xpose.msra.mxu0 0.0
    %916 = vmatprep.subr.mxu0 0.0
    %917 = vmatpush1.xpose.msra.mxu0 0.0
    %918 = vmatprep.subr.mxu0 0.0
    %919 = vmatpush1.xpose.msra.mxu0 0.0
    %920 = vmatprep.subr.mxu0 0.0
    %921 = vmatpush1.xpose.msra.mxu0 0.0
    %922 = vmatprep.subr.mxu0 0.0
    %923 = vmatpush1.xpose.msra.mxu0 0.0
    %924 = vmatprep.subr.mxu0 0.0
    %925 = vmatpush1.xpose.msra.mxu0 0.0
    %926 = vmatprep.subr.mxu0 0.0
    %927 = vmatpush1.xpose.msra.mxu0 0.0
    %928 = vmatprep.subr.mxu0 0.0
    %929 = vmatpush1.xpose.msra.mxu0 0.0
    %930 = vmatprep.subr.mxu0 0.0
    %931 = vmatpush1.xpose.msra.mxu0 0.0
    %932 = vmatprep.subr.mxu0 0.0
    %933 = vmatpush1.xpose.msra.mxu0 0.0
    %934 = vmatprep.subr.mxu0 0.0
    %935 = vmatpush1.xpose.msra.mxu0 0.0
    %936 = vmatprep.subr.mxu0 0.0
    %937 = vmatpush1.xpose.msra.mxu0 0.0
    %938 = vmatprep.subr.mxu0 0.0
    %939 = vmatpush1.xpose.msra.mxu0 0.0
    %940 = vmatprep.subr.mxu0 0.0
    %941 = vmatpush1.xpose.msra.mxu0 0.0
    %942 = vmatprep.subr.mxu0 0.0
    %943 = vmatpush1.xpose.msra.mxu0 0.0
    %944 = vmatprep.subr.mxu0 0.0
    %945 = vmatpush1.xpose.msra.mxu0 0.0
    %946 = vmatprep.subr.mxu0 0.0
    %947 = vmatpush1.xpose.msra.mxu0 0.0
    %948 = vmatprep.subr.mxu0 0.0
    %949 = vmatpush1.xpose.msra.mxu0 0.0
    %950 = vmatprep.subr.mxu0 0.0
    %951 = vmatpush1.xpose.msra.mxu0 0.0
    %952 = vmatprep.subr.mxu0 0.0
    %953 = vmatpush1.xpose.msra.mxu0 0.0
    %954 = vmatprep.subr.mxu0 0.0
    %955 = vmatpush1.xpose.msra.mxu0 0.0
    %956 = vmatprep.subr.mxu0 0.0
    %957 = vmatpush1.xpose.msra.mxu0 0.0
    %958 = vmatprep.mubr.f32.mxu0 0.0
    %959 = vmatmul.mubr.f32.gmra.mrb[0].mxu0 %v890
    %v960 = vpop.f32.mrb[0].mxu0
    %v961 = vadd.f32 0.0, %v960
    %v962 = vpop.f32.mrb[0].mxu0
    %963 = vdwg.mxu0
    %v964 = vsel %vm639, %v883, -inf
    %965 = vmax.xlane.f32.xlu0 %v964
    %v966 = vpop.xlane.xlu0 %965
    %v967 = vsel %vm639, %v961, -inf
    %968 = vmax.xlane.f32.xlu0 %v967
    %v969 = vpop.xlane.xlu0 %968
    %v970 = vsub.f32 %v883, %v966
    %v971 = vsub.f32 %v961, %v969
    %v972 = vmul.f32 %v970, 1.442695
    %v973 = vpow.pop %v972
    %v974 = vmul.f32 %v971, 1.442695
    %v975 = vpow.pop %v974
    %v976 = vsel %vm639, %v973, 0.0
    %977 = vadd.xlane.f32.xlu0 %v976
    %v978 = vpop.xlane.xlu0 %977
    %v979 = vsel %vm639, %v975, 0.0
    %980 = vadd.xlane.f32.xlu0 %v979
    %v981 = vpop.xlane.xlu0 %980
    %v982 = vrcp.pop %v978
    %v983 = vrcp.pop %v981
    %v984 = vmul.f32 %v973, %v982
    %v985 = vmul.f32 %v975, %v983
    %987 = vrot.lane.b32.xlu0 %v476, 112
    %v988 = vpop.permute.xlu0 %987
    %v991 = vsel %vm639, %v984, 0
    %993 = vmatprep.subr.mxu0 0.0
    %994 = vmatpush1.msra.mxu0 %v988
    %995 = vmatprep.subr.mxu0 0.0
    %996 = vmatpush1.msra.mxu0 0.0
    %997 = vmatprep.subr.mxu0 0.0
    %998 = vmatpush1.msra.mxu0 0.0
    %999 = vmatprep.subr.mxu0 0.0
    %1000 = vmatpush1.msra.mxu0 0.0
    %1001 = vmatprep.subr.mxu0 0.0
    %1002 = vmatpush1.msra.mxu0 0.0
    %1003 = vmatprep.subr.mxu0 0.0
    %1004 = vmatpush1.msra.mxu0 0.0
    %1005 = vmatprep.subr.mxu0 0.0
    %1006 = vmatpush1.msra.mxu0 0.0
    %1007 = vmatprep.subr.mxu0 0.0
    %1008 = vmatpush1.msra.mxu0 0.0
    %1009 = vmatprep.subr.mxu0 0.0
    %1010 = vmatpush1.msra.mxu0 0.0
    %1011 = vmatprep.subr.mxu0 0.0
    %1012 = vmatpush1.msra.mxu0 0.0
    %1013 = vmatprep.subr.mxu0 0.0
    %1014 = vmatpush1.msra.mxu0 0.0
    %1015 = vmatprep.subr.mxu0 0.0
    %1016 = vmatpush1.msra.mxu0 0.0
    %1017 = vmatprep.subr.mxu0 0.0
    %1018 = vmatpush1.msra.mxu0 0.0
    %1019 = vmatprep.subr.mxu0 0.0
    %1020 = vmatpush1.msra.mxu0 0.0
    %1021 = vmatprep.subr.mxu0 0.0
    %1022 = vmatpush1.msra.mxu0 0.0
    %1023 = vmatprep.subr.mxu0 0.0
    %1024 = vmatpush1.msra.mxu0 0.0
    %1025 = vmatprep.subr.mxu0 0.0
    %1026 = vmatpush1.msra.mxu0 0.0
    %1027 = vmatprep.subr.mxu0 0.0
    %1028 = vmatpush1.msra.mxu0 0.0
    %1029 = vmatprep.subr.mxu0 0.0
    %1030 = vmatpush1.msra.mxu0 0.0
    %1031 = vmatprep.subr.mxu0 0.0
    %1032 = vmatpush1.msra.mxu0 0.0
    %1033 = vmatprep.subr.mxu0 0.0
    %1034 = vmatpush1.msra.mxu0 0.0
    %1035 = vmatprep.subr.mxu0 0.0
    %1036 = vmatpush1.msra.mxu0 0.0
    %1037 = vmatprep.subr.mxu0 0.0
    %1038 = vmatpush1.msra.mxu0 0.0
    %1039 = vmatprep.subr.mxu0 0.0
    %1040 = vmatpush1.msra.mxu0 0.0
    %1041 = vmatprep.subr.mxu0 0.0
    %1042 = vmatpush1.msra.mxu0 0.0
    %1043 = vmatprep.subr.mxu0 0.0
    %1044 = vmatpush1.msra.mxu0 0.0
    %1045 = vmatprep.subr.mxu0 0.0
    %1046 = vmatpush1.msra.mxu0 0.0
    %1047 = vmatprep.subr.mxu0 0.0
    %1048 = vmatpush1.msra.mxu0 0.0
    %1049 = vmatprep.subr.mxu0 0.0
    %1050 = vmatpush1.msra.mxu0 0.0
    %1051 = vmatprep.subr.mxu0 0.0
    %1052 = vmatpush1.msra.mxu0 0.0
    %1053 = vmatprep.subr.mxu0 0.0
    %1054 = vmatpush1.msra.mxu0 0.0
    %1055 = vmatprep.subr.mxu0 0.0
    %1056 = vmatpush1.msra.mxu0 0.0
    %1057 = vmatprep.mubr.f32.mxu0 0.0
    %1058 = vmatmul.mubr.f32.gmra.mrb[0].mxu0 %v991
    %v1059 = vpop.f32.mrb[0].mxu0
    %v1060 = vadd.f32 0.0, %v1059
    %v1061 = vpop.f32.mrb[0].mxu0
    %1062 = vdwg.mxu0
    %1064 = vrot.lane.b32.xlu0 %v482, 112
    %v1065 = vpop.permute.xlu0 %1064
    %v1068 = vsel %vm639, %v985, 0
    %1070 = vmatprep.subr.mxu0 0.0
    %1071 = vmatpush1.msra.mxu0 %v1065
    %1072 = vmatprep.subr.mxu0 0.0
    %1073 = vmatpush1.msra.mxu0 0.0
    %1074 = vmatprep.subr.mxu0 0.0
    %1075 = vmatpush1.msra.mxu0 0.0
    %1076 = vmatprep.subr.mxu0 0.0
    %1077 = vmatpush1.msra.mxu0 0.0
    %1078 = vmatprep.subr.mxu0 0.0
    %1079 = vmatpush1.msra.mxu0 0.0
    %1080 = vmatprep.subr.mxu0 0.0
    %1081 = vmatpush1.msra.mxu0 0.0
    %1082 = vmatprep.subr.mxu0 0.0
    %1083 = vmatpush1.msra.mxu0 0.0
    %1084 = vmatprep.subr.mxu0 0.0
    %1085 = vmatpush1.msra.mxu0 0.0
    %1086 = vmatprep.subr.mxu0 0.0
    %1087 = vmatpush1.msra.mxu0 0.0
    %1088 = vmatprep.subr.mxu0 0.0
    %1089 = vmatpush1.msra.mxu0 0.0
    %1090 = vmatprep.subr.mxu0 0.0
    %1091 = vmatpush1.msra.mxu0 0.0
    %1092 = vmatprep.subr.mxu0 0.0
    %1093 = vmatpush1.msra.mxu0 0.0
    %1094 = vmatprep.subr.mxu0 0.0
    %1095 = vmatpush1.msra.mxu0 0.0
    %1096 = vmatprep.subr.mxu0 0.0
    %1097 = vmatpush1.msra.mxu0 0.0
    %1098 = vmatprep.subr.mxu0 0.0
    %1099 = vmatpush1.msra.mxu0 0.0
    %1100 = vmatprep.subr.mxu0 0.0
    %1101 = vmatpush1.msra.mxu0 0.0
    %1102 = vmatprep.subr.mxu0 0.0
    %1103 = vmatpush1.msra.mxu0 0.0
    %1104 = vmatprep.subr.mxu0 0.0
    %1105 = vmatpush1.msra.mxu0 0.0
    %1106 = vmatprep.subr.mxu0 0.0
    %1107 = vmatpush1.msra.mxu0 0.0
    %1108 = vmatprep.subr.mxu0 0.0
    %1109 = vmatpush1.msra.mxu0 0.0
    %1110 = vmatprep.subr.mxu0 0.0
    %1111 = vmatpush1.msra.mxu0 0.0
    %1112 = vmatprep.subr.mxu0 0.0
    %1113 = vmatpush1.msra.mxu0 0.0
    %1114 = vmatprep.subr.mxu0 0.0
    %1115 = vmatpush1.msra.mxu0 0.0
    %1116 = vmatprep.subr.mxu0 0.0
    %1117 = vmatpush1.msra.mxu0 0.0
    %1118 = vmatprep.subr.mxu0 0.0
    %1119 = vmatpush1.msra.mxu0 0.0
    %1120 = vmatprep.subr.mxu0 0.0
    %1121 = vmatpush1.msra.mxu0 0.0
    %1122 = vmatprep.subr.mxu0 0.0
    %1123 = vmatpush1.msra.mxu0 0.0
    %1124 = vmatprep.subr.mxu0 0.0
    %1125 = vmatpush1.msra.mxu0 0.0
    %1126 = vmatprep.subr.mxu0 0.0
    %1127 = vmatpush1.msra.mxu0 0.0
    %1128 = vmatprep.subr.mxu0 0.0
    %1129 = vmatpush1.msra.mxu0 0.0
    %1130 = vmatprep.subr.mxu0 0.0
    %1131 = vmatpush1.msra.mxu0 0.0
    %1132 = vmatprep.subr.mxu0 0.0
    %1133 = vmatpush1.msra.mxu0 0.0
    %1134 = vmatprep.mubr.f32.mxu0 0.0
    %1135 = vmatmul.mubr.f32.gmra.mrb[0].mxu0 %v1068
    %v1136 = vpop.f32.mrb[0].mxu0
    %v1137 = vadd.f32 0.0, %v1136
    %v1138 = vpop.f32.mrb[0].mxu0
    %1139 = vdwg.mxu0
    %1140 = vrot.lane.b32.xlu0 %v474, 96
    %v1141 = vpop.permute.xlu0 %1140
    %1142 = vrot.lane.b32.xlu0 %v474, 32
    %v1143 = vpop.permute.xlu0 %1142
    %v1144 = vsel %vm487, %v1141, 0
    %v1146 = vsel %vm487, %v1143, 0
    %1148 = vmatprep.subr.mxu0 0.0
    %1149 = vmatpush1.xpose.msra.mxu0 %v1146
    %1150 = vmatprep.subr.mxu0 0.0
    %1151 = vmatpush1.xpose.msra.mxu0 0.0
    %1152 = vmatprep.subr.mxu0 0.0
    %1153 = vmatpush1.xpose.msra.mxu0 0.0
    %1154 = vmatprep.subr.mxu0 0.0
    %1155 = vmatpush1.xpose.msra.mxu0 0.0
    %1156 = vmatprep.subr.mxu0 0.0
    %1157 = vmatpush1.xpose.msra.mxu0 0.0
    %1158 = vmatprep.subr.mxu0 0.0
    %1159 = vmatpush1.xpose.msra.mxu0 0.0
    %1160 = vmatprep.subr.mxu0 0.0
    %1161 = vmatpush1.xpose.msra.mxu0 0.0
    %1162 = vmatprep.subr.mxu0 0.0
    %1163 = vmatpush1.xpose.msra.mxu0 0.0
    %1164 = vmatprep.subr.mxu0 0.0
    %1165 = vmatpush1.xpose.msra.mxu0 0.0
    %1166 = vmatprep.subr.mxu0 0.0
    %1167 = vmatpush1.xpose.msra.mxu0 0.0
    %1168 = vmatprep.subr.mxu0 0.0
    %1169 = vmatpush1.xpose.msra.mxu0 0.0
    %1170 = vmatprep.subr.mxu0 0.0
    %1171 = vmatpush1.xpose.msra.mxu0 0.0
    %1172 = vmatprep.subr.mxu0 0.0
    %1173 = vmatpush1.xpose.msra.mxu0 0.0
    %1174 = vmatprep.subr.mxu0 0.0
    %1175 = vmatpush1.xpose.msra.mxu0 0.0
    %1176 = vmatprep.subr.mxu0 0.0
    %1177 = vmatpush1.xpose.msra.mxu0 0.0
    %1178 = vmatprep.subr.mxu0 0.0
    %1179 = vmatpush1.xpose.msra.mxu0 0.0
    %1180 = vmatprep.subr.mxu0 0.0
    %1181 = vmatpush1.xpose.msra.mxu0 0.0
    %1182 = vmatprep.subr.mxu0 0.0
    %1183 = vmatpush1.xpose.msra.mxu0 0.0
    %1184 = vmatprep.subr.mxu0 0.0
    %1185 = vmatpush1.xpose.msra.mxu0 0.0
    %1186 = vmatprep.subr.mxu0 0.0
    %1187 = vmatpush1.xpose.msra.mxu0 0.0
    %1188 = vmatprep.subr.mxu0 0.0
    %1189 = vmatpush1.xpose.msra.mxu0 0.0
    %1190 = vmatprep.subr.mxu0 0.0
    %1191 = vmatpush1.xpose.msra.mxu0 0.0
    %1192 = vmatprep.subr.mxu0 0.0
    %1193 = vmatpush1.xpose.msra.mxu0 0.0
    %1194 = vmatprep.subr.mxu0 0.0
    %1195 = vmatpush1.xpose.msra.mxu0 0.0
    %1196 = vmatprep.subr.mxu0 0.0
    %1197 = vmatpush1.xpose.msra.mxu0 0.0
    %1198 = vmatprep.subr.mxu0 0.0
    %1199 = vmatpush1.xpose.msra.mxu0 0.0
    %1200 = vmatprep.subr.mxu0 0.0
    %1201 = vmatpush1.xpose.msra.mxu0 0.0
    %1202 = vmatprep.subr.mxu0 0.0
    %1203 = vmatpush1.xpose.msra.mxu0 0.0
    %1204 = vmatprep.subr.mxu0 0.0
    %1205 = vmatpush1.xpose.msra.mxu0 0.0
    %1206 = vmatprep.subr.mxu0 0.0
    %1207 = vmatpush1.xpose.msra.mxu0 0.0
    %1208 = vmatprep.subr.mxu0 0.0
    %1209 = vmatpush1.xpose.msra.mxu0 0.0
    %1210 = vmatprep.subr.mxu0 0.0
    %1211 = vmatpush1.xpose.msra.mxu0 0.0
    %1212 = vmatprep.mubr.f32.mxu0 0.0
    %1213 = vmatmul.mubr.f32.gmra.mrb[0].mxu0 %v1144
    %v1214 = vpop.f32.mrb[0].mxu0
    %v1215 = vadd.f32 0.0, %v1214
    %v1216 = vpop.f32.mrb[0].mxu0
    %1217 = vdwg.mxu0
    %1218 = vrot.lane.b32.xlu0 %v480, 96
    %v1219 = vpop.permute.xlu0 %1218
    %1220 = vrot.lane.b32.xlu0 %v480, 32
    %v1221 = vpop.permute.xlu0 %1220
    %v1222 = vsel %vm487, %v1219, 0
    %v1224 = vsel %vm487, %v1221, 0
    %1226 = vmatprep.subr.mxu0 0.0
    %1227 = vmatpush1.xpose.msra.mxu0 %v1224
    %1228 = vmatprep.subr.mxu0 0.0
    %1229 = vmatpush1.xpose.msra.mxu0 0.0
    %1230 = vmatprep.subr.mxu0 0.0
    %1231 = vmatpush1.xpose.msra.mxu0 0.0
    %1232 = vmatprep.subr.mxu0 0.0
    %1233 = vmatpush1.xpose.msra.mxu0 0.0
    %1234 = vmatprep.subr.mxu0 0.0
    %1235 = vmatpush1.xpose.msra.mxu0 0.0
    %1236 = vmatprep.subr.mxu0 0.0
    %1237 = vmatpush1.xpose.msra.mxu0 0.0
    %1238 = vmatprep.subr.mxu0 0.0
    %1239 = vmatpush1.xpose.msra.mxu0 0.0
    %1240 = vmatprep.subr.mxu0 0.0
    %1241 = vmatpush1.xpose.msra.mxu0 0.0
    %1242 = vmatprep.subr.mxu0 0.0
    %1243 = vmatpush1.xpose.msra.mxu0 0.0
    %1244 = vmatprep.subr.mxu0 0.0
    %1245 = vmatpush1.xpose.msra.mxu0 0.0
    %1246 = vmatprep.subr.mxu0 0.0
    %1247 = vmatpush1.xpose.msra.mxu0 0.0
    %1248 = vmatprep.subr.mxu0 0.0
    %1249 = vmatpush1.xpose.msra.mxu0 0.0
    %1250 = vmatprep.subr.mxu0 0.0
    %1251 = vmatpush1.xpose.msra.mxu0 0.0
    %1252 = vmatprep.subr.mxu0 0.0
    %1253 = vmatpush1.xpose.msra.mxu0 0.0
    %1254 = vmatprep.subr.mxu0 0.0
    %1255 = vmatpush1.xpose.msra.mxu0 0.0
    %1256 = vmatprep.subr.mxu0 0.0
    %1257 = vmatpush1.xpose.msra.mxu0 0.0
    %1258 = vmatprep.subr.mxu0 0.0
    %1259 = vmatpush1.xpose.msra.mxu0 0.0
    %1260 = vmatprep.subr.mxu0 0.0
    %1261 = vmatpush1.xpose.msra.mxu0 0.0
    %1262 = vmatprep.subr.mxu0 0.0
    %1263 = vmatpush1.xpose.msra.mxu0 0.0
    %1264 = vmatprep.subr.mxu0 0.0
    %1265 = vmatpush1.xpose.msra.mxu0 0.0
    %1266 = vmatprep.subr.mxu0 0.0
    %1267 = vmatpush1.xpose.msra.mxu0 0.0
    %1268 = vmatprep.subr.mxu0 0.0
    %1269 = vmatpush1.xpose.msra.mxu0 0.0
    %1270 = vmatprep.subr.mxu0 0.0
    %1271 = vmatpush1.xpose.msra.mxu0 0.0
    %1272 = vmatprep.subr.mxu0 0.0
    %1273 = vmatpush1.xpose.msra.mxu0 0.0
    %1274 = vmatprep.subr.mxu0 0.0
    %1275 = vmatpush1.xpose.msra.mxu0 0.0
    %1276 = vmatprep.subr.mxu0 0.0
    %1277 = vmatpush1.xpose.msra.mxu0 0.0
    %1278 = vmatprep.subr.mxu0 0.0
    %1279 = vmatpush1.xpose.msra.mxu0 0.0
    %1280 = vmatprep.subr.mxu0 0.0
    %1281 = vmatpush1.xpose.msra.mxu0 0.0
    %1282 = vmatprep.subr.mxu0 0.0
    %1283 = vmatpush1.xpose.msra.mxu0 0.0
    %1284 = vmatprep.subr.mxu0 0.0
    %1285 = vmatpush1.xpose.msra.mxu0 0.0
    %1286 = vmatprep.subr.mxu0 0.0
    %1287 = vmatpush1.xpose.msra.mxu0 0.0
    %1288 = vmatprep.subr.mxu0 0.0
    %1289 = vmatpush1.xpose.msra.mxu0 0.0
    %1290 = vmatprep.mubr.f32.mxu0 0.0
    %1291 = vmatmul.mubr.f32.gmra.mrb[0].mxu0 %v1222
    %v1292 = vpop.f32.mrb[0].mxu0
    %v1293 = vadd.f32 0.0, %v1292
    %v1294 = vpop.f32.mrb[0].mxu0
    %1295 = vdwg.mxu0
    %v1296 = vsel %vm639, %v1215, -inf
    %1297 = vmax.xlane.f32.xlu0 %v1296
    %v1298 = vpop.xlane.xlu0 %1297
    %v1299 = vsel %vm639, %v1293, -inf
    %1300 = vmax.xlane.f32.xlu0 %v1299
    %v1301 = vpop.xlane.xlu0 %1300
    %v1302 = vsub.f32 %v1215, %v1298
    %v1303 = vsub.f32 %v1293, %v1301
    %v1304 = vmul.f32 %v1302, 1.442695
    %v1305 = vpow.pop %v1304
    %v1306 = vmul.f32 %v1303, 1.442695
    %v1307 = vpow.pop %v1306
    %v1308 = vsel %vm639, %v1305, 0.0
    %1309 = vadd.xlane.f32.xlu0 %v1308
    %v1310 = vpop.xlane.xlu0 %1309
    %v1311 = vsel %vm639, %v1307, 0.0
    %1312 = vadd.xlane.f32.xlu0 %v1311
    %v1313 = vpop.xlane.xlu0 %1312
    %v1314 = vrcp.pop %v1310
    %v1315 = vrcp.pop %v1313
    %v1316 = vmul.f32 %v1305, %v1314
    %v1317 = vmul.f32 %v1307, %v1315
    %1318 = vrot.lane.b32.xlu0 %v476, 96
    %v1319 = vpop.permute.xlu0 %1318
    %v1322 = vsel %vm639, %v1316, 0
    %1324 = vmatprep.subr.mxu0 0.0
    %1325 = vmatpush1.msra.mxu0 %v1319
    %1326 = vmatprep.subr.mxu0 0.0
    %1327 = vmatpush1.msra.mxu0 0.0
    %1328 = vmatprep.subr.mxu0 0.0
    %1329 = vmatpush1.msra.mxu0 0.0
    %1330 = vmatprep.subr.mxu0 0.0
    %1331 = vmatpush1.msra.mxu0 0.0
    %1332 = vmatprep.subr.mxu0 0.0
    %1333 = vmatpush1.msra.mxu0 0.0
    %1334 = vmatprep.subr.mxu0 0.0
    %1335 = vmatpush1.msra.mxu0 0.0
    %1336 = vmatprep.subr.mxu0 0.0
    %1337 = vmatpush1.msra.mxu0 0.0
    %1338 = vmatprep.subr.mxu0 0.0
    %1339 = vmatpush1.msra.mxu0 0.0
    %1340 = vmatprep.subr.mxu0 0.0
    %1341 = vmatpush1.msra.mxu0 0.0
    %1342 = vmatprep.subr.mxu0 0.0
    %1343 = vmatpush1.msra.mxu0 0.0
    %1344 = vmatprep.subr.mxu0 0.0
    %1345 = vmatpush1.msra.mxu0 0.0
    %1346 = vmatprep.subr.mxu0 0.0
    %1347 = vmatpush1.msra.mxu0 0.0
    %1348 = vmatprep.subr.mxu0 0.0
    %1349 = vmatpush1.msra.mxu0 0.0
    %1350 = vmatprep.subr.mxu0 0.0
    %1351 = vmatpush1.msra.mxu0 0.0
    %1352 = vmatprep.subr.mxu0 0.0
    %1353 = vmatpush1.msra.mxu0 0.0
    %1354 = vmatprep.subr.mxu0 0.0
    %1355 = vmatpush1.msra.mxu0 0.0
    %1356 = vmatprep.subr.mxu0 0.0
    %1357 = vmatpush1.msra.mxu0 0.0
    %1358 = vmatprep.subr.mxu0 0.0
    %1359 = vmatpush1.msra.mxu0 0.0
    %1360 = vmatprep.subr.mxu0 0.0
    %1361 = vmatpush1.msra.mxu0 0.0
    %1362 = vmatprep.subr.mxu0 0.0
    %1363 = vmatpush1.msra.mxu0 0.0
    %1364 = vmatprep.subr.mxu0 0.0
    %1365 = vmatpush1.msra.mxu0 0.0
    %1366 = vmatprep.subr.mxu0 0.0
    %1367 = vmatpush1.msra.mxu0 0.0
    %1368 = vmatprep.subr.mxu0 0.0
    %1369 = vmatpush1.msra.mxu0 0.0
    %1370 = vmatprep.subr.mxu0 0.0
    %1371 = vmatpush1.msra.mxu0 0.0
    %1372 = vmatprep.subr.mxu0 0.0
    %1373 = vmatpush1.msra.mxu0 0.0
    %1374 = vmatprep.subr.mxu0 0.0
    %1375 = vmatpush1.msra.mxu0 0.0
    %1376 = vmatprep.subr.mxu0 0.0
    %1377 = vmatpush1.msra.mxu0 0.0
    %1378 = vmatprep.subr.mxu0 0.0
    %1379 = vmatpush1.msra.mxu0 0.0
    %1380 = vmatprep.subr.mxu0 0.0
    %1381 = vmatpush1.msra.mxu0 0.0
    %1382 = vmatprep.subr.mxu0 0.0
    %1383 = vmatpush1.msra.mxu0 0.0
    %1384 = vmatprep.subr.mxu0 0.0
    %1385 = vmatpush1.msra.mxu0 0.0
    %1386 = vmatprep.subr.mxu0 0.0
    %1387 = vmatpush1.msra.mxu0 0.0
    %1388 = vmatprep.mubr.f32.mxu0 0.0
    %1389 = vmatmul.mubr.f32.gmra.mrb[0].mxu0 %v1322
    %v1390 = vpop.f32.mrb[0].mxu0
    %v1391 = vadd.f32 0.0, %v1390
    %v1392 = vpop.f32.mrb[0].mxu0
    %1393 = vdwg.mxu0
    %1394 = vrot.lane.b32.xlu0 %v482, 96
    %v1395 = vpop.permute.xlu0 %1394
    %v1398 = vsel %vm639, %v1317, 0
    %1400 = vmatprep.subr.mxu0 0.0
    %1401 = vmatpush1.msra.mxu0 %v1395
    %1402 = vmatprep.subr.mxu0 0.0
    %1403 = vmatpush1.msra.mxu0 0.0
    %1404 = vmatprep.subr.mxu0 0.0
    %1405 = vmatpush1.msra.mxu0 0.0
    %1406 = vmatprep.subr.mxu0 0.0
    %1407 = vmatpush1.msra.mxu0 0.0
    %1408 = vmatprep.subr.mxu0 0.0
    %1409 = vmatpush1.msra.mxu0 0.0
    %1410 = vmatprep.subr.mxu0 0.0
    %1411 = vmatpush1.msra.mxu0 0.0
    %1412 = vmatprep.subr.mxu0 0.0
    %1413 = vmatpush1.msra.mxu0 0.0
    %1414 = vmatprep.subr.mxu0 0.0
    %1415 = vmatpush1.msra.mxu0 0.0
    %1416 = vmatprep.subr.mxu0 0.0
    %1417 = vmatpush1.msra.mxu0 0.0
    %1418 = vmatprep.subr.mxu0 0.0
    %1419 = vmatpush1.msra.mxu0 0.0
    %1420 = vmatprep.subr.mxu0 0.0
    %1421 = vmatpush1.msra.mxu0 0.0
    %1422 = vmatprep.subr.mxu0 0.0
    %1423 = vmatpush1.msra.mxu0 0.0
    %1424 = vmatprep.subr.mxu0 0.0
    %1425 = vmatpush1.msra.mxu0 0.0
    %1426 = vmatprep.subr.mxu0 0.0
    %1427 = vmatpush1.msra.mxu0 0.0
    %1428 = vmatprep.subr.mxu0 0.0
    %1429 = vmatpush1.msra.mxu0 0.0
    %1430 = vmatprep.subr.mxu0 0.0
    %1431 = vmatpush1.msra.mxu0 0.0
    %1432 = vmatprep.subr.mxu0 0.0
    %1433 = vmatpush1.msra.mxu0 0.0
    %1434 = vmatprep.subr.mxu0 0.0
    %1435 = vmatpush1.msra.mxu0 0.0
    %1436 = vmatprep.subr.mxu0 0.0
    %1437 = vmatpush1.msra.mxu0 0.0
    %1438 = vmatprep.subr.mxu0 0.0
    %1439 = vmatpush1.msra.mxu0 0.0
    %1440 = vmatprep.subr.mxu0 0.0
    %1441 = vmatpush1.msra.mxu0 0.0
    %1442 = vmatprep.subr.mxu0 0.0
    %1443 = vmatpush1.msra.mxu0 0.0
    %1444 = vmatprep.subr.mxu0 0.0
    %1445 = vmatpush1.msra.mxu0 0.0
    %1446 = vmatprep.subr.mxu0 0.0
    %1447 = vmatpush1.msra.mxu0 0.0
    %1448 = vmatprep.subr.mxu0 0.0
    %1449 = vmatpush1.msra.mxu0 0.0
    %1450 = vmatprep.subr.mxu0 0.0
    %1451 = vmatpush1.msra.mxu0 0.0
    %1452 = vmatprep.subr.mxu0 0.0
    %1453 = vmatpush1.msra.mxu0 0.0
    %1454 = vmatprep.subr.mxu0 0.0
    %1455 = vmatpush1.msra.mxu0 0.0
    %1456 = vmatprep.subr.mxu0 0.0
    %1457 = vmatpush1.msra.mxu0 0.0
    %1458 = vmatprep.subr.mxu0 0.0
    %1459 = vmatpush1.msra.mxu0 0.0
    %1460 = vmatprep.subr.mxu0 0.0
    %1461 = vmatpush1.msra.mxu0 0.0
    %1462 = vmatprep.subr.mxu0 0.0
    %1463 = vmatpush1.msra.mxu0 0.0
    %1464 = vmatprep.mubr.f32.mxu0 0.0
    %1465 = vmatmul.mubr.f32.gmra.mrb[0].mxu0 %v1398
    %v1466 = vpop.f32.mrb[0].mxu0
    %v1467 = vadd.f32 0.0, %v1466
    %v1468 = vpop.f32.mrb[0].mxu0
    %1469 = vdwg.mxu0
    %1470 = vrot.lane.b32.xlu0 %v474, 80
    %v1471 = vpop.permute.xlu0 %1470
    %1472 = vrot.lane.b32.xlu0 %v474, 16
    %v1473 = vpop.permute.xlu0 %1472
    %v1474 = vsel %vm487, %v1471, 0
    %v1476 = vsel %vm487, %v1473, 0
    %1478 = vmatprep.subr.mxu0 0.0
    %1479 = vmatpush1.xpose.msra.mxu0 %v1476
    %1480 = vmatprep.subr.mxu0 0.0
    %1481 = vmatpush1.xpose.msra.mxu0 0.0
    %1482 = vmatprep.subr.mxu0 0.0
    %1483 = vmatpush1.xpose.msra.mxu0 0.0
    %1484 = vmatprep.subr.mxu0 0.0
    %1485 = vmatpush1.xpose.msra.mxu0 0.0
    %1486 = vmatprep.subr.mxu0 0.0
    %1487 = vmatpush1.xpose.msra.mxu0 0.0
    %1488 = vmatprep.subr.mxu0 0.0
    %1489 = vmatpush1.xpose.msra.mxu0 0.0
    %1490 = vmatprep.subr.mxu0 0.0
    %1491 = vmatpush1.xpose.msra.mxu0 0.0
    %1492 = vmatprep.subr.mxu0 0.0
    %1493 = vmatpush1.xpose.msra.mxu0 0.0
    %1494 = vmatprep.subr.mxu0 0.0
    %1495 = vmatpush1.xpose.msra.mxu0 0.0
    %1496 = vmatprep.subr.mxu0 0.0
    %1497 = vmatpush1.xpose.msra.mxu0 0.0
    %1498 = vmatprep.subr.mxu0 0.0
    %1499 = vmatpush1.xpose.msra.mxu0 0.0
    %1500 = vmatprep.subr.mxu0 0.0
    %1501 = vmatpush1.xpose.msra.mxu0 0.0
    %1502 = vmatprep.subr.mxu0 0.0
    %1503 = vmatpush1.xpose.msra.mxu0 0.0
    %1504 = vmatprep.subr.mxu0 0.0
    %1505 = vmatpush1.xpose.msra.mxu0 0.0
    %1506 = vmatprep.subr.mxu0 0.0
    %1507 = vmatpush1.xpose.msra.mxu0 0.0
    %1508 = vmatprep.subr.mxu0 0.0
    %1509 = vmatpush1.xpose.msra.mxu0 0.0
    %1510 = vmatprep.subr.mxu0 0.0
    %1511 = vmatpush1.xpose.msra.mxu0 0.0
    %1512 = vmatprep.subr.mxu0 0.0
    %1513 = vmatpush1.xpose.msra.mxu0 0.0
    %1514 = vmatprep.subr.mxu0 0.0
    %1515 = vmatpush1.xpose.msra.mxu0 0.0
    %1516 = vmatprep.subr.mxu0 0.0
    %1517 = vmatpush1.xpose.msra.mxu0 0.0
    %1518 = vmatprep.subr.mxu0 0.0
    %1519 = vmatpush1.xpose.msra.mxu0 0.0
    %1520 = vmatprep.subr.mxu0 0.0
    %1521 = vmatpush1.xpose.msra.mxu0 0.0
    %1522 = vmatprep.subr.mxu0 0.0
    %1523 = vmatpush1.xpose.msra.mxu0 0.0
    %1524 = vmatprep.subr.mxu0 0.0
    %1525 = vmatpush1.xpose.msra.mxu0 0.0
    %1526 = vmatprep.subr.mxu0 0.0
    %1527 = vmatpush1.xpose.msra.mxu0 0.0
    %1528 = vmatprep.subr.mxu0 0.0
    %1529 = vmatpush1.xpose.msra.mxu0 0.0
    %1530 = vmatprep.subr.mxu0 0.0
    %1531 = vmatpush1.xpose.msra.mxu0 0.0
    %1532 = vmatprep.subr.mxu0 0.0
    %1533 = vmatpush1.xpose.msra.mxu0 0.0
    %1534 = vmatprep.subr.mxu0 0.0
    %1535 = vmatpush1.xpose.msra.mxu0 0.0
    %1536 = vmatprep.subr.mxu0 0.0
    %1537 = vmatpush1.xpose.msra.mxu0 0.0
    %1538 = vmatprep.subr.mxu0 0.0
    %1539 = vmatpush1.xpose.msra.mxu0 0.0
    %1540 = vmatprep.subr.mxu0 0.0
    %1541 = vmatpush1.xpose.msra.mxu0 0.0
    %1542 = vmatprep.mubr.f32.mxu0 0.0
    %1543 = vmatmul.mubr.f32.gmra.mrb[0].mxu0 %v1474
    %v1544 = vpop.f32.mrb[0].mxu0
    %v1545 = vadd.f32 0.0, %v1544
    %v1546 = vpop.f32.mrb[0].mxu0
    %1547 = vdwg.mxu0
    %1548 = vrot.lane.b32.xlu0 %v480, 80
    %v1549 = vpop.permute.xlu0 %1548
    %1550 = vrot.lane.b32.xlu0 %v480, 16
    %v1551 = vpop.permute.xlu0 %1550
    %v1552 = vsel %vm487, %v1549, 0
    %v1554 = vsel %vm487, %v1551, 0
    %1556 = vmatprep.subr.mxu0 0.0
    %1557 = vmatpush1.xpose.msra.mxu0 %v1554
    %1558 = vmatprep.subr.mxu0 0.0
    %1559 = vmatpush1.xpose.msra.mxu0 0.0
    %1560 = vmatprep.subr.mxu0 0.0
    %1561 = vmatpush1.xpose.msra.mxu0 0.0
    %1562 = vmatprep.subr.mxu0 0.0
    %1563 = vmatpush1.xpose.msra.mxu0 0.0
    %1564 = vmatprep.subr.mxu0 0.0
    %1565 = vmatpush1.xpose.msra.mxu0 0.0
    %1566 = vmatprep.subr.mxu0 0.0
    %1567 = vmatpush1.xpose.msra.mxu0 0.0
    %1568 = vmatprep.subr.mxu0 0.0
    %1569 = vmatpush1.xpose.msra.mxu0 0.0
    %1570 = vmatprep.subr.mxu0 0.0
    %1571 = vmatpush1.xpose.msra.mxu0 0.0
    %1572 = vmatprep.subr.mxu0 0.0
    %1573 = vmatpush1.xpose.msra.mxu0 0.0
    %1574 = vmatprep.subr.mxu0 0.0
    %1575 = vmatpush1.xpose.msra.mxu0 0.0
    %1576 = vmatprep.subr.mxu0 0.0
    %1577 = vmatpush1.xpose.msra.mxu0 0.0
    %1578 = vmatprep.subr.mxu0 0.0
    %1579 = vmatpush1.xpose.msra.mxu0 0.0
    %1580 = vmatprep.subr.mxu0 0.0
    %1581 = vmatpush1.xpose.msra.mxu0 0.0
    %1582 = vmatprep.subr.mxu0 0.0
    %1583 = vmatpush1.xpose.msra.mxu0 0.0
    %1584 = vmatprep.subr.mxu0 0.0
    %1585 = vmatpush1.xpose.msra.mxu0 0.0
    %1586 = vmatprep.subr.mxu0 0.0
    %1587 = vmatpush1.xpose.msra.mxu0 0.0
    %1588 = vmatprep.subr.mxu0 0.0
    %1589 = vmatpush1.xpose.msra.mxu0 0.0
    %1590 = vmatprep.subr.mxu0 0.0
    %1591 = vmatpush1.xpose.msra.mxu0 0.0
    %1592 = vmatprep.subr.mxu0 0.0
    %1593 = vmatpush1.xpose.msra.mxu0 0.0
    %1594 = vmatprep.subr.mxu0 0.0
    %1595 = vmatpush1.xpose.msra.mxu0 0.0
    %1596 = vmatprep.subr.mxu0 0.0
    %1597 = vmatpush1.xpose.msra.mxu0 0.0
    %1598 = vmatprep.subr.mxu0 0.0
    %1599 = vmatpush1.xpose.msra.mxu0 0.0
    %1600 = vmatprep.subr.mxu0 0.0
    %1601 = vmatpush1.xpose.msra.mxu0 0.0
    %1602 = vmatprep.subr.mxu0 0.0
    %1603 = vmatpush1.xpose.msra.mxu0 0.0
    %1604 = vmatprep.subr.mxu0 0.0
    %1605 = vmatpush1.xpose.msra.mxu0 0.0
    %1606 = vmatprep.subr.mxu0 0.0
    %1607 = vmatpush1.xpose.msra.mxu0 0.0
    %1608 = vmatprep.subr.mxu0 0.0
    %1609 = vmatpush1.xpose.msra.mxu0 0.0
    %1610 = vmatprep.subr.mxu0 0.0
    %1611 = vmatpush1.xpose.msra.mxu0 0.0
    %1612 = vmatprep.subr.mxu0 0.0
    %1613 = vmatpush1.xpose.msra.mxu0 0.0
    %1614 = vmatprep.subr.mxu0 0.0
    %1615 = vmatpush1.xpose.msra.mxu0 0.0
    %1616 = vmatprep.subr.mxu0 0.0
    %1617 = vmatpush1.xpose.msra.mxu0 0.0
    %1618 = vmatprep.subr.mxu0 0.0
    %1619 = vmatpush1.xpose.msra.mxu0 0.0
    %1620 = vmatprep.mubr.f32.mxu0 0.0
    %1621 = vmatmul.mubr.f32.gmra.mrb[0].mxu0 %v1552
    %v1622 = vpop.f32.mrb[0].mxu0
    %v1623 = vadd.f32 0.0, %v1622
    %v1624 = vpop.f32.mrb[0].mxu0
    %1625 = vdwg.mxu0
    %v1626 = vsel %vm639, %v1545, -inf
    %1627 = vmax.xlane.f32.xlu0 %v1626
    %v1628 = vpop.xlane.xlu0 %1627
    %v1629 = vsel %vm639, %v1623, -inf
    %1630 = vmax.xlane.f32.xlu0 %v1629
    %v1631 = vpop.xlane.xlu0 %1630
    %v1632 = vsub.f32 %v1545, %v1628
    %v1633 = vsub.f32 %v1623, %v1631
    %v1634 = vmul.f32 %v1632, 1.442695
    %v1635 = vpow.pop %v1634
    %v1636 = vmul.f32 %v1633, 1.442695
    %v1637 = vpow.pop %v1636
    %v1638 = vsel %vm639, %v1635, 0.0
    %1639 = vadd.xlane.f32.xlu0 %v1638
    %v1640 = vpop.xlane.xlu0 %1639
    %v1641 = vsel %vm639, %v1637, 0.0
    %1642 = vadd.xlane.f32.xlu0 %v1641
    %v1643 = vpop.xlane.xlu0 %1642
    %v1644 = vrcp.pop %v1640
    %v1645 = vrcp.pop %v1643
    %v1646 = vmul.f32 %v1635, %v1644
    %v1647 = vmul.f32 %v1637, %v1645
    %1648 = vrot.lane.b32.xlu0 %v476, 80
    %v1649 = vpop.permute.xlu0 %1648
    %v1652 = vsel %vm639, %v1646, 0
    %1654 = vmatprep.subr.mxu0 0.0
    %1655 = vmatpush1.msra.mxu0 %v1649
    %1656 = vmatprep.subr.mxu0 0.0
    %1657 = vmatpush1.msra.mxu0 0.0
    %1658 = vmatprep.subr.mxu0 0.0
    %1659 = vmatpush1.msra.mxu0 0.0
    %1660 = vmatprep.subr.mxu0 0.0
    %1661 = vmatpush1.msra.mxu0 0.0
    %1662 = vmatprep.subr.mxu0 0.0
    %1663 = vmatpush1.msra.mxu0 0.0
    %1664 = vmatprep.subr.mxu0 0.0
    %1665 = vmatpush1.msra.mxu0 0.0
    %1666 = vmatprep.subr.mxu0 0.0
    %1667 = vmatpush1.msra.mxu0 0.0
    %1668 = vmatprep.subr.mxu0 0.0
    %1669 = vmatpush1.msra.mxu0 0.0
    %1670 = vmatprep.subr.mxu0 0.0
    %1671 = vmatpush1.msra.mxu0 0.0
    %1672 = vmatprep.subr.mxu0 0.0
    %1673 = vmatpush1.msra.mxu0 0.0
    %1674 = vmatprep.subr.mxu0 0.0
    %1675 = vmatpush1.msra.mxu0 0.0
    %1676 = vmatprep.subr.mxu0 0.0
    %1677 = vmatpush1.msra.mxu0 0.0
    %1678 = vmatprep.subr.mxu0 0.0
    %1679 = vmatpush1.msra.mxu0 0.0
    %1680 = vmatprep.subr.mxu0 0.0
    %1681 = vmatpush1.msra.mxu0 0.0
    %1682 = vmatprep.subr.mxu0 0.0
    %1683 = vmatpush1.msra.mxu0 0.0
    %1684 = vmatprep.subr.mxu0 0.0
    %1685 = vmatpush1.msra.mxu0 0.0
    %1686 = vmatprep.subr.mxu0 0.0
    %1687 = vmatpush1.msra.mxu0 0.0
    %1688 = vmatprep.subr.mxu0 0.0
    %1689 = vmatpush1.msra.mxu0 0.0
    %1690 = vmatprep.subr.mxu0 0.0
    %1691 = vmatpush1.msra.mxu0 0.0
    %1692 = vmatprep.subr.mxu0 0.0
    %1693 = vmatpush1.msra.mxu0 0.0
    %1694 = vmatprep.subr.mxu0 0.0
    %1695 = vmatpush1.msra.mxu0 0.0
    %1696 = vmatprep.subr.mxu0 0.0
    %1697 = vmatpush1.msra.mxu0 0.0
    %1698 = vmatprep.subr.mxu0 0.0
    %1699 = vmatpush1.msra.mxu0 0.0
    %1700 = vmatprep.subr.mxu0 0.0
    %1701 = vmatpush1.msra.mxu0 0.0
    %1702 = vmatprep.subr.mxu0 0.0
    %1703 = vmatpush1.msra.mxu0 0.0
    %1704 = vmatprep.subr.mxu0 0.0
    %1705 = vmatpush1.msra.mxu0 0.0
    %1706 = vmatprep.subr.mxu0 0.0
    %1707 = vmatpush1.msra.mxu0 0.0
    %1708 = vmatprep.subr.mxu0 0.0
    %1709 = vmatpush1.msra.mxu0 0.0
    %1710 = vmatprep.subr.mxu0 0.0
    %1711 = vmatpush1.msra.mxu0 0.0
    %1712 = vmatprep.subr.mxu0 0.0
    %1713 = vmatpush1.msra.mxu0 0.0
    %1714 = vmatprep.subr.mxu0 0.0
    %1715 = vmatpush1.msra.mxu0 0.0
    %1716 = vmatprep.subr.mxu0 0.0
    %1717 = vmatpush1.msra.mxu0 0.0
    %1718 = vmatprep.mubr.f32.mxu0 0.0
    %1719 = vmatmul.mubr.f32.gmra.mrb[0].mxu0 %v1652
    %v1720 = vpop.f32.mrb[0].mxu0
    %v1721 = vadd.f32 0.0, %v1720
    %v1722 = vpop.f32.mrb[0].mxu0
    %1723 = vdwg.mxu0
    %1724 = vrot.lane.b32.xlu0 %v482, 80
    %v1725 = vpop.permute.xlu0 %1724
    %v1728 = vsel %vm639, %v1647, 0
    %1730 = vmatprep.subr.mxu0 0.0
    %1731 = vmatpush1.msra.mxu0 %v1725
    %1732 = vmatprep.subr.mxu0 0.0
    %1733 = vmatpush1.msra.mxu0 0.0
    %1734 = vmatprep.subr.mxu0 0.0
    %1735 = vmatpush1.msra.mxu0 0.0
    %1736 = vmatprep.subr.mxu0 0.0
    %1737 = vmatpush1.msra.mxu0 0.0
    %1738 = vmatprep.subr.mxu0 0.0
    %1739 = vmatpush1.msra.mxu0 0.0
    %1740 = vmatprep.subr.mxu0 0.0
    %1741 = vmatpush1.msra.mxu0 0.0
    %1742 = vmatprep.subr.mxu0 0.0
    %1743 = vmatpush1.msra.mxu0 0.0
    %1744 = vmatprep.subr.mxu0 0.0
    %1745 = vmatpush1.msra.mxu0 0.0
    %1746 = vmatprep.subr.mxu0 0.0
    %1747 = vmatpush1.msra.mxu0 0.0
    %1748 = vmatprep.subr.mxu0 0.0
    %1749 = vmatpush1.msra.mxu0 0.0
    %1750 = vmatprep.subr.mxu0 0.0
    %1751 = vmatpush1.msra.mxu0 0.0
    %1752 = vmatprep.subr.mxu0 0.0
    %1753 = vmatpush1.msra.mxu0 0.0
    %1754 = vmatprep.subr.mxu0 0.0
    %1755 = vmatpush1.msra.mxu0 0.0
    %1756 = vmatprep.subr.mxu0 0.0
    %1757 = vmatpush1.msra.mxu0 0.0
    %1758 = vmatprep.subr.mxu0 0.0
    %1759 = vmatpush1.msra.mxu0 0.0
    %1760 = vmatprep.subr.mxu0 0.0
    %1761 = vmatpush1.msra.mxu0 0.0
    %1762 = vmatprep.subr.mxu0 0.0
    %1763 = vmatpush1.msra.mxu0 0.0
    %1764 = vmatprep.subr.mxu0 0.0
    %1765 = vmatpush1.msra.mxu0 0.0
    %1766 = vmatprep.subr.mxu0 0.0
    %1767 = vmatpush1.msra.mxu0 0.0
    %1768 = vmatprep.subr.mxu0 0.0
    %1769 = vmatpush1.msra.mxu0 0.0
    %1770 = vmatprep.subr.mxu0 0.0
    %1771 = vmatpush1.msra.mxu0 0.0
    %1772 = vmatprep.subr.mxu0 0.0
    %1773 = vmatpush1.msra.mxu0 0.0
    %1774 = vmatprep.subr.mxu0 0.0
    %1775 = vmatpush1.msra.mxu0 0.0
    %1776 = vmatprep.subr.mxu0 0.0
    %1777 = vmatpush1.msra.mxu0 0.0
    %1778 = vmatprep.subr.mxu0 0.0
    %1779 = vmatpush1.msra.mxu0 0.0
    %1780 = vmatprep.subr.mxu0 0.0
    %1781 = vmatpush1.msra.mxu0 0.0
    %1782 = vmatprep.subr.mxu0 0.0
    %1783 = vmatpush1.msra.mxu0 0.0
    %1784 = vmatprep.subr.mxu0 0.0
    %1785 = vmatpush1.msra.mxu0 0.0
    %1786 = vmatprep.subr.mxu0 0.0
    %1787 = vmatpush1.msra.mxu0 0.0
    %1788 = vmatprep.subr.mxu0 0.0
    %1789 = vmatpush1.msra.mxu0 0.0
    %1790 = vmatprep.subr.mxu0 0.0
    %1791 = vmatpush1.msra.mxu0 0.0
    %1792 = vmatprep.subr.mxu0 0.0
    %1793 = vmatpush1.msra.mxu0 0.0
    %1794 = vmatprep.mubr.f32.mxu0 0.0
    %1795 = vmatmul.mubr.f32.gmra.mrb[0].mxu0 %v1728
    %v1796 = vpop.f32.mrb[0].mxu0
    %v1797 = vadd.f32 0.0, %v1796
    %v1798 = vpop.f32.mrb[0].mxu0
    %1799 = vdwg.mxu0
    %1802 = vrot.lane.b32.xlu0 %v1060, 16
    %v1803 = vpop.permute.xlu0 %1802
    %1804 = vrot.lane.b32.xlu0 %v1137, 16
    %v1805 = vpop.permute.xlu0 %1804
    %1810 = vrot.lane.b32.xlu0 %v1391, 32
    %v1811 = vpop.permute.xlu0 %1810
    %1812 = vrot.lane.b32.xlu0 %v1467, 32
    %v1813 = vpop.permute.xlu0 %1812
    %1818 = vrot.lane.b32.xlu0 %v1721, 48
    %v1819 = vpop.permute.xlu0 %1818
    %1820 = vrot.lane.b32.xlu0 %v1797, 48
    %v1821 = vpop.permute.xlu0 %1820
    %v1824 = vsel %vm487, %v732, %v1803
    %v1825 = vsel %vm487, %v805, %v1805
    %v1826 = vsel %vm357, %v1824, %v1811
    %v1827 = vsel %vm357, %v1825, %v1813
    %vm1828 = vcmask 392192
    %v1829 = vsel %vm1828, %v1826, %v1819
    %v1830 = vsel %vm1828, %v1827, %v1821
    %v1831 = vld [vmem:[%s7] sm:$0xff]
    %v1832 = vld [vmem:[%s7 + $0x8] sm:$0xff]
    %v1833 = vld [vmem:[%s7 + $0x10] sm:$0xff]
    %v1834 = vld [vmem:[%s7 + $0x18] sm:$0xff]
    %v1835 = vld [vmem:[%s7 + $0x20] sm:$0xff]
    %v1836 = vld [vmem:[%s7 + $0x28] sm:$0xff]
    %v1837 = vld [vmem:[%s7 + $0x30] sm:$0xff]
    %v1838 = vld [vmem:[%s7 + $0x38] sm:$0xff]
    %v1839 = vld [vmem:[%s8] sm:$0x1]
    %v1841 = vlaneseq
    %v1842 = vshrl.u32 %v1841, 7
    %v1843 = vsub.s32 0, %v1842
    %v1844 = vrot.slane %v1839, %v1843
    %v1847 = vsel %vm400, %v1829, 0
    %v1850 = vsel %vm400, %v1830, 0
    %1852 = vmatprep.subr.mxu0 0.0
    %1853 = vmatpush1.msra.mxu0 %v1831
    %1854 = vmatprep.subr.mxu0 0.0
    %1855 = vmatpush1.msra.mxu0 %v1832
    %1856 = vmatprep.subr.mxu0 0.0
    %1857 = vmatpush1.msra.mxu0 %v1833
    %1858 = vmatprep.subr.mxu0 0.0
    %1859 = vmatpush1.msra.mxu0 %v1834
    %1860 = vmatprep.subr.mxu0 0.0
    %1861 = vmatpush1.msra.mxu0 %v1835
    %1862 = vmatprep.subr.mxu0 0.0
    %1863 = vmatpush1.msra.mxu0 %v1836
    %1864 = vmatprep.subr.mxu0 0.0
    %1865 = vmatpush1.msra.mxu0 %v1837
    %1866 = vmatprep.subr.mxu0 0.0
    %1867 = vmatpush1.msra.mxu0 %v1838
    %1868 = vmatprep.subr.mxu0 0.0
    %1869 = vmatpush1.msra.mxu0 0.0
    %1870 = vmatprep.subr.mxu0 0.0
    %1871 = vmatpush1.msra.mxu0 0.0
    %1872 = vmatprep.subr.mxu0 0.0
    %1873 = vmatpush1.msra.mxu0 0.0
    %1874 = vmatprep.subr.mxu0 0.0
    %1875 = vmatpush1.msra.mxu0 0.0
    %1876 = vmatprep.subr.mxu0 0.0
    %1877 = vmatpush1.msra.mxu0 0.0
    %1878 = vmatprep.subr.mxu0 0.0
    %1879 = vmatpush1.msra.mxu0 0.0
    %1880 = vmatprep.subr.mxu0 0.0
    %1881 = vmatpush1.msra.mxu0 0.0
    %1882 = vmatprep.subr.mxu0 0.0
    %1883 = vmatpush1.msra.mxu0 0.0
    %1884 = vmatprep.subr.mxu0 0.0
    %1885 = vmatpush1.msra.mxu0 0.0
    %1886 = vmatprep.subr.mxu0 0.0
    %1887 = vmatpush1.msra.mxu0 0.0
    %1888 = vmatprep.subr.mxu0 0.0
    %1889 = vmatpush1.msra.mxu0 0.0
    %1890 = vmatprep.subr.mxu0 0.0
    %1891 = vmatpush1.msra.mxu0 0.0
    %1892 = vmatprep.subr.mxu0 0.0
    %1893 = vmatpush1.msra.mxu0 0.0
    %1894 = vmatprep.subr.mxu0 0.0
    %1895 = vmatpush1.msra.mxu0 0.0
    %1896 = vmatprep.subr.mxu0 0.0
    %1897 = vmatpush1.msra.mxu0 0.0
    %1898 = vmatprep.subr.mxu0 0.0
    %1899 = vmatpush1.msra.mxu0 0.0
    %1900 = vmatprep.subr.mxu0 0.0
    %1901 = vmatpush1.msra.mxu0 0.0
    %1902 = vmatprep.subr.mxu0 0.0
    %1903 = vmatpush1.msra.mxu0 0.0
    %1904 = vmatprep.subr.mxu0 0.0
    %1905 = vmatpush1.msra.mxu0 0.0
    %1906 = vmatprep.subr.mxu0 0.0
    %1907 = vmatpush1.msra.mxu0 0.0
    %1908 = vmatprep.subr.mxu0 0.0
    %1909 = vmatpush1.msra.mxu0 0.0
    %1910 = vmatprep.subr.mxu0 0.0
    %1911 = vmatpush1.msra.mxu0 0.0
    %1912 = vmatprep.subr.mxu0 0.0
    %1913 = vmatpush1.msra.mxu0 0.0
    %1914 = vmatprep.subr.mxu0 0.0
    %1915 = vmatpush1.msra.mxu0 0.0
    %1916 = vmatprep.mubr.f32.mxu0 0.0
    %1917 = vmatmul.mubr.f32.gmra.mrb[0].mxu0 %v1847
    %v1918 = vpop.f32.mrb[0].mxu0
    %v1919 = vadd.f32 %v1844, %v1918
    %v1920 = vpop.f32.mrb[0].mxu0
    %1921 = vmatprep.mubr.f32.mxu0 0.0
    %1922 = vmatmul.mubr.f32.gmra.mrb[0].mxu0 %v1850
    %v1923 = vpop.f32.mrb[0].mxu0
    %v1924 = vadd.f32 %v1844, %v1923
    %v1925 = vpop.f32.mrb[0].mxu0
    %1926 = vdwg.mxu0
    %v1927 = vadd.f32 %v368, %v1919
    %v1928 = vadd.f32 %v369, %v1924
    %v1929 = vld [vmem:[#allocation8] sm:$0x1]
    %v1930 = vld [vmem:[#allocation10] sm:$0x1]
    %v1931 = vsel %vm400, %v1927, 0.0
    %1932 = vadd.xlane.f32.xlu0 %v1931
    %v1933 = vpop.xlane.xlu0 %1932
    %v1934 = vsel %vm400, %v1928, 0.0
    %1935 = vadd.xlane.f32.xlu0 %v1934
    %v1936 = vpop.xlane.xlu0 %1935
    %v1937 = vrcp.pop 64.0
    %v1938 = vmul.f32 %v1933, %v1937
    %v1939 = vmul.f32 %v1936, %v1937
    %v1940 = vsub.f32 %v1927, %v1938
    %v1941 = vsub.f32 %v1928, %v1939
    %v1942 = vmul.f32 %v1940, %v1940
    %v1943 = vmul.f32 %v1941, %v1941
    %v1944 = vsel %vm400, %v1942, 0.0
    %1945 = vadd.xlane.f32.xlu0 %v1944
    %v1946 = vpop.xlane.xlu0 %1945
    %v1947 = vsel %vm400, %v1943, 0.0
    %1948 = vadd.xlane.f32.xlu0 %v1947
    %v1949 = vpop.xlane.xlu0 %1948
    %v1950 = vmul.f32 %v1946, %v1937
    %v1951 = vmul.f32 %v1949, %v1937
    %v1952 = vadd.f32 %v1950, 1e-05
    %v1953 = vadd.f32 %v1951, 1e-05
    %v1954 = vrsqrt.pop %v1952
    %v1955 = vrsqrt.pop %v1953
    %v1956 = vmul.f32 %v1940, %v1954
    %v1957 = vmul.f32 %v1941, %v1955
    %v1959 = vlaneseq
    %v1960 = vshrl.u32 %v1959, 7
    %v1961 = vsub.s32 0, %v1960
    %v1962 = vrot.slane %v1929, %v1961
    %v1964 = vmul.f32 %v1956, %v1962
    %v1965 = vmul.f32 %v1957, %v1962
    %v1967 = vlaneseq
    %v1968 = vshrl.u32 %v1967, 7
    %v1969 = vsub.s32 0, %v1968
    %v1970 = vrot.slane %v1930, %v1969
    %v1972 = vadd.f32 %v1964, %v1970
    %v1973 = vadd.f32 %v1965, %v1970
    %v1974 = vld [vmem:[#allocation11] sm:$0xff]
    %v1975 = vld [vmem:[#allocation11 + $0x8] sm:$0xff]
    %v1976 = vld [vmem:[#allocation11 + $0x10] sm:$0xff]
    %v1977 = vld [vmem:[#allocation11 + $0x18] sm:$0xff]
    %v1978 = vld [vmem:[#allocation11 + $0x20] sm:$0xff]
    %v1979 = vld [vmem:[#allocation11 + $0x28] sm:$0xff]
    %v1980 = vld [vmem:[#allocation11 + $0x30] sm:$0xff]
    %v1981 = vld [vmem:[#allocation11 + $0x38] sm:$0xff]
    %v1982 = vld [vmem:[#allocation13] sm:$0x1]
    %v1984 = vlaneseq
    %v1985 = vshrl.u32 %v1984, 7
    %v1986 = vsub.s32 0, %v1985
    %v1987 = vrot.slane %v1982, %v1986
    %v1990 = vsel %vm400, %v1972, 0
    %v1993 = vsel %vm400, %v1973, 0
    %1995 = vmatprep.subr.mxu0 0.0
    %1996 = vmatpush1.msra.mxu0 %v1974
    %1997 = vmatprep.subr.mxu0 0.0
    %1998 = vmatpush1.msra.mxu0 %v1975
    %1999 = vmatprep.subr.mxu0 0.0
    %2000 = vmatpush1.msra.mxu0 %v1976
    %2001 = vmatprep.subr.mxu0 0.0
    %2002 = vmatpush1.msra.mxu0 %v1977
    %2003 = vmatprep.subr.mxu0 0.0
    %2004 = vmatpush1.msra.mxu0 %v1978
    %2005 = vmatprep.subr.mxu0 0.0
    %2006 = vmatpush1.msra.mxu0 %v1979
    %2007 = vmatprep.subr.mxu0 0.0
    %2008 = vmatpush1.msra.mxu0 %v1980
    %2009 = vmatprep.subr.mxu0 0.0
    %2010 = vmatpush1.msra.mxu0 %v1981
    %2011 = vmatprep.subr.mxu0 0.0
    %2012 = vmatpush1.msra.mxu0 0.0
    %2013 = vmatprep.subr.mxu0 0.0
    %2014 = vmatpush1.msra.mxu0 0.0
    %2015 = vmatprep.subr.mxu0 0.0
    %2016 = vmatpush1.msra.mxu0 0.0
    %2017 = vmatprep.subr.mxu0 0.0
    %2018 = vmatpush1.msra.mxu0 0.0
    %2019 = vmatprep.subr.mxu0 0.0
    %2020 = vmatpush1.msra.mxu0 0.0
    %2021 = vmatprep.subr.mxu0 0.0
    %2022 = vmatpush1.msra.mxu0 0.0
    %2023 = vmatprep.subr.mxu0 0.0
    %2024 = vmatpush1.msra.mxu0 0.0
    %2025 = vmatprep.subr.mxu0 0.0
    %2026 = vmatpush1.msra.mxu0 0.0
    %2027 = vmatprep.subr.mxu0 0.0
    %2028 = vmatpush1.msra.mxu0 0.0
    %2029 = vmatprep.subr.mxu0 0.0
    %2030 = vmatpush1.msra.mxu0 0.0
    %2031 = vmatprep.subr.mxu0 0.0
    %2032 = vmatpush1.msra.mxu0 0.0
    %2033 = vmatprep.subr.mxu0 0.0
    %2034 = vmatpush1.msra.mxu0 0.0
    %2035 = vmatprep.subr.mxu0 0.0
    %2036 = vmatpush1.msra.mxu0 0.0
    %2037 = vmatprep.subr.mxu0 0.0
    %2038 = vmatpush1.msra.mxu0 0.0
    %2039 = vmatprep.subr.mxu0 0.0
    %2040 = vmatpush1.msra.mxu0 0.0
    %2041 = vmatprep.subr.mxu0 0.0
    %2042 = vmatpush1.msra.mxu0 0.0
    %2043 = vmatprep.subr.mxu0 0.0
    %2044 = vmatpush1.msra.mxu0 0.0
    %2045 = vmatprep.subr.mxu0 0.0
    %2046 = vmatpush1.msra.mxu0 0.0
    %2047 = vmatprep.subr.mxu0 0.0
    %2048 = vmatpush1.msra.mxu0 0.0
    %2049 = vmatprep.subr.mxu0 0.0
    %2050 = vmatpush1.msra.mxu0 0.0
    %2051 = vmatprep.subr.mxu0 0.0
    %2052 = vmatpush1.msra.mxu0 0.0
    %2053 = vmatprep.subr.mxu0 0.0
    %2054 = vmatpush1.msra.mxu0 0.0
    %2055 = vmatprep.subr.mxu0 0.0
    %2056 = vmatpush1.msra.mxu0 0.0
    %2057 = vmatprep.subr.mxu0 0.0
    %2058 = vmatpush1.msra.mxu0 0.0
    %2059 = vmatprep.mubr.f32.mxu0 0.0
    %2060 = vmatmul.mubr.f32.gmra.mrb[0].mxu0 %v1990
    %v2061 = vpop.f32.mrb[0].mxu0
    %v2062 = vadd.f32 %v1987, %v2061
    %v2063 = vpop.f32.mrb[0].mxu0
    %2064 = vmatprep.mubr.f32.mxu0 0.0
    %2065 = vmatmul.mubr.f32.gmra.mrb[0].mxu0 %v1993
    %v2066 = vpop.f32.mrb[0].mxu0
    %v2067 = vadd.f32 %v1987, %v2066
    %v2068 = vpop.f32.mrb[0].mxu0
    %2069 = vdwg.mxu0
    %v2070 = vld [vmem:[#allocation14] sm:$0xff]
    %v2071 = vld [vmem:[#allocation14 + $0x8] sm:$0xff]
    %v2072 = vld [vmem:[#allocation14 + $0x10] sm:$0xff]
    %v2073 = vld [vmem:[#allocation14 + $0x18] sm:$0xff]
    %v2074 = vld [vmem:[#allocation14 + $0x20] sm:$0xff]
    %v2075 = vld [vmem:[#allocation14 + $0x28] sm:$0xff]
    %v2076 = vld [vmem:[#allocation14 + $0x30] sm:$0xff]
    %v2077 = vld [vmem:[#allocation14 + $0x38] sm:$0xff]
    %v2078 = vld [vmem:[#allocation16] sm:$0x1]
    %v2080 = vlaneseq
    %v2081 = vshrl.u32 %v2080, 7
    %v2082 = vsub.s32 0, %v2081
    %v2083 = vrot.slane %v2078, %v2082
    %v2086 = vsel %vm400, %v370, 0
    %v2089 = vsel %vm400, %v371, 0
    %2091 = vmatprep.subr.mxu0 0.0
    %2092 = vmatpush1.msra.mxu0 %v2070
    %2093 = vmatprep.subr.mxu0 0.0
    %2094 = vmatpush1.msra.mxu0 %v2071
    %2095 = vmatprep.subr.mxu0 0.0
    %2096 = vmatpush1.msra.mxu0 %v2072
    %2097 = vmatprep.subr.mxu0 0.0
    %2098 = vmatpush1.msra.mxu0 %v2073
    %2099 = vmatprep.subr.mxu0 0.0
    %2100 = vmatpush1.msra.mxu0 %v2074
    %2101 = vmatprep.subr.mxu0 0.0
    %2102 = vmatpush1.msra.mxu0 %v2075
    %2103 = vmatprep.subr.mxu0 0.0
    %2104 = vmatpush1.msra.mxu0 %v2076
    %2105 = vmatprep.subr.mxu0 0.0
    %2106 = vmatpush1.msra.mxu0 %v2077
    %2107 = vmatprep.subr.mxu0 0.0
    %2108 = vmatpush1.msra.mxu0 0.0
    %2109 = vmatprep.subr.mxu0 0.0
    %2110 = vmatpush1.msra.mxu0 0.0
    %2111 = vmatprep.subr.mxu0 0.0
    %2112 = vmatpush1.msra.mxu0 0.0
    %2113 = vmatprep.subr.mxu0 0.0
    %2114 = vmatpush1.msra.mxu0 0.0
    %2115 = vmatprep.subr.mxu0 0.0
    %2116 = vmatpush1.msra.mxu0 0.0
    %2117 = vmatprep.subr.mxu0 0.0
    %2118 = vmatpush1.msra.mxu0 0.0
    %2119 = vmatprep.subr.mxu0 0.0
    %2120 = vmatpush1.msra.mxu0 0.0
    %2121 = vmatprep.subr.mxu0 0.0
    %2122 = vmatpush1.msra.mxu0 0.0
    %2123 = vmatprep.subr.mxu0 0.0
    %2124 = vmatpush1.msra.mxu0 0.0
    %2125 = vmatprep.subr.mxu0 0.0
    %2126 = vmatpush1.msra.mxu0 0.0
    %2127 = vmatprep.subr.mxu0 0.0
    %2128 = vmatpush1.msra.mxu0 0.0
    %2129 = vmatprep.subr.mxu0 0.0
    %2130 = vmatpush1.msra.mxu0 0.0
    %2131 = vmatprep.subr.mxu0 0.0
    %2132 = vmatpush1.msra.mxu0 0.0
    %2133 = vmatprep.subr.mxu0 0.0
    %2134 = vmatpush1.msra.mxu0 0.0
    %2135 = vmatprep.subr.mxu0 0.0
    %2136 = vmatpush1.msra.mxu0 0.0
    %2137 = vmatprep.subr.mxu0 0.0
    %2138 = vmatpush1.msra.mxu0 0.0
    %2139 = vmatprep.subr.mxu0 0.0
    %2140 = vmatpush1.msra.mxu0 0.0
    %2141 = vmatprep.subr.mxu0 0.0
    %2142 = vmatpush1.msra.mxu0 0.0
    %2143 = vmatprep.subr.mxu0 0.0
    %2144 = vmatpush1.msra.mxu0 0.0
    %2145 = vmatprep.subr.mxu0 0.0
    %2146 = vmatpush1.msra.mxu0 0.0
    %2147 = vmatprep.subr.mxu0 0.0
    %2148 = vmatpush1.msra.mxu0 0.0
    %2149 = vmatprep.subr.mxu0 0.0
    %2150 = vmatpush1.msra.mxu0 0.0
    %2151 = vmatprep.subr.mxu0 0.0
    %2152 = vmatpush1.msra.mxu0 0.0
    %2153 = vmatprep.subr.mxu0 0.0
    %2154 = vmatpush1.msra.mxu0 0.0
    %2155 = vmatprep.mubr.f32.mxu0 0.0
    %2156 = vmatmul.mubr.f32.gmra.mrb[0].mxu0 %v2086
    %v2157 = vpop.f32.mrb[0].mxu0
    %v2158 = vadd.f32 %v2083, %v2157
    %v2159 = vpop.f32.mrb[0].mxu0
    %2160 = vmatprep.mubr.f32.mxu0 0.0
    %2161 = vmatmul.mubr.f32.gmra.mrb[0].mxu0 %v2089
    %v2162 = vpop.f32.mrb[0].mxu0
    %v2163 = vadd.f32 %v2083, %v2162
    %v2164 = vpop.f32.mrb[0].mxu0
    %2165 = vdwg.mxu0
    %v2167 = vsel %vm487, %v2062, 0
    %v2170 = vsel %vm487, %v2158, 0
    %2172 = vmatprep.subr.mxu0 0.0
    %2173 = vmatpush1.xpose.msra.mxu0 %v2170
    %2174 = vmatprep.subr.mxu0 0.0
    %2175 = vmatpush1.xpose.msra.mxu0 0.0
    %2176 = vmatprep.subr.mxu0 0.0
    %2177 = vmatpush1.xpose.msra.mxu0 0.0
    %2178 = vmatprep.subr.mxu0 0.0
    %2179 = vmatpush1.xpose.msra.mxu0 0.0
    %2180 = vmatprep.subr.mxu0 0.0
    %2181 = vmatpush1.xpose.msra.mxu0 0.0
    %2182 = vmatprep.subr.mxu0 0.0
    %2183 = vmatpush1.xpose.msra.mxu0 0.0
    %2184 = vmatprep.subr.mxu0 0.0
    %2185 = vmatpush1.xpose.msra.mxu0 0.0
    %2186 = vmatprep.subr.mxu0 0.0
    %2187 = vmatpush1.xpose.msra.mxu0 0.0
    %2188 = vmatprep.subr.mxu0 0.0
    %2189 = vmatpush1.xpose.msra.mxu0 0.0
    %2190 = vmatprep.subr.mxu0 0.0
    %2191 = vmatpush1.xpose.msra.mxu0 0.0
    %2192 = vmatprep.subr.mxu0 0.0
    %2193 = vmatpush1.xpose.msra.mxu0 0.0
    %2194 = vmatprep.subr.mxu0 0.0
    %2195 = vmatpush1.xpose.msra.mxu0 0.0
    %2196 = vmatprep.subr.mxu0 0.0
    %2197 = vmatpush1.xpose.msra.mxu0 0.0
    %2198 = vmatprep.subr.mxu0 0.0
    %2199 = vmatpush1.xpose.msra.mxu0 0.0
    %2200 = vmatprep.subr.mxu0 0.0
    %2201 = vmatpush1.xpose.msra.mxu0 0.0
    %2202 = vmatprep.subr.mxu0 0.0
    %2203 = vmatpush1.xpose.msra.mxu0 0.0
    %2204 = vmatprep.subr.mxu0 0.0
    %2205 = vmatpush1.xpose.msra.mxu0 0.0
    %2206 = vmatprep.subr.mxu0 0.0
    %2207 = vmatpush1.xpose.msra.mxu0 0.0
    %2208 = vmatprep.subr.mxu0 0.0
    %2209 = vmatpush1.xpose.msra.mxu0 0.0
    %2210 = vmatprep.subr.mxu0 0.0
    %2211 = vmatpush1.xpose.msra.mxu0 0.0
    %2212 = vmatprep.subr.mxu0 0.0
    %2213 = vmatpush1.xpose.msra.mxu0 0.0
    %2214 = vmatprep.subr.mxu0 0.0
    %2215 = vmatpush1.xpose.msra.mxu0 0.0
    %2216 = vmatprep.subr.mxu0 0.0
    %2217 = vmatpush1.xpose.msra.mxu0 0.0
    %2218 = vmatprep.subr.mxu0 0.0
    %2219 = vmatpush1.xpose.msra.mxu0 0.0
    %2220 = vmatprep.subr.mxu0 0.0
    %2221 = vmatpush1.xpose.msra.mxu0 0.0
    %2222 = vmatprep.subr.mxu0 0.0
    %2223 = vmatpush1.xpose.msra.mxu0 0.0
    %2224 = vmatprep.subr.mxu0 0.0
    %2225 = vmatpush1.xpose.msra.mxu0 0.0
    %2226 = vmatprep.subr.mxu0 0.0
    %2227 = vmatpush1.xpose.msra.mxu0 0.0
    %2228 = vmatprep.subr.mxu0 0.0
    %2229 = vmatpush1.xpose.msra.mxu0 0.0
    %2230 = vmatprep.subr.mxu0 0.0
    %2231 = vmatpush1.xpose.msra.mxu0 0.0
    %2232 = vmatprep.subr.mxu0 0.0
    %2233 = vmatpush1.xpose.msra.mxu0 0.0
    %2234 = vmatprep.subr.mxu0 0.0
    %2235 = vmatpush1.xpose.msra.mxu0 0.0
    %2236 = vmatprep.mubr.f32.mxu0 0.0
    %2237 = vmatmul.mubr.f32.gmra.mrb[0].mxu0 %v2167
    %v2238 = vpop.f32.mrb[0].mxu0
    %v2239 = vadd.f32 0.0, %v2238
    %v2240 = vpop.f32.mrb[0].mxu0
    %2241 = vdwg.mxu0
    %v2243 = vsel %vm487, %v2067, 0
    %v2246 = vsel %vm487, %v2163, 0
    %2248 = vmatprep.subr.mxu0 0.0
    %2249 = vmatpush1.xpose.msra.mxu0 %v2246
    %2250 = vmatprep.subr.mxu0 0.0
    %2251 = vmatpush1.xpose.msra.mxu0 0.0
    %2252 = vmatprep.subr.mxu0 0.0
    %2253 = vmatpush1.xpose.msra.mxu0 0.0
    %2254 = vmatprep.subr.mxu0 0.0
    %2255 = vmatpush1.xpose.msra.mxu0 0.0
    %2256 = vmatprep.subr.mxu0 0.0
    %2257 = vmatpush1.xpose.msra.mxu0 0.0
    %2258 = vmatprep.subr.mxu0 0.0
    %2259 = vmatpush1.xpose.msra.mxu0 0.0
    %2260 = vmatprep.subr.mxu0 0.0
    %2261 = vmatpush1.xpose.msra.mxu0 0.0
    %2262 = vmatprep.subr.mxu0 0.0
    %2263 = vmatpush1.xpose.msra.mxu0 0.0
    %2264 = vmatprep.subr.mxu0 0.0
    %2265 = vmatpush1.xpose.msra.mxu0 0.0
    %2266 = vmatprep.subr.mxu0 0.0
    %2267 = vmatpush1.xpose.msra.mxu0 0.0
    %2268 = vmatprep.subr.mxu0 0.0
    %2269 = vmatpush1.xpose.msra.mxu0 0.0
    %2270 = vmatprep.subr.mxu0 0.0
    %2271 = vmatpush1.xpose.msra.mxu0 0.0
    %2272 = vmatprep.subr.mxu0 0.0
    %2273 = vmatpush1.xpose.msra.mxu0 0.0
    %2274 = vmatprep.subr.mxu0 0.0
    %2275 = vmatpush1.xpose.msra.mxu0 0.0
    %2276 = vmatprep.subr.mxu0 0.0
    %2277 = vmatpush1.xpose.msra.mxu0 0.0
    %2278 = vmatprep.subr.mxu0 0.0
    %2279 = vmatpush1.xpose.msra.mxu0 0.0
    %2280 = vmatprep.subr.mxu0 0.0
    %2281 = vmatpush1.xpose.msra.mxu0 0.0
    %2282 = vmatprep.subr.mxu0 0.0
    %2283 = vmatpush1.xpose.msra.mxu0 0.0
    %2284 = vmatprep.subr.mxu0 0.0
    %2285 = vmatpush1.xpose.msra.mxu0 0.0
    %2286 = vmatprep.subr.mxu0 0.0
    %2287 = vmatpush1.xpose.msra.mxu0 0.0
    %2288 = vmatprep.subr.mxu0 0.0
    %2289 = vmatpush1.xpose.msra.mxu0 0.0
    %2290 = vmatprep.subr.mxu0 0.0
    %2291 = vmatpush1.xpose.msra.mxu0 0.0
    %2292 = vmatprep.subr.mxu0 0.0
    %2293 = vmatpush1.xpose.msra.mxu0 0.0
    %2294 = vmatprep.subr.mxu0 0.0
    %2295 = vmatpush1.xpose.msra.mxu0 0.0
    %2296 = vmatprep.subr.mxu0 0.0
    %2297 = vmatpush1.xpose.msra.mxu0 0.0
    %2298 = vmatprep.subr.mxu0 0.0
    %2299 = vmatpush1.xpose.msra.mxu0 0.0
    %2300 = vmatprep.subr.mxu0 0.0
    %2301 = vmatpush1.xpose.msra.mxu0 0.0
    %2302 = vmatprep.subr.mxu0 0.0
    %2303 = vmatpush1.xpose.msra.mxu0 0.0
    %2304 = vmatprep.subr.mxu0 0.0
    %2305 = vmatpush1.xpose.msra.mxu0 0.0
    %2306 = vmatprep.subr.mxu0 0.0
    %2307 = vmatpush1.xpose.msra.mxu0 0.0
    %2308 = vmatprep.subr.mxu0 0.0
    %2309 = vmatpush1.xpose.msra.mxu0 0.0
    %2310 = vmatprep.subr.mxu0 0.0
    %2311 = vmatpush1.xpose.msra.mxu0 0.0
    %2312 = vmatprep.mubr.f32.mxu0 0.0
    %2313 = vmatmul.mubr.f32.gmra.mrb[0].mxu0 %v2243
    %v2314 = vpop.f32.mrb[0].mxu0
    %v2315 = vadd.f32 0.0, %v2314
    %v2316 = vpop.f32.mrb[0].mxu0
    %2317 = vdwg.mxu0
    %v2318 = vsel %vm639, %v2239, -inf
    %2319 = vmax.xlane.f32.xlu0 %v2318
    %v2320 = vpop.xlane.xlu0 %2319
    %v2321 = vsel %vm639, %v2315, -inf
    %2322 = vmax.xlane.f32.xlu0 %v2321
    %v2323 = vpop.xlane.xlu0 %2322
    %v2324 = vsub.f32 %v2239, %v2320
    %v2325 = vsub.f32 %v2315, %v2323
    %v2326 = vmul.f32 %v2324, 1.442695
    %v2327 = vpow.pop %v2326
    %v2328 = vmul.f32 %v2325, 1.442695
    %v2329 = vpow.pop %v2328
    %v2330 = vsel %vm639, %v2327, 0.0
    %2331 = vadd.xlane.f32.xlu0 %v2330
    %v2332 = vpop.xlane.xlu0 %2331
    %v2333 = vsel %vm639, %v2329, 0.0
    %2334 = vadd.xlane.f32.xlu0 %v2333
    %v2335 = vpop.xlane.xlu0 %2334
    %v2336 = vrcp.pop %v2332
    %v2337 = vrcp.pop %v2335
    %v2338 = vmul.f32 %v2327, %v2336
    %v2339 = vmul.f32 %v2329, %v2337
    %2340 = vrot.lane.b32.xlu0 %v2158, 64
    %v2341 = vpop.permute.xlu0 %2340
    %v2344 = vsel %vm639, %v2338, 0
    %2346 = vmatprep.subr.mxu0 0.0
    %2347 = vmatpush1.msra.mxu0 %v2341
    %2348 = vmatprep.subr.mxu0 0.0
    %2349 = vmatpush1.msra.mxu0 0.0
    %2350 = vmatprep.subr.mxu0 0.0
    %2351 = vmatpush1.msra.mxu0 0.0
    %2352 = vmatprep.subr.mxu0 0.0
    %2353 = vmatpush1.msra.mxu0 0.0
    %2354 = vmatprep.subr.mxu0 0.0
    %2355 = vmatpush1.msra.mxu0 0.0
    %2356 = vmatprep.subr.mxu0 0.0
    %2357 = vmatpush1.msra.mxu0 0.0
    %2358 = vmatprep.subr.mxu0 0.0
    %2359 = vmatpush1.msra.mxu0 0.0
    %2360 = vmatprep.subr.mxu0 0.0
    %2361 = vmatpush1.msra.mxu0 0.0
    %2362 = vmatprep.subr.mxu0 0.0
    %2363 = vmatpush1.msra.mxu0 0.0
    %2364 = vmatprep.subr.mxu0 0.0
    %2365 = vmatpush1.msra.mxu0 0.0
    %2366 = vmatprep.subr.mxu0 0.0
    %2367 = vmatpush1.msra.mxu0 0.0
    %2368 = vmatprep.subr.mxu0 0.0
    %2369 = vmatpush1.msra.mxu0 0.0
    %2370 = vmatprep.subr.mxu0 0.0
    %2371 = vmatpush1.msra.mxu0 0.0
    %2372 = vmatprep.subr.mxu0 0.0
    %2373 = vmatpush1.msra.mxu0 0.0
    %2374 = vmatprep.subr.mxu0 0.0
    %2375 = vmatpush1.msra.mxu0 0.0
    %2376 = vmatprep.subr.mxu0 0.0
    %2377 = vmatpush1.msra.mxu0 0.0
    %2378 = vmatprep.subr.mxu0 0.0
    %2379 = vmatpush1.msra.mxu0 0.0
    %2380 = vmatprep.subr.mxu0 0.0
    %2381 = vmatpush1.msra.mxu0 0.0
    %2382 = vmatprep.subr.mxu0 0.0
    %2383 = vmatpush1.msra.mxu0 0.0
    %2384 = vmatprep.subr.mxu0 0.0
    %2385 = vmatpush1.msra.mxu0 0.0
    %2386 = vmatprep.subr.mxu0 0.0
    %2387 = vmatpush1.msra.mxu0 0.0
    %2388 = vmatprep.subr.mxu0 0.0
    %2389 = vmatpush1.msra.mxu0 0.0
    %2390 = vmatprep.subr.mxu0 0.0
    %2391 = vmatpush1.msra.mxu0 0.0
    %2392 = vmatprep.subr.mxu0 0.0
    %2393 = vmatpush1.msra.mxu0 0.0
    %2394 = vmatprep.subr.mxu0 0.0
    %2395 = vmatpush1.msra.mxu0 0.0
    %2396 = vmatprep.subr.mxu0 0.0
    %2397 = vmatpush1.msra.mxu0 0.0
    %2398 = vmatprep.subr.mxu0 0.0
    %2399 = vmatpush1.msra.mxu0 0.0
    %2400 = vmatprep.subr.mxu0 0.0
    %2401 = vmatpush1.msra.mxu0 0.0
    %2402 = vmatprep.subr.mxu0 0.0
    %2403 = vmatpush1.msra.mxu0 0.0
    %2404 = vmatprep.subr.mxu0 0.0
    %2405 = vmatpush1.msra.mxu0 0.0
    %2406 = vmatprep.subr.mxu0 0.0
    %2407 = vmatpush1.msra.mxu0 0.0
    %2408 = vmatprep.subr.mxu0 0.0
    %2409 = vmatpush1.msra.mxu0 0.0
    %2410 = vmatprep.mubr.f32.mxu0 0.0
    %2411 = vmatmul.mubr.f32.gmra.mrb[0].mxu0 %v2344
    %v2412 = vpop.f32.mrb[0].mxu0
    %v2413 = vadd.f32 0.0, %v2412
    %v2414 = vpop.f32.mrb[0].mxu0
    %2415 = vdwg.mxu0
    %2416 = vrot.lane.b32.xlu0 %v2163, 64
    %v2417 = vpop.permute.xlu0 %2416
    %v2420 = vsel %vm639, %v2339, 0
    %2422 = vmatprep.subr.mxu0 0.0
    %2423 = vmatpush1.msra.mxu0 %v2417
    %2424 = vmatprep.subr.mxu0 0.0
    %2425 = vmatpush1.msra.mxu0 0.0
    %2426 = vmatprep.subr.mxu0 0.0
    %2427 = vmatpush1.msra.mxu0 0.0
    %2428 = vmatprep.subr.mxu0 0.0
    %2429 = vmatpush1.msra.mxu0 0.0
    %2430 = vmatprep.subr.mxu0 0.0
    %2431 = vmatpush1.msra.mxu0 0.0
    %2432 = vmatprep.subr.mxu0 0.0
    %2433 = vmatpush1.msra.mxu0 0.0
    %2434 = vmatprep.subr.mxu0 0.0
    %2435 = vmatpush1.msra.mxu0 0.0
    %2436 = vmatprep.subr.mxu0 0.0
    %2437 = vmatpush1.msra.mxu0 0.0
    %2438 = vmatprep.subr.mxu0 0.0
    %2439 = vmatpush1.msra.mxu0 0.0
    %2440 = vmatprep.subr.mxu0 0.0
    %2441 = vmatpush1.msra.mxu0 0.0
    %2442 = vmatprep.subr.mxu0 0.0
    %2443 = vmatpush1.msra.mxu0 0.0
    %2444 = vmatprep.subr.mxu0 0.0
    %2445 = vmatpush1.msra.mxu0 0.0
    %2446 = vmatprep.subr.mxu0 0.0
    %2447 = vmatpush1.msra.mxu0 0.0
    %2448 = vmatprep.subr.mxu0 0.0
    %2449 = vmatpush1.msra.mxu0 0.0
    %2450 = vmatprep.subr.mxu0 0.0
    %2451 = vmatpush1.msra.mxu0 0.0
    %2452 = vmatprep.subr.mxu0 0.0
    %2453 = vmatpush1.msra.mxu0 0.0
    %2454 = vmatprep.subr.mxu0 0.0
    %2455 = vmatpush1.msra.mxu0 0.0
    %2456 = vmatprep.subr.mxu0 0.0
    %2457 = vmatpush1.msra.mxu0 0.0
    %2458 = vmatprep.subr.mxu0 0.0
    %2459 = vmatpush1.msra.mxu0 0.0
    %2460 = vmatprep.subr.mxu0 0.0
    %2461 = vmatpush1.msra.mxu0 0.0
    %2462 = vmatprep.subr.mxu0 0.0
    %2463 = vmatpush1.msra.mxu0 0.0
    %2464 = vmatprep.subr.mxu0 0.0
    %2465 = vmatpush1.msra.mxu0 0.0
    %2466 = vmatprep.subr.mxu0 0.0
    %2467 = vmatpush1.msra.mxu0 0.0
    %2468 = vmatprep.subr.mxu0 0.0
    %2469 = vmatpush1.msra.mxu0 0.0
    %2470 = vmatprep.subr.mxu0 0.0
    %2471 = vmatpush1.msra.mxu0 0.0
    %2472 = vmatprep.subr.mxu0 0.0
    %2473 = vmatpush1.msra.mxu0 0.0
    %2474 = vmatprep.subr.mxu0 0.0
    %2475 = vmatpush1.msra.mxu0 0.0
    %2476 = vmatprep.subr.mxu0 0.0
    %2477 = vmatpush1.msra.mxu0 0.0
    %2478 = vmatprep.subr.mxu0 0.0
    %2479 = vmatpush1.msra.mxu0 0.0
    %2480 = vmatprep.subr.mxu0 0.0
    %2481 = vmatpush1.msra.mxu0 0.0
    %2482 = vmatprep.subr.mxu0 0.0
    %2483 = vmatpush1.msra.mxu0 0.0
    %2484 = vmatprep.subr.mxu0 0.0
    %2485 = vmatpush1.msra.mxu0 0.0
    %2486 = vmatprep.mubr.f32.mxu0 0.0
    %2487 = vmatmul.mubr.f32.gmra.mrb[0].mxu0 %v2420
    %v2488 = vpop.f32.mrb[0].mxu0
    %v2489 = vadd.f32 0.0, %v2488
    %v2490 = vpop.f32.mrb[0].mxu0
    %2491 = vdwg.mxu0
    %2492 = vrot.lane.b32.xlu0 %v2062, 112
    %v2493 = vpop.permute.xlu0 %2492
    %2494 = vrot.lane.b32.xlu0 %v2158, 112
    %v2495 = vpop.permute.xlu0 %2494
    %v2496 = vsel %vm487, %v2493, 0
    %v2498 = vsel %vm487, %v2495, 0
    %2500 = vmatprep.subr.mxu0 0.0
    %2501 = vmatpush1.xpose.msra.mxu0 %v2498
    %2502 = vmatprep.subr.mxu0 0.0
    %2503 = vmatpush1.xpose.msra.mxu0 0.0
    %2504 = vmatprep.subr.mxu0 0.0
    %2505 = vmatpush1.xpose.msra.mxu0 0.0
    %2506 = vmatprep.subr.mxu0 0.0
    %2507 = vmatpush1.xpose.msra.mxu0 0.0
    %2508 = vmatprep.subr.mxu0 0.0
    %2509 = vmatpush1.xpose.msra.mxu0 0.0
    %2510 = vmatprep.subr.mxu0 0.0
    %2511 = vmatpush1.xpose.msra.mxu0 0.0
    %2512 = vmatprep.subr.mxu0 0.0
    %2513 = vmatpush1.xpose.msra.mxu0 0.0
    %2514 = vmatprep.subr.mxu0 0.0
    %2515 = vmatpush1.xpose.msra.mxu0 0.0
    %2516 = vmatprep.subr.mxu0 0.0
    %2517 = vmatpush1.xpose.msra.mxu0 0.0
    %2518 = vmatprep.subr.mxu0 0.0
    %2519 = vmatpush1.xpose.msra.mxu0 0.0
    %2520 = vmatprep.subr.mxu0 0.0
    %2521 = vmatpush1.xpose.msra.mxu0 0.0
    %2522 = vmatprep.subr.mxu0 0.0
    %2523 = vmatpush1.xpose.msra.mxu0 0.0
    %2524 = vmatprep.subr.mxu0 0.0
    %2525 = vmatpush1.xpose.msra.mxu0 0.0
    %2526 = vmatprep.subr.mxu0 0.0
    %2527 = vmatpush1.xpose.msra.mxu0 0.0
    %2528 = vmatprep.subr.mxu0 0.0
    %2529 = vmatpush1.xpose.msra.mxu0 0.0
    %2530 = vmatprep.subr.mxu0 0.0
    %2531 = vmatpush1.xpose.msra.mxu0 0.0
    %2532 = vmatprep.subr.mxu0 0.0
    %2533 = vmatpush1.xpose.msra.mxu0 0.0
    %2534 = vmatprep.subr.mxu0 0.0
    %2535 = vmatpush1.xpose.msra.mxu0 0.0
    %2536 = vmatprep.subr.mxu0 0.0
    %2537 = vmatpush1.xpose.msra.mxu0 0.0
    %2538 = vmatprep.subr.mxu0 0.0
    %2539 = vmatpush1.xpose.msra.mxu0 0.0
    %2540 = vmatprep.subr.mxu0 0.0
    %2541 = vmatpush1.xpose.msra.mxu0 0.0
    %2542 = vmatprep.subr.mxu0 0.0
    %2543 = vmatpush1.xpose.msra.mxu0 0.0
    %2544 = vmatprep.subr.mxu0 0.0
    %2545 = vmatpush1.xpose.msra.mxu0 0.0
    %2546 = vmatprep.subr.mxu0 0.0
    %2547 = vmatpush1.xpose.msra.mxu0 0.0
    %2548 = vmatprep.subr.mxu0 0.0
    %2549 = vmatpush1.xpose.msra.mxu0 0.0
    %2550 = vmatprep.subr.mxu0 0.0
    %2551 = vmatpush1.xpose.msra.mxu0 0.0
    %2552 = vmatprep.subr.mxu0 0.0
    %2553 = vmatpush1.xpose.msra.mxu0 0.0
    %2554 = vmatprep.subr.mxu0 0.0
    %2555 = vmatpush1.xpose.msra.mxu0 0.0
    %2556 = vmatprep.subr.mxu0 0.0
    %2557 = vmatpush1.xpose.msra.mxu0 0.0
    %2558 = vmatprep.subr.mxu0 0.0
    %2559 = vmatpush1.xpose.msra.mxu0 0.0
    %2560 = vmatprep.subr.mxu0 0.0
    %2561 = vmatpush1.xpose.msra.mxu0 0.0
    %2562 = vmatprep.subr.mxu0 0.0
    %2563 = vmatpush1.xpose.msra.mxu0 0.0
    %2564 = vmatprep.mubr.f32.mxu0 0.0
    %2565 = vmatmul.mubr.f32.gmra.mrb[0].mxu0 %v2496
    %v2566 = vpop.f32.mrb[0].mxu0
    %v2567 = vadd.f32 0.0, %v2566
    %v2568 = vpop.f32.mrb[0].mxu0
    %2569 = vdwg.mxu0
    %2570 = vrot.lane.b32.xlu0 %v2067, 112
    %v2571 = vpop.permute.xlu0 %2570
    %2572 = vrot.lane.b32.xlu0 %v2163, 112
    %v2573 = vpop.permute.xlu0 %2572
    %v2574 = vsel %vm487, %v2571, 0
    %v2576 = vsel %vm487, %v2573, 0
    %2578 = vmatprep.subr.mxu0 0.0
    %2579 = vmatpush1.xpose.msra.mxu0 %v2576
    %2580 = vmatprep.subr.mxu0 0.0
    %2581 = vmatpush1.xpose.msra.mxu0 0.0
    %2582 = vmatprep.subr.mxu0 0.0
    %2583 = vmatpush1.xpose.msra.mxu0 0.0
    %2584 = vmatprep.subr.mxu0 0.0
    %2585 = vmatpush1.xpose.msra.mxu0 0.0
    %2586 = vmatprep.subr.mxu0 0.0
    %2587 = vmatpush1.xpose.msra.mxu0 0.0
    %2588 = vmatprep.subr.mxu0 0.0
    %2589 = vmatpush1.xpose.msra.mxu0 0.0
    %2590 = vmatprep.subr.mxu0 0.0
    %2591 = vmatpush1.xpose.msra.mxu0 0.0
    %2592 = vmatprep.subr.mxu0 0.0
    %2593 = vmatpush1.xpose.msra.mxu0 0.0
    %2594 = vmatprep.subr.mxu0 0.0
    %2595 = vmatpush1.xpose.msra.mxu0 0.0
    %2596 = vmatprep.subr.mxu0 0.0
    %2597 = vmatpush1.xpose.msra.mxu0 0.0
    %2598 = vmatprep.subr.mxu0 0.0
    %2599 = vmatpush1.xpose.msra.mxu0 0.0
    %2600 = vmatprep.subr.mxu0 0.0
    %2601 = vmatpush1.xpose.msra.mxu0 0.0
    %2602 = vmatprep.subr.mxu0 0.0
    %2603 = vmatpush1.xpose.msra.mxu0 0.0
    %2604 = vmatprep.subr.mxu0 0.0
    %2605 = vmatpush1.xpose.msra.mxu0 0.0
    %2606 = vmatprep.subr.mxu0 0.0
    %2607 = vmatpush1.xpose.msra.mxu0 0.0
    %2608 = vmatprep.subr.mxu0 0.0
    %2609 = vmatpush1.xpose.msra.mxu0 0.0
    %2610 = vmatprep.subr.mxu0 0.0
    %2611 = vmatpush1.xpose.msra.mxu0 0.0
    %2612 = vmatprep.subr.mxu0 0.0
    %2613 = vmatpush1.xpose.msra.mxu0 0.0
    %2614 = vmatprep.subr.mxu0 0.0
    %2615 = vmatpush1.xpose.msra.mxu0 0.0
    %2616 = vmatprep.subr.mxu0 0.0
    %2617 = vmatpush1.xpose.msra.mxu0 0.0
    %2618 = vmatprep.subr.mxu0 0.0
    %2619 = vmatpush1.xpose.msra.mxu0 0.0
    %2620 = vmatprep.subr.mxu0 0.0
    %2621 = vmatpush1.xpose.msra.mxu0 0.0
    %2622 = vmatprep.subr.mxu0 0.0
    %2623 = vmatpush1.xpose.msra.mxu0 0.0
    %2624 = vmatprep.subr.mxu0 0.0
    %2625 = vmatpush1.xpose.msra.mxu0 0.0
    %2626 = vmatprep.subr.mxu0 0.0
    %2627 = vmatpush1.xpose.msra.mxu0 0.0
    %2628 = vmatprep.subr.mxu0 0.0
    %2629 = vmatpush1.xpose.msra.mxu0 0.0
    %2630 = vmatprep.subr.mxu0 0.0
    %2631 = vmatpush1.xpose.msra.mxu0 0.0
    %2632 = vmatprep.subr.mxu0 0.0
    %2633 = vmatpush1.xpose.msra.mxu0 0.0
    %2634 = vmatprep.subr.mxu0 0.0
    %2635 = vmatpush1.xpose.msra.mxu0 0.0
    %2636 = vmatprep.subr.mxu0 0.0
    %2637 = vmatpush1.xpose.msra.mxu0 0.0
    %2638 = vmatprep.subr.mxu0 0.0
    %2639 = vmatpush1.xpose.msra.mxu0 0.0
    %2640 = vmatprep.subr.mxu0 0.0
    %2641 = vmatpush1.xpose.msra.mxu0 0.0
    %2642 = vmatprep.mubr.f32.mxu0 0.0
    %2643 = vmatmul.mubr.f32.gmra.mrb[0].mxu0 %v2574
    %v2644 = vpop.f32.mrb[0].mxu0
    %v2645 = vadd.f32 0.0, %v2644
    %v2646 = vpop.f32.mrb[0].mxu0
    %2647 = vdwg.mxu0
    %v2648 = vsel %vm639, %v2567, -inf
    %2649 = vmax.xlane.f32.xlu0 %v2648
    %v2650 = vpop.xlane.xlu0 %2649
    %v2651 = vsel %vm639, %v2645, -inf
    %2652 = vmax.xlane.f32.xlu0 %v2651
    %v2653 = vpop.xlane.xlu0 %2652
    %v2654 = vsub.f32 %v2567, %v2650
    %v2655 = vsub.f32 %v2645, %v2653
    %v2656 = vmul.f32 %v2654, 1.442695
    %v2657 = vpow.pop %v2656
    %v2658 = vmul.f32 %v2655, 1.442695
    %v2659 = vpow.pop %v2658
    %v2660 = vsel %vm639, %v2657, 0.0
    %2661 = vadd.xlane.f32.xlu0 %v2660
    %v2662 = vpop.xlane.xlu0 %2661
    %v2663 = vsel %vm639, %v2659, 0.0
    %2664 = vadd.xlane.f32.xlu0 %v2663
    %v2665 = vpop.xlane.xlu0 %2664
    %v2666 = vrcp.pop %v2662
    %v2667 = vrcp.pop %v2665
    %v2668 = vmul.f32 %v2657, %v2666
    %v2669 = vmul.f32 %v2659, %v2667
    %2670 = vrot.lane.b32.xlu0 %v2158, 48
    %v2671 = vpop.permute.xlu0 %2670
    %v2674 = vsel %vm639, %v2668, 0
    %2676 = vmatprep.subr.mxu0 0.0
    %2677 = vmatpush1.msra.mxu0 %v2671
    %2678 = vmatprep.subr.mxu0 0.0
    %2679 = vmatpush1.msra.mxu0 0.0
    %2680 = vmatprep.subr.mxu0 0.0
    %2681 = vmatpush1.msra.mxu0 0.0
    %2682 = vmatprep.subr.mxu0 0.0
    %2683 = vmatpush1.msra.mxu0 0.0
    %2684 = vmatprep.subr.mxu0 0.0
    %2685 = vmatpush1.msra.mxu0 0.0
    %2686 = vmatprep.subr.mxu0 0.0
    %2687 = vmatpush1.msra.mxu0 0.0
    %2688 = vmatprep.subr.mxu0 0.0
    %2689 = vmatpush1.msra.mxu0 0.0
    %2690 = vmatprep.subr.mxu0 0.0
    %2691 = vmatpush1.msra.mxu0 0.0
    %2692 = vmatprep.subr.mxu0 0.0
    %2693 = vmatpush1.msra.mxu0 0.0
    %2694 = vmatprep.subr.mxu0 0.0
    %2695 = vmatpush1.msra.mxu0 0.0
    %2696 = vmatprep.subr.mxu0 0.0
    %2697 = vmatpush1.msra.mxu0 0.0
    %2698 = vmatprep.subr.mxu0 0.0
    %2699 = vmatpush1.msra.mxu0 0.0
    %2700 = vmatprep.subr.mxu0 0.0
    %2701 = vmatpush1.msra.mxu0 0.0
    %2702 = vmatprep.subr.mxu0 0.0
    %2703 = vmatpush1.msra.mxu0 0.0
    %2704 = vmatprep.subr.mxu0 0.0
    %2705 = vmatpush1.msra.mxu0 0.0
    %2706 = vmatprep.subr.mxu0 0.0
    %2707 = vmatpush1.msra.mxu0 0.0
    %2708 = vmatprep.subr.mxu0 0.0
    %2709 = vmatpush1.msra.mxu0 0.0
    %2710 = vmatprep.subr.mxu0 0.0
    %2711 = vmatpush1.msra.mxu0 0.0
    %2712 = vmatprep.subr.mxu0 0.0
    %2713 = vmatpush1.msra.mxu0 0.0
    %2714 = vmatprep.subr.mxu0 0.0
    %2715 = vmatpush1.msra.mxu0 0.0
    %2716 = vmatprep.subr.mxu0 0.0
    %2717 = vmatpush1.msra.mxu0 0.0
    %2718 = vmatprep.subr.mxu0 0.0
    %2719 = vmatpush1.msra.mxu0 0.0
    %2720 = vmatprep.subr.mxu0 0.0
    %2721 = vmatpush1.msra.mxu0 0.0
    %2722 = vmatprep.subr.mxu0 0.0
    %2723 = vmatpush1.msra.mxu0 0.0
    %2724 = vmatprep.subr.mxu0 0.0
    %2725 = vmatpush1.msra.mxu0 0.0
    %2726 = vmatprep.subr.mxu0 0.0
    %2727 = vmatpush1.msra.mxu0 0.0
    %2728 = vmatprep.subr.mxu0 0.0
    %2729 = vmatpush1.msra.mxu0 0.0
    %2730 = vmatprep.subr.mxu0 0.0
    %2731 = vmatpush1.msra.mxu0 0.0
    %2732 = vmatprep.subr.mxu0 0.0
    %2733 = vmatpush1.msra.mxu0 0.0
    %2734 = vmatprep.subr.mxu0 0.0
    %2735 = vmatpush1.msra.mxu0 0.0
    %2736 = vmatprep.subr.mxu0 0.0
    %2737 = vmatpush1.msra.mxu0 0.0
    %2738 = vmatprep.subr.mxu0 0.0
    %2739 = vmatpush1.msra.mxu0 0.0
    %2740 = vmatprep.mubr.f32.mxu0 0.0
    %2741 = vmatmul.mubr.f32.gmra.mrb[0].mxu0 %v2674
    %v2742 = vpop.f32.mrb[0].mxu0
    %v2743 = vadd.f32 0.0, %v2742
    %v2744 = vpop.f32.mrb[0].mxu0
    %2745 = vdwg.mxu0
    %2746 = vrot.lane.b32.xlu0 %v2163, 48
    %v2747 = vpop.permute.xlu0 %2746
    %v2750 = vsel %vm639, %v2669, 0
    %2752 = vmatprep.subr.mxu0 0.0
    %2753 = vmatpush1.msra.mxu0 %v2747
    %2754 = vmatprep.subr.mxu0 0.0
    %2755 = vmatpush1.msra.mxu0 0.0
    %2756 = vmatprep.subr.mxu0 0.0
    %2757 = vmatpush1.msra.mxu0 0.0
    %2758 = vmatprep.subr.mxu0 0.0
    %2759 = vmatpush1.msra.mxu0 0.0
    %2760 = vmatprep.subr.mxu0 0.0
    %2761 = vmatpush1.msra.mxu0 0.0
    %2762 = vmatprep.subr.mxu0 0.0
    %2763 = vmatpush1.msra.mxu0 0.0
    %2764 = vmatprep.subr.mxu0 0.0
    %2765 = vmatpush1.msra.mxu0 0.0
    %2766 = vmatprep.subr.mxu0 0.0
    %2767 = vmatpush1.msra.mxu0 0.0
    %2768 = vmatprep.subr.mxu0 0.0
    %2769 = vmatpush1.msra.mxu0 0.0
    %2770 = vmatprep.subr.mxu0 0.0
    %2771 = vmatpush1.msra.mxu0 0.0
    %2772 = vmatprep.subr.mxu0 0.0
    %2773 = vmatpush1.msra.mxu0 0.0
    %2774 = vmatprep.subr.mxu0 0.0
    %2775 = vmatpush1.msra.mxu0 0.0
    %2776 = vmatprep.subr.mxu0 0.0
    %2777 = vmatpush1.msra.mxu0 0.0
    %2778 = vmatprep.subr.mxu0 0.0
    %2779 = vmatpush1.msra.mxu0 0.0
    %2780 = vmatprep.subr.mxu0 0.0
    %2781 = vmatpush1.msra.mxu0 0.0
    %2782 = vmatprep.subr.mxu0 0.0
    %2783 = vmatpush1.msra.mxu0 0.0
    %2784 = vmatprep.subr.mxu0 0.0
    %2785 = vmatpush1.msra.mxu0 0.0
    %2786 = vmatprep.subr.mxu0 0.0
    %2787 = vmatpush1.msra.mxu0 0.0
    %2788 = vmatprep.subr.mxu0 0.0
    %2789 = vmatpush1.msra.mxu0 0.0
    %2790 = vmatprep.subr.mxu0 0.0
    %2791 = vmatpush1.msra.mxu0 0.0
    %2792 = vmatprep.subr.mxu0 0.0
    %2793 = vmatpush1.msra.mxu0 0.0
    %2794 = vmatprep.subr.mxu0 0.0
    %2795 = vmatpush1.msra.mxu0 0.0
    %2796 = vmatprep.subr.mxu0 0.0
    %2797 = vmatpush1.msra.mxu0 0.0
    %2798 = vmatprep.subr.mxu0 0.0
    %2799 = vmatpush1.msra.mxu0 0.0
    %2800 = vmatprep.subr.mxu0 0.0
    %2801 = vmatpush1.msra.mxu0 0.0
    %2802 = vmatprep.subr.mxu0 0.0
    %2803 = vmatpush1.msra.mxu0 0.0
    %2804 = vmatprep.subr.mxu0 0.0
    %2805 = vmatpush1.msra.mxu0 0.0
    %2806 = vmatprep.subr.mxu0 0.0
    %2807 = vmatpush1.msra.mxu0 0.0
    %2808 = vmatprep.subr.mxu0 0.0
    %2809 = vmatpush1.msra.mxu0 0.0
    %2810 = vmatprep.subr.mxu0 0.0
    %2811 = vmatpush1.msra.mxu0 0.0
    %2812 = vmatprep.subr.mxu0 0.0
    %2813 = vmatpush1.msra.mxu0 0.0
    %2814 = vmatprep.subr.mxu0 0.0
    %2815 = vmatpush1.msra.mxu0 0.0
    %2816 = vmatprep.mubr.f32.mxu0 0.0
    %2817 = vmatmul.mubr.f32.gmra.mrb[0].mxu0 %v2750
    %v2818 = vpop.f32.mrb[0].mxu0
    %v2819 = vadd.f32 0.0, %v2818
    %v2820 = vpop.f32.mrb[0].mxu0
    %2821 = vdwg.mxu0
    %2822 = vrot.lane.b32.xlu0 %v2062, 96
    %v2823 = vpop.permute.xlu0 %2822
    %2824 = vrot.lane.b32.xlu0 %v2158, 96
    %v2825 = vpop.permute.xlu0 %2824
    %v2826 = vsel %vm487, %v2823, 0
    %v2828 = vsel %vm487, %v2825, 0
    %2830 = vmatprep.subr.mxu0 0.0
    %2831 = vmatpush1.xpose.msra.mxu0 %v2828
    %2832 = vmatprep.subr.mxu0 0.0
    %2833 = vmatpush1.xpose.msra.mxu0 0.0
    %2834 = vmatprep.subr.mxu0 0.0
    %2835 = vmatpush1.xpose.msra.mxu0 0.0
    %2836 = vmatprep.subr.mxu0 0.0
    %2837 = vmatpush1.xpose.msra.mxu0 0.0
    %2838 = vmatprep.subr.mxu0 0.0
    %2839 = vmatpush1.xpose.msra.mxu0 0.0
    %2840 = vmatprep.subr.mxu0 0.0
    %2841 = vmatpush1.xpose.msra.mxu0 0.0
    %2842 = vmatprep.subr.mxu0 0.0
    %2843 = vmatpush1.xpose.msra.mxu0 0.0
    %2844 = vmatprep.subr.mxu0 0.0
    %2845 = vmatpush1.xpose.msra.mxu0 0.0
    %2846 = vmatprep.subr.mxu0 0.0
    %2847 = vmatpush1.xpose.msra.mxu0 0.0
    %2848 = vmatprep.subr.mxu0 0.0
    %2849 = vmatpush1.xpose.msra.mxu0 0.0
    %2850 = vmatprep.subr.mxu0 0.0
    %2851 = vmatpush1.xpose.msra.mxu0 0.0
    %2852 = vmatprep.subr.mxu0 0.0
    %2853 = vmatpush1.xpose.msra.mxu0 0.0
    %2854 = vmatprep.subr.mxu0 0.0
    %2855 = vmatpush1.xpose.msra.mxu0 0.0
    %2856 = vmatprep.subr.mxu0 0.0
    %2857 = vmatpush1.xpose.msra.mxu0 0.0
    %2858 = vmatprep.subr.mxu0 0.0
    %2859 = vmatpush1.xpose.msra.mxu0 0.0
    %2860 = vmatprep.subr.mxu0 0.0
    %2861 = vmatpush1.xpose.msra.mxu0 0.0
    %2862 = vmatprep.subr.mxu0 0.0
    %2863 = vmatpush1.xpose.msra.mxu0 0.0
    %2864 = vmatprep.subr.mxu0 0.0
    %2865 = vmatpush1.xpose.msra.mxu0 0.0
    %2866 = vmatprep.subr.mxu0 0.0
    %2867 = vmatpush1.xpose.msra.mxu0 0.0
    %2868 = vmatprep.subr.mxu0 0.0
    %2869 = vmatpush1.xpose.msra.mxu0 0.0
    %2870 = vmatprep.subr.mxu0 0.0
    %2871 = vmatpush1.xpose.msra.mxu0 0.0
    %2872 = vmatprep.subr.mxu0 0.0
    %2873 = vmatpush1.xpose.msra.mxu0 0.0
    %2874 = vmatprep.subr.mxu0 0.0
    %2875 = vmatpush1.xpose.msra.mxu0 0.0
    %2876 = vmatprep.subr.mxu0 0.0
    %2877 = vmatpush1.xpose.msra.mxu0 0.0
    %2878 = vmatprep.subr.mxu0 0.0
    %2879 = vmatpush1.xpose.msra.mxu0 0.0
    %2880 = vmatprep.subr.mxu0 0.0
    %2881 = vmatpush1.xpose.msra.mxu0 0.0
    %2882 = vmatprep.subr.mxu0 0.0
    %2883 = vmatpush1.xpose.msra.mxu0 0.0
    %2884 = vmatprep.subr.mxu0 0.0
    %2885 = vmatpush1.xpose.msra.mxu0 0.0
    %2886 = vmatprep.subr.mxu0 0.0
    %2887 = vmatpush1.xpose.msra.mxu0 0.0
    %2888 = vmatprep.subr.mxu0 0.0
    %2889 = vmatpush1.xpose.msra.mxu0 0.0
    %2890 = vmatprep.subr.mxu0 0.0
    %2891 = vmatpush1.xpose.msra.mxu0 0.0
    %2892 = vmatprep.subr.mxu0 0.0
    %2893 = vmatpush1.xpose.msra.mxu0 0.0
    %2894 = vmatprep.mubr.f32.mxu0 0.0
    %2895 = vmatmul.mubr.f32.gmra.mrb[0].mxu0 %v2826
    %v2896 = vpop.f32.mrb[0].mxu0
    %v2897 = vadd.f32 0.0, %v2896
    %v2898 = vpop.f32.mrb[0].mxu0
    %2899 = vdwg.mxu0
    %2900 = vrot.lane.b32.xlu0 %v2067, 96
    %v2901 = vpop.permute.xlu0 %2900
    %2902 = vrot.lane.b32.xlu0 %v2163, 96
    %v2903 = vpop.permute.xlu0 %2902
    %v2904 = vsel %vm487, %v2901, 0
    %v2906 = vsel %vm487, %v2903, 0
    %2908 = vmatprep.subr.mxu0 0.0
    %2909 = vmatpush1.xpose.msra.mxu0 %v2906
    %2910 = vmatprep.subr.mxu0 0.0
    %2911 = vmatpush1.xpose.msra.mxu0 0.0
    %2912 = vmatprep.subr.mxu0 0.0
    %2913 = vmatpush1.xpose.msra.mxu0 0.0
    %2914 = vmatprep.subr.mxu0 0.0
    %2915 = vmatpush1.xpose.msra.mxu0 0.0
    %2916 = vmatprep.subr.mxu0 0.0
    %2917 = vmatpush1.xpose.msra.mxu0 0.0
    %2918 = vmatprep.subr.mxu0 0.0
    %2919 = vmatpush1.xpose.msra.mxu0 0.0
    %2920 = vmatprep.subr.mxu0 0.0
    %2921 = vmatpush1.xpose.msra.mxu0 0.0
    %2922 = vmatprep.subr.mxu0 0.0
    %2923 = vmatpush1.xpose.msra.mxu0 0.0
    %2924 = vmatprep.subr.mxu0 0.0
    %2925 = vmatpush1.xpose.msra.mxu0 0.0
    %2926 = vmatprep.subr.mxu0 0.0
    %2927 = vmatpush1.xpose.msra.mxu0 0.0
    %2928 = vmatprep.subr.mxu0 0.0
    %2929 = vmatpush1.xpose.msra.mxu0 0.0
    %2930 = vmatprep.subr.mxu0 0.0
    %2931 = vmatpush1.xpose.msra.mxu0 0.0
    %2932 = vmatprep.subr.mxu0 0.0
    %2933 = vmatpush1.xpose.msra.mxu0 0.0
    %2934 = vmatprep.subr.mxu0 0.0
    %2935 = vmatpush1.xpose.msra.mxu0 0.0
    %2936 = vmatprep.subr.mxu0 0.0
    %2937 = vmatpush1.xpose.msra.mxu0 0.0
    %2938 = vmatprep.subr.mxu0 0.0
    %2939 = vmatpush1.xpose.msra.mxu0 0.0
    %2940 = vmatprep.subr.mxu0 0.0
    %2941 = vmatpush1.xpose.msra.mxu0 0.0
    %2942 = vmatprep.subr.mxu0 0.0
    %2943 = vmatpush1.xpose.msra.mxu0 0.0
    %2944 = vmatprep.subr.mxu0 0.0
    %2945 = vmatpush1.xpose.msra.mxu0 0.0
    %2946 = vmatprep.subr.mxu0 0.0
    %2947 = vmatpush1.xpose.msra.mxu0 0.0
    %2948 = vmatprep.subr.mxu0 0.0
    %2949 = vmatpush1.xpose.msra.mxu0 0.0
    %2950 = vmatprep.subr.mxu0 0.0
    %2951 = vmatpush1.xpose.msra.mxu0 0.0
    %2952 = vmatprep.subr.mxu0 0.0
    %2953 = vmatpush1.xpose.msra.mxu0 0.0
    %2954 = vmatprep.subr.mxu0 0.0
    %2955 = vmatpush1.xpose.msra.mxu0 0.0
    %2956 = vmatprep.subr.mxu0 0.0
    %2957 = vmatpush1.xpose.msra.mxu0 0.0
    %2958 = vmatprep.subr.mxu0 0.0
    %2959 = vmatpush1.xpose.msra.mxu0 0.0
    %2960 = vmatprep.subr.mxu0 0.0
    %2961 = vmatpush1.xpose.msra.mxu0 0.0
    %2962 = vmatprep.subr.mxu0 0.0
    %2963 = vmatpush1.xpose.msra.mxu0 0.0
    %2964 = vmatprep.subr.mxu0 0.0
    %2965 = vmatpush1.xpose.msra.mxu0 0.0
    %2966 = vmatprep.subr.mxu0 0.0
    %2967 = vmatpush1.xpose.msra.mxu0 0.0
    %2968 = vmatprep.subr.mxu0 0.0
    %2969 = vmatpush1.xpose.msra.mxu0 0.0
    %2970 = vmatprep.subr.mxu0 0.0
    %2971 = vmatpush1.xpose.msra.mxu0 0.0
    %2972 = vmatprep.mubr.f32.mxu0 0.0
    %2973 = vmatmul.mubr.f32.gmra.mrb[0].mxu0 %v2904
    %v2974 = vpop.f32.mrb[0].mxu0
    %v2975 = vadd.f32 0.0, %v2974
    %v2976 = vpop.f32.mrb[0].mxu0
    %2977 = vdwg.mxu0
    %v2978 = vsel %vm639, %v2897, -inf
    %2979 = vmax.xlane.f32.xlu0 %v2978
    %v2980 = vpop.xlane.xlu0 %2979
    %v2981 = vsel %vm639, %v2975, -inf
    %2982 = vmax.xlane.f32.xlu0 %v2981
    %v2983 = vpop.xlane.xlu0 %2982
    %v2984 = vsub.f32 %v2897, %v2980
    %v2985 = vsub.f32 %v2975, %v2983
    %v2986 = vmul.f32 %v2984, 1.442695
    %v2987 = vpow.pop %v2986
    %v2988 = vmul.f32 %v2985, 1.442695
    %v2989 = vpow.pop %v2988
    %v2990 = vsel %vm639, %v2987, 0.0
    %2991 = vadd.xlane.f32.xlu0 %v2990
    %v2992 = vpop.xlane.xlu0 %2991
    %v2993 = vsel %vm639, %v2989, 0.0
    %2994 = vadd.xlane.f32.xlu0 %v2993
    %v2995 = vpop.xlane.xlu0 %2994
    %v2996 = vrcp.pop %v2992
    %v2997 = vrcp.pop %v2995
    %v2998 = vmul.f32 %v2987, %v2996
    %v2999 = vmul.f32 %v2989, %v2997
    %3000 = vrot.lane.b32.xlu0 %v2158, 32
    %v3001 = vpop.permute.xlu0 %3000
    %v3004 = vsel %vm639, %v2998, 0
    %3006 = vmatprep.subr.mxu0 0.0
    %3007 = vmatpush1.msra.mxu0 %v3001
    %3008 = vmatprep.subr.mxu0 0.0
    %3009 = vmatpush1.msra.mxu0 0.0
    %3010 = vmatprep.subr.mxu0 0.0
    %3011 = vmatpush1.msra.mxu0 0.0
    %3012 = vmatprep.subr.mxu0 0.0
    %3013 = vmatpush1.msra.mxu0 0.0
    %3014 = vmatprep.subr.mxu0 0.0
    %3015 = vmatpush1.msra.mxu0 0.0
    %3016 = vmatprep.subr.mxu0 0.0
    %3017 = vmatpush1.msra.mxu0 0.0
    %3018 = vmatprep.subr.mxu0 0.0
    %3019 = vmatpush1.msra.mxu0 0.0
    %3020 = vmatprep.subr.mxu0 0.0
    %3021 = vmatpush1.msra.mxu0 0.0
    %3022 = vmatprep.subr.mxu0 0.0
    %3023 = vmatpush1.msra.mxu0 0.0
    %3024 = vmatprep.subr.mxu0 0.0
    %3025 = vmatpush1.msra.mxu0 0.0
    %3026 = vmatprep.subr.mxu0 0.0
    %3027 = vmatpush1.msra.mxu0 0.0
    %3028 = vmatprep.subr.mxu0 0.0
    %3029 = vmatpush1.msra.mxu0 0.0
    %3030 = vmatprep.subr.mxu0 0.0
    %3031 = vmatpush1.msra.mxu0 0.0
    %3032 = vmatprep.subr.mxu0 0.0
    %3033 = vmatpush1.msra.mxu0 0.0
    %3034 = vmatprep.subr.mxu0 0.0
    %3035 = vmatpush1.msra.mxu0 0.0
    %3036 = vmatprep.subr.mxu0 0.0
    %3037 = vmatpush1.msra.mxu0 0.0
    %3038 = vmatprep.subr.mxu0 0.0
    %3039 = vmatpush1.msra.mxu0 0.0
    %3040 = vmatprep.subr.mxu0 0.0
    %3041 = vmatpush1.msra.mxu0 0.0
    %3042 = vmatprep.subr.mxu0 0.0
    %3043 = vmatpush1.msra.mxu0 0.0
    %3044 = vmatprep.subr.mxu0 0.0
    %3045 = vmatpush1.msra.mxu0 0.0
    %3046 = vmatprep.subr.mxu0 0.0
    %3047 = vmatpush1.msra.mxu0 0.0
    %3048 = vmatprep.subr.mxu0 0.0
    %3049 = vmatpush1.msra.mxu0 0.0
    %3050 = vmatprep.subr.mxu0 0.0
    %3051 = vmatpush1.msra.mxu0 0.0
    %3052 = vmatprep.subr.mxu0 0.0
    %3053 = vmatpush1.msra.mxu0 0.0
    %3054 = vmatprep.subr.mxu0 0.0
    %3055 = vmatpush1.msra.mxu0 0.0
    %3056 = vmatprep.subr.mxu0 0.0
    %3057 = vmatpush1.msra.mxu0 0.0
    %3058 = vmatprep.subr.mxu0 0.0
    %3059 = vmatpush1.msra.mxu0 0.0
    %3060 = vmatprep.subr.mxu0 0.0
    %3061 = vmatpush1.msra.mxu0 0.0
    %3062 = vmatprep.subr.mxu0 0.0
    %3063 = vmatpush1.msra.mxu0 0.0
    %3064 = vmatprep.subr.mxu0 0.0
    %3065 = vmatpush1.msra.mxu0 0.0
    %3066 = vmatprep.subr.mxu0 0.0
    %3067 = vmatpush1.msra.mxu0 0.0
    %3068 = vmatprep.subr.mxu0 0.0
    %3069 = vmatpush1.msra.mxu0 0.0
    %3070 = vmatprep.mubr.f32.mxu0 0.0
    %3071 = vmatmul.mubr.f32.gmra.mrb[0].mxu0 %v3004
    %v3072 = vpop.f32.mrb[0].mxu0
    %v3073 = vadd.f32 0.0, %v3072
    %v3074 = vpop.f32.mrb[0].mxu0
    %3075 = vdwg.mxu0
    %3076 = vrot.lane.b32.xlu0 %v2163, 32
    %v3077 = vpop.permute.xlu0 %3076
    %v3080 = vsel %vm639, %v2999, 0
    %3082 = vmatprep.subr.mxu0 0.0
    %3083 = vmatpush1.msra.mxu0 %v3077
    %3084 = vmatprep.subr.mxu0 0.0
    %3085 = vmatpush1.msra.mxu0 0.0
    %3086 = vmatprep.subr.mxu0 0.0
    %3087 = vmatpush1.msra.mxu0 0.0
    %3088 = vmatprep.subr.mxu0 0.0
    %3089 = vmatpush1.msra.mxu0 0.0
    %3090 = vmatprep.subr.mxu0 0.0
    %3091 = vmatpush1.msra.mxu0 0.0
    %3092 = vmatprep.subr.mxu0 0.0
    %3093 = vmatpush1.msra.mxu0 0.0
    %3094 = vmatprep.subr.mxu0 0.0
    %3095 = vmatpush1.msra.mxu0 0.0
    %3096 = vmatprep.subr.mxu0 0.0
    %3097 = vmatpush1.msra.mxu0 0.0
    %3098 = vmatprep.subr.mxu0 0.0
    %3099 = vmatpush1.msra.mxu0 0.0
    %3100 = vmatprep.subr.mxu0 0.0
    %3101 = vmatpush1.msra.mxu0 0.0
    %3102 = vmatprep.subr.mxu0 0.0
    %3103 = vmatpush1.msra.mxu0 0.0
    %3104 = vmatprep.subr.mxu0 0.0
    %3105 = vmatpush1.msra.mxu0 0.0
    %3106 = vmatprep.subr.mxu0 0.0
    %3107 = vmatpush1.msra.mxu0 0.0
    %3108 = vmatprep.subr.mxu0 0.0
    %3109 = vmatpush1.msra.mxu0 0.0
    %3110 = vmatprep.subr.mxu0 0.0
    %3111 = vmatpush1.msra.mxu0 0.0
    %3112 = vmatprep.subr.mxu0 0.0
    %3113 = vmatpush1.msra.mxu0 0.0
    %3114 = vmatprep.subr.mxu0 0.0
    %3115 = vmatpush1.msra.mxu0 0.0
    %3116 = vmatprep.subr.mxu0 0.0
    %3117 = vmatpush1.msra.mxu0 0.0
    %3118 = vmatprep.subr.mxu0 0.0
    %3119 = vmatpush1.msra.mxu0 0.0
    %3120 = vmatprep.subr.mxu0 0.0
    %3121 = vmatpush1.msra.mxu0 0.0
    %3122 = vmatprep.subr.mxu0 0.0
    %3123 = vmatpush1.msra.mxu0 0.0
    %3124 = vmatprep.subr.mxu0 0.0
    %3125 = vmatpush1.msra.mxu0 0.0
    %3126 = vmatprep.subr.mxu0 0.0
    %3127 = vmatpush1.msra.mxu0 0.0
    %3128 = vmatprep.subr.mxu0 0.0
    %3129 = vmatpush1.msra.mxu0 0.0
    %3130 = vmatprep.subr.mxu0 0.0
    %3131 = vmatpush1.msra.mxu0 0.0
    %3132 = vmatprep.subr.mxu0 0.0
    %3133 = vmatpush1.msra.mxu0 0.0
    %3134 = vmatprep.subr.mxu0 0.0
    %3135 = vmatpush1.msra.mxu0 0.0
    %3136 = vmatprep.subr.mxu0 0.0
    %3137 = vmatpush1.msra.mxu0 0.0
    %3138 = vmatprep.subr.mxu0 0.0
    %3139 = vmatpush1.msra.mxu0 0.0
    %3140 = vmatprep.subr.mxu0 0.0
    %3141 = vmatpush1.msra.mxu0 0.0
    %3142 = vmatprep.subr.mxu0 0.0
    %3143 = vmatpush1.msra.mxu0 0.0
    %3144 = vmatprep.subr.mxu0 0.0
    %3145 = vmatpush1.msra.mxu0 0.0
    %3146 = vmatprep.mubr.f32.mxu0 0.0
    %3147 = vmatmul.mubr.f32.gmra.mrb[0].mxu0 %v3080
    %v3148 = vpop.f32.mrb[0].mxu0
    %v3149 = vadd.f32 0.0, %v3148
    %v3150 = vpop.f32.mrb[0].mxu0
    %3151 = vdwg.mxu0
    %3152 = vrot.lane.b32.xlu0 %v2062, 80
    %v3153 = vpop.permute.xlu0 %3152
    %3154 = vrot.lane.b32.xlu0 %v2158, 80
    %v3155 = vpop.permute.xlu0 %3154
    %v3156 = vsel %vm487, %v3153, 0
    %v3158 = vsel %vm487, %v3155, 0
    %3160 = vmatprep.subr.mxu0 0.0
    %3161 = vmatpush1.xpose.msra.mxu0 %v3158
    %3162 = vmatprep.subr.mxu0 0.0
    %3163 = vmatpush1.xpose.msra.mxu0 0.0
    %3164 = vmatprep.subr.mxu0 0.0
    %3165 = vmatpush1.xpose.msra.mxu0 0.0
    %3166 = vmatprep.subr.mxu0 0.0
    %3167 = vmatpush1.xpose.msra.mxu0 0.0
    %3168 = vmatprep.subr.mxu0 0.0
    %3169 = vmatpush1.xpose.msra.mxu0 0.0
    %3170 = vmatprep.subr.mxu0 0.0
    %3171 = vmatpush1.xpose.msra.mxu0 0.0
    %3172 = vmatprep.subr.mxu0 0.0
    %3173 = vmatpush1.xpose.msra.mxu0 0.0
    %3174 = vmatprep.subr.mxu0 0.0
    %3175 = vmatpush1.xpose.msra.mxu0 0.0
    %3176 = vmatprep.subr.mxu0 0.0
    %3177 = vmatpush1.xpose.msra.mxu0 0.0
    %3178 = vmatprep.subr.mxu0 0.0
    %3179 = vmatpush1.xpose.msra.mxu0 0.0
    %3180 = vmatprep.subr.mxu0 0.0
    %3181 = vmatpush1.xpose.msra.mxu0 0.0
    %3182 = vmatprep.subr.mxu0 0.0
    %3183 = vmatpush1.xpose.msra.mxu0 0.0
    %3184 = vmatprep.subr.mxu0 0.0
    %3185 = vmatpush1.xpose.msra.mxu0 0.0
    %3186 = vmatprep.subr.mxu0 0.0
    %3187 = vmatpush1.xpose.msra.mxu0 0.0
    %3188 = vmatprep.subr.mxu0 0.0
    %3189 = vmatpush1.xpose.msra.mxu0 0.0
    %3190 = vmatprep.subr.mxu0 0.0
    %3191 = vmatpush1.xpose.msra.mxu0 0.0
    %3192 = vmatprep.subr.mxu0 0.0
    %3193 = vmatpush1.xpose.msra.mxu0 0.0
    %3194 = vmatprep.subr.mxu0 0.0
    %3195 = vmatpush1.xpose.msra.mxu0 0.0
    %3196 = vmatprep.subr.mxu0 0.0
    %3197 = vmatpush1.xpose.msra.mxu0 0.0
    %3198 = vmatprep.subr.mxu0 0.0
    %3199 = vmatpush1.xpose.msra.mxu0 0.0
    %3200 = vmatprep.subr.mxu0 0.0
    %3201 = vmatpush1.xpose.msra.mxu0 0.0
    %3202 = vmatprep.subr.mxu0 0.0
    %3203 = vmatpush1.xpose.msra.mxu0 0.0
    %3204 = vmatprep.subr.mxu0 0.0
    %3205 = vmatpush1.xpose.msra.mxu0 0.0
    %3206 = vmatprep.subr.mxu0 0.0
    %3207 = vmatpush1.xpose.msra.mxu0 0.0
    %3208 = vmatprep.subr.mxu0 0.0
    %3209 = vmatpush1.xpose.msra.mxu0 0.0
    %3210 = vmatprep.subr.mxu0 0.0
    %3211 = vmatpush1.xpose.msra.mxu0 0.0
    %3212 = vmatprep.subr.mxu0 0.0
    %3213 = vmatpush1.xpose.msra.mxu0 0.0
    %3214 = vmatprep.subr.mxu0 0.0
    %3215 = vmatpush1.xpose.msra.mxu0 0.0
    %3216 = vmatprep.subr.mxu0 0.0
    %3217 = vmatpush1.xpose.msra.mxu0 0.0
    %3218 = vmatprep.subr.mxu0 0.0
    %3219 = vmatpush1.xpose.msra.mxu0 0.0
    %3220 = vmatprep.subr.mxu0 0.0
    %3221 = vmatpush1.xpose.msra.mxu0 0.0
    %3222 = vmatprep.subr.mxu0 0.0
    %3223 = vmatpush1.xpose.msra.mxu0 0.0
    %3224 = vmatprep.mubr.f32.mxu0 0.0
    %3225 = vmatmul.mubr.f32.gmra.mrb[0].mxu0 %v3156
    %v3226 = vpop.f32.mrb[0].mxu0
    %v3227 = vadd.f32 0.0, %v3226
    %v3228 = vpop.f32.mrb[0].mxu0
    %3229 = vdwg.mxu0
    %3230 = vrot.lane.b32.xlu0 %v2067, 80
    %v3231 = vpop.permute.xlu0 %3230
    %3232 = vrot.lane.b32.xlu0 %v2163, 80
    %v3233 = vpop.permute.xlu0 %3232
    %v3234 = vsel %vm487, %v3231, 0
    %v3236 = vsel %vm487, %v3233, 0
    %3238 = vmatprep.subr.mxu0 0.0
    %3239 = vmatpush1.xpose.msra.mxu0 %v3236
    %3240 = vmatprep.subr.mxu0 0.0
    %3241 = vmatpush1.xpose.msra.mxu0 0.0
    %3242 = vmatprep.subr.mxu0 0.0
    %3243 = vmatpush1.xpose.msra.mxu0 0.0
    %3244 = vmatprep.subr.mxu0 0.0
    %3245 = vmatpush1.xpose.msra.mxu0 0.0
    %3246 = vmatprep.subr.mxu0 0.0
    %3247 = vmatpush1.xpose.msra.mxu0 0.0
    %3248 = vmatprep.subr.mxu0 0.0
    %3249 = vmatpush1.xpose.msra.mxu0 0.0
    %3250 = vmatprep.subr.mxu0 0.0
    %3251 = vmatpush1.xpose.msra.mxu0 0.0
    %3252 = vmatprep.subr.mxu0 0.0
    %3253 = vmatpush1.xpose.msra.mxu0 0.0
    %3254 = vmatprep.subr.mxu0 0.0
    %3255 = vmatpush1.xpose.msra.mxu0 0.0
    %3256 = vmatprep.subr.mxu0 0.0
    %3257 = vmatpush1.xpose.msra.mxu0 0.0
    %3258 = vmatprep.subr.mxu0 0.0
    %3259 = vmatpush1.xpose.msra.mxu0 0.0
    %3260 = vmatprep.subr.mxu0 0.0
    %3261 = vmatpush1.xpose.msra.mxu0 0.0
    %3262 = vmatprep.subr.mxu0 0.0
    %3263 = vmatpush1.xpose.msra.mxu0 0.0
    %3264 = vmatprep.subr.mxu0 0.0
    %3265 = vmatpush1.xpose.msra.mxu0 0.0
    %3266 = vmatprep.subr.mxu0 0.0
    %3267 = vmatpush1.xpose.msra.mxu0 0.0
    %3268 = vmatprep.subr.mxu0 0.0
    %3269 = vmatpush1.xpose.msra.mxu0 0.0
    %3270 = vmatprep.subr.mxu0 0.0
    %3271 = vmatpush1.xpose.msra.mxu0 0.0
    %3272 = vmatprep.subr.mxu0 0.0
    %3273 = vmatpush1.xpose.msra.mxu0 0.0
    %3274 = vmatprep.subr.mxu0 0.0
    %3275 = vmatpush1.xpose.msra.mxu0 0.0
    %3276 = vmatprep.subr.mxu0 0.0
    %3277 = vmatpush1.xpose.msra.mxu0 0.0
    %3278 = vmatprep.subr.mxu0 0.0
    %3279 = vmatpush1.xpose.msra.mxu0 0.0
    %3280 = vmatprep.subr.mxu0 0.0
    %3281 = vmatpush1.xpose.msra.mxu0 0.0
    %3282 = vmatprep.subr.mxu0 0.0
    %3283 = vmatpush1.xpose.msra.mxu0 0.0
    %3284 = vmatprep.subr.mxu0 0.0
    %3285 = vmatpush1.xpose.msra.mxu0 0.0
    %3286 = vmatprep.subr.mxu0 0.0
    %3287 = vmatpush1.xpose.msra.mxu0 0.0
    %3288 = vmatprep.subr.mxu0 0.0
    %3289 = vmatpush1.xpose.msra.mxu0 0.0
    %3290 = vmatprep.subr.mxu0 0.0
    %3291 = vmatpush1.xpose.msra.mxu0 0.0
    %3292 = vmatprep.subr.mxu0 0.0
    %3293 = vmatpush1.xpose.msra.mxu0 0.0
    %3294 = vmatprep.subr.mxu0 0.0
    %3295 = vmatpush1.xpose.msra.mxu0 0.0
    %3296 = vmatprep.subr.mxu0 0.0
    %3297 = vmatpush1.xpose.msra.mxu0 0.0
    %3298 = vmatprep.subr.mxu0 0.0
    %3299 = vmatpush1.xpose.msra.mxu0 0.0
    %3300 = vmatprep.subr.mxu0 0.0
    %3301 = vmatpush1.xpose.msra.mxu0 0.0
    %3302 = vmatprep.mubr.f32.mxu0 0.0
    %3303 = vmatmul.mubr.f32.gmra.mrb[0].mxu0 %v3234
    %v3304 = vpop.f32.mrb[0].mxu0
    %v3305 = vadd.f32 0.0, %v3304
    %v3306 = vpop.f32.mrb[0].mxu0
    %3307 = vdwg.mxu0
    %v3308 = vsel %vm639, %v3227, -inf
    %3309 = vmax.xlane.f32.xlu0 %v3308
    %v3310 = vpop.xlane.xlu0 %3309
    %v3311 = vsel %vm639, %v3305, -inf
    %3312 = vmax.xlane.f32.xlu0 %v3311
    %v3313 = vpop.xlane.xlu0 %3312
    %v3314 = vsub.f32 %v3227, %v3310
    %v3315 = vsub.f32 %v3305, %v3313
    %v3316 = vmul.f32 %v3314, 1.442695
    %v3317 = vpow.pop %v3316
    %v3318 = vmul.f32 %v3315, 1.442695
    %v3319 = vpow.pop %v3318
    %v3320 = vsel %vm639, %v3317, 0.0
    %3321 = vadd.xlane.f32.xlu0 %v3320
    %v3322 = vpop.xlane.xlu0 %3321
    %v3323 = vsel %vm639, %v3319, 0.0
    %3324 = vadd.xlane.f32.xlu0 %v3323
    %v3325 = vpop.xlane.xlu0 %3324
    %v3326 = vrcp.pop %v3322
    %v3327 = vrcp.pop %v3325
    %v3328 = vmul.f32 %v3317, %v3326
    %v3329 = vmul.f32 %v3319, %v3327
    %3330 = vrot.lane.b32.xlu0 %v2158, 16
    %v3331 = vpop.permute.xlu0 %3330
    %v3334 = vsel %vm639, %v3328, 0
    %3336 = vmatprep.subr.mxu0 0.0
    %3337 = vmatpush1.msra.mxu0 %v3331
    %3338 = vmatprep.subr.mxu0 0.0
    %3339 = vmatpush1.msra.mxu0 0.0
    %3340 = vmatprep.subr.mxu0 0.0
    %3341 = vmatpush1.msra.mxu0 0.0
    %3342 = vmatprep.subr.mxu0 0.0
    %3343 = vmatpush1.msra.mxu0 0.0
    %3344 = vmatprep.subr.mxu0 0.0
    %3345 = vmatpush1.msra.mxu0 0.0
    %3346 = vmatprep.subr.mxu0 0.0
    %3347 = vmatpush1.msra.mxu0 0.0
    %3348 = vmatprep.subr.mxu0 0.0
    %3349 = vmatpush1.msra.mxu0 0.0
    %3350 = vmatprep.subr.mxu0 0.0
    %3351 = vmatpush1.msra.mxu0 0.0
    %3352 = vmatprep.subr.mxu0 0.0
    %3353 = vmatpush1.msra.mxu0 0.0
    %3354 = vmatprep.subr.mxu0 0.0
    %3355 = vmatpush1.msra.mxu0 0.0
    %3356 = vmatprep.subr.mxu0 0.0
    %3357 = vmatpush1.msra.mxu0 0.0
    %3358 = vmatprep.subr.mxu0 0.0
    %3359 = vmatpush1.msra.mxu0 0.0
    %3360 = vmatprep.subr.mxu0 0.0
    %3361 = vmatpush1.msra.mxu0 0.0
    %3362 = vmatprep.subr.mxu0 0.0
    %3363 = vmatpush1.msra.mxu0 0.0
    %3364 = vmatprep.subr.mxu0 0.0
    %3365 = vmatpush1.msra.mxu0 0.0
    %3366 = vmatprep.subr.mxu0 0.0
    %3367 = vmatpush1.msra.mxu0 0.0
    %3368 = vmatprep.subr.mxu0 0.0
    %3369 = vmatpush1.msra.mxu0 0.0
    %3370 = vmatprep.subr.mxu0 0.0
    %3371 = vmatpush1.msra.mxu0 0.0
    %3372 = vmatprep.subr.mxu0 0.0
    %3373 = vmatpush1.msra.mxu0 0.0
    %3374 = vmatprep.subr.mxu0 0.0
    %3375 = vmatpush1.msra.mxu0 0.0
    %3376 = vmatprep.subr.mxu0 0.0
    %3377 = vmatpush1.msra.mxu0 0.0
    %3378 = vmatprep.subr.mxu0 0.0
    %3379 = vmatpush1.msra.mxu0 0.0
    %3380 = vmatprep.subr.mxu0 0.0
    %3381 = vmatpush1.msra.mxu0 0.0
    %3382 = vmatprep.subr.mxu0 0.0
    %3383 = vmatpush1.msra.mxu0 0.0
    %3384 = vmatprep.subr.mxu0 0.0
    %3385 = vmatpush1.msra.mxu0 0.0
    %3386 = vmatprep.subr.mxu0 0.0
    %3387 = vmatpush1.msra.mxu0 0.0
    %3388 = vmatprep.subr.mxu0 0.0
    %3389 = vmatpush1.msra.mxu0 0.0
    %3390 = vmatprep.subr.mxu0 0.0
    %3391 = vmatpush1.msra.mxu0 0.0
    %3392 = vmatprep.subr.mxu0 0.0
    %3393 = vmatpush1.msra.mxu0 0.0
    %3394 = vmatprep.subr.mxu0 0.0
    %3395 = vmatpush1.msra.mxu0 0.0
    %3396 = vmatprep.subr.mxu0 0.0
    %3397 = vmatpush1.msra.mxu0 0.0
    %3398 = vmatprep.subr.mxu0 0.0
    %3399 = vmatpush1.msra.mxu0 0.0
    %3400 = vmatprep.mubr.f32.mxu0 0.0
    %3401 = vmatmul.mubr.f32.gmra.mrb[0].mxu0 %v3334
    %v3402 = vpop.f32.mrb[0].mxu0
    %v3403 = vadd.f32 0.0, %v3402
    %v3404 = vpop.f32.mrb[0].mxu0
    %3405 = vdwg.mxu0
    %3406 = vrot.lane.b32.xlu0 %v2163, 16
    %v3407 = vpop.permute.xlu0 %3406
    %v3410 = vsel %vm639, %v3329, 0
    %3412 = vmatprep.subr.mxu0 0.0
    %3413 = vmatpush1.msra.mxu0 %v3407
    %3414 = vmatprep.subr.mxu0 0.0
    %3415 = vmatpush1.msra.mxu0 0.0
    %3416 = vmatprep.subr.mxu0 0.0
    %3417 = vmatpush1.msra.mxu0 0.0
    %3418 = vmatprep.subr.mxu0 0.0
    %3419 = vmatpush1.msra.mxu0 0.0
    %3420 = vmatprep.subr.mxu0 0.0
    %3421 = vmatpush1.msra.mxu0 0.0
    %3422 = vmatprep.subr.mxu0 0.0
    %3423 = vmatpush1.msra.mxu0 0.0
    %3424 = vmatprep.subr.mxu0 0.0
    %3425 = vmatpush1.msra.mxu0 0.0
    %3426 = vmatprep.subr.mxu0 0.0
    %3427 = vmatpush1.msra.mxu0 0.0
    %3428 = vmatprep.subr.mxu0 0.0
    %3429 = vmatpush1.msra.mxu0 0.0
    %3430 = vmatprep.subr.mxu0 0.0
    %3431 = vmatpush1.msra.mxu0 0.0
    %3432 = vmatprep.subr.mxu0 0.0
    %3433 = vmatpush1.msra.mxu0 0.0
    %3434 = vmatprep.subr.mxu0 0.0
    %3435 = vmatpush1.msra.mxu0 0.0
    %3436 = vmatprep.subr.mxu0 0.0
    %3437 = vmatpush1.msra.mxu0 0.0
    %3438 = vmatprep.subr.mxu0 0.0
    %3439 = vmatpush1.msra.mxu0 0.0
    %3440 = vmatprep.subr.mxu0 0.0
    %3441 = vmatpush1.msra.mxu0 0.0
    %3442 = vmatprep.subr.mxu0 0.0
    %3443 = vmatpush1.msra.mxu0 0.0
    %3444 = vmatprep.subr.mxu0 0.0
    %3445 = vmatpush1.msra.mxu0 0.0
    %3446 = vmatprep.subr.mxu0 0.0
    %3447 = vmatpush1.msra.mxu0 0.0
    %3448 = vmatprep.subr.mxu0 0.0
    %3449 = vmatpush1.msra.mxu0 0.0
    %3450 = vmatprep.subr.mxu0 0.0
    %3451 = vmatpush1.msra.mxu0 0.0
    %3452 = vmatprep.subr.mxu0 0.0
    %3453 = vmatpush1.msra.mxu0 0.0
    %3454 = vmatprep.subr.mxu0 0.0
    %3455 = vmatpush1.msra.mxu0 0.0
    %3456 = vmatprep.subr.mxu0 0.0
    %3457 = vmatpush1.msra.mxu0 0.0
    %3458 = vmatprep.subr.mxu0 0.0
    %3459 = vmatpush1.msra.mxu0 0.0
    %3460 = vmatprep.subr.mxu0 0.0
    %3461 = vmatpush1.msra.mxu0 0.0
    %3462 = vmatprep.subr.mxu0 0.0
    %3463 = vmatpush1.msra.mxu0 0.0
    %3464 = vmatprep.subr.mxu0 0.0
    %3465 = vmatpush1.msra.mxu0 0.0
    %3466 = vmatprep.subr.mxu0 0.0
    %3467 = vmatpush1.msra.mxu0 0.0
    %3468 = vmatprep.subr.mxu0 0.0
    %3469 = vmatpush1.msra.mxu0 0.0
    %3470 = vmatprep.subr.mxu0 0.0
    %3471 = vmatpush1.msra.mxu0 0.0
    %3472 = vmatprep.subr.mxu0 0.0
    %3473 = vmatpush1.msra.mxu0 0.0
    %3474 = vmatprep.subr.mxu0 0.0
    %3475 = vmatpush1.msra.mxu0 0.0
    %3476 = vmatprep.mubr.f32.mxu0 0.0
    %3477 = vmatmul.mubr.f32.gmra.mrb[0].mxu0 %v3410
    %v3478 = vpop.f32.mrb[0].mxu0
    %v3479 = vadd.f32 0.0, %v3478
    %v3480 = vpop.f32.mrb[0].mxu0
    %3481 = vdwg.mxu0
    %3484 = vrot.lane.b32.xlu0 %v2743, 16
    %v3485 = vpop.permute.xlu0 %3484
    %3486 = vrot.lane.b32.xlu0 %v2819, 16
    %v3487 = vpop.permute.xlu0 %3486
    %3492 = vrot.lane.b32.xlu0 %v3073, 32
    %v3493 = vpop.permute.xlu0 %3492
    %3494 = vrot.lane.b32.xlu0 %v3149, 32
    %v3495 = vpop.permute.xlu0 %3494
    %3500 = vrot.lane.b32.xlu0 %v3403, 48
    %v3501 = vpop.permute.xlu0 %3500
    %3502 = vrot.lane.b32.xlu0 %v3479, 48
    %v3503 = vpop.permute.xlu0 %3502
    %v3506 = vsel %vm487, %v2413, %v3485
    %v3507 = vsel %vm487, %v2489, %v3487
    %v3508 = vsel %vm357, %v3506, %v3493
    %v3509 = vsel %vm357, %v3507, %v3495
    %v3510 = vsel %vm1828, %v3508, %v3501
    %v3511 = vsel %vm1828, %v3509, %v3503
    %v3512 = vld [vmem:[%s15] sm:$0xff]
    %v3513 = vld [vmem:[%s15 + $0x8] sm:$0xff]
    %v3514 = vld [vmem:[%s15 + $0x10] sm:$0xff]
    %v3515 = vld [vmem:[%s15 + $0x18] sm:$0xff]
    %v3516 = vld [vmem:[%s15 + $0x20] sm:$0xff]
    %v3517 = vld [vmem:[%s15 + $0x28] sm:$0xff]
    %v3518 = vld [vmem:[%s15 + $0x30] sm:$0xff]
    %v3519 = vld [vmem:[%s15 + $0x38] sm:$0xff]
    %v3520 = vld [vmem:[%s16] sm:$0x1]
    %v3522 = vlaneseq
    %v3523 = vshrl.u32 %v3522, 7
    %v3524 = vsub.s32 0, %v3523
    %v3525 = vrot.slane %v3520, %v3524
    %v3528 = vsel %vm400, %v3510, 0
    %v3531 = vsel %vm400, %v3511, 0
    %3533 = vmatprep.subr.mxu0 0.0
    %3534 = vmatpush1.msra.mxu0 %v3512
    %3535 = vmatprep.subr.mxu0 0.0
    %3536 = vmatpush1.msra.mxu0 %v3513
    %3537 = vmatprep.subr.mxu0 0.0
    %3538 = vmatpush1.msra.mxu0 %v3514
    %3539 = vmatprep.subr.mxu0 0.0
    %3540 = vmatpush1.msra.mxu0 %v3515
    %3541 = vmatprep.subr.mxu0 0.0
    %3542 = vmatpush1.msra.mxu0 %v3516
    %3543 = vmatprep.subr.mxu0 0.0
    %3544 = vmatpush1.msra.mxu0 %v3517
    %3545 = vmatprep.subr.mxu0 0.0
    %3546 = vmatpush1.msra.mxu0 %v3518
    %3547 = vmatprep.subr.mxu0 0.0
    %3548 = vmatpush1.msra.mxu0 %v3519
    %3549 = vmatprep.subr.mxu0 0.0
    %3550 = vmatpush1.msra.mxu0 0.0
    %3551 = vmatprep.subr.mxu0 0.0
    %3552 = vmatpush1.msra.mxu0 0.0
    %3553 = vmatprep.subr.mxu0 0.0
    %3554 = vmatpush1.msra.mxu0 0.0
    %3555 = vmatprep.subr.mxu0 0.0
    %3556 = vmatpush1.msra.mxu0 0.0
    %3557 = vmatprep.subr.mxu0 0.0
    %3558 = vmatpush1.msra.mxu0 0.0
    %3559 = vmatprep.subr.mxu0 0.0
    %3560 = vmatpush1.msra.mxu0 0.0
    %3561 = vmatprep.subr.mxu0 0.0
    %3562 = vmatpush1.msra.mxu0 0.0
    %3563 = vmatprep.subr.mxu0 0.0
    %3564 = vmatpush1.msra.mxu0 0.0
    %3565 = vmatprep.subr.mxu0 0.0
    %3566 = vmatpush1.msra.mxu0 0.0
    %3567 = vmatprep.subr.mxu0 0.0
    %3568 = vmatpush1.msra.mxu0 0.0
    %3569 = vmatprep.subr.mxu0 0.0
    %3570 = vmatpush1.msra.mxu0 0.0
    %3571 = vmatprep.subr.mxu0 0.0
    %3572 = vmatpush1.msra.mxu0 0.0
    %3573 = vmatprep.subr.mxu0 0.0
    %3574 = vmatpush1.msra.mxu0 0.0
    %3575 = vmatprep.subr.mxu0 0.0
    %3576 = vmatpush1.msra.mxu0 0.0
    %3577 = vmatprep.subr.mxu0 0.0
    %3578 = vmatpush1.msra.mxu0 0.0
    %3579 = vmatprep.subr.mxu0 0.0
    %3580 = vmatpush1.msra.mxu0 0.0
    %3581 = vmatprep.subr.mxu0 0.0
    %3582 = vmatpush1.msra.mxu0 0.0
    %3583 = vmatprep.subr.mxu0 0.0
    %3584 = vmatpush1.msra.mxu0 0.0
    %3585 = vmatprep.subr.mxu0 0.0
    %3586 = vmatpush1.msra.mxu0 0.0
    %3587 = vmatprep.subr.mxu0 0.0
    %3588 = vmatpush1.msra.mxu0 0.0
    %3589 = vmatprep.subr.mxu0 0.0
    %3590 = vmatpush1.msra.mxu0 0.0
    %3591 = vmatprep.subr.mxu0 0.0
    %3592 = vmatpush1.msra.mxu0 0.0
    %3593 = vmatprep.subr.mxu0 0.0
    %3594 = vmatpush1.msra.mxu0 0.0
    %3595 = vmatprep.subr.mxu0 0.0
    %3596 = vmatpush1.msra.mxu0 0.0
    %3597 = vmatprep.mubr.f32.mxu0 0.0
    %3598 = vmatmul.mubr.f32.gmra.mrb[0].mxu0 %v3528
    %v3599 = vpop.f32.mrb[0].mxu0
    %v3600 = vadd.f32 %v3525, %v3599
    %v3601 = vpop.f32.mrb[0].mxu0
    %3602 = vmatprep.mubr.f32.mxu0 0.0
    %3603 = vmatmul.mubr.f32.gmra.mrb[0].mxu0 %v3531
    %v3604 = vpop.f32.mrb[0].mxu0
    %v3605 = vadd.f32 %v3525, %v3604
    %v3606 = vpop.f32.mrb[0].mxu0
    %3607 = vdwg.mxu0
    %v3608 = vadd.f32 %v1972, %v3600
    %v3609 = vadd.f32 %v1973, %v3605
    %v3610 = vld [vmem:[%s17] sm:$0x1]
    %v3611 = vld [vmem:[%s18] sm:$0x1]
    %v3612 = vsel %vm400, %v3608, 0.0
    %3613 = vadd.xlane.f32.xlu0 %v3612
    %v3614 = vpop.xlane.xlu0 %3613
    %v3615 = vsel %vm400, %v3609, 0.0
    %3616 = vadd.xlane.f32.xlu0 %v3615
    %v3617 = vpop.xlane.xlu0 %3616
    %v3618 = vmul.f32 %v3614, %v1937
    %v3619 = vmul.f32 %v3617, %v1937
    %v3620 = vsub.f32 %v3608, %v3618
    %v3621 = vsub.f32 %v3609, %v3619
    %v3622 = vmul.f32 %v3620, %v3620
    %v3623 = vmul.f32 %v3621, %v3621
    %v3624 = vsel %vm400, %v3622, 0.0
    %3625 = vadd.xlane.f32.xlu0 %v3624
    %v3626 = vpop.xlane.xlu0 %3625
    %v3627 = vsel %vm400, %v3623, 0.0
    %3628 = vadd.xlane.f32.xlu0 %v3627
    %v3629 = vpop.xlane.xlu0 %3628
    %v3630 = vmul.f32 %v3626, %v1937
    %v3631 = vmul.f32 %v3629, %v1937
    %v3632 = vadd.f32 %v3630, 1e-05
    %v3633 = vadd.f32 %v3631, 1e-05
    %v3634 = vrsqrt.pop %v3632
    %v3635 = vrsqrt.pop %v3633
    %v3636 = vmul.f32 %v3620, %v3634
    %v3637 = vmul.f32 %v3621, %v3635
    %v3639 = vlaneseq
    %v3640 = vshrl.u32 %v3639, 7
    %v3641 = vsub.s32 0, %v3640
    %v3642 = vrot.slane %v3610, %v3641
    %v3644 = vmul.f32 %v3636, %v3642
    %v3645 = vmul.f32 %v3637, %v3642
    %v3647 = vlaneseq
    %v3648 = vshrl.u32 %v3647, 7
    %v3649 = vsub.s32 0, %v3648
    %v3650 = vrot.slane %v3611, %v3649
    %v3652 = vadd.f32 %v3644, %v3650
    %v3653 = vadd.f32 %v3645, %v3650
    %v3654 = vld [vmem:[#allocation17] sm:$0xff]
    %v3655 = vld [vmem:[#allocation17 + $0x8] sm:$0xff]
    %v3656 = vld [vmem:[#allocation17 + $0x10] sm:$0xff]
    %v3657 = vld [vmem:[#allocation17 + $0x18] sm:$0xff]
    %v3658 = vld [vmem:[#allocation17 + $0x20] sm:$0xff]
    %v3659 = vld [vmem:[#allocation17 + $0x28] sm:$0xff]
    %v3660 = vld [vmem:[#allocation17 + $0x30] sm:$0xff]
    %v3661 = vld [vmem:[#allocation17 + $0x38] sm:$0xff]
    %v3662 = vld [vmem:[%s20] sm:$0x1]
    %v3664 = vlaneseq
    %v3665 = vshrl.u32 %v3664, 7
    %v3666 = vsub.s32 0, %v3665
    %v3667 = vrot.slane %v3662, %v3666
    %v3670 = vsel %vm400, %v3652, 0
    %v3673 = vsel %vm400, %v3653, 0
    %3675 = vmatprep.subr.mxu0 0.0
    %3676 = vmatpush1.msra.mxu0 %v3654
    %3677 = vmatprep.subr.mxu0 0.0
    %3678 = vmatpush1.msra.mxu0 %v3655
    %3679 = vmatprep.subr.mxu0 0.0
    %3680 = vmatpush1.msra.mxu0 %v3656
    %3681 = vmatprep.subr.mxu0 0.0
    %3682 = vmatpush1.msra.mxu0 %v3657
    %3683 = vmatprep.subr.mxu0 0.0
    %3684 = vmatpush1.msra.mxu0 %v3658
    %3685 = vmatprep.subr.mxu0 0.0
    %3686 = vmatpush1.msra.mxu0 %v3659
    %3687 = vmatprep.subr.mxu0 0.0
    %3688 = vmatpush1.msra.mxu0 %v3660
    %3689 = vmatprep.subr.mxu0 0.0
    %3690 = vmatpush1.msra.mxu0 %v3661
    %3691 = vmatprep.subr.mxu0 0.0
    %3692 = vmatpush1.msra.mxu0 0.0
    %3693 = vmatprep.subr.mxu0 0.0
    %3694 = vmatpush1.msra.mxu0 0.0
    %3695 = vmatprep.subr.mxu0 0.0
    %3696 = vmatpush1.msra.mxu0 0.0
    %3697 = vmatprep.subr.mxu0 0.0
    %3698 = vmatpush1.msra.mxu0 0.0
    %3699 = vmatprep.subr.mxu0 0.0
    %3700 = vmatpush1.msra.mxu0 0.0
    %3701 = vmatprep.subr.mxu0 0.0
    %3702 = vmatpush1.msra.mxu0 0.0
    %3703 = vmatprep.subr.mxu0 0.0
    %3704 = vmatpush1.msra.mxu0 0.0
    %3705 = vmatprep.subr.mxu0 0.0
    %3706 = vmatpush1.msra.mxu0 0.0
    %3707 = vmatprep.subr.mxu0 0.0
    %3708 = vmatpush1.msra.mxu0 0.0
    %3709 = vmatprep.subr.mxu0 0.0
    %3710 = vmatpush1.msra.mxu0 0.0
    %3711 = vmatprep.subr.mxu0 0.0
    %3712 = vmatpush1.msra.mxu0 0.0
    %3713 = vmatprep.subr.mxu0 0.0
    %3714 = vmatpush1.msra.mxu0 0.0
    %3715 = vmatprep.subr.mxu0 0.0
    %3716 = vmatpush1.msra.mxu0 0.0
    %3717 = vmatprep.subr.mxu0 0.0
    %3718 = vmatpush1.msra.mxu0 0.0
    %3719 = vmatprep.subr.mxu0 0.0
    %3720 = vmatpush1.msra.mxu0 0.0
    %3721 = vmatprep.subr.mxu0 0.0
    %3722 = vmatpush1.msra.mxu0 0.0
    %3723 = vmatprep.subr.mxu0 0.0
    %3724 = vmatpush1.msra.mxu0 0.0
    %3725 = vmatprep.subr.mxu0 0.0
    %3726 = vmatpush1.msra.mxu0 0.0
    %3727 = vmatprep.subr.mxu0 0.0
    %3728 = vmatpush1.msra.mxu0 0.0
    %3729 = vmatprep.subr.mxu0 0.0
    %3730 = vmatpush1.msra.mxu0 0.0
    %3731 = vmatprep.subr.mxu0 0.0
    %3732 = vmatpush1.msra.mxu0 0.0
    %3733 = vmatprep.subr.mxu0 0.0
    %3734 = vmatpush1.msra.mxu0 0.0
    %3735 = vmatprep.subr.mxu0 0.0
    %3736 = vmatpush1.msra.mxu0 0.0
    %3737 = vmatprep.subr.mxu0 0.0
    %3738 = vmatpush1.msra.mxu0 0.0
    %3739 = vmatprep.mubr.f32.mxu0 0.0
    %3740 = vmatmul.mubr.f32.gmra.mrb[0].mxu0 %v3670
    %v3741 = vpop.f32.mrb[0].mxu0
    %v3742 = vadd.f32 %v3667, %v3741
    %v3743 = vpop.f32.mrb[0].mxu0
    %3744 = vmatprep.mubr.f32.mxu0 0.0
    %3745 = vmatmul.mubr.f32.gmra.mrb[0].mxu0 %v3673
    %v3746 = vpop.f32.mrb[0].mxu0
    %v3747 = vadd.f32 %v3667, %v3746
    %v3748 = vpop.f32.mrb[0].mxu0
    %3749 = vdwg.mxu0
    %v3750 = vmax.f32 %v3742, 0.0
    %v3751 = vmax.f32 %v3747, 0.0
    %v3752 = vld [vmem:[%s21] sm:$0xff]
    %v3753 = vld [vmem:[%s21 + $0x8] sm:$0xff]
    %v3754 = vld [vmem:[%s21 + $0x10] sm:$0xff]
    %v3755 = vld [vmem:[%s21 + $0x18] sm:$0xff]
    %v3756 = vld [vmem:[%s21 + $0x20] sm:$0xff]
    %v3757 = vld [vmem:[%s21 + $0x28] sm:$0xff]
    %v3758 = vld [vmem:[%s21 + $0x30] sm:$0xff]
    %v3759 = vld [vmem:[%s21 + $0x38] sm:$0xff]
    %v3760 = vld [vmem:[%s21 + $0x40] sm:$0xff]
    %v3761 = vld [vmem:[%s21 + $0x48] sm:$0xff]
    %v3762 = vld [vmem:[%s21 + $0x50] sm:$0xff]
    %v3763 = vld [vmem:[%s21 + $0x58] sm:$0xff]
    %v3764 = vld [vmem:[%s21 + $0x60] sm:$0xff]
    %v3765 = vld [vmem:[%s21 + $0x68] sm:$0xff]
    %v3766 = vld [vmem:[%s21 + $0x70] sm:$0xff]
    %v3767 = vld [vmem:[%s21 + $0x78] sm:$0xff]
    %v3768 = vld [vmem:[%s22] sm:$0x1]
    %v3770 = vlaneseq
    %v3771 = vshrl.u32 %v3770, 7
    %v3772 = vsub.s32 0, %v3771
    %v3773 = vrot.slane %v3768, %v3772
    %3775 = vmatprep.subr.mxu0 0.0
    %3776 = vmatpush1.msra.mxu0 %v3752
    %3777 = vmatprep.subr.mxu0 0.0
    %3778 = vmatpush1.msra.mxu0 %v3753
    %3779 = vmatprep.subr.mxu0 0.0
    %3780 = vmatpush1.msra.mxu0 %v3754
    %3781 = vmatprep.subr.mxu0 0.0
    %3782 = vmatpush1.msra.mxu0 %v3755
    %3783 = vmatprep.subr.mxu0 0.0
    %3784 = vmatpush1.msra.mxu0 %v3756
    %3785 = vmatprep.subr.mxu0 0.0
    %3786 = vmatpush1.msra.mxu0 %v3757
    %3787 = vmatprep.subr.mxu0 0.0
    %3788 = vmatpush1.msra.mxu0 %v3758
    %3789 = vmatprep.subr.mxu0 0.0
    %3790 = vmatpush1.msra.mxu0 %v3759
    %3791 = vmatprep.subr.mxu0 0.0
    %3792 = vmatpush1.msra.mxu0 %v3760
    %3793 = vmatprep.subr.mxu0 0.0
    %3794 = vmatpush1.msra.mxu0 %v3761
    %3795 = vmatprep.subr.mxu0 0.0
    %3796 = vmatpush1.msra.mxu0 %v3762
    %3797 = vmatprep.subr.mxu0 0.0
    %3798 = vmatpush1.msra.mxu0 %v3763
    %3799 = vmatprep.subr.mxu0 0.0
    %3800 = vmatpush1.msra.mxu0 %v3764
    %3801 = vmatprep.subr.mxu0 0.0
    %3802 = vmatpush1.msra.mxu0 %v3765
    %3803 = vmatprep.subr.mxu0 0.0
    %3804 = vmatpush1.msra.mxu0 %v3766
    %3805 = vmatprep.subr.mxu0 0.0
    %3806 = vmatpush1.msra.mxu0 %v3767
    %3807 = vmatprep.subr.mxu0 0.0
    %3808 = vmatpush1.msra.mxu0 0.0
    %3809 = vmatprep.subr.mxu0 0.0
    %3810 = vmatpush1.msra.mxu0 0.0
    %3811 = vmatprep.subr.mxu0 0.0
    %3812 = vmatpush1.msra.mxu0 0.0
    %3813 = vmatprep.subr.mxu0 0.0
    %3814 = vmatpush1.msra.mxu0 0.0
    %3815 = vmatprep.subr.mxu0 0.0
    %3816 = vmatpush1.msra.mxu0 0.0
    %3817 = vmatprep.subr.mxu0 0.0
    %3818 = vmatpush1.msra.mxu0 0.0
    %3819 = vmatprep.subr.mxu0 0.0
    %3820 = vmatpush1.msra.mxu0 0.0
    %3821 = vmatprep.subr.mxu0 0.0
    %3822 = vmatpush1.msra.mxu0 0.0
    %3823 = vmatprep.subr.mxu0 0.0
    %3824 = vmatpush1.msra.mxu0 0.0
    %3825 = vmatprep.subr.mxu0 0.0
    %3826 = vmatpush1.msra.mxu0 0.0
    %3827 = vmatprep.subr.mxu0 0.0
    %3828 = vmatpush1.msra.mxu0 0.0
    %3829 = vmatprep.subr.mxu0 0.0
    %3830 = vmatpush1.msra.mxu0 0.0
    %3831 = vmatprep.subr.mxu0 0.0
    %3832 = vmatpush1.msra.mxu0 0.0
    %3833 = vmatprep.subr.mxu0 0.0
    %3834 = vmatpush1.msra.mxu0 0.0
    %3835 = vmatprep.subr.mxu0 0.0
    %3836 = vmatpush1.msra.mxu0 0.0
    %3837 = vmatprep.subr.mxu0 0.0
    %3838 = vmatpush1.msra.mxu0 0.0
    %3839 = vmatprep.mubr.f32.mxu0 0.0
    %3840 = vmatmul.mubr.f32.gmra.mrb[0].mxu0 %v3750
    %v3841 = vpop.f32.mrb[0].mxu0
    %v3842 = vadd.f32 %v3773, %v3841
    %v3843 = vpop.f32.mrb[0].mxu0
    %3844 = vmatprep.mubr.f32.mxu0 0.0
    %3845 = vmatmul.mubr.f32.gmra.mrb[0].mxu0 %v3751
    %v3846 = vpop.f32.mrb[0].mxu0
    %v3847 = vadd.f32 %v3773, %v3846
    %v3848 = vpop.f32.mrb[0].mxu0
    %3849 = vdwg.mxu0
    %v3850 = vadd.f32 %v3652, %v3842
    %v3851 = vadd.f32 %v3653, %v3847
    %v3852 = vld [vmem:[%s23] sm:$0x1]
    %v3853 = vld [vmem:[%s24] sm:$0x1]
    %v3854 = vsel %vm400, %v3850, 0.0
    %3855 = vadd.xlane.f32.xlu0 %v3854
    %v3856 = vpop.xlane.xlu0 %3855
    %v3857 = vsel %vm400, %v3851, 0.0
    %3858 = vadd.xlane.f32.xlu0 %v3857
    %v3859 = vpop.xlane.xlu0 %3858
    %v3860 = vmul.f32 %v3856, %v1937
    %v3861 = vmul.f32 %v3859, %v1937
    %v3862 = vsub.f32 %v3850, %v3860
    %v3863 = vsub.f32 %v3851, %v3861
    %v3864 = vmul.f32 %v3862, %v3862
    %v3865 = vmul.f32 %v3863, %v3863
    %v3866 = vsel %vm400, %v3864, 0.0
    %3867 = vadd.xlane.f32.xlu0 %v3866
    %v3868 = vpop.xlane.xlu0 %3867
    %v3869 = vsel %vm400, %v3865, 0.0
    %3870 = vadd.xlane.f32.xlu0 %v3869
    %v3871 = vpop.xlane.xlu0 %3870
    %v3872 = vmul.f32 %v3868, %v1937
    %v3873 = vmul.f32 %v3871, %v1937
    %v3874 = vadd.f32 %v3872, 1e-05
    %v3875 = vadd.f32 %v3873, 1e-05
    %v3876 = vrsqrt.pop %v3874
    %v3877 = vrsqrt.pop %v3875
    %v3878 = vmul.f32 %v3862, %v3876
    %v3879 = vmul.f32 %v3863, %v3877
    %v3881 = vlaneseq
    %v3882 = vshrl.u32 %v3881, 7
    %v3883 = vsub.s32 0, %v3882
    %v3884 = vrot.slane %v3852, %v3883
    %v3886 = vmul.f32 %v3878, %v3884
    %v3887 = vmul.f32 %v3879, %v3884
    %v3889 = vlaneseq
    %v3890 = vshrl.u32 %v3889, 7
    %v3891 = vsub.s32 0, %v3890
    %v3892 = vrot.slane %v3853, %v3891
    %v3894 = vadd.f32 %v3886, %v3892
    %v3895 = vadd.f32 %v3887, %v3892
    %s3896 = scalar_lea.vmem %s5, 128
    %v3897 = vld [vmem:[%s3896] sm:$0xff]
    %v3898 = vld [vmem:[%s3896 + $0x8] sm:$0xff]
    %v3899 = vld [vmem:[%s3896 + $0x10] sm:$0xff]
    %v3900 = vld [vmem:[%s3896 + $0x18] sm:$0xff]
    %v3901 = vld [vmem:[%s3896 + $0x20] sm:$0xff]
    %v3902 = vld [vmem:[%s3896 + $0x28] sm:$0xff]
    %v3903 = vld [vmem:[%s3896 + $0x30] sm:$0xff]
    %v3904 = vld [vmem:[%s3896 + $0x38] sm:$0xff]
    %v3905 = vld [vmem:[%s3896 + $0x40] sm:$0xff]
    %v3906 = vld [vmem:[%s3896 + $0x48] sm:$0xff]
    %v3907 = vld [vmem:[%s3896 + $0x50] sm:$0xff]
    %v3908 = vld [vmem:[%s3896 + $0x58] sm:$0xff]
    %v3909 = vld [vmem:[%s3896 + $0x60] sm:$0xff]
    %v3910 = vld [vmem:[%s3896 + $0x68] sm:$0xff]
    %v3911 = vld [vmem:[%s3896 + $0x70] sm:$0xff]
    %v3912 = vld [vmem:[%s3896 + $0x78] sm:$0xff]
    %s3913 = scalar_lea.vmem %s6, 2
    %v3914 = vld [vmem:[%s3913] sm:$0x3]
    %v3916 = vlaneseq
    %v3917 = vshrl.u32 %v3916, 7
    %v3918 = vsub.s32 0, %v3917
    %v3919 = vrot.slane %v3914, %v3918
    %v3920 = vlaneseq
    %v3921 = vshrl.u32 %v3920, 7
    %v3922 = vsub.s32 1, %v3921
    %v3923 = vrot.slane %v3914, %v3922
    %v3927 = vsel %vm400, %v3894, 0
    %v3930 = vsel %vm400, %v3895, 0
    %3932 = vmatprep.subr.mxu0 %v3898
    %3933 = vmatpush1.msra.mxu0 %v3897
    %3934 = vmatprep.subr.mxu0 %v3900
    %3935 = vmatpush1.msra.mxu0 %v3899
    %3936 = vmatprep.subr.mxu0 %v3902
    %3937 = vmatpush1.msra.mxu0 %v3901
    %3938 = vmatprep.subr.mxu0 %v3904
    %3939 = vmatpush1.msra.mxu0 %v3903
    %3940 = vmatprep.subr.mxu0 %v3906
    %3941 = vmatpush1.msra.mxu0 %v3905
    %3942 = vmatprep.subr.mxu0 %v3908
    %3943 = vmatpush1.msra.mxu0 %v3907
    %3944 = vmatprep.subr.mxu0 %v3910
    %3945 = vmatpush1.msra.mxu0 %v3909
    %3946 = vmatprep.subr.mxu0 %v3912
    %3947 = vmatpush1.msra.mxu0 %v3911
    %3948 = vmatprep.subr.mxu0 0.0
    %3949 = vmatpush1.msra.mxu0 0.0
    %3950 = vmatprep.subr.mxu0 0.0
    %3951 = vmatpush1.msra.mxu0 0.0
    %3952 = vmatprep.subr.mxu0 0.0
    %3953 = vmatpush1.msra.mxu0 0.0
    %3954 = vmatprep.subr.mxu0 0.0
    %3955 = vmatpush1.msra.mxu0 0.0
    %3956 = vmatprep.subr.mxu0 0.0
    %3957 = vmatpush1.msra.mxu0 0.0
    %3958 = vmatprep.subr.mxu0 0.0
    %3959 = vmatpush1.msra.mxu0 0.0
    %3960 = vmatprep.subr.mxu0 0.0
    %3961 = vmatpush1.msra.mxu0 0.0
    %3962 = vmatprep.subr.mxu0 0.0
    %3963 = vmatpush1.msra.mxu0 0.0
    %3964 = vmatprep.subr.mxu0 0.0
    %3965 = vmatpush1.msra.mxu0 0.0
    %3966 = vmatprep.subr.mxu0 0.0
    %3967 = vmatpush1.msra.mxu0 0.0
    %3968 = vmatprep.subr.mxu0 0.0
    %3969 = vmatpush1.msra.mxu0 0.0
    %3970 = vmatprep.subr.mxu0 0.0
    %3971 = vmatpush1.msra.mxu0 0.0
    %3972 = vmatprep.subr.mxu0 0.0
    %3973 = vmatpush1.msra.mxu0 0.0
    %3974 = vmatprep.subr.mxu0 0.0
    %3975 = vmatpush1.msra.mxu0 0.0
    %3976 = vmatprep.subr.mxu0 0.0
    %3977 = vmatpush1.msra.mxu0 0.0
    %3978 = vmatprep.subr.mxu0 0.0
    %3979 = vmatpush1.msra.mxu0 0.0
    %3980 = vmatprep.subr.mxu0 0.0
    %3981 = vmatpush1.msra.mxu0 0.0
    %3982 = vmatprep.subr.mxu0 0.0
    %3983 = vmatpush1.msra.mxu0 0.0
    %3984 = vmatprep.subr.mxu0 0.0
    %3985 = vmatpush1.msra.mxu0 0.0
    %3986 = vmatprep.subr.mxu0 0.0
    %3987 = vmatpush1.msra.mxu0 0.0
    %3988 = vmatprep.subr.mxu0 0.0
    %3989 = vmatpush1.msra.mxu0 0.0
    %3990 = vmatprep.subr.mxu0 0.0
    %3991 = vmatpush1.msra.mxu0 0.0
    %3992 = vmatprep.subr.mxu0 0.0
    %3993 = vmatpush1.msra.mxu0 0.0
    %3994 = vmatprep.subr.mxu0 0.0
    %3995 = vmatpush1.msra.mxu0 0.0
    %3996 = vmatprep.mubr.f32.mxu0 0.0
    %3997 = vmatmul.mubr.f32.gmra.mrb[0].mxu0 %v3927
    %v3998 = vpop.f32.mrb[0].mxu0
    %v3999 = vadd.f32 %v3919, %v3998
    %v4000 = vpop.f32.mrb[0].mxu0
    %v4001 = vadd.f32 %v3923, %v4000
    %4002 = vmatprep.mubr.f32.mxu0 0.0
    %4003 = vmatmul.mubr.f32.gmra.mrb[0].mxu0 %v3930
    %v4004 = vpop.f32.mrb[0].mxu0
    %v4005 = vadd.f32 %v3919, %v4004
    %v4006 = vpop.f32.mrb[0].mxu0
    %v4007 = vadd.f32 %v3923, %v4006
    %4008 = vdwg.mxu0
    %4010 = vrot.lane.b32.xlu0 %v3999, 64
    %v4011 = vpop.permute.xlu0 %4010
    %v4012 = vsel %vm487, %v3999, 0
    %v4014 = vsel %vm487, %v4011, 0
    %4016 = vmatprep.subr.mxu0 0.0
    %4017 = vmatpush1.xpose.msra.mxu0 %v4014
    %4018 = vmatprep.subr.mxu0 0.0
    %4019 = vmatpush1.xpose.msra.mxu0 0.0
    %4020 = vmatprep.subr.mxu0 0.0
    %4021 = vmatpush1.xpose.msra.mxu0 0.0
    %4022 = vmatprep.subr.mxu0 0.0
    %4023 = vmatpush1.xpose.msra.mxu0 0.0
    %4024 = vmatprep.subr.mxu0 0.0
    %4025 = vmatpush1.xpose.msra.mxu0 0.0
    %4026 = vmatprep.subr.mxu0 0.0
    %4027 = vmatpush1.xpose.msra.mxu0 0.0
    %4028 = vmatprep.subr.mxu0 0.0
    %4029 = vmatpush1.xpose.msra.mxu0 0.0
    %4030 = vmatprep.subr.mxu0 0.0
    %4031 = vmatpush1.xpose.msra.mxu0 0.0
    %4032 = vmatprep.subr.mxu0 0.0
    %4033 = vmatpush1.xpose.msra.mxu0 0.0
    %4034 = vmatprep.subr.mxu0 0.0
    %4035 = vmatpush1.xpose.msra.mxu0 0.0
    %4036 = vmatprep.subr.mxu0 0.0
    %4037 = vmatpush1.xpose.msra.mxu0 0.0
    %4038 = vmatprep.subr.mxu0 0.0
    %4039 = vmatpush1.xpose.msra.mxu0 0.0
    %4040 = vmatprep.subr.mxu0 0.0
    %4041 = vmatpush1.xpose.msra.mxu0 0.0
    %4042 = vmatprep.subr.mxu0 0.0
    %4043 = vmatpush1.xpose.msra.mxu0 0.0
    %4044 = vmatprep.subr.mxu0 0.0
    %4045 = vmatpush1.xpose.msra.mxu0 0.0
    %4046 = vmatprep.subr.mxu0 0.0
    %4047 = vmatpush1.xpose.msra.mxu0 0.0
    %4048 = vmatprep.subr.mxu0 0.0
    %4049 = vmatpush1.xpose.msra.mxu0 0.0
    %4050 = vmatprep.subr.mxu0 0.0
    %4051 = vmatpush1.xpose.msra.mxu0 0.0
    %4052 = vmatprep.subr.mxu0 0.0
    %4053 = vmatpush1.xpose.msra.mxu0 0.0
    %4054 = vmatprep.subr.mxu0 0.0
    %4055 = vmatpush1.xpose.msra.mxu0 0.0
    %4056 = vmatprep.subr.mxu0 0.0
    %4057 = vmatpush1.xpose.msra.mxu0 0.0
    %4058 = vmatprep.subr.mxu0 0.0
    %4059 = vmatpush1.xpose.msra.mxu0 0.0
    %4060 = vmatprep.subr.mxu0 0.0
    %4061 = vmatpush1.xpose.msra.mxu0 0.0
    %4062 = vmatprep.subr.mxu0 0.0
    %4063 = vmatpush1.xpose.msra.mxu0 0.0
    %4064 = vmatprep.subr.mxu0 0.0
    %4065 = vmatpush1.xpose.msra.mxu0 0.0
    %4066 = vmatprep.subr.mxu0 0.0
    %4067 = vmatpush1.xpose.msra.mxu0 0.0
    %4068 = vmatprep.subr.mxu0 0.0
    %4069 = vmatpush1.xpose.msra.mxu0 0.0
    %4070 = vmatprep.subr.mxu0 0.0
    %4071 = vmatpush1.xpose.msra.mxu0 0.0
    %4072 = vmatprep.subr.mxu0 0.0
    %4073 = vmatpush1.xpose.msra.mxu0 0.0
    %4074 = vmatprep.subr.mxu0 0.0
    %4075 = vmatpush1.xpose.msra.mxu0 0.0
    %4076 = vmatprep.subr.mxu0 0.0
    %4077 = vmatpush1.xpose.msra.mxu0 0.0
    %4078 = vmatprep.subr.mxu0 0.0
    %4079 = vmatpush1.xpose.msra.mxu0 0.0
    %4080 = vmatprep.mubr.f32.mxu0 0.0
    %4081 = vmatmul.mubr.f32.gmra.mrb[0].mxu0 %v4012
    %v4082 = vpop.f32.mrb[0].mxu0
    %v4083 = vadd.f32 0.0, %v4082
    %v4084 = vpop.f32.mrb[0].mxu0
    %4085 = vdwg.mxu0
    %4087 = vrot.lane.b32.xlu0 %v4005, 64
    %v4088 = vpop.permute.xlu0 %4087
    %v4089 = vsel %vm487, %v4005, 0
    %v4091 = vsel %vm487, %v4088, 0
    %4093 = vmatprep.subr.mxu0 0.0
    %4094 = vmatpush1.xpose.msra.mxu0 %v4091
    %4095 = vmatprep.subr.mxu0 0.0
    %4096 = vmatpush1.xpose.msra.mxu0 0.0
    %4097 = vmatprep.subr.mxu0 0.0
    %4098 = vmatpush1.xpose.msra.mxu0 0.0
    %4099 = vmatprep.subr.mxu0 0.0
    %4100 = vmatpush1.xpose.msra.mxu0 0.0
    %4101 = vmatprep.subr.mxu0 0.0
    %4102 = vmatpush1.xpose.msra.mxu0 0.0
    %4103 = vmatprep.subr.mxu0 0.0
    %4104 = vmatpush1.xpose.msra.mxu0 0.0
    %4105 = vmatprep.subr.mxu0 0.0
    %4106 = vmatpush1.xpose.msra.mxu0 0.0
    %4107 = vmatprep.subr.mxu0 0.0
    %4108 = vmatpush1.xpose.msra.mxu0 0.0
    %4109 = vmatprep.subr.mxu0 0.0
    %4110 = vmatpush1.xpose.msra.mxu0 0.0
    %4111 = vmatprep.subr.mxu0 0.0
    %4112 = vmatpush1.xpose.msra.mxu0 0.0
    %4113 = vmatprep.subr.mxu0 0.0
    %4114 = vmatpush1.xpose.msra.mxu0 0.0
    %4115 = vmatprep.subr.mxu0 0.0
    %4116 = vmatpush1.xpose.msra.mxu0 0.0
    %4117 = vmatprep.subr.mxu0 0.0
    %4118 = vmatpush1.xpose.msra.mxu0 0.0
    %4119 = vmatprep.subr.mxu0 0.0
    %4120 = vmatpush1.xpose.msra.mxu0 0.0
    %4121 = vmatprep.subr.mxu0 0.0
    %4122 = vmatpush1.xpose.msra.mxu0 0.0
    %4123 = vmatprep.subr.mxu0 0.0
    %4124 = vmatpush1.xpose.msra.mxu0 0.0
    %4125 = vmatprep.subr.mxu0 0.0
    %4126 = vmatpush1.xpose.msra.mxu0 0.0
    %4127 = vmatprep.subr.mxu0 0.0
    %4128 = vmatpush1.xpose.msra.mxu0 0.0
    %4129 = vmatprep.subr.mxu0 0.0
    %4130 = vmatpush1.xpose.msra.mxu0 0.0
    %4131 = vmatprep.subr.mxu0 0.0
    %4132 = vmatpush1.xpose.msra.mxu0 0.0
    %4133 = vmatprep.subr.mxu0 0.0
    %4134 = vmatpush1.xpose.msra.mxu0 0.0
    %4135 = vmatprep.subr.mxu0 0.0
    %4136 = vmatpush1.xpose.msra.mxu0 0.0
    %4137 = vmatprep.subr.mxu0 0.0
    %4138 = vmatpush1.xpose.msra.mxu0 0.0
    %4139 = vmatprep.subr.mxu0 0.0
    %4140 = vmatpush1.xpose.msra.mxu0 0.0
    %4141 = vmatprep.subr.mxu0 0.0
    %4142 = vmatpush1.xpose.msra.mxu0 0.0
    %4143 = vmatprep.subr.mxu0 0.0
    %4144 = vmatpush1.xpose.msra.mxu0 0.0
    %4145 = vmatprep.subr.mxu0 0.0
    %4146 = vmatpush1.xpose.msra.mxu0 0.0
    %4147 = vmatprep.subr.mxu0 0.0
    %4148 = vmatpush1.xpose.msra.mxu0 0.0
    %4149 = vmatprep.subr.mxu0 0.0
    %4150 = vmatpush1.xpose.msra.mxu0 0.0
    %4151 = vmatprep.subr.mxu0 0.0
    %4152 = vmatpush1.xpose.msra.mxu0 0.0
    %4153 = vmatprep.subr.mxu0 0.0
    %4154 = vmatpush1.xpose.msra.mxu0 0.0
    %4155 = vmatprep.subr.mxu0 0.0
    %4156 = vmatpush1.xpose.msra.mxu0 0.0
    %4157 = vmatprep.mubr.f32.mxu0 0.0
    %4158 = vmatmul.mubr.f32.gmra.mrb[0].mxu0 %v4089
    %v4159 = vpop.f32.mrb[0].mxu0
    %v4160 = vadd.f32 0.0, %v4159
    %v4161 = vpop.f32.mrb[0].mxu0
    %4162 = vdwg.mxu0
    %v4163 = vsel %vm639, %v4083, -inf
    %4164 = vmax.xlane.f32.xlu0 %v4163
    %v4165 = vpop.xlane.xlu0 %4164
    %v4166 = vsel %vm639, %v4160, -inf
    %4167 = vmax.xlane.f32.xlu0 %v4166
    %v4168 = vpop.xlane.xlu0 %4167
    %v4169 = vsub.f32 %v4083, %v4165
    %v4170 = vsub.f32 %v4160, %v4168
    %v4171 = vmul.f32 %v4169, 1.442695
    %v4172 = vpow.pop %v4171
    %v4173 = vmul.f32 %v4170, 1.442695
    %v4174 = vpow.pop %v4173
    %v4175 = vsel %vm639, %v4172, 0.0
    %4176 = vadd.xlane.f32.xlu0 %v4175
    %v4177 = vpop.xlane.xlu0 %4176
    %v4178 = vsel %vm639, %v4174, 0.0
    %4179 = vadd.xlane.f32.xlu0 %v4178
    %v4180 = vpop.xlane.xlu0 %4179
    %v4181 = vrcp.pop %v4177
    %v4182 = vrcp.pop %v4180
    %v4183 = vmul.f32 %v4172, %v4181
    %v4184 = vmul.f32 %v4174, %v4182
    %v4186 = vsel %vm639, %v4183, 0
    %4188 = vmatprep.subr.mxu0 0.0
    %4189 = vmatpush1.msra.mxu0 %v4001
    %4190 = vmatprep.subr.mxu0 0.0
    %4191 = vmatpush1.msra.mxu0 0.0
    %4192 = vmatprep.subr.mxu0 0.0
    %4193 = vmatpush1.msra.mxu0 0.0
    %4194 = vmatprep.subr.mxu0 0.0
    %4195 = vmatpush1.msra.mxu0 0.0
    %4196 = vmatprep.subr.mxu0 0.0
    %4197 = vmatpush1.msra.mxu0 0.0
    %4198 = vmatprep.subr.mxu0 0.0
    %4199 = vmatpush1.msra.mxu0 0.0
    %4200 = vmatprep.subr.mxu0 0.0
    %4201 = vmatpush1.msra.mxu0 0.0
    %4202 = vmatprep.subr.mxu0 0.0
    %4203 = vmatpush1.msra.mxu0 0.0
    %4204 = vmatprep.subr.mxu0 0.0
    %4205 = vmatpush1.msra.mxu0 0.0
    %4206 = vmatprep.subr.mxu0 0.0
    %4207 = vmatpush1.msra.mxu0 0.0
    %4208 = vmatprep.subr.mxu0 0.0
    %4209 = vmatpush1.msra.mxu0 0.0
    %4210 = vmatprep.subr.mxu0 0.0
    %4211 = vmatpush1.msra.mxu0 0.0
    %4212 = vmatprep.subr.mxu0 0.0
    %4213 = vmatpush1.msra.mxu0 0.0
    %4214 = vmatprep.subr.mxu0 0.0
    %4215 = vmatpush1.msra.mxu0 0.0
    %4216 = vmatprep.subr.mxu0 0.0
    %4217 = vmatpush1.msra.mxu0 0.0
    %4218 = vmatprep.subr.mxu0 0.0
    %4219 = vmatpush1.msra.mxu0 0.0
    %4220 = vmatprep.subr.mxu0 0.0
    %4221 = vmatpush1.msra.mxu0 0.0
    %4222 = vmatprep.subr.mxu0 0.0
    %4223 = vmatpush1.msra.mxu0 0.0
    %4224 = vmatprep.subr.mxu0 0.0
    %4225 = vmatpush1.msra.mxu0 0.0
    %4226 = vmatprep.subr.mxu0 0.0
    %4227 = vmatpush1.msra.mxu0 0.0
    %4228 = vmatprep.subr.mxu0 0.0
    %4229 = vmatpush1.msra.mxu0 0.0
    %4230 = vmatprep.subr.mxu0 0.0
    %4231 = vmatpush1.msra.mxu0 0.0
    %4232 = vmatprep.subr.mxu0 0.0
    %4233 = vmatpush1.msra.mxu0 0.0
    %4234 = vmatprep.subr.mxu0 0.0
    %4235 = vmatpush1.msra.mxu0 0.0
    %4236 = vmatprep.subr.mxu0 0.0
    %4237 = vmatpush1.msra.mxu0 0.0
    %4238 = vmatprep.subr.mxu0 0.0
    %4239 = vmatpush1.msra.mxu0 0.0
    %4240 = vmatprep.subr.mxu0 0.0
    %4241 = vmatpush1.msra.mxu0 0.0
    %4242 = vmatprep.subr.mxu0 0.0
    %4243 = vmatpush1.msra.mxu0 0.0
    %4244 = vmatprep.subr.mxu0 0.0
    %4245 = vmatpush1.msra.mxu0 0.0
    %4246 = vmatprep.subr.mxu0 0.0
    %4247 = vmatpush1.msra.mxu0 0.0
    %4248 = vmatprep.subr.mxu0 0.0
    %4249 = vmatpush1.msra.mxu0 0.0
    %4250 = vmatprep.subr.mxu0 0.0
    %4251 = vmatpush1.msra.mxu0 0.0
    %4252 = vmatprep.mubr.f32.mxu0 0.0
    %4253 = vmatmul.mubr.f32.gmra.mrb[0].mxu0 %v4186
    %v4254 = vpop.f32.mrb[0].mxu0
    %v4255 = vadd.f32 0.0, %v4254
    %v4256 = vpop.f32.mrb[0].mxu0
    %4257 = vdwg.mxu0
    %v4259 = vsel %vm639, %v4184, 0
    %4261 = vmatprep.subr.mxu0 0.0
    %4262 = vmatpush1.msra.mxu0 %v4007
    %4263 = vmatprep.subr.mxu0 0.0
    %4264 = vmatpush1.msra.mxu0 0.0
    %4265 = vmatprep.subr.mxu0 0.0
    %4266 = vmatpush1.msra.mxu0 0.0
    %4267 = vmatprep.subr.mxu0 0.0
    %4268 = vmatpush1.msra.mxu0 0.0
    %4269 = vmatprep.subr.mxu0 0.0
    %4270 = vmatpush1.msra.mxu0 0.0
    %4271 = vmatprep.subr.mxu0 0.0
    %4272 = vmatpush1.msra.mxu0 0.0
    %4273 = vmatprep.subr.mxu0 0.0
    %4274 = vmatpush1.msra.mxu0 0.0
    %4275 = vmatprep.subr.mxu0 0.0
    %4276 = vmatpush1.msra.mxu0 0.0
    %4277 = vmatprep.subr.mxu0 0.0
    %4278 = vmatpush1.msra.mxu0 0.0
    %4279 = vmatprep.subr.mxu0 0.0
    %4280 = vmatpush1.msra.mxu0 0.0
    %4281 = vmatprep.subr.mxu0 0.0
    %4282 = vmatpush1.msra.mxu0 0.0
    %4283 = vmatprep.subr.mxu0 0.0
    %4284 = vmatpush1.msra.mxu0 0.0
    %4285 = vmatprep.subr.mxu0 0.0
    %4286 = vmatpush1.msra.mxu0 0.0
    %4287 = vmatprep.subr.mxu0 0.0
    %4288 = vmatpush1.msra.mxu0 0.0
    %4289 = vmatprep.subr.mxu0 0.0
    %4290 = vmatpush1.msra.mxu0 0.0
    %4291 = vmatprep.subr.mxu0 0.0
    %4292 = vmatpush1.msra.mxu0 0.0
    %4293 = vmatprep.subr.mxu0 0.0
    %4294 = vmatpush1.msra.mxu0 0.0
    %4295 = vmatprep.subr.mxu0 0.0
    %4296 = vmatpush1.msra.mxu0 0.0
    %4297 = vmatprep.subr.mxu0 0.0
    %4298 = vmatpush1.msra.mxu0 0.0
    %4299 = vmatprep.subr.mxu0 0.0
    %4300 = vmatpush1.msra.mxu0 0.0
    %4301 = vmatprep.subr.mxu0 0.0
    %4302 = vmatpush1.msra.mxu0 0.0
    %4303 = vmatprep.subr.mxu0 0.0
    %4304 = vmatpush1.msra.mxu0 0.0
    %4305 = vmatprep.subr.mxu0 0.0
    %4306 = vmatpush1.msra.mxu0 0.0
    %4307 = vmatprep.subr.mxu0 0.0
    %4308 = vmatpush1.msra.mxu0 0.0
    %4309 = vmatprep.subr.mxu0 0.0
    %4310 = vmatpush1.msra.mxu0 0.0
    %4311 = vmatprep.subr.mxu0 0.0
    %4312 = vmatpush1.msra.mxu0 0.0
    %4313 = vmatprep.subr.mxu0 0.0
    %4314 = vmatpush1.msra.mxu0 0.0
    %4315 = vmatprep.subr.mxu0 0.0
    %4316 = vmatpush1.msra.mxu0 0.0
    %4317 = vmatprep.subr.mxu0 0.0
    %4318 = vmatpush1.msra.mxu0 0.0
    %4319 = vmatprep.subr.mxu0 0.0
    %4320 = vmatpush1.msra.mxu0 0.0
    %4321 = vmatprep.subr.mxu0 0.0
    %4322 = vmatpush1.msra.mxu0 0.0
    %4323 = vmatprep.subr.mxu0 0.0
    %4324 = vmatpush1.msra.mxu0 0.0
    %4325 = vmatprep.mubr.f32.mxu0 0.0
    %4326 = vmatmul.mubr.f32.gmra.mrb[0].mxu0 %v4259
    %v4327 = vpop.f32.mrb[0].mxu0
    %v4328 = vadd.f32 0.0, %v4327
    %v4329 = vpop.f32.mrb[0].mxu0
    %4330 = vdwg.mxu0
    %4331 = vrot.lane.b32.xlu0 %v3999, 112
    %v4332 = vpop.permute.xlu0 %4331
    %4333 = vrot.lane.b32.xlu0 %v3999, 48
    %v4334 = vpop.permute.xlu0 %4333
    %v4335 = vsel %vm487, %v4332, 0
    %v4337 = vsel %vm487, %v4334, 0
    %4339 = vmatprep.subr.mxu0 0.0
    %4340 = vmatpush1.xpose.msra.mxu0 %v4337
    %4341 = vmatprep.subr.mxu0 0.0
    %4342 = vmatpush1.xpose.msra.mxu0 0.0
    %4343 = vmatprep.subr.mxu0 0.0
    %4344 = vmatpush1.xpose.msra.mxu0 0.0
    %4345 = vmatprep.subr.mxu0 0.0
    %4346 = vmatpush1.xpose.msra.mxu0 0.0
    %4347 = vmatprep.subr.mxu0 0.0
    %4348 = vmatpush1.xpose.msra.mxu0 0.0
    %4349 = vmatprep.subr.mxu0 0.0
    %4350 = vmatpush1.xpose.msra.mxu0 0.0
    %4351 = vmatprep.subr.mxu0 0.0
    %4352 = vmatpush1.xpose.msra.mxu0 0.0
    %4353 = vmatprep.subr.mxu0 0.0
    %4354 = vmatpush1.xpose.msra.mxu0 0.0
    %4355 = vmatprep.subr.mxu0 0.0
    %4356 = vmatpush1.xpose.msra.mxu0 0.0
    %4357 = vmatprep.subr.mxu0 0.0
    %4358 = vmatpush1.xpose.msra.mxu0 0.0
    %4359 = vmatprep.subr.mxu0 0.0
    %4360 = vmatpush1.xpose.msra.mxu0 0.0
    %4361 = vmatprep.subr.mxu0 0.0
    %4362 = vmatpush1.xpose.msra.mxu0 0.0
    %4363 = vmatprep.subr.mxu0 0.0
    %4364 = vmatpush1.xpose.msra.mxu0 0.0
    %4365 = vmatprep.subr.mxu0 0.0
    %4366 = vmatpush1.xpose.msra.mxu0 0.0
    %4367 = vmatprep.subr.mxu0 0.0
    %4368 = vmatpush1.xpose.msra.mxu0 0.0
    %4369 = vmatprep.subr.mxu0 0.0
    %4370 = vmatpush1.xpose.msra.mxu0 0.0
    %4371 = vmatprep.subr.mxu0 0.0
    %4372 = vmatpush1.xpose.msra.mxu0 0.0
    %4373 = vmatprep.subr.mxu0 0.0
    %4374 = vmatpush1.xpose.msra.mxu0 0.0
    %4375 = vmatprep.subr.mxu0 0.0
    %4376 = vmatpush1.xpose.msra.mxu0 0.0
    %4377 = vmatprep.subr.mxu0 0.0
    %4378 = vmatpush1.xpose.msra.mxu0 0.0
    %4379 = vmatprep.subr.mxu0 0.0
    %4380 = vmatpush1.xpose.msra.mxu0 0.0
    %4381 = vmatprep.subr.mxu0 0.0
    %4382 = vmatpush1.xpose.msra.mxu0 0.0
    %4383 = vmatprep.subr.mxu0 0.0
    %4384 = vmatpush1.xpose.msra.mxu0 0.0
    %4385 = vmatprep.subr.mxu0 0.0
    %4386 = vmatpush1.xpose.msra.mxu0 0.0
    %4387 = vmatprep.subr.mxu0 0.0
    %4388 = vmatpush1.xpose.msra.mxu0 0.0
    %4389 = vmatprep.subr.mxu0 0.0
    %4390 = vmatpush1.xpose.msra.mxu0 0.0
    %4391 = vmatprep.subr.mxu0 0.0
    %4392 = vmatpush1.xpose.msra.mxu0 0.0
    %4393 = vmatprep.subr.mxu0 0.0
    %4394 = vmatpush1.xpose.msra.mxu0 0.0
    %4395 = vmatprep.subr.mxu0 0.0
    %4396 = vmatpush1.xpose.msra.mxu0 0.0
    %4397 = vmatprep.subr.mxu0 0.0
    %4398 = vmatpush1.xpose.msra.mxu0 0.0
    %4399 = vmatprep.subr.mxu0 0.0
    %4400 = vmatpush1.xpose.msra.mxu0 0.0
    %4401 = vmatprep.subr.mxu0 0.0
    %4402 = vmatpush1.xpose.msra.mxu0 0.0
    %4403 = vmatprep.mubr.f32.mxu0 0.0
    %4404 = vmatmul.mubr.f32.gmra.mrb[0].mxu0 %v4335
    %v4405 = vpop.f32.mrb[0].mxu0
    %v4406 = vadd.f32 0.0, %v4405
    %v4407 = vpop.f32.mrb[0].mxu0
    %4408 = vdwg.mxu0
    %4409 = vrot.lane.b32.xlu0 %v4005, 112
    %v4410 = vpop.permute.xlu0 %4409
    %4411 = vrot.lane.b32.xlu0 %v4005, 48
    %v4412 = vpop.permute.xlu0 %4411
    %v4413 = vsel %vm487, %v4410, 0
    %v4415 = vsel %vm487, %v4412, 0
    %4417 = vmatprep.subr.mxu0 0.0
    %4418 = vmatpush1.xpose.msra.mxu0 %v4415
    %4419 = vmatprep.subr.mxu0 0.0
    %4420 = vmatpush1.xpose.msra.mxu0 0.0
    %4421 = vmatprep.subr.mxu0 0.0
    %4422 = vmatpush1.xpose.msra.mxu0 0.0
    %4423 = vmatprep.subr.mxu0 0.0
    %4424 = vmatpush1.xpose.msra.mxu0 0.0
    %4425 = vmatprep.subr.mxu0 0.0
    %4426 = vmatpush1.xpose.msra.mxu0 0.0
    %4427 = vmatprep.subr.mxu0 0.0
    %4428 = vmatpush1.xpose.msra.mxu0 0.0
    %4429 = vmatprep.subr.mxu0 0.0
    %4430 = vmatpush1.xpose.msra.mxu0 0.0
    %4431 = vmatprep.subr.mxu0 0.0
    %4432 = vmatpush1.xpose.msra.mxu0 0.0
    %4433 = vmatprep.subr.mxu0 0.0
    %4434 = vmatpush1.xpose.msra.mxu0 0.0
    %4435 = vmatprep.subr.mxu0 0.0
    %4436 = vmatpush1.xpose.msra.mxu0 0.0
    %4437 = vmatprep.subr.mxu0 0.0
    %4438 = vmatpush1.xpose.msra.mxu0 0.0
    %4439 = vmatprep.subr.mxu0 0.0
    %4440 = vmatpush1.xpose.msra.mxu0 0.0
    %4441 = vmatprep.subr.mxu0 0.0
    %4442 = vmatpush1.xpose.msra.mxu0 0.0
    %4443 = vmatprep.subr.mxu0 0.0
    %4444 = vmatpush1.xpose.msra.mxu0 0.0
    %4445 = vmatprep.subr.mxu0 0.0
    %4446 = vmatpush1.xpose.msra.mxu0 0.0
    %4447 = vmatprep.subr.mxu0 0.0
    %4448 = vmatpush1.xpose.msra.mxu0 0.0
    %4449 = vmatprep.subr.mxu0 0.0
    %4450 = vmatpush1.xpose.msra.mxu0 0.0
    %4451 = vmatprep.subr.mxu0 0.0
    %4452 = vmatpush1.xpose.msra.mxu0 0.0
    %4453 = vmatprep.subr.mxu0 0.0
    %4454 = vmatpush1.xpose.msra.mxu0 0.0
    %4455 = vmatprep.subr.mxu0 0.0
    %4456 = vmatpush1.xpose.msra.mxu0 0.0
    %4457 = vmatprep.subr.mxu0 0.0
    %4458 = vmatpush1.xpose.msra.mxu0 0.0
    %4459 = vmatprep.subr.mxu0 0.0
    %4460 = vmatpush1.xpose.msra.mxu0 0.0
    %4461 = vmatprep.subr.mxu0 0.0
    %4462 = vmatpush1.xpose.msra.mxu0 0.0
    %4463 = vmatprep.subr.mxu0 0.0
    %4464 = vmatpush1.xpose.msra.mxu0 0.0
    %4465 = vmatprep.subr.mxu0 0.0
    %4466 = vmatpush1.xpose.msra.mxu0 0.0
    %4467 = vmatprep.subr.mxu0 0.0
    %4468 = vmatpush1.xpose.msra.mxu0 0.0
    %4469 = vmatprep.subr.mxu0 0.0
    %4470 = vmatpush1.xpose.msra.mxu0 0.0
    %4471 = vmatprep.subr.mxu0 0.0
    %4472 = vmatpush1.xpose.msra.mxu0 0.0
    %4473 = vmatprep.subr.mxu0 0.0
    %4474 = vmatpush1.xpose.msra.mxu0 0.0
    %4475 = vmatprep.subr.mxu0 0.0
    %4476 = vmatpush1.xpose.msra.mxu0 0.0
    %4477 = vmatprep.subr.mxu0 0.0
    %4478 = vmatpush1.xpose.msra.mxu0 0.0
    %4479 = vmatprep.subr.mxu0 0.0
    %4480 = vmatpush1.xpose.msra.mxu0 0.0
    %4481 = vmatprep.mubr.f32.mxu0 0.0
    %4482 = vmatmul.mubr.f32.gmra.mrb[0].mxu0 %v4413
    %v4483 = vpop.f32.mrb[0].mxu0
    %v4484 = vadd.f32 0.0, %v4483
    %v4485 = vpop.f32.mrb[0].mxu0
    %4486 = vdwg.mxu0
    %v4487 = vsel %vm639, %v4406, -inf
    %4488 = vmax.xlane.f32.xlu0 %v4487
    %v4489 = vpop.xlane.xlu0 %4488
    %v4490 = vsel %vm639, %v4484, -inf
    %4491 = vmax.xlane.f32.xlu0 %v4490
    %v4492 = vpop.xlane.xlu0 %4491
    %v4493 = vsub.f32 %v4406, %v4489
    %v4494 = vsub.f32 %v4484, %v4492
    %v4495 = vmul.f32 %v4493, 1.442695
    %v4496 = vpow.pop %v4495
    %v4497 = vmul.f32 %v4494, 1.442695
    %v4498 = vpow.pop %v4497
    %v4499 = vsel %vm639, %v4496, 0.0
    %4500 = vadd.xlane.f32.xlu0 %v4499
    %v4501 = vpop.xlane.xlu0 %4500
    %v4502 = vsel %vm639, %v4498, 0.0
    %4503 = vadd.xlane.f32.xlu0 %v4502
    %v4504 = vpop.xlane.xlu0 %4503
    %v4505 = vrcp.pop %v4501
    %v4506 = vrcp.pop %v4504
    %v4507 = vmul.f32 %v4496, %v4505
    %v4508 = vmul.f32 %v4498, %v4506
    %4510 = vrot.lane.b32.xlu0 %v4001, 112
    %v4511 = vpop.permute.xlu0 %4510
    %v4514 = vsel %vm639, %v4507, 0
    %4516 = vmatprep.subr.mxu0 0.0
    %4517 = vmatpush1.msra.mxu0 %v4511
    %4518 = vmatprep.subr.mxu0 0.0
    %4519 = vmatpush1.msra.mxu0 0.0
    %4520 = vmatprep.subr.mxu0 0.0
    %4521 = vmatpush1.msra.mxu0 0.0
    %4522 = vmatprep.subr.mxu0 0.0
    %4523 = vmatpush1.msra.mxu0 0.0
    %4524 = vmatprep.subr.mxu0 0.0
    %4525 = vmatpush1.msra.mxu0 0.0
    %4526 = vmatprep.subr.mxu0 0.0
    %4527 = vmatpush1.msra.mxu0 0.0
    %4528 = vmatprep.subr.mxu0 0.0
    %4529 = vmatpush1.msra.mxu0 0.0
    %4530 = vmatprep.subr.mxu0 0.0
    %4531 = vmatpush1.msra.mxu0 0.0
    %4532 = vmatprep.subr.mxu0 0.0
    %4533 = vmatpush1.msra.mxu0 0.0
    %4534 = vmatprep.subr.mxu0 0.0
    %4535 = vmatpush1.msra.mxu0 0.0
    %4536 = vmatprep.subr.mxu0 0.0
    %4537 = vmatpush1.msra.mxu0 0.0
    %4538 = vmatprep.subr.mxu0 0.0
    %4539 = vmatpush1.msra.mxu0 0.0
    %4540 = vmatprep.subr.mxu0 0.0
    %4541 = vmatpush1.msra.mxu0 0.0
    %4542 = vmatprep.subr.mxu0 0.0
    %4543 = vmatpush1.msra.mxu0 0.0
    %4544 = vmatprep.subr.mxu0 0.0
    %4545 = vmatpush1.msra.mxu0 0.0
    %4546 = vmatprep.subr.mxu0 0.0
    %4547 = vmatpush1.msra.mxu0 0.0
    %4548 = vmatprep.subr.mxu0 0.0
    %4549 = vmatpush1.msra.mxu0 0.0
    %4550 = vmatprep.subr.mxu0 0.0
    %4551 = vmatpush1.msra.mxu0 0.0
    %4552 = vmatprep.subr.mxu0 0.0
    %4553 = vmatpush1.msra.mxu0 0.0
    %4554 = vmatprep.subr.mxu0 0.0
    %4555 = vmatpush1.msra.mxu0 0.0
    %4556 = vmatprep.subr.mxu0 0.0
    %4557 = vmatpush1.msra.mxu0 0.0
    %4558 = vmatprep.subr.mxu0 0.0
    %4559 = vmatpush1.msra.mxu0 0.0
    %4560 = vmatprep.subr.mxu0 0.0
    %4561 = vmatpush1.msra.mxu0 0.0
    %4562 = vmatprep.subr.mxu0 0.0
    %4563 = vmatpush1.msra.mxu0 0.0
    %4564 = vmatprep.subr.mxu0 0.0
    %4565 = vmatpush1.msra.mxu0 0.0
    %4566 = vmatprep.subr.mxu0 0.0
    %4567 = vmatpush1.msra.mxu0 0.0
    %4568 = vmatprep.subr.mxu0 0.0
    %4569 = vmatpush1.msra.mxu0 0.0
    %4570 = vmatprep.subr.mxu0 0.0
    %4571 = vmatpush1.msra.mxu0 0.0
    %4572 = vmatprep.subr.mxu0 0.0
    %4573 = vmatpush1.msra.mxu0 0.0
    %4574 = vmatprep.subr.mxu0 0.0
    %4575 = vmatpush1.msra.mxu0 0.0
    %4576 = vmatprep.subr.mxu0 0.0
    %4577 = vmatpush1.msra.mxu0 0.0
    %4578 = vmatprep.subr.mxu0 0.0
    %4579 = vmatpush1.msra.mxu0 0.0
    %4580 = vmatprep.mubr.f32.mxu0 0.0
    %4581 = vmatmul.mubr.f32.gmra.mrb[0].mxu0 %v4514
    %v4582 = vpop.f32.mrb[0].mxu0
    %v4583 = vadd.f32 0.0, %v4582
    %v4584 = vpop.f32.mrb[0].mxu0
    %4585 = vdwg.mxu0
    %4587 = vrot.lane.b32.xlu0 %v4007, 112
    %v4588 = vpop.permute.xlu0 %4587
    %v4591 = vsel %vm639, %v4508, 0
    %4593 = vmatprep.subr.mxu0 0.0
    %4594 = vmatpush1.msra.mxu0 %v4588
    %4595 = vmatprep.subr.mxu0 0.0
    %4596 = vmatpush1.msra.mxu0 0.0
    %4597 = vmatprep.subr.mxu0 0.0
    %4598 = vmatpush1.msra.mxu0 0.0
    %4599 = vmatprep.subr.mxu0 0.0
    %4600 = vmatpush1.msra.mxu0 0.0
    %4601 = vmatprep.subr.mxu0 0.0
    %4602 = vmatpush1.msra.mxu0 0.0
    %4603 = vmatprep.subr.mxu0 0.0
    %4604 = vmatpush1.msra.mxu0 0.0
    %4605 = vmatprep.subr.mxu0 0.0
    %4606 = vmatpush1.msra.mxu0 0.0
    %4607 = vmatprep.subr.mxu0 0.0
    %4608 = vmatpush1.msra.mxu0 0.0
    %4609 = vmatprep.subr.mxu0 0.0
    %4610 = vmatpush1.msra.mxu0 0.0
    %4611 = vmatprep.subr.mxu0 0.0
    %4612 = vmatpush1.msra.mxu0 0.0
    %4613 = vmatprep.subr.mxu0 0.0
    %4614 = vmatpush1.msra.mxu0 0.0
    %4615 = vmatprep.subr.mxu0 0.0
    %4616 = vmatpush1.msra.mxu0 0.0
    %4617 = vmatprep.subr.mxu0 0.0
    %4618 = vmatpush1.msra.mxu0 0.0
    %4619 = vmatprep.subr.mxu0 0.0
    %4620 = vmatpush1.msra.mxu0 0.0
    %4621 = vmatprep.subr.mxu0 0.0
    %4622 = vmatpush1.msra.mxu0 0.0
    %4623 = vmatprep.subr.mxu0 0.0
    %4624 = vmatpush1.msra.mxu0 0.0
    %4625 = vmatprep.subr.mxu0 0.0
    %4626 = vmatpush1.msra.mxu0 0.0
    %4627 = vmatprep.subr.mxu0 0.0
    %4628 = vmatpush1.msra.mxu0 0.0
    %4629 = vmatprep.subr.mxu0 0.0
    %4630 = vmatpush1.msra.mxu0 0.0
    %4631 = vmatprep.subr.mxu0 0.0
    %4632 = vmatpush1.msra.mxu0 0.0
    %4633 = vmatprep.subr.mxu0 0.0
    %4634 = vmatpush1.msra.mxu0 0.0
    %4635 = vmatprep.subr.mxu0 0.0
    %4636 = vmatpush1.msra.mxu0 0.0
    %4637 = vmatprep.subr.mxu0 0.0
    %4638 = vmatpush1.msra.mxu0 0.0
    %4639 = vmatprep.subr.mxu0 0.0
    %4640 = vmatpush1.msra.mxu0 0.0
    %4641 = vmatprep.subr.mxu0 0.0
    %4642 = vmatpush1.msra.mxu0 0.0
    %4643 = vmatprep.subr.mxu0 0.0
    %4644 = vmatpush1.msra.mxu0 0.0
    %4645 = vmatprep.subr.mxu0 0.0
    %4646 = vmatpush1.msra.mxu0 0.0
    %4647 = vmatprep.subr.mxu0 0.0
    %4648 = vmatpush1.msra.mxu0 0.0
    %4649 = vmatprep.subr.mxu0 0.0
    %4650 = vmatpush1.msra.mxu0 0.0
    %4651 = vmatprep.subr.mxu0 0.0
    %4652 = vmatpush1.msra.mxu0 0.0
    %4653 = vmatprep.subr.mxu0 0.0
    %4654 = vmatpush1.msra.mxu0 0.0
    %4655 = vmatprep.subr.mxu0 0.0
    %4656 = vmatpush1.msra.mxu0 0.0
    %4657 = vmatprep.mubr.f32.mxu0 0.0
    %4658 = vmatmul.mubr.f32.gmra.mrb[0].mxu0 %v4591
    %v4659 = vpop.f32.mrb[0].mxu0
    %v4660 = vadd.f32 0.0, %v4659
    %v4661 = vpop.f32.mrb[0].mxu0
    %4662 = vdwg.mxu0
    %4663 = vrot.lane.b32.xlu0 %v3999, 96
    %v4664 = vpop.permute.xlu0 %4663
    %4665 = vrot.lane.b32.xlu0 %v3999, 32
    %v4666 = vpop.permute.xlu0 %4665
    %v4667 = vsel %vm487, %v4664, 0
    %v4669 = vsel %vm487, %v4666, 0
    %4671 = vmatprep.subr.mxu0 0.0
    %4672 = vmatpush1.xpose.msra.mxu0 %v4669
    %4673 = vmatprep.subr.mxu0 0.0
    %4674 = vmatpush1.xpose.msra.mxu0 0.0
    %4675 = vmatprep.subr.mxu0 0.0
    %4676 = vmatpush1.xpose.msra.mxu0 0.0
    %4677 = vmatprep.subr.mxu0 0.0
    %4678 = vmatpush1.xpose.msra.mxu0 0.0
    %4679 = vmatprep.subr.mxu0 0.0
    %4680 = vmatpush1.xpose.msra.mxu0 0.0
    %4681 = vmatprep.subr.mxu0 0.0
    %4682 = vmatpush1.xpose.msra.mxu0 0.0
    %4683 = vmatprep.subr.mxu0 0.0
    %4684 = vmatpush1.xpose.msra.mxu0 0.0
    %4685 = vmatprep.subr.mxu0 0.0
    %4686 = vmatpush1.xpose.msra.mxu0 0.0
    %4687 = vmatprep.subr.mxu0 0.0
    %4688 = vmatpush1.xpose.msra.mxu0 0.0
    %4689 = vmatprep.subr.mxu0 0.0
    %4690 = vmatpush1.xpose.msra.mxu0 0.0
    %4691 = vmatprep.subr.mxu0 0.0
    %4692 = vmatpush1.xpose.msra.mxu0 0.0
    %4693 = vmatprep.subr.mxu0 0.0
    %4694 = vmatpush1.xpose.msra.mxu0 0.0
    %4695 = vmatprep.subr.mxu0 0.0
    %4696 = vmatpush1.xpose.msra.mxu0 0.0
    %4697 = vmatprep.subr.mxu0 0.0
    %4698 = vmatpush1.xpose.msra.mxu0 0.0
    %4699 = vmatprep.subr.mxu0 0.0
    %4700 = vmatpush1.xpose.msra.mxu0 0.0
    %4701 = vmatprep.subr.mxu0 0.0
    %4702 = vmatpush1.xpose.msra.mxu0 0.0
    %4703 = vmatprep.subr.mxu0 0.0
    %4704 = vmatpush1.xpose.msra.mxu0 0.0
    %4705 = vmatprep.subr.mxu0 0.0
    %4706 = vmatpush1.xpose.msra.mxu0 0.0
    %4707 = vmatprep.subr.mxu0 0.0
    %4708 = vmatpush1.xpose.msra.mxu0 0.0
    %4709 = vmatprep.subr.mxu0 0.0
    %4710 = vmatpush1.xpose.msra.mxu0 0.0
    %4711 = vmatprep.subr.mxu0 0.0
    %4712 = vmatpush1.xpose.msra.mxu0 0.0
    %4713 = vmatprep.subr.mxu0 0.0
    %4714 = vmatpush1.xpose.msra.mxu0 0.0
    %4715 = vmatprep.subr.mxu0 0.0
    %4716 = vmatpush1.xpose.msra.mxu0 0.0
    %4717 = vmatprep.subr.mxu0 0.0
    %4718 = vmatpush1.xpose.msra.mxu0 0.0
    %4719 = vmatprep.subr.mxu0 0.0
    %4720 = vmatpush1.xpose.msra.mxu0 0.0
    %4721 = vmatprep.subr.mxu0 0.0
    %4722 = vmatpush1.xpose.msra.mxu0 0.0
    %4723 = vmatprep.subr.mxu0 0.0
    %4724 = vmatpush1.xpose.msra.mxu0 0.0
    %4725 = vmatprep.subr.mxu0 0.0
    %4726 = vmatpush1.xpose.msra.mxu0 0.0
    %4727 = vmatprep.subr.mxu0 0.0
    %4728 = vmatpush1.xpose.msra.mxu0 0.0
    %4729 = vmatprep.subr.mxu0 0.0
    %4730 = vmatpush1.xpose.msra.mxu0 0.0
    %4731 = vmatprep.subr.mxu0 0.0
    %4732 = vmatpush1.xpose.msra.mxu0 0.0
    %4733 = vmatprep.subr.mxu0 0.0
    %4734 = vmatpush1.xpose.msra.mxu0 0.0
    %4735 = vmatprep.mubr.f32.mxu0 0.0
    %4736 = vmatmul.mubr.f32.gmra.mrb[0].mxu0 %v4667
    %v4737 = vpop.f32.mrb[0].mxu0
    %v4738 = vadd.f32 0.0, %v4737
    %v4739 = vpop.f32.mrb[0].mxu0
    %4740 = vdwg.mxu0
    %4741 = vrot.lane.b32.xlu0 %v4005, 96
    %v4742 = vpop.permute.xlu0 %4741
    %4743 = vrot.lane.b32.xlu0 %v4005, 32
    %v4744 = vpop.permute.xlu0 %4743
    %v4745 = vsel %vm487, %v4742, 0
    %v4747 = vsel %vm487, %v4744, 0
    %4749 = vmatprep.subr.mxu0 0.0
    %4750 = vmatpush1.xpose.msra.mxu0 %v4747
    %4751 = vmatprep.subr.mxu0 0.0
    %4752 = vmatpush1.xpose.msra.mxu0 0.0
    %4753 = vmatprep.subr.mxu0 0.0
    %4754 = vmatpush1.xpose.msra.mxu0 0.0
    %4755 = vmatprep.subr.mxu0 0.0
    %4756 = vmatpush1.xpose.msra.mxu0 0.0
    %4757 = vmatprep.subr.mxu0 0.0
    %4758 = vmatpush1.xpose.msra.mxu0 0.0
    %4759 = vmatprep.subr.mxu0 0.0
    %4760 = vmatpush1.xpose.msra.mxu0 0.0
    %4761 = vmatprep.subr.mxu0 0.0
    %4762 = vmatpush1.xpose.msra.mxu0 0.0
    %4763 = vmatprep.subr.mxu0 0.0
    %4764 = vmatpush1.xpose.msra.mxu0 0.0
    %4765 = vmatprep.subr.mxu0 0.0
    %4766 = vmatpush1.xpose.msra.mxu0 0.0
    %4767 = vmatprep.subr.mxu0 0.0
    %4768 = vmatpush1.xpose.msra.mxu0 0.0
    %4769 = vmatprep.subr.mxu0 0.0
    %4770 = vmatpush1.xpose.msra.mxu0 0.0
    %4771 = vmatprep.subr.mxu0 0.0
    %4772 = vmatpush1.xpose.msra.mxu0 0.0
    %4773 = vmatprep.subr.mxu0 0.0
    %4774 = vmatpush1.xpose.msra.mxu0 0.0
    %4775 = vmatprep.subr.mxu0 0.0
    %4776 = vmatpush1.xpose.msra.mxu0 0.0
    %4777 = vmatprep.subr.mxu0 0.0
    %4778 = vmatpush1.xpose.msra.mxu0 0.0
    %4779 = vmatprep.subr.mxu0 0.0
    %4780 = vmatpush1.xpose.msra.mxu0 0.0
    %4781 = vmatprep.subr.mxu0 0.0
    %4782 = vmatpush1.xpose.msra.mxu0 0.0
    %4783 = vmatprep.subr.mxu0 0.0
    %4784 = vmatpush1.xpose.msra.mxu0 0.0
    %4785 = vmatprep.subr.mxu0 0.0
    %4786 = vmatpush1.xpose.msra.mxu0 0.0
    %4787 = vmatprep.subr.mxu0 0.0
    %4788 = vmatpush1.xpose.msra.mxu0 0.0
    %4789 = vmatprep.subr.mxu0 0.0
    %4790 = vmatpush1.xpose.msra.mxu0 0.0
    %4791 = vmatprep.subr.mxu0 0.0
    %4792 = vmatpush1.xpose.msra.mxu0 0.0
    %4793 = vmatprep.subr.mxu0 0.0
    %4794 = vmatpush1.xpose.msra.mxu0 0.0
    %4795 = vmatprep.subr.mxu0 0.0
    %4796 = vmatpush1.xpose.msra.mxu0 0.0
    %4797 = vmatprep.subr.mxu0 0.0
    %4798 = vmatpush1.xpose.msra.mxu0 0.0
    %4799 = vmatprep.subr.mxu0 0.0
    %4800 = vmatpush1.xpose.msra.mxu0 0.0
    %4801 = vmatprep.subr.mxu0 0.0
    %4802 = vmatpush1.xpose.msra.mxu0 0.0
    %4803 = vmatprep.subr.mxu0 0.0
    %4804 = vmatpush1.xpose.msra.mxu0 0.0
    %4805 = vmatprep.subr.mxu0 0.0
    %4806 = vmatpush1.xpose.msra.mxu0 0.0
    %4807 = vmatprep.subr.mxu0 0.0
    %4808 = vmatpush1.xpose.msra.mxu0 0.0
    %4809 = vmatprep.subr.mxu0 0.0
    %4810 = vmatpush1.xpose.msra.mxu0 0.0
    %4811 = vmatprep.subr.mxu0 0.0
    %4812 = vmatpush1.xpose.msra.mxu0 0.0
    %4813 = vmatprep.mubr.f32.mxu0 0.0
    %4814 = vmatmul.mubr.f32.gmra.mrb[0].mxu0 %v4745
    %v4815 = vpop.f32.mrb[0].mxu0
    %v4816 = vadd.f32 0.0, %v4815
    %v4817 = vpop.f32.mrb[0].mxu0
    %4818 = vdwg.mxu0
    %v4819 = vsel %vm639, %v4738, -inf
    %4820 = vmax.xlane.f32.xlu0 %v4819
    %v4821 = vpop.xlane.xlu0 %4820
    %v4822 = vsel %vm639, %v4816, -inf
    %4823 = vmax.xlane.f32.xlu0 %v4822
    %v4824 = vpop.xlane.xlu0 %4823
    %v4825 = vsub.f32 %v4738, %v4821
    %v4826 = vsub.f32 %v4816, %v4824
    %v4827 = vmul.f32 %v4825, 1.442695
    %v4828 = vpow.pop %v4827
    %v4829 = vmul.f32 %v4826, 1.442695
    %v4830 = vpow.pop %v4829
    %v4831 = vsel %vm639, %v4828, 0.0
    %4832 = vadd.xlane.f32.xlu0 %v4831
    %v4833 = vpop.xlane.xlu0 %4832
    %v4834 = vsel %vm639, %v4830, 0.0
    %4835 = vadd.xlane.f32.xlu0 %v4834
    %v4836 = vpop.xlane.xlu0 %4835
    %v4837 = vrcp.pop %v4833
    %v4838 = vrcp.pop %v4836
    %v4839 = vmul.f32 %v4828, %v4837
    %v4840 = vmul.f32 %v4830, %v4838
    %4841 = vrot.lane.b32.xlu0 %v4001, 96
    %v4842 = vpop.permute.xlu0 %4841
    %v4845 = vsel %vm639, %v4839, 0
    %4847 = vmatprep.subr.mxu0 0.0
    %4848 = vmatpush1.msra.mxu0 %v4842
    %4849 = vmatprep.subr.mxu0 0.0
    %4850 = vmatpush1.msra.mxu0 0.0
    %4851 = vmatprep.subr.mxu0 0.0
    %4852 = vmatpush1.msra.mxu0 0.0
    %4853 = vmatprep.subr.mxu0 0.0
    %4854 = vmatpush1.msra.mxu0 0.0
    %4855 = vmatprep.subr.mxu0 0.0
    %4856 = vmatpush1.msra.mxu0 0.0
    %4857 = vmatprep.subr.mxu0 0.0
    %4858 = vmatpush1.msra.mxu0 0.0
    %4859 = vmatprep.subr.mxu0 0.0
    %4860 = vmatpush1.msra.mxu0 0.0
    %4861 = vmatprep.subr.mxu0 0.0
    %4862 = vmatpush1.msra.mxu0 0.0
    %4863 = vmatprep.subr.mxu0 0.0
    %4864 = vmatpush1.msra.mxu0 0.0
    %4865 = vmatprep.subr.mxu0 0.0
    %4866 = vmatpush1.msra.mxu0 0.0
    %4867 = vmatprep.subr.mxu0 0.0
    %4868 = vmatpush1.msra.mxu0 0.0
    %4869 = vmatprep.subr.mxu0 0.0
    %4870 = vmatpush1.msra.mxu0 0.0
    %4871 = vmatprep.subr.mxu0 0.0
    %4872 = vmatpush1.msra.mxu0 0.0
    %4873 = vmatprep.subr.mxu0 0.0
    %4874 = vmatpush1.msra.mxu0 0.0
    %4875 = vmatprep.subr.mxu0 0.0
    %4876 = vmatpush1.msra.mxu0 0.0
    %4877 = vmatprep.subr.mxu0 0.0
    %4878 = vmatpush1.msra.mxu0 0.0
    %4879 = vmatprep.subr.mxu0 0.0
    %4880 = vmatpush1.msra.mxu0 0.0
    %4881 = vmatprep.subr.mxu0 0.0
    %4882 = vmatpush1.msra.mxu0 0.0
    %4883 = vmatprep.subr.mxu0 0.0
    %4884 = vmatpush1.msra.mxu0 0.0
    %4885 = vmatprep.subr.mxu0 0.0
    %4886 = vmatpush1.msra.mxu0 0.0
    %4887 = vmatprep.subr.mxu0 0.0
    %4888 = vmatpush1.msra.mxu0 0.0
    %4889 = vmatprep.subr.mxu0 0.0
    %4890 = vmatpush1.msra.mxu0 0.0
    %4891 = vmatprep.subr.mxu0 0.0
    %4892 = vmatpush1.msra.mxu0 0.0
    %4893 = vmatprep.subr.mxu0 0.0
    %4894 = vmatpush1.msra.mxu0 0.0
    %4895 = vmatprep.subr.mxu0 0.0
    %4896 = vmatpush1.msra.mxu0 0.0
    %4897 = vmatprep.subr.mxu0 0.0
    %4898 = vmatpush1.msra.mxu0 0.0
    %4899 = vmatprep.subr.mxu0 0.0
    %4900 = vmatpush1.msra.mxu0 0.0
    %4901 = vmatprep.subr.mxu0 0.0
    %4902 = vmatpush1.msra.mxu0 0.0
    %4903 = vmatprep.subr.mxu0 0.0
    %4904 = vmatpush1.msra.mxu0 0.0
    %4905 = vmatprep.subr.mxu0 0.0
    %4906 = vmatpush1.msra.mxu0 0.0
    %4907 = vmatprep.subr.mxu0 0.0
    %4908 = vmatpush1.msra.mxu0 0.0
    %4909 = vmatprep.subr.mxu0 0.0
    %4910 = vmatpush1.msra.mxu0 0.0
    %4911 = vmatprep.mubr.f32.mxu0 0.0
    %4912 = vmatmul.mubr.f32.gmra.mrb[0].mxu0 %v4845
    %v4913 = vpop.f32.mrb[0].mxu0
    %v4914 = vadd.f32 0.0, %v4913
    %v4915 = vpop.f32.mrb[0].mxu0
    %4916 = vdwg.mxu0
    %4917 = vrot.lane.b32.xlu0 %v4007, 96
    %v4918 = vpop.permute.xlu0 %4917
    %v4921 = vsel %vm639, %v4840, 0
    %4923 = vmatprep.subr.mxu0 0.0
    %4924 = vmatpush1.msra.mxu0 %v4918
    %4925 = vmatprep.subr.mxu0 0.0
    %4926 = vmatpush1.msra.mxu0 0.0
    %4927 = vmatprep.subr.mxu0 0.0
    %4928 = vmatpush1.msra.mxu0 0.0
    %4929 = vmatprep.subr.mxu0 0.0
    %4930 = vmatpush1.msra.mxu0 0.0
    %4931 = vmatprep.subr.mxu0 0.0
    %4932 = vmatpush1.msra.mxu0 0.0
    %4933 = vmatprep.subr.mxu0 0.0
    %4934 = vmatpush1.msra.mxu0 0.0
    %4935 = vmatprep.subr.mxu0 0.0
    %4936 = vmatpush1.msra.mxu0 0.0
    %4937 = vmatprep.subr.mxu0 0.0
    %4938 = vmatpush1.msra.mxu0 0.0
    %4939 = vmatprep.subr.mxu0 0.0
    %4940 = vmatpush1.msra.mxu0 0.0
    %4941 = vmatprep.subr.mxu0 0.0
    %4942 = vmatpush1.msra.mxu0 0.0
    %4943 = vmatprep.subr.mxu0 0.0
    %4944 = vmatpush1.msra.mxu0 0.0
    %4945 = vmatprep.subr.mxu0 0.0
    %4946 = vmatpush1.msra.mxu0 0.0
    %4947 = vmatprep.subr.mxu0 0.0
    %4948 = vmatpush1.msra.mxu0 0.0
    %4949 = vmatprep.subr.mxu0 0.0
    %4950 = vmatpush1.msra.mxu0 0.0
    %4951 = vmatprep.subr.mxu0 0.0
    %4952 = vmatpush1.msra.mxu0 0.0
    %4953 = vmatprep.subr.mxu0 0.0
    %4954 = vmatpush1.msra.mxu0 0.0
    %4955 = vmatprep.subr.mxu0 0.0
    %4956 = vmatpush1.msra.mxu0 0.0
    %4957 = vmatprep.subr.mxu0 0.0
    %4958 = vmatpush1.msra.mxu0 0.0
    %4959 = vmatprep.subr.mxu0 0.0
    %4960 = vmatpush1.msra.mxu0 0.0
    %4961 = vmatprep.subr.mxu0 0.0
    %4962 = vmatpush1.msra.mxu0 0.0
    %4963 = vmatprep.subr.mxu0 0.0
    %4964 = vmatpush1.msra.mxu0 0.0
    %4965 = vmatprep.subr.mxu0 0.0
    %4966 = vmatpush1.msra.mxu0 0.0
    %4967 = vmatprep.subr.mxu0 0.0
    %4968 = vmatpush1.msra.mxu0 0.0
    %4969 = vmatprep.subr.mxu0 0.0
    %4970 = vmatpush1.msra.mxu0 0.0
    %4971 = vmatprep.subr.mxu0 0.0
    %4972 = vmatpush1.msra.mxu0 0.0
    %4973 = vmatprep.subr.mxu0 0.0
    %4974 = vmatpush1.msra.mxu0 0.0
    %4975 = vmatprep.subr.mxu0 0.0
    %4976 = vmatpush1.msra.mxu0 0.0
    %4977 = vmatprep.subr.mxu0 0.0
    %4978 = vmatpush1.msra.mxu0 0.0
    %4979 = vmatprep.subr.mxu0 0.0
    %4980 = vmatpush1.msra.mxu0 0.0
    %4981 = vmatprep.subr.mxu0 0.0
    %4982 = vmatpush1.msra.mxu0 0.0
    %4983 = vmatprep.subr.mxu0 0.0
    %4984 = vmatpush1.msra.mxu0 0.0
    %4985 = vmatprep.subr.mxu0 0.0
    %4986 = vmatpush1.msra.mxu0 0.0
    %4987 = vmatprep.mubr.f32.mxu0 0.0
    %4988 = vmatmul.mubr.f32.gmra.mrb[0].mxu0 %v4921
    %v4989 = vpop.f32.mrb[0].mxu0
    %v4990 = vadd.f32 0.0, %v4989
    %v4991 = vpop.f32.mrb[0].mxu0
    %4992 = vdwg.mxu0
    %4993 = vrot.lane.b32.xlu0 %v3999, 80
    %v4994 = vpop.permute.xlu0 %4993
    %4995 = vrot.lane.b32.xlu0 %v3999, 16
    %v4996 = vpop.permute.xlu0 %4995
    %v4997 = vsel %vm487, %v4994, 0
    %v4999 = vsel %vm487, %v4996, 0
    %5001 = vmatprep.subr.mxu0 0.0
    %5002 = vmatpush1.xpose.msra.mxu0 %v4999
    %5003 = vmatprep.subr.mxu0 0.0
    %5004 = vmatpush1.xpose.msra.mxu0 0.0
    %5005 = vmatprep.subr.mxu0 0.0
    %5006 = vmatpush1.xpose.msra.mxu0 0.0
    %5007 = vmatprep.subr.mxu0 0.0
    %5008 = vmatpush1.xpose.msra.mxu0 0.0
    %5009 = vmatprep.subr.mxu0 0.0
    %5010 = vmatpush1.xpose.msra.mxu0 0.0
    %5011 = vmatprep.subr.mxu0 0.0
    %5012 = vmatpush1.xpose.msra.mxu0 0.0
    %5013 = vmatprep.subr.mxu0 0.0
    %5014 = vmatpush1.xpose.msra.mxu0 0.0
    %5015 = vmatprep.subr.mxu0 0.0
    %5016 = vmatpush1.xpose.msra.mxu0 0.0
    %5017 = vmatprep.subr.mxu0 0.0
    %5018 = vmatpush1.xpose.msra.mxu0 0.0
    %5019 = vmatprep.subr.mxu0 0.0
    %5020 = vmatpush1.xpose.msra.mxu0 0.0
    %5021 = vmatprep.subr.mxu0 0.0
    %5022 = vmatpush1.xpose.msra.mxu0 0.0
    %5023 = vmatprep.subr.mxu0 0.0
    %5024 = vmatpush1.xpose.msra.mxu0 0.0
    %5025 = vmatprep.subr.mxu0 0.0
    %5026 = vmatpush1.xpose.msra.mxu0 0.0
    %5027 = vmatprep.subr.mxu0 0.0
    %5028 = vmatpush1.xpose.msra.mxu0 0.0
    %5029 = vmatprep.subr.mxu0 0.0
    %5030 = vmatpush1.xpose.msra.mxu0 0.0
    %5031 = vmatprep.subr.mxu0 0.0
    %5032 = vmatpush1.xpose.msra.mxu0 0.0
    %5033 = vmatprep.subr.mxu0 0.0
    %5034 = vmatpush1.xpose.msra.mxu0 0.0
    %5035 = vmatprep.subr.mxu0 0.0
    %5036 = vmatpush1.xpose.msra.mxu0 0.0
    %5037 = vmatprep.subr.mxu0 0.0
    %5038 = vmatpush1.xpose.msra.mxu0 0.0
    %5039 = vmatprep.subr.mxu0 0.0
    %5040 = vmatpush1.xpose.msra.mxu0 0.0
    %5041 = vmatprep.subr.mxu0 0.0
    %5042 = vmatpush1.xpose.msra.mxu0 0.0
    %5043 = vmatprep.subr.mxu0 0.0
    %5044 = vmatpush1.xpose.msra.mxu0 0.0
    %5045 = vmatprep.subr.mxu0 0.0
    %5046 = vmatpush1.xpose.msra.mxu0 0.0
    %5047 = vmatprep.subr.mxu0 0.0
    %5048 = vmatpush1.xpose.msra.mxu0 0.0
    %5049 = vmatprep.subr.mxu0 0.0
    %5050 = vmatpush1.xpose.msra.mxu0 0.0
    %5051 = vmatprep.subr.mxu0 0.0
    %5052 = vmatpush1.xpose.msra.mxu0 0.0
    %5053 = vmatprep.subr.mxu0 0.0
    %5054 = vmatpush1.xpose.msra.mxu0 0.0
    %5055 = vmatprep.subr.mxu0 0.0
    %5056 = vmatpush1.xpose.msra.mxu0 0.0
    %5057 = vmatprep.subr.mxu0 0.0
    %5058 = vmatpush1.xpose.msra.mxu0 0.0
    %5059 = vmatprep.subr.mxu0 0.0
    %5060 = vmatpush1.xpose.msra.mxu0 0.0
    %5061 = vmatprep.subr.mxu0 0.0
    %5062 = vmatpush1.xpose.msra.mxu0 0.0
    %5063 = vmatprep.subr.mxu0 0.0
    %5064 = vmatpush1.xpose.msra.mxu0 0.0
    %5065 = vmatprep.mubr.f32.mxu0 0.0
    %5066 = vmatmul.mubr.f32.gmra.mrb[0].mxu0 %v4997
    %v5067 = vpop.f32.mrb[0].mxu0
    %v5068 = vadd.f32 0.0, %v5067
    %v5069 = vpop.f32.mrb[0].mxu0
    %5070 = vdwg.mxu0
    %5071 = vrot.lane.b32.xlu0 %v4005, 80
    %v5072 = vpop.permute.xlu0 %5071
    %5073 = vrot.lane.b32.xlu0 %v4005, 16
    %v5074 = vpop.permute.xlu0 %5073
    %v5075 = vsel %vm487, %v5072, 0
    %v5077 = vsel %vm487, %v5074, 0
    %5079 = vmatprep.subr.mxu0 0.0
    %5080 = vmatpush1.xpose.msra.mxu0 %v5077
    %5081 = vmatprep.subr.mxu0 0.0
    %5082 = vmatpush1.xpose.msra.mxu0 0.0
    %5083 = vmatprep.subr.mxu0 0.0
    %5084 = vmatpush1.xpose.msra.mxu0 0.0
    %5085 = vmatprep.subr.mxu0 0.0
    %5086 = vmatpush1.xpose.msra.mxu0 0.0
    %5087 = vmatprep.subr.mxu0 0.0
    %5088 = vmatpush1.xpose.msra.mxu0 0.0
    %5089 = vmatprep.subr.mxu0 0.0
    %5090 = vmatpush1.xpose.msra.mxu0 0.0
    %5091 = vmatprep.subr.mxu0 0.0
    %5092 = vmatpush1.xpose.msra.mxu0 0.0
    %5093 = vmatprep.subr.mxu0 0.0
    %5094 = vmatpush1.xpose.msra.mxu0 0.0
    %5095 = vmatprep.subr.mxu0 0.0
    %5096 = vmatpush1.xpose.msra.mxu0 0.0
    %5097 = vmatprep.subr.mxu0 0.0
    %5098 = vmatpush1.xpose.msra.mxu0 0.0
    %5099 = vmatprep.subr.mxu0 0.0
    %5100 = vmatpush1.xpose.msra.mxu0 0.0
    %5101 = vmatprep.subr.mxu0 0.0
    %5102 = vmatpush1.xpose.msra.mxu0 0.0
    %5103 = vmatprep.subr.mxu0 0.0
    %5104 = vmatpush1.xpose.msra.mxu0 0.0
    %5105 = vmatprep.subr.mxu0 0.0
    %5106 = vmatpush1.xpose.msra.mxu0 0.0
    %5107 = vmatprep.subr.mxu0 0.0
    %5108 = vmatpush1.xpose.msra.mxu0 0.0
    %5109 = vmatprep.subr.mxu0 0.0
    %5110 = vmatpush1.xpose.msra.mxu0 0.0
    %5111 = vmatprep.subr.mxu0 0.0
    %5112 = vmatpush1.xpose.msra.mxu0 0.0
    %5113 = vmatprep.subr.mxu0 0.0
    %5114 = vmatpush1.xpose.msra.mxu0 0.0
    %5115 = vmatprep.subr.mxu0 0.0
    %5116 = vmatpush1.xpose.msra.mxu0 0.0
    %5117 = vmatprep.subr.mxu0 0.0
    %5118 = vmatpush1.xpose.msra.mxu0 0.0
    %5119 = vmatprep.subr.mxu0 0.0
    %5120 = vmatpush1.xpose.msra.mxu0 0.0
    %5121 = vmatprep.subr.mxu0 0.0
    %5122 = vmatpush1.xpose.msra.mxu0 0.0
    %5123 = vmatprep.subr.mxu0 0.0
    %5124 = vmatpush1.xpose.msra.mxu0 0.0
    %5125 = vmatprep.subr.mxu0 0.0
    %5126 = vmatpush1.xpose.msra.mxu0 0.0
    %5127 = vmatprep.subr.mxu0 0.0
    %5128 = vmatpush1.xpose.msra.mxu0 0.0
    %5129 = vmatprep.subr.mxu0 0.0
    %5130 = vmatpush1.xpose.msra.mxu0 0.0
    %5131 = vmatprep.subr.mxu0 0.0
    %5132 = vmatpush1.xpose.msra.mxu0 0.0
    %5133 = vmatprep.subr.mxu0 0.0
    %5134 = vmatpush1.xpose.msra.mxu0 0.0
    %5135 = vmatprep.subr.mxu0 0.0
    %5136 = vmatpush1.xpose.msra.mxu0 0.0
    %5137 = vmatprep.subr.mxu0 0.0
    %5138 = vmatpush1.xpose.msra.mxu0 0.0
    %5139 = vmatprep.subr.mxu0 0.0
    %5140 = vmatpush1.xpose.msra.mxu0 0.0
    %5141 = vmatprep.subr.mxu0 0.0
    %5142 = vmatpush1.xpose.msra.mxu0 0.0
    %5143 = vmatprep.mubr.f32.mxu0 0.0
    %5144 = vmatmul.mubr.f32.gmra.mrb[0].mxu0 %v5075
    %v5145 = vpop.f32.mrb[0].mxu0
    %v5146 = vadd.f32 0.0, %v5145
    %v5147 = vpop.f32.mrb[0].mxu0
    %5148 = vdwg.mxu0
    %v5149 = vsel %vm639, %v5068, -inf
    %5150 = vmax.xlane.f32.xlu0 %v5149
    %v5151 = vpop.xlane.xlu0 %5150
    %v5152 = vsel %vm639, %v5146, -inf
    %5153 = vmax.xlane.f32.xlu0 %v5152
    %v5154 = vpop.xlane.xlu0 %5153
    %v5155 = vsub.f32 %v5068, %v5151
    %v5156 = vsub.f32 %v5146, %v5154
    %v5157 = vmul.f32 %v5155, 1.442695
    %v5158 = vpow.pop %v5157
    %v5159 = vmul.f32 %v5156, 1.442695
    %v5160 = vpow.pop %v5159
    %v5161 = vsel %vm639, %v5158, 0.0
    %5162 = vadd.xlane.f32.xlu0 %v5161
    %v5163 = vpop.xlane.xlu0 %5162
    %v5164 = vsel %vm639, %v5160, 0.0
    %5165 = vadd.xlane.f32.xlu0 %v5164
    %v5166 = vpop.xlane.xlu0 %5165
    %v5167 = vrcp.pop %v5163
    %v5168 = vrcp.pop %v5166
    %v5169 = vmul.f32 %v5158, %v5167
    %v5170 = vmul.f32 %v5160, %v5168
    %5171 = vrot.lane.b32.xlu0 %v4001, 80
    %v5172 = vpop.permute.xlu0 %5171
    %v5175 = vsel %vm639, %v5169, 0
    %5177 = vmatprep.subr.mxu0 0.0
    %5178 = vmatpush1.msra.mxu0 %v5172
    %5179 = vmatprep.subr.mxu0 0.0
    %5180 = vmatpush1.msra.mxu0 0.0
    %5181 = vmatprep.subr.mxu0 0.0
    %5182 = vmatpush1.msra.mxu0 0.0
    %5183 = vmatprep.subr.mxu0 0.0
    %5184 = vmatpush1.msra.mxu0 0.0
    %5185 = vmatprep.subr.mxu0 0.0
    %5186 = vmatpush1.msra.mxu0 0.0
    %5187 = vmatprep.subr.mxu0 0.0
    %5188 = vmatpush1.msra.mxu0 0.0
    %5189 = vmatprep.subr.mxu0 0.0
    %5190 = vmatpush1.msra.mxu0 0.0
    %5191 = vmatprep.subr.mxu0 0.0
    %5192 = vmatpush1.msra.mxu0 0.0
    %5193 = vmatprep.subr.mxu0 0.0
    %5194 = vmatpush1.msra.mxu0 0.0
    %5195 = vmatprep.subr.mxu0 0.0
    %5196 = vmatpush1.msra.mxu0 0.0
    %5197 = vmatprep.subr.mxu0 0.0
    %5198 = vmatpush1.msra.mxu0 0.0
    %5199 = vmatprep.subr.mxu0 0.0
    %5200 = vmatpush1.msra.mxu0 0.0
    %5201 = vmatprep.subr.mxu0 0.0
    %5202 = vmatpush1.msra.mxu0 0.0
    %5203 = vmatprep.subr.mxu0 0.0
    %5204 = vmatpush1.msra.mxu0 0.0
    %5205 = vmatprep.subr.mxu0 0.0
    %5206 = vmatpush1.msra.mxu0 0.0
    %5207 = vmatprep.subr.mxu0 0.0
    %5208 = vmatpush1.msra.mxu0 0.0
    %5209 = vmatprep.subr.mxu0 0.0
    %5210 = vmatpush1.msra.mxu0 0.0
    %5211 = vmatprep.subr.mxu0 0.0
    %5212 = vmatpush1.msra.mxu0 0.0
    %5213 = vmatprep.subr.mxu0 0.0
    %5214 = vmatpush1.msra.mxu0 0.0
    %5215 = vmatprep.subr.mxu0 0.0
    %5216 = vmatpush1.msra.mxu0 0.0
    %5217 = vmatprep.subr.mxu0 0.0
    %5218 = vmatpush1.msra.mxu0 0.0
    %5219 = vmatprep.subr.mxu0 0.0
    %5220 = vmatpush1.msra.mxu0 0.0
    %5221 = vmatprep.subr.mxu0 0.0
    %5222 = vmatpush1.msra.mxu0 0.0
    %5223 = vmatprep.subr.mxu0 0.0
    %5224 = vmatpush1.msra.mxu0 0.0
    %5225 = vmatprep.subr.mxu0 0.0
    %5226 = vmatpush1.msra.mxu0 0.0
    %5227 = vmatprep.subr.mxu0 0.0
    %5228 = vmatpush1.msra.mxu0 0.0
    %5229 = vmatprep.subr.mxu0 0.0
    %5230 = vmatpush1.msra.mxu0 0.0
    %5231 = vmatprep.subr.mxu0 0.0
    %5232 = vmatpush1.msra.mxu0 0.0
    %5233 = vmatprep.subr.mxu0 0.0
    %5234 = vmatpush1.msra.mxu0 0.0
    %5235 = vmatprep.subr.mxu0 0.0
    %5236 = vmatpush1.msra.mxu0 0.0
    %5237 = vmatprep.subr.mxu0 0.0
    %5238 = vmatpush1.msra.mxu0 0.0
    %5239 = vmatprep.subr.mxu0 0.0
    %5240 = vmatpush1.msra.mxu0 0.0
    %5241 = vmatprep.mubr.f32.mxu0 0.0
    %5242 = vmatmul.mubr.f32.gmra.mrb[0].mxu0 %v5175
    %v5243 = vpop.f32.mrb[0].mxu0
    %v5244 = vadd.f32 0.0, %v5243
    %v5245 = vpop.f32.mrb[0].mxu0
    %5246 = vdwg.mxu0
    %5247 = vrot.lane.b32.xlu0 %v4007, 80
    %v5248 = vpop.permute.xlu0 %5247
    %v5251 = vsel %vm639, %v5170, 0
    %5253 = vmatprep.subr.mxu0 0.0
    %5254 = vmatpush1.msra.mxu0 %v5248
    %5255 = vmatprep.subr.mxu0 0.0
    %5256 = vmatpush1.msra.mxu0 0.0
    %5257 = vmatprep.subr.mxu0 0.0
    %5258 = vmatpush1.msra.mxu0 0.0
    %5259 = vmatprep.subr.mxu0 0.0
    %5260 = vmatpush1.msra.mxu0 0.0
    %5261 = vmatprep.subr.mxu0 0.0
    %5262 = vmatpush1.msra.mxu0 0.0
    %5263 = vmatprep.subr.mxu0 0.0
    %5264 = vmatpush1.msra.mxu0 0.0
    %5265 = vmatprep.subr.mxu0 0.0
    %5266 = vmatpush1.msra.mxu0 0.0
    %5267 = vmatprep.subr.mxu0 0.0
    %5268 = vmatpush1.msra.mxu0 0.0
    %5269 = vmatprep.subr.mxu0 0.0
    %5270 = vmatpush1.msra.mxu0 0.0
    %5271 = vmatprep.subr.mxu0 0.0
    %5272 = vmatpush1.msra.mxu0 0.0
    %5273 = vmatprep.subr.mxu0 0.0
    %5274 = vmatpush1.msra.mxu0 0.0
    %5275 = vmatprep.subr.mxu0 0.0
    %5276 = vmatpush1.msra.mxu0 0.0
    %5277 = vmatprep.subr.mxu0 0.0
    %5278 = vmatpush1.msra.mxu0 0.0
    %5279 = vmatprep.subr.mxu0 0.0
    %5280 = vmatpush1.msra.mxu0 0.0
    %5281 = vmatprep.subr.mxu0 0.0
    %5282 = vmatpush1.msra.mxu0 0.0
    %5283 = vmatprep.subr.mxu0 0.0
    %5284 = vmatpush1.msra.mxu0 0.0
    %5285 = vmatprep.subr.mxu0 0.0
    %5286 = vmatpush1.msra.mxu0 0.0
    %5287 = vmatprep.subr.mxu0 0.0
    %5288 = vmatpush1.msra.mxu0 0.0
    %5289 = vmatprep.subr.mxu0 0.0
    %5290 = vmatpush1.msra.mxu0 0.0
    %5291 = vmatprep.subr.mxu0 0.0
    %5292 = vmatpush1.msra.mxu0 0.0
    %5293 = vmatprep.subr.mxu0 0.0
    %5294 = vmatpush1.msra.mxu0 0.0
    %5295 = vmatprep.subr.mxu0 0.0
    %5296 = vmatpush1.msra.mxu0 0.0
    %5297 = vmatprep.subr.mxu0 0.0
    %5298 = vmatpush1.msra.mxu0 0.0
    %5299 = vmatprep.subr.mxu0 0.0
    %5300 = vmatpush1.msra.mxu0 0.0
    %5301 = vmatprep.subr.mxu0 0.0
    %5302 = vmatpush1.msra.mxu0 0.0
    %5303 = vmatprep.subr.mxu0 0.0
    %5304 = vmatpush1.msra.mxu0 0.0
    %5305 = vmatprep.subr.mxu0 0.0
    %5306 = vmatpush1.msra.mxu0 0.0
    %5307 = vmatprep.subr.mxu0 0.0
    %5308 = vmatpush1.msra.mxu0 0.0
    %5309 = vmatprep.subr.mxu0 0.0
    %5310 = vmatpush1.msra.mxu0 0.0
    %5311 = vmatprep.subr.mxu0 0.0
    %5312 = vmatpush1.msra.mxu0 0.0
    %5313 = vmatprep.subr.mxu0 0.0
    %5314 = vmatpush1.msra.mxu0 0.0
    %5315 = vmatprep.subr.mxu0 0.0
    %5316 = vmatpush1.msra.mxu0 0.0
    %5317 = vmatprep.mubr.f32.mxu0 0.0
    %5318 = vmatmul.mubr.f32.gmra.mrb[0].mxu0 %v5251
    %v5319 = vpop.f32.mrb[0].mxu0
    %v5320 = vadd.f32 0.0, %v5319
    %v5321 = vpop.f32.mrb[0].mxu0
    %5322 = vdwg.mxu0
    %5325 = vrot.lane.b32.xlu0 %v4583, 16
    %v5326 = vpop.permute.xlu0 %5325
    %5327 = vrot.lane.b32.xlu0 %v4660, 16
    %v5328 = vpop.permute.xlu0 %5327
    %5333 = vrot.lane.b32.xlu0 %v4914, 32
    %v5334 = vpop.permute.xlu0 %5333
    %5335 = vrot.lane.b32.xlu0 %v4990, 32
    %v5336 = vpop.permute.xlu0 %5335
    %5341 = vrot.lane.b32.xlu0 %v5244, 48
    %v5342 = vpop.permute.xlu0 %5341
    %5343 = vrot.lane.b32.xlu0 %v5320, 48
    %v5344 = vpop.permute.xlu0 %5343
    %v5347 = vsel %vm487, %v4255, %v5326
    %v5348 = vsel %vm487, %v4328, %v5328
    %v5349 = vsel %vm357, %v5347, %v5334
    %v5350 = vsel %vm357, %v5348, %v5336
    %v5351 = vsel %vm1828, %v5349, %v5342
    %v5352 = vsel %vm1828, %v5350, %v5344
    %s5353 = scalar_lea.vmem %s7, 64
    %v5354 = vld [vmem:[%s5353] sm:$0xff]
    %v5355 = vld [vmem:[%s5353 + $0x8] sm:$0xff]
    %v5356 = vld [vmem:[%s5353 + $0x10] sm:$0xff]
    %v5357 = vld [vmem:[%s5353 + $0x18] sm:$0xff]
    %v5358 = vld [vmem:[%s5353 + $0x20] sm:$0xff]
    %v5359 = vld [vmem:[%s5353 + $0x28] sm:$0xff]
    %v5360 = vld [vmem:[%s5353 + $0x30] sm:$0xff]
    %v5361 = vld [vmem:[%s5353 + $0x38] sm:$0xff]
    %s5362 = scalar_lea.vmem %s8, 1
    %v5363 = vld [vmem:[%s5362] sm:$0x1]
    %v5365 = vlaneseq
    %v5366 = vshrl.u32 %v5365, 7
    %v5367 = vsub.s32 0, %v5366
    %v5368 = vrot.slane %v5363, %v5367
    %v5371 = vsel %vm400, %v5351, 0
    %v5374 = vsel %vm400, %v5352, 0
    %5376 = vmatprep.subr.mxu0 0.0
    %5377 = vmatpush1.msra.mxu0 %v5354
    %5378 = vmatprep.subr.mxu0 0.0
    %5379 = vmatpush1.msra.mxu0 %v5355
    %5380 = vmatprep.subr.mxu0 0.0
    %5381 = vmatpush1.msra.mxu0 %v5356
    %5382 = vmatprep.subr.mxu0 0.0
    %5383 = vmatpush1.msra.mxu0 %v5357
    %5384 = vmatprep.subr.mxu0 0.0
    %5385 = vmatpush1.msra.mxu0 %v5358
    %5386 = vmatprep.subr.mxu0 0.0
    %5387 = vmatpush1.msra.mxu0 %v5359
    %5388 = vmatprep.subr.mxu0 0.0
    %5389 = vmatpush1.msra.mxu0 %v5360
    %5390 = vmatprep.subr.mxu0 0.0
    %5391 = vmatpush1.msra.mxu0 %v5361
    %5392 = vmatprep.subr.mxu0 0.0
    %5393 = vmatpush1.msra.mxu0 0.0
    %5394 = vmatprep.subr.mxu0 0.0
    %5395 = vmatpush1.msra.mxu0 0.0
    %5396 = vmatprep.subr.mxu0 0.0
    %5397 = vmatpush1.msra.mxu0 0.0
    %5398 = vmatprep.subr.mxu0 0.0
    %5399 = vmatpush1.msra.mxu0 0.0
    %5400 = vmatprep.subr.mxu0 0.0
    %5401 = vmatpush1.msra.mxu0 0.0
    %5402 = vmatprep.subr.mxu0 0.0
    %5403 = vmatpush1.msra.mxu0 0.0
    %5404 = vmatprep.subr.mxu0 0.0
    %5405 = vmatpush1.msra.mxu0 0.0
    %5406 = vmatprep.subr.mxu0 0.0
    %5407 = vmatpush1.msra.mxu0 0.0
    %5408 = vmatprep.subr.mxu0 0.0
    %5409 = vmatpush1.msra.mxu0 0.0
    %5410 = vmatprep.subr.mxu0 0.0
    %5411 = vmatpush1.msra.mxu0 0.0
    %5412 = vmatprep.subr.mxu0 0.0
    %5413 = vmatpush1.msra.mxu0 0.0
    %5414 = vmatprep.subr.mxu0 0.0
    %5415 = vmatpush1.msra.mxu0 0.0
    %5416 = vmatprep.subr.mxu0 0.0
    %5417 = vmatpush1.msra.mxu0 0.0
    %5418 = vmatprep.subr.mxu0 0.0
    %5419 = vmatpush1.msra.mxu0 0.0
    %5420 = vmatprep.subr.mxu0 0.0
    %5421 = vmatpush1.msra.mxu0 0.0
    %5422 = vmatprep.subr.mxu0 0.0
    %5423 = vmatpush1.msra.mxu0 0.0
    %5424 = vmatprep.subr.mxu0 0.0
    %5425 = vmatpush1.msra.mxu0 0.0
    %5426 = vmatprep.subr.mxu0 0.0
    %5427 = vmatpush1.msra.mxu0 0.0
    %5428 = vmatprep.subr.mxu0 0.0
    %5429 = vmatpush1.msra.mxu0 0.0
    %5430 = vmatprep.subr.mxu0 0.0
    %5431 = vmatpush1.msra.mxu0 0.0
    %5432 = vmatprep.subr.mxu0 0.0
    %5433 = vmatpush1.msra.mxu0 0.0
    %5434 = vmatprep.subr.mxu0 0.0
    %5435 = vmatpush1.msra.mxu0 0.0
    %5436 = vmatprep.subr.mxu0 0.0
    %5437 = vmatpush1.msra.mxu0 0.0
    %5438 = vmatprep.subr.mxu0 0.0
    %5439 = vmatpush1.msra.mxu0 0.0
    %5440 = vmatprep.mubr.f32.mxu0 0.0
    %5441 = vmatmul.mubr.f32.gmra.mrb[0].mxu0 %v5371
    %v5442 = vpop.f32.mrb[0].mxu0
    %v5443 = vadd.f32 %v5368, %v5442
    %v5444 = vpop.f32.mrb[0].mxu0
    %5445 = vmatprep.mubr.f32.mxu0 0.0
    %5446 = vmatmul.mubr.f32.gmra.mrb[0].mxu0 %v5374
    %v5447 = vpop.f32.mrb[0].mxu0
    %v5448 = vadd.f32 %v5368, %v5447
    %v5449 = vpop.f32.mrb[0].mxu0
    %5450 = vdwg.mxu0
    %v5451 = vadd.f32 %v3894, %v5443
    %v5452 = vadd.f32 %v3895, %v5448
    %s5453 = scalar_lea.vmem [#allocation8], 1
    %v5454 = vld [vmem:[%s5453] sm:$0x1]
    %s5455 = scalar_lea.vmem [#allocation10], 1
    %v5456 = vld [vmem:[%s5455] sm:$0x1]
    %v5457 = vsel %vm400, %v5451, 0.0
    %5458 = vadd.xlane.f32.xlu0 %v5457
    %v5459 = vpop.xlane.xlu0 %5458
    %v5460 = vsel %vm400, %v5452, 0.0
    %5461 = vadd.xlane.f32.xlu0 %v5460
    %v5462 = vpop.xlane.xlu0 %5461
    %v5463 = vmul.f32 %v5459, %v1937
    %v5464 = vmul.f32 %v5462, %v1937
    %v5465 = vsub.f32 %v5451, %v5463
    %v5466 = vsub.f32 %v5452, %v5464
    %v5467 = vmul.f32 %v5465, %v5465
    %v5468 = vmul.f32 %v5466, %v5466
    %v5469 = vsel %vm400, %v5467, 0.0
    %5470 = vadd.xlane.f32.xlu0 %v5469
    %v5471 = vpop.xlane.xlu0 %5470
    %v5472 = vsel %vm400, %v5468, 0.0
    %5473 = vadd.xlane.f32.xlu0 %v5472
    %v5474 = vpop.xlane.xlu0 %5473
    %v5475 = vmul.f32 %v5471, %v1937
    %v5476 = vmul.f32 %v5474, %v1937
    %v5477 = vadd.f32 %v5475, 1e-05
    %v5478 = vadd.f32 %v5476, 1e-05
    %v5479 = vrsqrt.pop %v5477
    %v5480 = vrsqrt.pop %v5478
    %v5481 = vmul.f32 %v5465, %v5479
    %v5482 = vmul.f32 %v5466, %v5480
    %v5484 = vlaneseq
    %v5485 = vshrl.u32 %v5484, 7
    %v5486 = vsub.s32 0, %v5485
    %v5487 = vrot.slane %v5454, %v5486
    %v5489 = vmul.f32 %v5481, %v5487
    %v5490 = vmul.f32 %v5482, %v5487
    %v5492 = vlaneseq
    %v5493 = vshrl.u32 %v5492, 7
    %v5494 = vsub.s32 0, %v5493
    %v5495 = vrot.slane %v5456, %v5494
    %v5497 = vadd.f32 %v5489, %v5495
    %v5498 = vadd.f32 %v5490, %v5495
    %s5499 = scalar_lea.vmem [#allocation11], 64
    %v5500 = vld [vmem:[%s5499] sm:$0xff]
    %v5501 = vld [vmem:[%s5499 + $0x8] sm:$0xff]
    %v5502 = vld [vmem:[%s5499 + $0x10] sm:$0xff]
    %v5503 = vld [vmem:[%s5499 + $0x18] sm:$0xff]
    %v5504 = vld [vmem:[%s5499 + $0x20] sm:$0xff]
    %v5505 = vld [vmem:[%s5499 + $0x28] sm:$0xff]
    %v5506 = vld [vmem:[%s5499 + $0x30] sm:$0xff]
    %v5507 = vld [vmem:[%s5499 + $0x38] sm:$0xff]
    %s5508 = scalar_lea.vmem [#allocation13], 1
    %v5509 = vld [vmem:[%s5508] sm:$0x1]
    %v5511 = vlaneseq
    %v5512 = vshrl.u32 %v5511, 7
    %v5513 = vsub.s32 0, %v5512
    %v5514 = vrot.slane %v5509, %v5513
    %v5517 = vsel %vm400, %v5497, 0
    %v5520 = vsel %vm400, %v5498, 0
    %5522 = vmatprep.subr.mxu0 0.0
    %5523 = vmatpush1.msra.mxu0 %v5500
    %5524 = vmatprep.subr.mxu0 0.0
    %5525 = vmatpush1.msra.mxu0 %v5501
    %5526 = vmatprep.subr.mxu0 0.0
    %5527 = vmatpush1.msra.mxu0 %v5502
    %5528 = vmatprep.subr.mxu0 0.0
    %5529 = vmatpush1.msra.mxu0 %v5503
    %5530 = vmatprep.subr.mxu0 0.0
    %5531 = vmatpush1.msra.mxu0 %v5504
    %5532 = vmatprep.subr.mxu0 0.0
    %5533 = vmatpush1.msra.mxu0 %v5505
    %5534 = vmatprep.subr.mxu0 0.0
    %5535 = vmatpush1.msra.mxu0 %v5506
    %5536 = vmatprep.subr.mxu0 0.0
    %5537 = vmatpush1.msra.mxu0 %v5507
    %5538 = vmatprep.subr.mxu0 0.0
    %5539 = vmatpush1.msra.mxu0 0.0
    %5540 = vmatprep.subr.mxu0 0.0
    %5541 = vmatpush1.msra.mxu0 0.0
    %5542 = vmatprep.subr.mxu0 0.0
    %5543 = vmatpush1.msra.mxu0 0.0
    %5544 = vmatprep.subr.mxu0 0.0
    %5545 = vmatpush1.msra.mxu0 0.0
    %5546 = vmatprep.subr.mxu0 0.0
    %5547 = vmatpush1.msra.mxu0 0.0
    %5548 = vmatprep.subr.mxu0 0.0
    %5549 = vmatpush1.msra.mxu0 0.0
    %5550 = vmatprep.subr.mxu0 0.0
    %5551 = vmatpush1.msra.mxu0 0.0
    %5552 = vmatprep.subr.mxu0 0.0
    %5553 = vmatpush1.msra.mxu0 0.0
    %5554 = vmatprep.subr.mxu0 0.0
    %5555 = vmatpush1.msra.mxu0 0.0
    %5556 = vmatprep.subr.mxu0 0.0
    %5557 = vmatpush1.msra.mxu0 0.0
    %5558 = vmatprep.subr.mxu0 0.0
    %5559 = vmatpush1.msra.mxu0 0.0
    %5560 = vmatprep.subr.mxu0 0.0
    %5561 = vmatpush1.msra.mxu0 0.0
    %5562 = vmatprep.subr.mxu0 0.0
    %5563 = vmatpush1.msra.mxu0 0.0
    %5564 = vmatprep.subr.mxu0 0.0
    %5565 = vmatpush1.msra.mxu0 0.0
    %5566 = vmatprep.subr.mxu0 0.0
    %5567 = vmatpush1.msra.mxu0 0.0
    %5568 = vmatprep.subr.mxu0 0.0
    %5569 = vmatpush1.msra.mxu0 0.0
    %5570 = vmatprep.subr.mxu0 0.0
    %5571 = vmatpush1.msra.mxu0 0.0
    %5572 = vmatprep.subr.mxu0 0.0
    %5573 = vmatpush1.msra.mxu0 0.0
    %5574 = vmatprep.subr.mxu0 0.0
    %5575 = vmatpush1.msra.mxu0 0.0
    %5576 = vmatprep.subr.mxu0 0.0
    %5577 = vmatpush1.msra.mxu0 0.0
    %5578 = vmatprep.subr.mxu0 0.0
    %5579 = vmatpush1.msra.mxu0 0.0
    %5580 = vmatprep.subr.mxu0 0.0
    %5581 = vmatpush1.msra.mxu0 0.0
    %5582 = vmatprep.subr.mxu0 0.0
    %5583 = vmatpush1.msra.mxu0 0.0
    %5584 = vmatprep.subr.mxu0 0.0
    %5585 = vmatpush1.msra.mxu0 0.0
    %5586 = vmatprep.mubr.f32.mxu0 0.0
    %5587 = vmatmul.mubr.f32.gmra.mrb[0].mxu0 %v5517
    %v5588 = vpop.f32.mrb[0].mxu0
    %v5589 = vadd.f32 %v5514, %v5588
    %v5590 = vpop.f32.mrb[0].mxu0
    %5591 = vmatprep.mubr.f32.mxu0 0.0
    %5592 = vmatmul.mubr.f32.gmra.mrb[0].mxu0 %v5520
    %v5593 = vpop.f32.mrb[0].mxu0
    %v5594 = vadd.f32 %v5514, %v5593
    %v5595 = vpop.f32.mrb[0].mxu0
    %5596 = vdwg.mxu0
    %s5597 = scalar_lea.vmem [#allocation14], 64
    %v5598 = vld [vmem:[%s5597] sm:$0xff]
    %v5599 = vld [vmem:[%s5597 + $0x8] sm:$0xff]
    %v5600 = vld [vmem:[%s5597 + $0x10] sm:$0xff]
    %v5601 = vld [vmem:[%s5597 + $0x18] sm:$0xff]
    %v5602 = vld [vmem:[%s5597 + $0x20] sm:$0xff]
    %v5603 = vld [vmem:[%s5597 + $0x28] sm:$0xff]
    %v5604 = vld [vmem:[%s5597 + $0x30] sm:$0xff]
    %v5605 = vld [vmem:[%s5597 + $0x38] sm:$0xff]
    %s5606 = scalar_lea.vmem [#allocation16], 1
    %v5607 = vld [vmem:[%s5606] sm:$0x1]
    %v5609 = vlaneseq
    %v5610 = vshrl.u32 %v5609, 7
    %v5611 = vsub.s32 0, %v5610
    %v5612 = vrot.slane %v5607, %v5611
    %5614 = vmatprep.subr.mxu0 0.0
    %5615 = vmatpush1.msra.mxu0 %v5598
    %5616 = vmatprep.subr.mxu0 0.0
    %5617 = vmatpush1.msra.mxu0 %v5599
    %5618 = vmatprep.subr.mxu0 0.0
    %5619 = vmatpush1.msra.mxu0 %v5600
    %5620 = vmatprep.subr.mxu0 0.0
    %5621 = vmatpush1.msra.mxu0 %v5601
    %5622 = vmatprep.subr.mxu0 0.0
    %5623 = vmatpush1.msra.mxu0 %v5602
    %5624 = vmatprep.subr.mxu0 0.0
    %5625 = vmatpush1.msra.mxu0 %v5603
    %5626 = vmatprep.subr.mxu0 0.0
    %5627 = vmatpush1.msra.mxu0 %v5604
    %5628 = vmatprep.subr.mxu0 0.0
    %5629 = vmatpush1.msra.mxu0 %v5605
    %5630 = vmatprep.subr.mxu0 0.0
    %5631 = vmatpush1.msra.mxu0 0.0
    %5632 = vmatprep.subr.mxu0 0.0
    %5633 = vmatpush1.msra.mxu0 0.0
    %5634 = vmatprep.subr.mxu0 0.0
    %5635 = vmatpush1.msra.mxu0 0.0
    %5636 = vmatprep.subr.mxu0 0.0
    %5637 = vmatpush1.msra.mxu0 0.0
    %5638 = vmatprep.subr.mxu0 0.0
    %5639 = vmatpush1.msra.mxu0 0.0
    %5640 = vmatprep.subr.mxu0 0.0
    %5641 = vmatpush1.msra.mxu0 0.0
    %5642 = vmatprep.subr.mxu0 0.0
    %5643 = vmatpush1.msra.mxu0 0.0
    %5644 = vmatprep.subr.mxu0 0.0
    %5645 = vmatpush1.msra.mxu0 0.0
    %5646 = vmatprep.subr.mxu0 0.0
    %5647 = vmatpush1.msra.mxu0 0.0
    %5648 = vmatprep.subr.mxu0 0.0
    %5649 = vmatpush1.msra.mxu0 0.0
    %5650 = vmatprep.subr.mxu0 0.0
    %5651 = vmatpush1.msra.mxu0 0.0
    %5652 = vmatprep.subr.mxu0 0.0
    %5653 = vmatpush1.msra.mxu0 0.0
    %5654 = vmatprep.subr.mxu0 0.0
    %5655 = vmatpush1.msra.mxu0 0.0
    %5656 = vmatprep.subr.mxu0 0.0
    %5657 = vmatpush1.msra.mxu0 0.0
    %5658 = vmatprep.subr.mxu0 0.0
    %5659 = vmatpush1.msra.mxu0 0.0
    %5660 = vmatprep.subr.mxu0 0.0
    %5661 = vmatpush1.msra.mxu0 0.0
    %5662 = vmatprep.subr.mxu0 0.0
    %5663 = vmatpush1.msra.mxu0 0.0
    %5664 = vmatprep.subr.mxu0 0.0
    %5665 = vmatpush1.msra.mxu0 0.0
    %5666 = vmatprep.subr.mxu0 0.0
    %5667 = vmatpush1.msra.mxu0 0.0
    %5668 = vmatprep.subr.mxu0 0.0
    %5669 = vmatpush1.msra.mxu0 0.0
    %5670 = vmatprep.subr.mxu0 0.0
    %5671 = vmatpush1.msra.mxu0 0.0
    %5672 = vmatprep.subr.mxu0 0.0
    %5673 = vmatpush1.msra.mxu0 0.0
    %5674 = vmatprep.subr.mxu0 0.0
    %5675 = vmatpush1.msra.mxu0 0.0
    %5676 = vmatprep.subr.mxu0 0.0
    %5677 = vmatpush1.msra.mxu0 0.0
    %5678 = vmatprep.mubr.f32.mxu0 0.0
    %5679 = vmatmul.mubr.f32.gmra.mrb[0].mxu0 %v2086
    %v5680 = vpop.f32.mrb[0].mxu0
    %v5681 = vadd.f32 %v5612, %v5680
    %v5682 = vpop.f32.mrb[0].mxu0
    %5683 = vmatprep.mubr.f32.mxu0 0.0
    %5684 = vmatmul.mubr.f32.gmra.mrb[0].mxu0 %v2089
    %v5685 = vpop.f32.mrb[0].mxu0
    %v5686 = vadd.f32 %v5612, %v5685
    %v5687 = vpop.f32.mrb[0].mxu0
    %5688 = vdwg.mxu0
    %v5690 = vsel %vm487, %v5589, 0
    %v5693 = vsel %vm487, %v5681, 0
    %5695 = vmatprep.subr.mxu0 0.0
    %5696 = vmatpush1.xpose.msra.mxu0 %v5693
    %5697 = vmatprep.subr.mxu0 0.0
    %5698 = vmatpush1.xpose.msra.mxu0 0.0
    %5699 = vmatprep.subr.mxu0 0.0
    %5700 = vmatpush1.xpose.msra.mxu0 0.0
    %5701 = vmatprep.subr.mxu0 0.0
    %5702 = vmatpush1.xpose.msra.mxu0 0.0
    %5703 = vmatprep.subr.mxu0 0.0
    %5704 = vmatpush1.xpose.msra.mxu0 0.0
    %5705 = vmatprep.subr.mxu0 0.0
    %5706 = vmatpush1.xpose.msra.mxu0 0.0
    %5707 = vmatprep.subr.mxu0 0.0
    %5708 = vmatpush1.xpose.msra.mxu0 0.0
    %5709 = vmatprep.subr.mxu0 0.0
    %5710 = vmatpush1.xpose.msra.mxu0 0.0
    %5711 = vmatprep.subr.mxu0 0.0
    %5712 = vmatpush1.xpose.msra.mxu0 0.0
    %5713 = vmatprep.subr.mxu0 0.0
    %5714 = vmatpush1.xpose.msra.mxu0 0.0
    %5715 = vmatprep.subr.mxu0 0.0
    %5716 = vmatpush1.xpose.msra.mxu0 0.0
    %5717 = vmatprep.subr.mxu0 0.0
    %5718 = vmatpush1.xpose.msra.mxu0 0.0
    %5719 = vmatprep.subr.mxu0 0.0
    %5720 = vmatpush1.xpose.msra.mxu0 0.0
    %5721 = vmatprep.subr.mxu0 0.0
    %5722 = vmatpush1.xpose.msra.mxu0 0.0
    %5723 = vmatprep.subr.mxu0 0.0
    %5724 = vmatpush1.xpose.msra.mxu0 0.0
    %5725 = vmatprep.subr.mxu0 0.0
    %5726 = vmatpush1.xpose.msra.mxu0 0.0
    %5727 = vmatprep.subr.mxu0 0.0
    %5728 = vmatpush1.xpose.msra.mxu0 0.0
    %5729 = vmatprep.subr.mxu0 0.0
    %5730 = vmatpush1.xpose.msra.mxu0 0.0
    %5731 = vmatprep.subr.mxu0 0.0
    %5732 = vmatpush1.xpose.msra.mxu0 0.0
    %5733 = vmatprep.subr.mxu0 0.0
    %5734 = vmatpush1.xpose.msra.mxu0 0.0
    %5735 = vmatprep.subr.mxu0 0.0
    %5736 = vmatpush1.xpose.msra.mxu0 0.0
    %5737 = vmatprep.subr.mxu0 0.0
    %5738 = vmatpush1.xpose.msra.mxu0 0.0
    %5739 = vmatprep.subr.mxu0 0.0
    %5740 = vmatpush1.xpose.msra.mxu0 0.0
    %5741 = vmatprep.subr.mxu0 0.0
    %5742 = vmatpush1.xpose.msra.mxu0 0.0
    %5743 = vmatprep.subr.mxu0 0.0
    %5744 = vmatpush1.xpose.msra.mxu0 0.0
    %5745 = vmatprep.subr.mxu0 0.0
    %5746 = vmatpush1.xpose.msra.mxu0 0.0
    %5747 = vmatprep.subr.mxu0 0.0
    %5748 = vmatpush1.xpose.msra.mxu0 0.0
    %5749 = vmatprep.subr.mxu0 0.0
    %5750 = vmatpush1.xpose.msra.mxu0 0.0
    %5751 = vmatprep.subr.mxu0 0.0
    %5752 = vmatpush1.xpose.msra.mxu0 0.0
    %5753 = vmatprep.subr.mxu0 0.0
    %5754 = vmatpush1.xpose.msra.mxu0 0.0
    %5755 = vmatprep.subr.mxu0 0.0
    %5756 = vmatpush1.xpose.msra.mxu0 0.0
    %5757 = vmatprep.subr.mxu0 0.0
    %5758 = vmatpush1.xpose.msra.mxu0 0.0
    %5759 = vmatprep.mubr.f32.mxu0 0.0
    %5760 = vmatmul.mubr.f32.gmra.mrb[0].mxu0 %v5690
    %v5761 = vpop.f32.mrb[0].mxu0
    %v5762 = vadd.f32 0.0, %v5761
    %v5763 = vpop.f32.mrb[0].mxu0
    %5764 = vdwg.mxu0
    %v5766 = vsel %vm487, %v5594, 0
    %v5769 = vsel %vm487, %v5686, 0
    %5771 = vmatprep.subr.mxu0 0.0
    %5772 = vmatpush1.xpose.msra.mxu0 %v5769
    %5773 = vmatprep.subr.mxu0 0.0
    %5774 = vmatpush1.xpose.msra.mxu0 0.0
    %5775 = vmatprep.subr.mxu0 0.0
    %5776 = vmatpush1.xpose.msra.mxu0 0.0
    %5777 = vmatprep.subr.mxu0 0.0
    %5778 = vmatpush1.xpose.msra.mxu0 0.0
    %5779 = vmatprep.subr.mxu0 0.0
    %5780 = vmatpush1.xpose.msra.mxu0 0.0
    %5781 = vmatprep.subr.mxu0 0.0
    %5782 = vmatpush1.xpose.msra.mxu0 0.0
    %5783 = vmatprep.subr.mxu0 0.0
    %5784 = vmatpush1.xpose.msra.mxu0 0.0
    %5785 = vmatprep.subr.mxu0 0.0
    %5786 = vmatpush1.xpose.msra.mxu0 0.0
    %5787 = vmatprep.subr.mxu0 0.0
    %5788 = vmatpush1.xpose.msra.mxu0 0.0
    %5789 = vmatprep.subr.mxu0 0.0
    %5790 = vmatpush1.xpose.msra.mxu0 0.0
    %5791 = vmatprep.subr.mxu0 0.0
    %5792 = vmatpush1.xpose.msra.mxu0 0.0
    %5793 = vmatprep.subr.mxu0 0.0
    %5794 = vmatpush1.xpose.msra.mxu0 0.0
    %5795 = vmatprep.subr.mxu0 0.0
    %5796 = vmatpush1.xpose.msra.mxu0 0.0
    %5797 = vmatprep.subr.mxu0 0.0
    %5798 = vmatpush1.xpose.msra.mxu0 0.0
    %5799 = vmatprep.subr.mxu0 0.0
    %5800 = vmatpush1.xpose.msra.mxu0 0.0
    %5801 = vmatprep.subr.mxu0 0.0
    %5802 = vmatpush1.xpose.msra.mxu0 0.0
    %5803 = vmatprep.subr.mxu0 0.0
    %5804 = vmatpush1.xpose.msra.mxu0 0.0
    %5805 = vmatprep.subr.mxu0 0.0
    %5806 = vmatpush1.xpose.msra.mxu0 0.0
    %5807 = vmatprep.subr.mxu0 0.0
    %5808 = vmatpush1.xpose.msra.mxu0 0.0
    %5809 = vmatprep.subr.mxu0 0.0
    %5810 = vmatpush1.xpose.msra.mxu0 0.0
    %5811 = vmatprep.subr.mxu0 0.0
    %5812 = vmatpush1.xpose.msra.mxu0 0.0
    %5813 = vmatprep.subr.mxu0 0.0
    %5814 = vmatpush1.xpose.msra.mxu0 0.0
    %5815 = vmatprep.subr.mxu0 0.0
    %5816 = vmatpush1.xpose.msra.mxu0 0.0
    %5817 = vmatprep.subr.mxu0 0.0
    %5818 = vmatpush1.xpose.msra.mxu0 0.0
    %5819 = vmatprep.subr.mxu0 0.0
    %5820 = vmatpush1.xpose.msra.mxu0 0.0
    %5821 = vmatprep.subr.mxu0 0.0
    %5822 = vmatpush1.xpose.msra.mxu0 0.0
    %5823 = vmatprep.subr.mxu0 0.0
    %5824 = vmatpush1.xpose.msra.mxu0 0.0
    %5825 = vmatprep.subr.mxu0 0.0
    %5826 = vmatpush1.xpose.msra.mxu0 0.0
    %5827 = vmatprep.subr.mxu0 0.0
    %5828 = vmatpush1.xpose.msra.mxu0 0.0
    %5829 = vmatprep.subr.mxu0 0.0
    %5830 = vmatpush1.xpose.msra.mxu0 0.0
    %5831 = vmatprep.subr.mxu0 0.0
    %5832 = vmatpush1.xpose.msra.mxu0 0.0
    %5833 = vmatprep.subr.mxu0 0.0
    %5834 = vmatpush1.xpose.msra.mxu0 0.0
    %5835 = vmatprep.mubr.f32.mxu0 0.0
    %5836 = vmatmul.mubr.f32.gmra.mrb[0].mxu0 %v5766
    %v5837 = vpop.f32.mrb[0].mxu0
    %v5838 = vadd.f32 0.0, %v5837
    %v5839 = vpop.f32.mrb[0].mxu0
    %5840 = vdwg.mxu0
    %v5841 = vsel %vm639, %v5762, -inf
    %5842 = vmax.xlane.f32.xlu0 %v5841
    %v5843 = vpop.xlane.xlu0 %5842
    %v5844 = vsel %vm639, %v5838, -inf
    %5845 = vmax.xlane.f32.xlu0 %v5844
    %v5846 = vpop.xlane.xlu0 %5845
    %v5847 = vsub.f32 %v5762, %v5843
    %v5848 = vsub.f32 %v5838, %v5846
    %v5849 = vmul.f32 %v5847, 1.442695
    %v5850 = vpow.pop %v5849
    %v5851 = vmul.f32 %v5848, 1.442695
    %v5852 = vpow.pop %v5851
    %v5853 = vsel %vm639, %v5850, 0.0
    %5854 = vadd.xlane.f32.xlu0 %v5853
    %v5855 = vpop.xlane.xlu0 %5854
    %v5856 = vsel %vm639, %v5852, 0.0
    %5857 = vadd.xlane.f32.xlu0 %v5856
    %v5858 = vpop.xlane.xlu0 %5857
    %v5859 = vrcp.pop %v5855
    %v5860 = vrcp.pop %v5858
    %v5861 = vmul.f32 %v5850, %v5859
    %v5862 = vmul.f32 %v5852, %v5860
    %5863 = vrot.lane.b32.xlu0 %v5681, 64
    %v5864 = vpop.permute.xlu0 %5863
    %v5867 = vsel %vm639, %v5861, 0
    %5869 = vmatprep.subr.mxu0 0.0
    %5870 = vmatpush1.msra.mxu0 %v5864
    %5871 = vmatprep.subr.mxu0 0.0
    %5872 = vmatpush1.msra.mxu0 0.0
    %5873 = vmatprep.subr.mxu0 0.0
    %5874 = vmatpush1.msra.mxu0 0.0
    %5875 = vmatprep.subr.mxu0 0.0
    %5876 = vmatpush1.msra.mxu0 0.0
    %5877 = vmatprep.subr.mxu0 0.0
    %5878 = vmatpush1.msra.mxu0 0.0
    %5879 = vmatprep.subr.mxu0 0.0
    %5880 = vmatpush1.msra.mxu0 0.0
    %5881 = vmatprep.subr.mxu0 0.0
    %5882 = vmatpush1.msra.mxu0 0.0
    %5883 = vmatprep.subr.mxu0 0.0
    %5884 = vmatpush1.msra.mxu0 0.0
    %5885 = vmatprep.subr.mxu0 0.0
    %5886 = vmatpush1.msra.mxu0 0.0
    %5887 = vmatprep.subr.mxu0 0.0
    %5888 = vmatpush1.msra.mxu0 0.0
    %5889 = vmatprep.subr.mxu0 0.0
    %5890 = vmatpush1.msra.mxu0 0.0
    %5891 = vmatprep.subr.mxu0 0.0
    %5892 = vmatpush1.msra.mxu0 0.0
    %5893 = vmatprep.subr.mxu0 0.0
    %5894 = vmatpush1.msra.mxu0 0.0
    %5895 = vmatprep.subr.mxu0 0.0
    %5896 = vmatpush1.msra.mxu0 0.0
    %5897 = vmatprep.subr.mxu0 0.0
    %5898 = vmatpush1.msra.mxu0 0.0
    %5899 = vmatprep.subr.mxu0 0.0
    %5900 = vmatpush1.msra.mxu0 0.0
    %5901 = vmatprep.subr.mxu0 0.0
    %5902 = vmatpush1.msra.mxu0 0.0
    %5903 = vmatprep.subr.mxu0 0.0
    %5904 = vmatpush1.msra.mxu0 0.0
    %5905 = vmatprep.subr.mxu0 0.0
    %5906 = vmatpush1.msra.mxu0 0.0
    %5907 = vmatprep.subr.mxu0 0.0
    %5908 = vmatpush1.msra.mxu0 0.0
    %5909 = vmatprep.subr.mxu0 0.0
    %5910 = vmatpush1.msra.mxu0 0.0
    %5911 = vmatprep.subr.mxu0 0.0
    %5912 = vmatpush1.msra.mxu0 0.0
    %5913 = vmatprep.subr.mxu0 0.0
    %5914 = vmatpush1.msra.mxu0 0.0
    %5915 = vmatprep.subr.mxu0 0.0
    %5916 = vmatpush1.msra.mxu0 0.0
    %5917 = vmatprep.subr.mxu0 0.0
    %5918 = vmatpush1.msra.mxu0 0.0
    %5919 = vmatprep.subr.mxu0 0.0
    %5920 = vmatpush1.msra.mxu0 0.0
    %5921 = vmatprep.subr.mxu0 0.0
    %5922 = vmatpush1.msra.mxu0 0.0
    %5923 = vmatprep.subr.mxu0 0.0
    %5924 = vmatpush1.msra.mxu0 0.0
    %5925 = vmatprep.subr.mxu0 0.0
    %5926 = vmatpush1.msra.mxu0 0.0
    %5927 = vmatprep.subr.mxu0 0.0
    %5928 = vmatpush1.msra.mxu0 0.0
    %5929 = vmatprep.subr.mxu0 0.0
    %5930 = vmatpush1.msra.mxu0 0.0
    %5931 = vmatprep.subr.mxu0 0.0
    %5932 = vmatpush1.msra.mxu0 0.0
    %5933 = vmatprep.mubr.f32.mxu0 0.0
    %5934 = vmatmul.mubr.f32.gmra.mrb[0].mxu0 %v5867
    %v5935 = vpop.f32.mrb[0].mxu0
    %v5936 = vadd.f32 0.0, %v5935
    %v5937 = vpop.f32.mrb[0].mxu0
    %5938 = vdwg.mxu0
    %5939 = vrot.lane.b32.xlu0 %v5686, 64
    %v5940 = vpop.permute.xlu0 %5939
    %v5943 = vsel %vm639, %v5862, 0
    %5945 = vmatprep.subr.mxu0 0.0
    %5946 = vmatpush1.msra.mxu0 %v5940
    %5947 = vmatprep.subr.mxu0 0.0
    %5948 = vmatpush1.msra.mxu0 0.0
    %5949 = vmatprep.subr.mxu0 0.0
    %5950 = vmatpush1.msra.mxu0 0.0
    %5951 = vmatprep.subr.mxu0 0.0
    %5952 = vmatpush1.msra.mxu0 0.0
    %5953 = vmatprep.subr.mxu0 0.0
    %5954 = vmatpush1.msra.mxu0 0.0
    %5955 = vmatprep.subr.mxu0 0.0
    %5956 = vmatpush1.msra.mxu0 0.0
    %5957 = vmatprep.subr.mxu0 0.0
    %5958 = vmatpush1.msra.mxu0 0.0
    %5959 = vmatprep.subr.mxu0 0.0
    %5960 = vmatpush1.msra.mxu0 0.0
    %5961 = vmatprep.subr.mxu0 0.0
    %5962 = vmatpush1.msra.mxu0 0.0
    %5963 = vmatprep.subr.mxu0 0.0
    %5964 = vmatpush1.msra.mxu0 0.0
    %5965 = vmatprep.subr.mxu0 0.0
    %5966 = vmatpush1.msra.mxu0 0.0
    %5967 = vmatprep.subr.mxu0 0.0
    %5968 = vmatpush1.msra.mxu0 0.0
    %5969 = vmatprep.subr.mxu0 0.0
    %5970 = vmatpush1.msra.mxu0 0.0
    %5971 = vmatprep.subr.mxu0 0.0
    %5972 = vmatpush1.msra.mxu0 0.0
    %5973 = vmatprep.subr.mxu0 0.0
    %5974 = vmatpush1.msra.mxu0 0.0
    %5975 = vmatprep.subr.mxu0 0.0
    %5976 = vmatpush1.msra.mxu0 0.0
    %5977 = vmatprep.subr.mxu0 0.0
    %5978 = vmatpush1.msra.mxu0 0.0
    %5979 = vmatprep.subr.mxu0 0.0
    %5980 = vmatpush1.msra.mxu0 0.0
    %5981 = vmatprep.subr.mxu0 0.0
    %5982 = vmatpush1.msra.mxu0 0.0
    %5983 = vmatprep.subr.mxu0 0.0
    %5984 = vmatpush1.msra.mxu0 0.0
    %5985 = vmatprep.subr.mxu0 0.0
    %5986 = vmatpush1.msra.mxu0 0.0
    %5987 = vmatprep.subr.mxu0 0.0
    %5988 = vmatpush1.msra.mxu0 0.0
    %5989 = vmatprep.subr.mxu0 0.0
    %5990 = vmatpush1.msra.mxu0 0.0
    %5991 = vmatprep.subr.mxu0 0.0
    %5992 = vmatpush1.msra.mxu0 0.0
    %5993 = vmatprep.subr.mxu0 0.0
    %5994 = vmatpush1.msra.mxu0 0.0
    %5995 = vmatprep.subr.mxu0 0.0
    %5996 = vmatpush1.msra.mxu0 0.0
    %5997 = vmatprep.subr.mxu0 0.0
    %5998 = vmatpush1.msra.mxu0 0.0
    %5999 = vmatprep.subr.mxu0 0.0
    %6000 = vmatpush1.msra.mxu0 0.0
    %6001 = vmatprep.subr.mxu0 0.0
    %6002 = vmatpush1.msra.mxu0 0.0
    %6003 = vmatprep.subr.mxu0 0.0
    %6004 = vmatpush1.msra.mxu0 0.0
    %6005 = vmatprep.subr.mxu0 0.0
    %6006 = vmatpush1.msra.mxu0 0.0
    %6007 = vmatprep.subr.mxu0 0.0
    %6008 = vmatpush1.msra.mxu0 0.0
    %6009 = vmatprep.mubr.f32.mxu0 0.0
    %6010 = vmatmul.mubr.f32.gmra.mrb[0].mxu0 %v5943
    %v6011 = vpop.f32.mrb[0].mxu0
    %v6012 = vadd.f32 0.0, %v6011
    %v6013 = vpop.f32.mrb[0].mxu0
    %6014 = vdwg.mxu0
    %6015 = vrot.lane.b32.xlu0 %v5589, 112
    %v6016 = vpop.permute.xlu0 %6015
    %6017 = vrot.lane.b32.xlu0 %v5681, 112
    %v6018 = vpop.permute.xlu0 %6017
    %v6019 = vsel %vm487, %v6016, 0
    %v6021 = vsel %vm487, %v6018, 0
    %6023 = vmatprep.subr.mxu0 0.0
    %6024 = vmatpush1.xpose.msra.mxu0 %v6021
    %6025 = vmatprep.subr.mxu0 0.0
    %6026 = vmatpush1.xpose.msra.mxu0 0.0
    %6027 = vmatprep.subr.mxu0 0.0
    %6028 = vmatpush1.xpose.msra.mxu0 0.0
    %6029 = vmatprep.subr.mxu0 0.0
    %6030 = vmatpush1.xpose.msra.mxu0 0.0
    %6031 = vmatprep.subr.mxu0 0.0
    %6032 = vmatpush1.xpose.msra.mxu0 0.0
    %6033 = vmatprep.subr.mxu0 0.0
    %6034 = vmatpush1.xpose.msra.mxu0 0.0
    %6035 = vmatprep.subr.mxu0 0.0
    %6036 = vmatpush1.xpose.msra.mxu0 0.0
    %6037 = vmatprep.subr.mxu0 0.0
    %6038 = vmatpush1.xpose.msra.mxu0 0.0
    %6039 = vmatprep.subr.mxu0 0.0
    %6040 = vmatpush1.xpose.msra.mxu0 0.0
    %6041 = vmatprep.subr.mxu0 0.0
    %6042 = vmatpush1.xpose.msra.mxu0 0.0
    %6043 = vmatprep.subr.mxu0 0.0
    %6044 = vmatpush1.xpose.msra.mxu0 0.0
    %6045 = vmatprep.subr.mxu0 0.0
    %6046 = vmatpush1.xpose.msra.mxu0 0.0
    %6047 = vmatprep.subr.mxu0 0.0
    %6048 = vmatpush1.xpose.msra.mxu0 0.0
    %6049 = vmatprep.subr.mxu0 0.0
    %6050 = vmatpush1.xpose.msra.mxu0 0.0
    %6051 = vmatprep.subr.mxu0 0.0
    %6052 = vmatpush1.xpose.msra.mxu0 0.0
    %6053 = vmatprep.subr.mxu0 0.0
    %6054 = vmatpush1.xpose.msra.mxu0 0.0
    %6055 = vmatprep.subr.mxu0 0.0
    %6056 = vmatpush1.xpose.msra.mxu0 0.0
    %6057 = vmatprep.subr.mxu0 0.0
    %6058 = vmatpush1.xpose.msra.mxu0 0.0
    %6059 = vmatprep.subr.mxu0 0.0
    %6060 = vmatpush1.xpose.msra.mxu0 0.0
    %6061 = vmatprep.subr.mxu0 0.0
    %6062 = vmatpush1.xpose.msra.mxu0 0.0
    %6063 = vmatprep.subr.mxu0 0.0
    %6064 = vmatpush1.xpose.msra.mxu0 0.0
    %6065 = vmatprep.subr.mxu0 0.0
    %6066 = vmatpush1.xpose.msra.mxu0 0.0
    %6067 = vmatprep.subr.mxu0 0.0
    %6068 = vmatpush1.xpose.msra.mxu0 0.0
    %6069 = vmatprep.subr.mxu0 0.0
    %6070 = vmatpush1.xpose.msra.mxu0 0.0
    %6071 = vmatprep.subr.mxu0 0.0
    %6072 = vmatpush1.xpose.msra.mxu0 0.0
    %6073 = vmatprep.subr.mxu0 0.0
    %6074 = vmatpush1.xpose.msra.mxu0 0.0
    %6075 = vmatprep.subr.mxu0 0.0
    %6076 = vmatpush1.xpose.msra.mxu0 0.0
    %6077 = vmatprep.subr.mxu0 0.0
    %6078 = vmatpush1.xpose.msra.mxu0 0.0
    %6079 = vmatprep.subr.mxu0 0.0
    %6080 = vmatpush1.xpose.msra.mxu0 0.0
    %6081 = vmatprep.subr.mxu0 0.0
    %6082 = vmatpush1.xpose.msra.mxu0 0.0
    %6083 = vmatprep.subr.mxu0 0.0
    %6084 = vmatpush1.xpose.msra.mxu0 0.0
    %6085 = vmatprep.subr.mxu0 0.0
    %6086 = vmatpush1.xpose.msra.mxu0 0.0
    %6087 = vmatprep.mubr.f32.mxu0 0.0
    %6088 = vmatmul.mubr.f32.gmra.mrb[0].mxu0 %v6019
    %v6089 = vpop.f32.mrb[0].mxu0
    %v6090 = vadd.f32 0.0, %v6089
    %v6091 = vpop.f32.mrb[0].mxu0
    %6092 = vdwg.mxu0
    %6093 = vrot.lane.b32.xlu0 %v5594, 112
    %v6094 = vpop.permute.xlu0 %6093
    %6095 = vrot.lane.b32.xlu0 %v5686, 112
    %v6096 = vpop.permute.xlu0 %6095
    %v6097 = vsel %vm487, %v6094, 0
    %v6099 = vsel %vm487, %v6096, 0
    %6101 = vmatprep.subr.mxu0 0.0
    %6102 = vmatpush1.xpose.msra.mxu0 %v6099
    %6103 = vmatprep.subr.mxu0 0.0
    %6104 = vmatpush1.xpose.msra.mxu0 0.0
    %6105 = vmatprep.subr.mxu0 0.0
    %6106 = vmatpush1.xpose.msra.mxu0 0.0
    %6107 = vmatprep.subr.mxu0 0.0
    %6108 = vmatpush1.xpose.msra.mxu0 0.0
    %6109 = vmatprep.subr.mxu0 0.0
    %6110 = vmatpush1.xpose.msra.mxu0 0.0
    %6111 = vmatprep.subr.mxu0 0.0
    %6112 = vmatpush1.xpose.msra.mxu0 0.0
    %6113 = vmatprep.subr.mxu0 0.0
    %6114 = vmatpush1.xpose.msra.mxu0 0.0
    %6115 = vmatprep.subr.mxu0 0.0
    %6116 = vmatpush1.xpose.msra.mxu0 0.0
    %6117 = vmatprep.subr.mxu0 0.0
    %6118 = vmatpush1.xpose.msra.mxu0 0.0
    %6119 = vmatprep.subr.mxu0 0.0
    %6120 = vmatpush1.xpose.msra.mxu0 0.0
    %6121 = vmatprep.subr.mxu0 0.0
    %6122 = vmatpush1.xpose.msra.mxu0 0.0
    %6123 = vmatprep.subr.mxu0 0.0
    %6124 = vmatpush1.xpose.msra.mxu0 0.0
    %6125 = vmatprep.subr.mxu0 0.0
    %6126 = vmatpush1.xpose.msra.mxu0 0.0
    %6127 = vmatprep.subr.mxu0 0.0
    %6128 = vmatpush1.xpose.msra.mxu0 0.0
    %6129 = vmatprep.subr.mxu0 0.0
    %6130 = vmatpush1.xpose.msra.mxu0 0.0
    %6131 = vmatprep.subr.mxu0 0.0
    %6132 = vmatpush1.xpose.msra.mxu0 0.0
    %6133 = vmatprep.subr.mxu0 0.0
    %6134 = vmatpush1.xpose.msra.mxu0 0.0
    %6135 = vmatprep.subr.mxu0 0.0
    %6136 = vmatpush1.xpose.msra.mxu0 0.0
    %6137 = vmatprep.subr.mxu0 0.0
    %6138 = vmatpush1.xpose.msra.mxu0 0.0
    %6139 = vmatprep.subr.mxu0 0.0
    %6140 = vmatpush1.xpose.msra.mxu0 0.0
    %6141 = vmatprep.subr.mxu0 0.0
    %6142 = vmatpush1.xpose.msra.mxu0 0.0
    %6143 = vmatprep.subr.mxu0 0.0
    %6144 = vmatpush1.xpose.msra.mxu0 0.0
    %6145 = vmatprep.subr.mxu0 0.0
    %6146 = vmatpush1.xpose.msra.mxu0 0.0
    %6147 = vmatprep.subr.mxu0 0.0
    %6148 = vmatpush1.xpose.msra.mxu0 0.0
    %6149 = vmatprep.subr.mxu0 0.0
    %6150 = vmatpush1.xpose.msra.mxu0 0.0
    %6151 = vmatprep.subr.mxu0 0.0
    %6152 = vmatpush1.xpose.msra.mxu0 0.0
    %6153 = vmatprep.subr.mxu0 0.0
    %6154 = vmatpush1.xpose.msra.mxu0 0.0
    %6155 = vmatprep.subr.mxu0 0.0
    %6156 = vmatpush1.xpose.msra.mxu0 0.0
    %6157 = vmatprep.subr.mxu0 0.0
    %6158 = vmatpush1.xpose.msra.mxu0 0.0
    %6159 = vmatprep.subr.mxu0 0.0
    %6160 = vmatpush1.xpose.msra.mxu0 0.0
    %6161 = vmatprep.subr.mxu0 0.0
    %6162 = vmatpush1.xpose.msra.mxu0 0.0
    %6163 = vmatprep.subr.mxu0 0.0
    %6164 = vmatpush1.xpose.msra.mxu0 0.0
    %6165 = vmatprep.mubr.f32.mxu0 0.0
    %6166 = vmatmul.mubr.f32.gmra.mrb[0].mxu0 %v6097
    %v6167 = vpop.f32.mrb[0].mxu0
    %v6168 = vadd.f32 0.0, %v6167
    %v6169 = vpop.f32.mrb[0].mxu0
    %6170 = vdwg.mxu0
    %v6171 = vsel %vm639, %v6090, -inf
    %6172 = vmax.xlane.f32.xlu0 %v6171
    %v6173 = vpop.xlane.xlu0 %6172
    %v6174 = vsel %vm639, %v6168, -inf
    %6175 = vmax.xlane.f32.xlu0 %v6174
    %v6176 = vpop.xlane.xlu0 %6175
    %v6177 = vsub.f32 %v6090, %v6173
    %v6178 = vsub.f32 %v6168, %v6176
    %v6179 = vmul.f32 %v6177, 1.442695
    %v6180 = vpow.pop %v6179
    %v6181 = vmul.f32 %v6178, 1.442695
    %v6182 = vpow.pop %v6181
    %v6183 = vsel %vm639, %v6180, 0.0
    %6184 = vadd.xlane.f32.xlu0 %v6183
    %v6185 = vpop.xlane.xlu0 %6184
    %v6186 = vsel %vm639, %v6182, 0.0
    %6187 = vadd.xlane.f32.xlu0 %v6186
    %v6188 = vpop.xlane.xlu0 %6187
    %v6189 = vrcp.pop %v6185
    %v6190 = vrcp.pop %v6188
    %v6191 = vmul.f32 %v6180, %v6189
    %v6192 = vmul.f32 %v6182, %v6190
    %6193 = vrot.lane.b32.xlu0 %v5681, 48
    %v6194 = vpop.permute.xlu0 %6193
    %v6197 = vsel %vm639, %v6191, 0
    %6199 = vmatprep.subr.mxu0 0.0
    %6200 = vmatpush1.msra.mxu0 %v6194
    %6201 = vmatprep.subr.mxu0 0.0
    %6202 = vmatpush1.msra.mxu0 0.0
    %6203 = vmatprep.subr.mxu0 0.0
    %6204 = vmatpush1.msra.mxu0 0.0
    %6205 = vmatprep.subr.mxu0 0.0
    %6206 = vmatpush1.msra.mxu0 0.0
    %6207 = vmatprep.subr.mxu0 0.0
    %6208 = vmatpush1.msra.mxu0 0.0
    %6209 = vmatprep.subr.mxu0 0.0
    %6210 = vmatpush1.msra.mxu0 0.0
    %6211 = vmatprep.subr.mxu0 0.0
    %6212 = vmatpush1.msra.mxu0 0.0
    %6213 = vmatprep.subr.mxu0 0.0
    %6214 = vmatpush1.msra.mxu0 0.0
    %6215 = vmatprep.subr.mxu0 0.0
    %6216 = vmatpush1.msra.mxu0 0.0
    %6217 = vmatprep.subr.mxu0 0.0
    %6218 = vmatpush1.msra.mxu0 0.0
    %6219 = vmatprep.subr.mxu0 0.0
    %6220 = vmatpush1.msra.mxu0 0.0
    %6221 = vmatprep.subr.mxu0 0.0
    %6222 = vmatpush1.msra.mxu0 0.0
    %6223 = vmatprep.subr.mxu0 0.0
    %6224 = vmatpush1.msra.mxu0 0.0
    %6225 = vmatprep.subr.mxu0 0.0
    %6226 = vmatpush1.msra.mxu0 0.0
    %6227 = vmatprep.subr.mxu0 0.0
    %6228 = vmatpush1.msra.mxu0 0.0
    %6229 = vmatprep.subr.mxu0 0.0
    %6230 = vmatpush1.msra.mxu0 0.0
    %6231 = vmatprep.subr.mxu0 0.0
    %6232 = vmatpush1.msra.mxu0 0.0
    %6233 = vmatprep.subr.mxu0 0.0
    %6234 = vmatpush1.msra.mxu0 0.0
    %6235 = vmatprep.subr.mxu0 0.0
    %6236 = vmatpush1.msra.mxu0 0.0
    %6237 = vmatprep.subr.mxu0 0.0
    %6238 = vmatpush1.msra.mxu0 0.0
    %6239 = vmatprep.subr.mxu0 0.0
    %6240 = vmatpush1.msra.mxu0 0.0
    %6241 = vmatprep.subr.mxu0 0.0
    %6242 = vmatpush1.msra.mxu0 0.0
    %6243 = vmatprep.subr.mxu0 0.0
    %6244 = vmatpush1.msra.mxu0 0.0
    %6245 = vmatprep.subr.mxu0 0.0
    %6246 = vmatpush1.msra.mxu0 0.0
    %6247 = vmatprep.subr.mxu0 0.0
    %6248 = vmatpush1.msra.mxu0 0.0
    %6249 = vmatprep.subr.mxu0 0.0
    %6250 = vmatpush1.msra.mxu0 0.0
    %6251 = vmatprep.subr.mxu0 0.0
    %6252 = vmatpush1.msra.mxu0 0.0
    %6253 = vmatprep.subr.mxu0 0.0
    %6254 = vmatpush1.msra.mxu0 0.0
    %6255 = vmatprep.subr.mxu0 0.0
    %6256 = vmatpush1.msra.mxu0 0.0
    %6257 = vmatprep.subr.mxu0 0.0
    %6258 = vmatpush1.msra.mxu0 0.0
    %6259 = vmatprep.subr.mxu0 0.0
    %6260 = vmatpush1.msra.mxu0 0.0
    %6261 = vmatprep.subr.mxu0 0.0
    %6262 = vmatpush1.msra.mxu0 0.0
    %6263 = vmatprep.mubr.f32.mxu0 0.0
    %6264 = vmatmul.mubr.f32.gmra.mrb[0].mxu0 %v6197
    %v6265 = vpop.f32.mrb[0].mxu0
    %v6266 = vadd.f32 0.0, %v6265
    %v6267 = vpop.f32.mrb[0].mxu0
    %6268 = vdwg.mxu0
    %6269 = vrot.lane.b32.xlu0 %v5686, 48
    %v6270 = vpop.permute.xlu0 %6269
    %v6273 = vsel %vm639, %v6192, 0
    %6275 = vmatprep.subr.mxu0 0.0
    %6276 = vmatpush1.msra.mxu0 %v6270
    %6277 = vmatprep.subr.mxu0 0.0
    %6278 = vmatpush1.msra.mxu0 0.0
    %6279 = vmatprep.subr.mxu0 0.0
    %6280 = vmatpush1.msra.mxu0 0.0
    %6281 = vmatprep.subr.mxu0 0.0
    %6282 = vmatpush1.msra.mxu0 0.0
    %6283 = vmatprep.subr.mxu0 0.0
    %6284 = vmatpush1.msra.mxu0 0.0
    %6285 = vmatprep.subr.mxu0 0.0
    %6286 = vmatpush1.msra.mxu0 0.0
    %6287 = vmatprep.subr.mxu0 0.0
    %6288 = vmatpush1.msra.mxu0 0.0
    %6289 = vmatprep.subr.mxu0 0.0
    %6290 = vmatpush1.msra.mxu0 0.0
    %6291 = vmatprep.subr.mxu0 0.0
    %6292 = vmatpush1.msra.mxu0 0.0
    %6293 = vmatprep.subr.mxu0 0.0
    %6294 = vmatpush1.msra.mxu0 0.0
    %6295 = vmatprep.subr.mxu0 0.0
    %6296 = vmatpush1.msra.mxu0 0.0
    %6297 = vmatprep.subr.mxu0 0.0
    %6298 = vmatpush1.msra.mxu0 0.0
    %6299 = vmatprep.subr.mxu0 0.0
    %6300 = vmatpush1.msra.mxu0 0.0
    %6301 = vmatprep.subr.mxu0 0.0
    %6302 = vmatpush1.msra.mxu0 0.0
    %6303 = vmatprep.subr.mxu0 0.0
    %6304 = vmatpush1.msra.mxu0 0.0
    %6305 = vmatprep.subr.mxu0 0.0
    %6306 = vmatpush1.msra.mxu0 0.0
    %6307 = vmatprep.subr.mxu0 0.0
    %6308 = vmatpush1.msra.mxu0 0.0
    %6309 = vmatprep.subr.mxu0 0.0
    %6310 = vmatpush1.msra.mxu0 0.0
    %6311 = vmatprep.subr.mxu0 0.0
    %6312 = vmatpush1.msra.mxu0 0.0
    %6313 = vmatprep.subr.mxu0 0.0
    %6314 = vmatpush1.msra.mxu0 0.0
    %6315 = vmatprep.subr.mxu0 0.0
    %6316 = vmatpush1.msra.mxu0 0.0
    %6317 = vmatprep.subr.mxu0 0.0
    %6318 = vmatpush1.msra.mxu0 0.0
    %6319 = vmatprep.subr.mxu0 0.0
    %6320 = vmatpush1.msra.mxu0 0.0
    %6321 = vmatprep.subr.mxu0 0.0
    %6322 = vmatpush1.msra.mxu0 0.0
    %6323 = vmatprep.subr.mxu0 0.0
    %6324 = vmatpush1.msra.mxu0 0.0
    %6325 = vmatprep.subr.mxu0 0.0
    %6326 = vmatpush1.msra.mxu0 0.0
    %6327 = vmatprep.subr.mxu0 0.0
    %6328 = vmatpush1.msra.mxu0 0.0
    %6329 = vmatprep.subr.mxu0 0.0
    %6330 = vmatpush1.msra.mxu0 0.0
    %6331 = vmatprep.subr.mxu0 0.0
    %6332 = vmatpush1.msra.mxu0 0.0
    %6333 = vmatprep.subr.mxu0 0.0
    %6334 = vmatpush1.msra.mxu0 0.0
    %6335 = vmatprep.subr.mxu0 0.0
    %6336 = vmatpush1.msra.mxu0 0.0
    %6337 = vmatprep.subr.mxu0 0.0
    %6338 = vmatpush1.msra.mxu0 0.0
    %6339 = vmatprep.mubr.f32.mxu0 0.0
    %6340 = vmatmul.mubr.f32.gmra.mrb[0].mxu0 %v6273
    %v6341 = vpop.f32.mrb[0].mxu0
    %v6342 = vadd.f32 0.0, %v6341
    %v6343 = vpop.f32.mrb[0].mxu0
    %6344 = vdwg.mxu0
    %6345 = vrot.lane.b32.xlu0 %v5589, 96
    %v6346 = vpop.permute.xlu0 %6345
    %6347 = vrot.lane.b32.xlu0 %v5681, 96
    %v6348 = vpop.permute.xlu0 %6347
    %v6349 = vsel %vm487, %v6346, 0
    %v6351 = vsel %vm487, %v6348, 0
    %6353 = vmatprep.subr.mxu0 0.0
    %6354 = vmatpush1.xpose.msra.mxu0 %v6351
    %6355 = vmatprep.subr.mxu0 0.0
    %6356 = vmatpush1.xpose.msra.mxu0 0.0
    %6357 = vmatprep.subr.mxu0 0.0
    %6358 = vmatpush1.xpose.msra.mxu0 0.0
    %6359 = vmatprep.subr.mxu0 0.0
    %6360 = vmatpush1.xpose.msra.mxu0 0.0
    %6361 = vmatprep.subr.mxu0 0.0
    %6362 = vmatpush1.xpose.msra.mxu0 0.0
    %6363 = vmatprep.subr.mxu0 0.0
    %6364 = vmatpush1.xpose.msra.mxu0 0.0
    %6365 = vmatprep.subr.mxu0 0.0
    %6366 = vmatpush1.xpose.msra.mxu0 0.0
    %6367 = vmatprep.subr.mxu0 0.0
    %6368 = vmatpush1.xpose.msra.mxu0 0.0
    %6369 = vmatprep.subr.mxu0 0.0
    %6370 = vmatpush1.xpose.msra.mxu0 0.0
    %6371 = vmatprep.subr.mxu0 0.0
    %6372 = vmatpush1.xpose.msra.mxu0 0.0
    %6373 = vmatprep.subr.mxu0 0.0
    %6374 = vmatpush1.xpose.msra.mxu0 0.0
    %6375 = vmatprep.subr.mxu0 0.0
    %6376 = vmatpush1.xpose.msra.mxu0 0.0
    %6377 = vmatprep.subr.mxu0 0.0
    %6378 = vmatpush1.xpose.msra.mxu0 0.0
    %6379 = vmatprep.subr.mxu0 0.0
    %6380 = vmatpush1.xpose.msra.mxu0 0.0
    %6381 = vmatprep.subr.mxu0 0.0
    %6382 = vmatpush1.xpose.msra.mxu0 0.0
    %6383 = vmatprep.subr.mxu0 0.0
    %6384 = vmatpush1.xpose.msra.mxu0 0.0
    %6385 = vmatprep.subr.mxu0 0.0
    %6386 = vmatpush1.xpose.msra.mxu0 0.0
    %6387 = vmatprep.subr.mxu0 0.0
    %6388 = vmatpush1.xpose.msra.mxu0 0.0
    %6389 = vmatprep.subr.mxu0 0.0
    %6390 = vmatpush1.xpose.msra.mxu0 0.0
    %6391 = vmatprep.subr.mxu0 0.0
    %6392 = vmatpush1.xpose.msra.mxu0 0.0
    %6393 = vmatprep.subr.mxu0 0.0
    %6394 = vmatpush1.xpose.msra.mxu0 0.0
    %6395 = vmatprep.subr.mxu0 0.0
    %6396 = vmatpush1.xpose.msra.mxu0 0.0
    %6397 = vmatprep.subr.mxu0 0.0
    %6398 = vmatpush1.xpose.msra.mxu0 0.0
    %6399 = vmatprep.subr.mxu0 0.0
    %6400 = vmatpush1.xpose.msra.mxu0 0.0
    %6401 = vmatprep.subr.mxu0 0.0
    %6402 = vmatpush1.xpose.msra.mxu0 0.0
    %6403 = vmatprep.subr.mxu0 0.0
    %6404 = vmatpush1.xpose.msra.mxu0 0.0
    %6405 = vmatprep.subr.mxu0 0.0
    %6406 = vmatpush1.xpose.msra.mxu0 0.0
    %6407 = vmatprep.subr.mxu0 0.0
    %6408 = vmatpush1.xpose.msra.mxu0 0.0
    %6409 = vmatprep.subr.mxu0 0.0
    %6410 = vmatpush1.xpose.msra.mxu0 0.0
    %6411 = vmatprep.subr.mxu0 0.0
    %6412 = vmatpush1.xpose.msra.mxu0 0.0
    %6413 = vmatprep.subr.mxu0 0.0
    %6414 = vmatpush1.xpose.msra.mxu0 0.0
    %6415 = vmatprep.subr.mxu0 0.0
    %6416 = vmatpush1.xpose.msra.mxu0 0.0
    %6417 = vmatprep.mubr.f32.mxu0 0.0
    %6418 = vmatmul.mubr.f32.gmra.mrb[0].mxu0 %v6349
    %v6419 = vpop.f32.mrb[0].mxu0
    %v6420 = vadd.f32 0.0, %v6419
    %v6421 = vpop.f32.mrb[0].mxu0
    %6422 = vdwg.mxu0
    %6423 = vrot.lane.b32.xlu0 %v5594, 96
    %v6424 = vpop.permute.xlu0 %6423
    %6425 = vrot.lane.b32.xlu0 %v5686, 96
    %v6426 = vpop.permute.xlu0 %6425
    %v6427 = vsel %vm487, %v6424, 0
    %v6429 = vsel %vm487, %v6426, 0
    %6431 = vmatprep.subr.mxu0 0.0
    %6432 = vmatpush1.xpose.msra.mxu0 %v6429
    %6433 = vmatprep.subr.mxu0 0.0
    %6434 = vmatpush1.xpose.msra.mxu0 0.0
    %6435 = vmatprep.subr.mxu0 0.0
    %6436 = vmatpush1.xpose.msra.mxu0 0.0
    %6437 = vmatprep.subr.mxu0 0.0
    %6438 = vmatpush1.xpose.msra.mxu0 0.0
    %6439 = vmatprep.subr.mxu0 0.0
    %6440 = vmatpush1.xpose.msra.mxu0 0.0
    %6441 = vmatprep.subr.mxu0 0.0
    %6442 = vmatpush1.xpose.msra.mxu0 0.0
    %6443 = vmatprep.subr.mxu0 0.0
    %6444 = vmatpush1.xpose.msra.mxu0 0.0
    %6445 = vmatprep.subr.mxu0 0.0
    %6446 = vmatpush1.xpose.msra.mxu0 0.0
    %6447 = vmatprep.subr.mxu0 0.0
    %6448 = vmatpush1.xpose.msra.mxu0 0.0
    %6449 = vmatprep.subr.mxu0 0.0
    %6450 = vmatpush1.xpose.msra.mxu0 0.0
    %6451 = vmatprep.subr.mxu0 0.0
    %6452 = vmatpush1.xpose.msra.mxu0 0.0
    %6453 = vmatprep.subr.mxu0 0.0
    %6454 = vmatpush1.xpose.msra.mxu0 0.0
    %6455 = vmatprep.subr.mxu0 0.0
    %6456 = vmatpush1.xpose.msra.mxu0 0.0
    %6457 = vmatprep.subr.mxu0 0.0
    %6458 = vmatpush1.xpose.msra.mxu0 0.0
    %6459 = vmatprep.subr.mxu0 0.0
    %6460 = vmatpush1.xpose.msra.mxu0 0.0
    %6461 = vmatprep.subr.mxu0 0.0
    %6462 = vmatpush1.xpose.msra.mxu0 0.0
    %6463 = vmatprep.subr.mxu0 0.0
    %6464 = vmatpush1.xpose.msra.mxu0 0.0
    %6465 = vmatprep.subr.mxu0 0.0
    %6466 = vmatpush1.xpose.msra.mxu0 0.0
    %6467 = vmatprep.subr.mxu0 0.0
    %6468 = vmatpush1.xpose.msra.mxu0 0.0
    %6469 = vmatprep.subr.mxu0 0.0
    %6470 = vmatpush1.xpose.msra.mxu0 0.0
    %6471 = vmatprep.subr.mxu0 0.0
    %6472 = vmatpush1.xpose.msra.mxu0 0.0
    %6473 = vmatprep.subr.mxu0 0.0
    %6474 = vmatpush1.xpose.msra.mxu0 0.0
    %6475 = vmatprep.subr.mxu0 0.0
    %6476 = vmatpush1.xpose.msra.mxu0 0.0
    %6477 = vmatprep.subr.mxu0 0.0
    %6478 = vmatpush1.xpose.msra.mxu0 0.0
    %6479 = vmatprep.subr.mxu0 0.0
    %6480 = vmatpush1.xpose.msra.mxu0 0.0
    %6481 = vmatprep.subr.mxu0 0.0
    %6482 = vmatpush1.xpose.msra.mxu0 0.0
    %6483 = vmatprep.subr.mxu0 0.0
    %6484 = vmatpush1.xpose.msra.mxu0 0.0
    %6485 = vmatprep.subr.mxu0 0.0
    %6486 = vmatpush1.xpose.msra.mxu0 0.0
    %6487 = vmatprep.subr.mxu0 0.0
    %6488 = vmatpush1.xpose.msra.mxu0 0.0
    %6489 = vmatprep.subr.mxu0 0.0
    %6490 = vmatpush1.xpose.msra.mxu0 0.0
    %6491 = vmatprep.subr.mxu0 0.0
    %6492 = vmatpush1.xpose.msra.mxu0 0.0
    %6493 = vmatprep.subr.mxu0 0.0
    %6494 = vmatpush1.xpose.msra.mxu0 0.0
    %6495 = vmatprep.mubr.f32.mxu0 0.0
    %6496 = vmatmul.mubr.f32.gmra.mrb[0].mxu0 %v6427
    %v6497 = vpop.f32.mrb[0].mxu0
    %v6498 = vadd.f32 0.0, %v6497
    %v6499 = vpop.f32.mrb[0].mxu0
    %6500 = vdwg.mxu0
    %v6501 = vsel %vm639, %v6420, -inf
    %6502 = vmax.xlane.f32.xlu0 %v6501
    %v6503 = vpop.xlane.xlu0 %6502
    %v6504 = vsel %vm639, %v6498, -inf
    %6505 = vmax.xlane.f32.xlu0 %v6504
    %v6506 = vpop.xlane.xlu0 %6505
    %v6507 = vsub.f32 %v6420, %v6503
    %v6508 = vsub.f32 %v6498, %v6506
    %v6509 = vmul.f32 %v6507, 1.442695
    %v6510 = vpow.pop %v6509
    %v6511 = vmul.f32 %v6508, 1.442695
    %v6512 = vpow.pop %v6511
    %v6513 = vsel %vm639, %v6510, 0.0
    %6514 = vadd.xlane.f32.xlu0 %v6513
    %v6515 = vpop.xlane.xlu0 %6514
    %v6516 = vsel %vm639, %v6512, 0.0
    %6517 = vadd.xlane.f32.xlu0 %v6516
    %v6518 = vpop.xlane.xlu0 %6517
    %v6519 = vrcp.pop %v6515
    %v6520 = vrcp.pop %v6518
    %v6521 = vmul.f32 %v6510, %v6519
    %v6522 = vmul.f32 %v6512, %v6520
    %6523 = vrot.lane.b32.xlu0 %v5681, 32
    %v6524 = vpop.permute.xlu0 %6523
    %v6527 = vsel %vm639, %v6521, 0
    %6529 = vmatprep.subr.mxu0 0.0
    %6530 = vmatpush1.msra.mxu0 %v6524
    %6531 = vmatprep.subr.mxu0 0.0
    %6532 = vmatpush1.msra.mxu0 0.0
    %6533 = vmatprep.subr.mxu0 0.0
    %6534 = vmatpush1.msra.mxu0 0.0
    %6535 = vmatprep.subr.mxu0 0.0
    %6536 = vmatpush1.msra.mxu0 0.0
    %6537 = vmatprep.subr.mxu0 0.0
    %6538 = vmatpush1.msra.mxu0 0.0
    %6539 = vmatprep.subr.mxu0 0.0
    %6540 = vmatpush1.msra.mxu0 0.0
    %6541 = vmatprep.subr.mxu0 0.0
    %6542 = vmatpush1.msra.mxu0 0.0
    %6543 = vmatprep.subr.mxu0 0.0
    %6544 = vmatpush1.msra.mxu0 0.0
    %6545 = vmatprep.subr.mxu0 0.0
    %6546 = vmatpush1.msra.mxu0 0.0
    %6547 = vmatprep.subr.mxu0 0.0
    %6548 = vmatpush1.msra.mxu0 0.0
    %6549 = vmatprep.subr.mxu0 0.0
    %6550 = vmatpush1.msra.mxu0 0.0
    %6551 = vmatprep.subr.mxu0 0.0
    %6552 = vmatpush1.msra.mxu0 0.0
    %6553 = vmatprep.subr.mxu0 0.0
    %6554 = vmatpush1.msra.mxu0 0.0
    %6555 = vmatprep.subr.mxu0 0.0
    %6556 = vmatpush1.msra.mxu0 0.0
    %6557 = vmatprep.subr.mxu0 0.0
    %6558 = vmatpush1.msra.mxu0 0.0
    %6559 = vmatprep.subr.mxu0 0.0
    %6560 = vmatpush1.msra.mxu0 0.0
    %6561 = vmatprep.subr.mxu0 0.0
    %6562 = vmatpush1.msra.mxu0 0.0
    %6563 = vmatprep.subr.mxu0 0.0
    %6564 = vmatpush1.msra.mxu0 0.0
    %6565 = vmatprep.subr.mxu0 0.0
    %6566 = vmatpush1.msra.mxu0 0.0
    %6567 = vmatprep.subr.mxu0 0.0
    %6568 = vmatpush1.msra.mxu0 0.0
    %6569 = vmatprep.subr.mxu0 0.0
    %6570 = vmatpush1.msra.mxu0 0.0
    %6571 = vmatprep.subr.mxu0 0.0
    %6572 = vmatpush1.msra.mxu0 0.0
    %6573 = vmatprep.subr.mxu0 0.0
    %6574 = vmatpush1.msra.mxu0 0.0
    %6575 = vmatprep.subr.mxu0 0.0
    %6576 = vmatpush1.msra.mxu0 0.0
    %6577 = vmatprep.subr.mxu0 0.0
    %6578 = vmatpush1.msra.mxu0 0.0
    %6579 = vmatprep.subr.mxu0 0.0
    %6580 = vmatpush1.msra.mxu0 0.0
    %6581 = vmatprep.subr.mxu0 0.0
    %6582 = vmatpush1.msra.mxu0 0.0
    %6583 = vmatprep.subr.mxu0 0.0
    %6584 = vmatpush1.msra.mxu0 0.0
    %6585 = vmatprep.subr.mxu0 0.0
    %6586 = vmatpush1.msra.mxu0 0.0
    %6587 = vmatprep.subr.mxu0 0.0
    %6588 = vmatpush1.msra.mxu0 0.0
    %6589 = vmatprep.subr.mxu0 0.0
    %6590 = vmatpush1.msra.mxu0 0.0
    %6591 = vmatprep.subr.mxu0 0.0
    %6592 = vmatpush1.msra.mxu0 0.0
    %6593 = vmatprep.mubr.f32.mxu0 0.0
    %6594 = vmatmul.mubr.f32.gmra.mrb[0].mxu0 %v6527
    %v6595 = vpop.f32.mrb[0].mxu0
    %v6596 = vadd.f32 0.0, %v6595
    %v6597 = vpop.f32.mrb[0].mxu0
    %6598 = vdwg.mxu0
    %6599 = vrot.lane.b32.xlu0 %v5686, 32
    %v6600 = vpop.permute.xlu0 %6599
    %v6603 = vsel %vm639, %v6522, 0
    %6605 = vmatprep.subr.mxu0 0.0
    %6606 = vmatpush1.msra.mxu0 %v6600
    %6607 = vmatprep.subr.mxu0 0.0
    %6608 = vmatpush1.msra.mxu0 0.0
    %6609 = vmatprep.subr.mxu0 0.0
    %6610 = vmatpush1.msra.mxu0 0.0
    %6611 = vmatprep.subr.mxu0 0.0
    %6612 = vmatpush1.msra.mxu0 0.0
    %6613 = vmatprep.subr.mxu0 0.0
    %6614 = vmatpush1.msra.mxu0 0.0
    %6615 = vmatprep.subr.mxu0 0.0
    %6616 = vmatpush1.msra.mxu0 0.0
    %6617 = vmatprep.subr.mxu0 0.0
    %6618 = vmatpush1.msra.mxu0 0.0
    %6619 = vmatprep.subr.mxu0 0.0
    %6620 = vmatpush1.msra.mxu0 0.0
    %6621 = vmatprep.subr.mxu0 0.0
    %6622 = vmatpush1.msra.mxu0 0.0
    %6623 = vmatprep.subr.mxu0 0.0
    %6624 = vmatpush1.msra.mxu0 0.0
    %6625 = vmatprep.subr.mxu0 0.0
    %6626 = vmatpush1.msra.mxu0 0.0
    %6627 = vmatprep.subr.mxu0 0.0
    %6628 = vmatpush1.msra.mxu0 0.0
    %6629 = vmatprep.subr.mxu0 0.0
    %6630 = vmatpush1.msra.mxu0 0.0
    %6631 = vmatprep.subr.mxu0 0.0
    %6632 = vmatpush1.msra.mxu0 0.0
    %6633 = vmatprep.subr.mxu0 0.0
    %6634 = vmatpush1.msra.mxu0 0.0
    %6635 = vmatprep.subr.mxu0 0.0
    %6636 = vmatpush1.msra.mxu0 0.0
    %6637 = vmatprep.subr.mxu0 0.0
    %6638 = vmatpush1.msra.mxu0 0.0
    %6639 = vmatprep.subr.mxu0 0.0
    %6640 = vmatpush1.msra.mxu0 0.0
    %6641 = vmatprep.subr.mxu0 0.0
    %6642 = vmatpush1.msra.mxu0 0.0
    %6643 = vmatprep.subr.mxu0 0.0
    %6644 = vmatpush1.msra.mxu0 0.0
    %6645 = vmatprep.subr.mxu0 0.0
    %6646 = vmatpush1.msra.mxu0 0.0
    %6647 = vmatprep.subr.mxu0 0.0
    %6648 = vmatpush1.msra.mxu0 0.0
    %6649 = vmatprep.subr.mxu0 0.0
    %6650 = vmatpush1.msra.mxu0 0.0
    %6651 = vmatprep.subr.mxu0 0.0
    %6652 = vmatpush1.msra.mxu0 0.0
    %6653 = vmatprep.subr.mxu0 0.0
    %6654 = vmatpush1.msra.mxu0 0.0
    %6655 = vmatprep.subr.mxu0 0.0
    %6656 = vmatpush1.msra.mxu0 0.0
    %6657 = vmatprep.subr.mxu0 0.0
    %6658 = vmatpush1.msra.mxu0 0.0
    %6659 = vmatprep.subr.mxu0 0.0
    %6660 = vmatpush1.msra.mxu0 0.0
    %6661 = vmatprep.subr.mxu0 0.0
    %6662 = vmatpush1.msra.mxu0 0.0
    %6663 = vmatprep.subr.mxu0 0.0
    %6664 = vmatpush1.msra.mxu0 0.0
    %6665 = vmatprep.subr.mxu0 0.0
    %6666 = vmatpush1.msra.mxu0 0.0
    %6667 = vmatprep.subr.mxu0 0.0
    %6668 = vmatpush1.msra.mxu0 0.0
    %6669 = vmatprep.mubr.f32.mxu0 0.0
    %6670 = vmatmul.mubr.f32.gmra.mrb[0].mxu0 %v6603
    %v6671 = vpop.f32.mrb[0].mxu0
    %v6672 = vadd.f32 0.0, %v6671
    %v6673 = vpop.f32.mrb[0].mxu0
    %6674 = vdwg.mxu0
    %6675 = vrot.lane.b32.xlu0 %v5589, 80
    %v6676 = vpop.permute.xlu0 %6675
    %6677 = vrot.lane.b32.xlu0 %v5681, 80
    %v6678 = vpop.permute.xlu0 %6677
    %v6679 = vsel %vm487, %v6676, 0
    %v6681 = vsel %vm487, %v6678, 0
    %6683 = vmatprep.subr.mxu0 0.0
    %6684 = vmatpush1.xpose.msra.mxu0 %v6681
    %6685 = vmatprep.subr.mxu0 0.0
    %6686 = vmatpush1.xpose.msra.mxu0 0.0
    %6687 = vmatprep.subr.mxu0 0.0
    %6688 = vmatpush1.xpose.msra.mxu0 0.0
    %6689 = vmatprep.subr.mxu0 0.0
    %6690 = vmatpush1.xpose.msra.mxu0 0.0
    %6691 = vmatprep.subr.mxu0 0.0
    %6692 = vmatpush1.xpose.msra.mxu0 0.0
    %6693 = vmatprep.subr.mxu0 0.0
    %6694 = vmatpush1.xpose.msra.mxu0 0.0
    %6695 = vmatprep.subr.mxu0 0.0
    %6696 = vmatpush1.xpose.msra.mxu0 0.0
    %6697 = vmatprep.subr.mxu0 0.0
    %6698 = vmatpush1.xpose.msra.mxu0 0.0
    %6699 = vmatprep.subr.mxu0 0.0
    %6700 = vmatpush1.xpose.msra.mxu0 0.0
    %6701 = vmatprep.subr.mxu0 0.0
    %6702 = vmatpush1.xpose.msra.mxu0 0.0
    %6703 = vmatprep.subr.mxu0 0.0
    %6704 = vmatpush1.xpose.msra.mxu0 0.0
    %6705 = vmatprep.subr.mxu0 0.0
    %6706 = vmatpush1.xpose.msra.mxu0 0.0
    %6707 = vmatprep.subr.mxu0 0.0
    %6708 = vmatpush1.xpose.msra.mxu0 0.0
    %6709 = vmatprep.subr.mxu0 0.0
    %6710 = vmatpush1.xpose.msra.mxu0 0.0
    %6711 = vmatprep.subr.mxu0 0.0
    %6712 = vmatpush1.xpose.msra.mxu0 0.0
    %6713 = vmatprep.subr.mxu0 0.0
    %6714 = vmatpush1.xpose.msra.mxu0 0.0
    %6715 = vmatprep.subr.mxu0 0.0
    %6716 = vmatpush1.xpose.msra.mxu0 0.0
    %6717 = vmatprep.subr.mxu0 0.0
    %6718 = vmatpush1.xpose.msra.mxu0 0.0
    %6719 = vmatprep.subr.mxu0 0.0
    %6720 = vmatpush1.xpose.msra.mxu0 0.0
    %6721 = vmatprep.subr.mxu0 0.0
    %6722 = vmatpush1.xpose.msra.mxu0 0.0
    %6723 = vmatprep.subr.mxu0 0.0
    %6724 = vmatpush1.xpose.msra.mxu0 0.0
    %6725 = vmatprep.subr.mxu0 0.0
    %6726 = vmatpush1.xpose.msra.mxu0 0.0
    %6727 = vmatprep.subr.mxu0 0.0
    %6728 = vmatpush1.xpose.msra.mxu0 0.0
    %6729 = vmatprep.subr.mxu0 0.0
    %6730 = vmatpush1.xpose.msra.mxu0 0.0
    %6731 = vmatprep.subr.mxu0 0.0
    %6732 = vmatpush1.xpose.msra.mxu0 0.0
    %6733 = vmatprep.subr.mxu0 0.0
    %6734 = vmatpush1.xpose.msra.mxu0 0.0
    %6735 = vmatprep.subr.mxu0 0.0
    %6736 = vmatpush1.xpose.msra.mxu0 0.0
    %6737 = vmatprep.subr.mxu0 0.0
    %6738 = vmatpush1.xpose.msra.mxu0 0.0
    %6739 = vmatprep.subr.mxu0 0.0
    %6740 = vmatpush1.xpose.msra.mxu0 0.0
    %6741 = vmatprep.subr.mxu0 0.0
    %6742 = vmatpush1.xpose.msra.mxu0 0.0
    %6743 = vmatprep.subr.mxu0 0.0
    %6744 = vmatpush1.xpose.msra.mxu0 0.0
    %6745 = vmatprep.subr.mxu0 0.0
    %6746 = vmatpush1.xpose.msra.mxu0 0.0
    %6747 = vmatprep.mubr.f32.mxu0 0.0
    %6748 = vmatmul.mubr.f32.gmra.mrb[0].mxu0 %v6679
    %v6749 = vpop.f32.mrb[0].mxu0
    %v6750 = vadd.f32 0.0, %v6749
    %v6751 = vpop.f32.mrb[0].mxu0
    %6752 = vdwg.mxu0
    %6753 = vrot.lane.b32.xlu0 %v5594, 80
    %v6754 = vpop.permute.xlu0 %6753
    %6755 = vrot.lane.b32.xlu0 %v5686, 80
    %v6756 = vpop.permute.xlu0 %6755
    %v6757 = vsel %vm487, %v6754, 0
    %v6759 = vsel %vm487, %v6756, 0
    %6761 = vmatprep.subr.mxu0 0.0
    %6762 = vmatpush1.xpose.msra.mxu0 %v6759
    %6763 = vmatprep.subr.mxu0 0.0
    %6764 = vmatpush1.xpose.msra.mxu0 0.0
    %6765 = vmatprep.subr.mxu0 0.0
    %6766 = vmatpush1.xpose.msra.mxu0 0.0
    %6767 = vmatprep.subr.mxu0 0.0
    %6768 = vmatpush1.xpose.msra.mxu0 0.0
    %6769 = vmatprep.subr.mxu0 0.0
    %6770 = vmatpush1.xpose.msra.mxu0 0.0
    %6771 = vmatprep.subr.mxu0 0.0
    %6772 = vmatpush1.xpose.msra.mxu0 0.0
    %6773 = vmatprep.subr.mxu0 0.0
    %6774 = vmatpush1.xpose.msra.mxu0 0.0
    %6775 = vmatprep.subr.mxu0 0.0
    %6776 = vmatpush1.xpose.msra.mxu0 0.0
    %6777 = vmatprep.subr.mxu0 0.0
    %6778 = vmatpush1.xpose.msra.mxu0 0.0
    %6779 = vmatprep.subr.mxu0 0.0
    %6780 = vmatpush1.xpose.msra.mxu0 0.0
    %6781 = vmatprep.subr.mxu0 0.0
    %6782 = vmatpush1.xpose.msra.mxu0 0.0
    %6783 = vmatprep.subr.mxu0 0.0
    %6784 = vmatpush1.xpose.msra.mxu0 0.0
    %6785 = vmatprep.subr.mxu0 0.0
    %6786 = vmatpush1.xpose.msra.mxu0 0.0
    %6787 = vmatprep.subr.mxu0 0.0
    %6788 = vmatpush1.xpose.msra.mxu0 0.0
    %6789 = vmatprep.subr.mxu0 0.0
    %6790 = vmatpush1.xpose.msra.mxu0 0.0
    %6791 = vmatprep.subr.mxu0 0.0
    %6792 = vmatpush1.xpose.msra.mxu0 0.0
    %6793 = vmatprep.subr.mxu0 0.0
    %6794 = vmatpush1.xpose.msra.mxu0 0.0
    %6795 = vmatprep.subr.mxu0 0.0
    %6796 = vmatpush1.xpose.msra.mxu0 0.0
    %6797 = vmatprep.subr.mxu0 0.0
    %6798 = vmatpush1.xpose.msra.mxu0 0.0
    %6799 = vmatprep.subr.mxu0 0.0
    %6800 = vmatpush1.xpose.msra.mxu0 0.0
    %6801 = vmatprep.subr.mxu0 0.0
    %6802 = vmatpush1.xpose.msra.mxu0 0.0
    %6803 = vmatprep.subr.mxu0 0.0
    %6804 = vmatpush1.xpose.msra.mxu0 0.0
    %6805 = vmatprep.subr.mxu0 0.0
    %6806 = vmatpush1.xpose.msra.mxu0 0.0
    %6807 = vmatprep.subr.mxu0 0.0
    %6808 = vmatpush1.xpose.msra.mxu0 0.0
    %6809 = vmatprep.subr.mxu0 0.0
    %6810 = vmatpush1.xpose.msra.mxu0 0.0
    %6811 = vmatprep.subr.mxu0 0.0
    %6812 = vmatpush1.xpose.msra.mxu0 0.0
    %6813 = vmatprep.subr.mxu0 0.0
    %6814 = vmatpush1.xpose.msra.mxu0 0.0
    %6815 = vmatprep.subr.mxu0 0.0
    %6816 = vmatpush1.xpose.msra.mxu0 0.0
    %6817 = vmatprep.subr.mxu0 0.0
    %6818 = vmatpush1.xpose.msra.mxu0 0.0
    %6819 = vmatprep.subr.mxu0 0.0
    %6820 = vmatpush1.xpose.msra.mxu0 0.0
    %6821 = vmatprep.subr.mxu0 0.0
    %6822 = vmatpush1.xpose.msra.mxu0 0.0
    %6823 = vmatprep.subr.mxu0 0.0
    %6824 = vmatpush1.xpose.msra.mxu0 0.0
    %6825 = vmatprep.mubr.f32.mxu0 0.0
    %6826 = vmatmul.mubr.f32.gmra.mrb[0].mxu0 %v6757
    %v6827 = vpop.f32.mrb[0].mxu0
    %v6828 = vadd.f32 0.0, %v6827
    %v6829 = vpop.f32.mrb[0].mxu0
    %6830 = vdwg.mxu0
    %v6831 = vsel %vm639, %v6750, -inf
    %6832 = vmax.xlane.f32.xlu0 %v6831
    %v6833 = vpop.xlane.xlu0 %6832
    %v6834 = vsel %vm639, %v6828, -inf
    %6835 = vmax.xlane.f32.xlu0 %v6834
    %v6836 = vpop.xlane.xlu0 %6835
    %v6837 = vsub.f32 %v6750, %v6833
    %v6838 = vsub.f32 %v6828, %v6836
    %v6839 = vmul.f32 %v6837, 1.442695
    %v6840 = vpow.pop %v6839
    %v6841 = vmul.f32 %v6838, 1.442695
    %v6842 = vpow.pop %v6841
    %v6843 = vsel %vm639, %v6840, 0.0
    %6844 = vadd.xlane.f32.xlu0 %v6843
    %v6845 = vpop.xlane.xlu0 %6844
    %v6846 = vsel %vm639, %v6842, 0.0
    %6847 = vadd.xlane.f32.xlu0 %v6846
    %v6848 = vpop.xlane.xlu0 %6847
    %v6849 = vrcp.pop %v6845
    %v6850 = vrcp.pop %v6848
    %v6851 = vmul.f32 %v6840, %v6849
    %v6852 = vmul.f32 %v6842, %v6850
    %6853 = vrot.lane.b32.xlu0 %v5681, 16
    %v6854 = vpop.permute.xlu0 %6853
    %v6857 = vsel %vm639, %v6851, 0
    %6859 = vmatprep.subr.mxu0 0.0
    %6860 = vmatpush1.msra.mxu0 %v6854
    %6861 = vmatprep.subr.mxu0 0.0
    %6862 = vmatpush1.msra.mxu0 0.0
    %6863 = vmatprep.subr.mxu0 0.0
    %6864 = vmatpush1.msra.mxu0 0.0
    %6865 = vmatprep.subr.mxu0 0.0
    %6866 = vmatpush1.msra.mxu0 0.0
    %6867 = vmatprep.subr.mxu0 0.0
    %6868 = vmatpush1.msra.mxu0 0.0
    %6869 = vmatprep.subr.mxu0 0.0
    %6870 = vmatpush1.msra.mxu0 0.0
    %6871 = vmatprep.subr.mxu0 0.0
    %6872 = vmatpush1.msra.mxu0 0.0
    %6873 = vmatprep.subr.mxu0 0.0
    %6874 = vmatpush1.msra.mxu0 0.0
    %6875 = vmatprep.subr.mxu0 0.0
    %6876 = vmatpush1.msra.mxu0 0.0
    %6877 = vmatprep.subr.mxu0 0.0
    %6878 = vmatpush1.msra.mxu0 0.0
    %6879 = vmatprep.subr.mxu0 0.0
    %6880 = vmatpush1.msra.mxu0 0.0
    %6881 = vmatprep.subr.mxu0 0.0
    %6882 = vmatpush1.msra.mxu0 0.0
    %6883 = vmatprep.subr.mxu0 0.0
    %6884 = vmatpush1.msra.mxu0 0.0
    %6885 = vmatprep.subr.mxu0 0.0
    %6886 = vmatpush1.msra.mxu0 0.0
    %6887 = vmatprep.subr.mxu0 0.0
    %6888 = vmatpush1.msra.mxu0 0.0
    %6889 = vmatprep.subr.mxu0 0.0
    %6890 = vmatpush1.msra.mxu0 0.0
    %6891 = vmatprep.subr.mxu0 0.0
    %6892 = vmatpush1.msra.mxu0 0.0
    %6893 = vmatprep.subr.mxu0 0.0
    %6894 = vmatpush1.msra.mxu0 0.0
    %6895 = vmatprep.subr.mxu0 0.0
    %6896 = vmatpush1.msra.mxu0 0.0
    %6897 = vmatprep.subr.mxu0 0.0
    %6898 = vmatpush1.msra.mxu0 0.0
    %6899 = vmatprep.subr.mxu0 0.0
    %6900 = vmatpush1.msra.mxu0 0.0
    %6901 = vmatprep.subr.mxu0 0.0
    %6902 = vmatpush1.msra.mxu0 0.0
    %6903 = vmatprep.subr.mxu0 0.0
    %6904 = vmatpush1.msra.mxu0 0.0
    %6905 = vmatprep.subr.mxu0 0.0
    %6906 = vmatpush1.msra.mxu0 0.0
    %6907 = vmatprep.subr.mxu0 0.0
    %6908 = vmatpush1.msra.mxu0 0.0
    %6909 = vmatprep.subr.mxu0 0.0
    %6910 = vmatpush1.msra.mxu0 0.0
    %6911 = vmatprep.subr.mxu0 0.0
    %6912 = vmatpush1.msra.mxu0 0.0
    %6913 = vmatprep.subr.mxu0 0.0
    %6914 = vmatpush1.msra.mxu0 0.0
    %6915 = vmatprep.subr.mxu0 0.0
    %6916 = vmatpush1.msra.mxu0 0.0
    %6917 = vmatprep.subr.mxu0 0.0
    %6918 = vmatpush1.msra.mxu0 0.0
    %6919 = vmatprep.subr.mxu0 0.0
    %6920 = vmatpush1.msra.mxu0 0.0
    %6921 = vmatprep.subr.mxu0 0.0
    %6922 = vmatpush1.msra.mxu0 0.0
    %6923 = vmatprep.mubr.f32.mxu0 0.0
    %6924 = vmatmul.mubr.f32.gmra.mrb[0].mxu0 %v6857
    %v6925 = vpop.f32.mrb[0].mxu0
    %v6926 = vadd.f32 0.0, %v6925
    %v6927 = vpop.f32.mrb[0].mxu0
    %6928 = vdwg.mxu0
    %6929 = vrot.lane.b32.xlu0 %v5686, 16
    %v6930 = vpop.permute.xlu0 %6929
    %v6933 = vsel %vm639, %v6852, 0
    %6935 = vmatprep.subr.mxu0 0.0
    %6936 = vmatpush1.msra.mxu0 %v6930
    %6937 = vmatprep.subr.mxu0 0.0
    %6938 = vmatpush1.msra.mxu0 0.0
    %6939 = vmatprep.subr.mxu0 0.0
    %6940 = vmatpush1.msra.mxu0 0.0
    %6941 = vmatprep.subr.mxu0 0.0
    %6942 = vmatpush1.msra.mxu0 0.0
    %6943 = vmatprep.subr.mxu0 0.0
    %6944 = vmatpush1.msra.mxu0 0.0
    %6945 = vmatprep.subr.mxu0 0.0
    %6946 = vmatpush1.msra.mxu0 0.0
    %6947 = vmatprep.subr.mxu0 0.0
    %6948 = vmatpush1.msra.mxu0 0.0
    %6949 = vmatprep.subr.mxu0 0.0
    %6950 = vmatpush1.msra.mxu0 0.0
    %6951 = vmatprep.subr.mxu0 0.0
    %6952 = vmatpush1.msra.mxu0 0.0
    %6953 = vmatprep.subr.mxu0 0.0
    %6954 = vmatpush1.msra.mxu0 0.0
    %6955 = vmatprep.subr.mxu0 0.0
    %6956 = vmatpush1.msra.mxu0 0.0
    %6957 = vmatprep.subr.mxu0 0.0
    %6958 = vmatpush1.msra.mxu0 0.0
    %6959 = vmatprep.subr.mxu0 0.0
    %6960 = vmatpush1.msra.mxu0 0.0
    %6961 = vmatprep.subr.mxu0 0.0
    %6962 = vmatpush1.msra.mxu0 0.0
    %6963 = vmatprep.subr.mxu0 0.0
    %6964 = vmatpush1.msra.mxu0 0.0
    %6965 = vmatprep.subr.mxu0 0.0
    %6966 = vmatpush1.msra.mxu0 0.0
    %6967 = vmatprep.subr.mxu0 0.0
    %6968 = vmatpush1.msra.mxu0 0.0
    %6969 = vmatprep.subr.mxu0 0.0
    %6970 = vmatpush1.msra.mxu0 0.0
    %6971 = vmatprep.subr.mxu0 0.0
    %6972 = vmatpush1.msra.mxu0 0.0
    %6973 = vmatprep.subr.mxu0 0.0
    %6974 = vmatpush1.msra.mxu0 0.0
    %6975 = vmatprep.subr.mxu0 0.0
    %6976 = vmatpush1.msra.mxu0 0.0
    %6977 = vmatprep.subr.mxu0 0.0
    %6978 = vmatpush1.msra.mxu0 0.0
    %6979 = vmatprep.subr.mxu0 0.0
    %6980 = vmatpush1.msra.mxu0 0.0
    %6981 = vmatprep.subr.mxu0 0.0
    %6982 = vmatpush1.msra.mxu0 0.0
    %6983 = vmatprep.subr.mxu0 0.0
    %6984 = vmatpush1.msra.mxu0 0.0
    %6985 = vmatprep.subr.mxu0 0.0
    %6986 = vmatpush1.msra.mxu0 0.0
    %6987 = vmatprep.subr.mxu0 0.0
    %6988 = vmatpush1.msra.mxu0 0.0
    %6989 = vmatprep.subr.mxu0 0.0
    %6990 = vmatpush1.msra.mxu0 0.0
    %6991 = vmatprep.subr.mxu0 0.0
    %6992 = vmatpush1.msra.mxu0 0.0
    %6993 = vmatprep.subr.mxu0 0.0
    %6994 = vmatpush1.msra.mxu0 0.0
    %6995 = vmatprep.subr.mxu0 0.0
    %6996 = vmatpush1.msra.mxu0 0.0
    %6997 = vmatprep.subr.mxu0 0.0
    %6998 = vmatpush1.msra.mxu0 0.0
    %6999 = vmatprep.mubr.f32.mxu0 0.0
    %7000 = vmatmul.mubr.f32.gmra.mrb[0].mxu0 %v6933
    %v7001 = vpop.f32.mrb[0].mxu0
    %v7002 = vadd.f32 0.0, %v7001
    %v7003 = vpop.f32.mrb[0].mxu0
    %7004 = vdwg.mxu0
    %7007 = vrot.lane.b32.xlu0 %v6266, 16
    %v7008 = vpop.permute.xlu0 %7007
    %7009 = vrot.lane.b32.xlu0 %v6342, 16
    %v7010 = vpop.permute.xlu0 %7009
    %7015 = vrot.lane.b32.xlu0 %v6596, 32
    %v7016 = vpop.permute.xlu0 %7015
    %7017 = vrot.lane.b32.xlu0 %v6672, 32
    %v7018 = vpop.permute.xlu0 %7017
    %7023 = vrot.lane.b32.xlu0 %v6926, 48
    %v7024 = vpop.permute.xlu0 %7023
    %7025 = vrot.lane.b32.xlu0 %v7002, 48
    %v7026 = vpop.permute.xlu0 %7025
    %v7029 = vsel %vm487, %v5936, %v7008
    %v7030 = vsel %vm487, %v6012, %v7010
    %v7031 = vsel %vm357, %v7029, %v7016
    %v7032 = vsel %vm357, %v7030, %v7018
    %v7033 = vsel %vm1828, %v7031, %v7024
    %v7034 = vsel %vm1828, %v7032, %v7026
    %s7035 = scalar_lea.vmem %s15, 64
    %v7036 = vld [vmem:[%s7035] sm:$0xff]
    %v7037 = vld [vmem:[%s7035 + $0x8] sm:$0xff]
    %v7038 = vld [vmem:[%s7035 + $0x10] sm:$0xff]
    %v7039 = vld [vmem:[%s7035 + $0x18] sm:$0xff]
    %v7040 = vld [vmem:[%s7035 + $0x20] sm:$0xff]
    %v7041 = vld [vmem:[%s7035 + $0x28] sm:$0xff]
    %v7042 = vld [vmem:[%s7035 + $0x30] sm:$0xff]
    %v7043 = vld [vmem:[%s7035 + $0x38] sm:$0xff]
    %s7044 = scalar_lea.vmem %s16, 1
    %v7045 = vld [vmem:[%s7044] sm:$0x1]
    %v7047 = vlaneseq
    %v7048 = vshrl.u32 %v7047, 7
    %v7049 = vsub.s32 0, %v7048
    %v7050 = vrot.slane %v7045, %v7049
    %v7053 = vsel %vm400, %v7033, 0
    %v7056 = vsel %vm400, %v7034, 0
    %7058 = vmatprep.subr.mxu0 0.0
    %7059 = vmatpush1.msra.mxu0 %v7036
    %7060 = vmatprep.subr.mxu0 0.0
    %7061 = vmatpush1.msra.mxu0 %v7037
    %7062 = vmatprep.subr.mxu0 0.0
    %7063 = vmatpush1.msra.mxu0 %v7038
    %7064 = vmatprep.subr.mxu0 0.0
    %7065 = vmatpush1.msra.mxu0 %v7039
    %7066 = vmatprep.subr.mxu0 0.0
    %7067 = vmatpush1.msra.mxu0 %v7040
    %7068 = vmatprep.subr.mxu0 0.0
    %7069 = vmatpush1.msra.mxu0 %v7041
    %7070 = vmatprep.subr.mxu0 0.0
    %7071 = vmatpush1.msra.mxu0 %v7042
    %7072 = vmatprep.subr.mxu0 0.0
    %7073 = vmatpush1.msra.mxu0 %v7043
    %7074 = vmatprep.subr.mxu0 0.0
    %7075 = vmatpush1.msra.mxu0 0.0
    %7076 = vmatprep.subr.mxu0 0.0
    %7077 = vmatpush1.msra.mxu0 0.0
    %7078 = vmatprep.subr.mxu0 0.0
    %7079 = vmatpush1.msra.mxu0 0.0
    %7080 = vmatprep.subr.mxu0 0.0
    %7081 = vmatpush1.msra.mxu0 0.0
    %7082 = vmatprep.subr.mxu0 0.0
    %7083 = vmatpush1.msra.mxu0 0.0
    %7084 = vmatprep.subr.mxu0 0.0
    %7085 = vmatpush1.msra.mxu0 0.0
    %7086 = vmatprep.subr.mxu0 0.0
    %7087 = vmatpush1.msra.mxu0 0.0
    %7088 = vmatprep.subr.mxu0 0.0
    %7089 = vmatpush1.msra.mxu0 0.0
    %7090 = vmatprep.subr.mxu0 0.0
    %7091 = vmatpush1.msra.mxu0 0.0
    %7092 = vmatprep.subr.mxu0 0.0
    %7093 = vmatpush1.msra.mxu0 0.0
    %7094 = vmatprep.subr.mxu0 0.0
    %7095 = vmatpush1.msra.mxu0 0.0
    %7096 = vmatprep.subr.mxu0 0.0
    %7097 = vmatpush1.msra.mxu0 0.0
    %7098 = vmatprep.subr.mxu0 0.0
    %7099 = vmatpush1.msra.mxu0 0.0
    %7100 = vmatprep.subr.mxu0 0.0
    %7101 = vmatpush1.msra.mxu0 0.0
    %7102 = vmatprep.subr.mxu0 0.0
    %7103 = vmatpush1.msra.mxu0 0.0
    %7104 = vmatprep.subr.mxu0 0.0
    %7105 = vmatpush1.msra.mxu0 0.0
    %7106 = vmatprep.subr.mxu0 0.0
    %7107 = vmatpush1.msra.mxu0 0.0
    %7108 = vmatprep.subr.mxu0 0.0
    %7109 = vmatpush1.msra.mxu0 0.0
    %7110 = vmatprep.subr.mxu0 0.0
    %7111 = vmatpush1.msra.mxu0 0.0
    %7112 = vmatprep.subr.mxu0 0.0
    %7113 = vmatpush1.msra.mxu0 0.0
    %7114 = vmatprep.subr.mxu0 0.0
    %7115 = vmatpush1.msra.mxu0 0.0
    %7116 = vmatprep.subr.mxu0 0.0
    %7117 = vmatpush1.msra.mxu0 0.0
    %7118 = vmatprep.subr.mxu0 0.0
    %7119 = vmatpush1.msra.mxu0 0.0
    %7120 = vmatprep.subr.mxu0 0.0
    %7121 = vmatpush1.msra.mxu0 0.0
    %7122 = vmatprep.mubr.f32.mxu0 0.0
    %7123 = vmatmul.mubr.f32.gmra.mrb[0].mxu0 %v7053
    %v7124 = vpop.f32.mrb[0].mxu0
    %v7125 = vadd.f32 %v7050, %v7124
    %v7126 = vpop.f32.mrb[0].mxu0
    %7127 = vmatprep.mubr.f32.mxu0 0.0
    %7128 = vmatmul.mubr.f32.gmra.mrb[0].mxu0 %v7056
    %v7129 = vpop.f32.mrb[0].mxu0
    %v7130 = vadd.f32 %v7050, %v7129
    %v7131 = vpop.f32.mrb[0].mxu0
    %7132 = vdwg.mxu0
    %v7133 = vadd.f32 %v5497, %v7125
    %v7134 = vadd.f32 %v5498, %v7130
    %s7135 = scalar_lea.vmem %s17, 1
    %v7136 = vld [vmem:[%s7135] sm:$0x1]
    %s7137 = scalar_lea.vmem %s18, 1
    %v7138 = vld [vmem:[%s7137] sm:$0x1]
    %v7139 = vsel %vm400, %v7133, 0.0
    %7140 = vadd.xlane.f32.xlu0 %v7139
    %v7141 = vpop.xlane.xlu0 %7140
    %v7142 = vsel %vm400, %v7134, 0.0
    %7143 = vadd.xlane.f32.xlu0 %v7142
    %v7144 = vpop.xlane.xlu0 %7143
    %v7145 = vmul.f32 %v7141, %v1937
    %v7146 = vmul.f32 %v7144, %v1937
    %v7147 = vsub.f32 %v7133, %v7145
    %v7148 = vsub.f32 %v7134, %v7146
    %v7149 = vmul.f32 %v7147, %v7147
    %v7150 = vmul.f32 %v7148, %v7148
    %v7151 = vsel %vm400, %v7149, 0.0
    %7152 = vadd.xlane.f32.xlu0 %v7151
    %v7153 = vpop.xlane.xlu0 %7152
    %v7154 = vsel %vm400, %v7150, 0.0
    %7155 = vadd.xlane.f32.xlu0 %v7154
    %v7156 = vpop.xlane.xlu0 %7155
    %v7157 = vmul.f32 %v7153, %v1937
    %v7158 = vmul.f32 %v7156, %v1937
    %v7159 = vadd.f32 %v7157, 1e-05
    %v7160 = vadd.f32 %v7158, 1e-05
    %v7161 = vrsqrt.pop %v7159
    %v7162 = vrsqrt.pop %v7160
    %v7163 = vmul.f32 %v7147, %v7161
    %v7164 = vmul.f32 %v7148, %v7162
    %v7166 = vlaneseq
    %v7167 = vshrl.u32 %v7166, 7
    %v7168 = vsub.s32 0, %v7167
    %v7169 = vrot.slane %v7136, %v7168
    %v7171 = vmul.f32 %v7163, %v7169
    %v7172 = vmul.f32 %v7164, %v7169
    %v7174 = vlaneseq
    %v7175 = vshrl.u32 %v7174, 7
    %v7176 = vsub.s32 0, %v7175
    %v7177 = vrot.slane %v7138, %v7176
    %v7179 = vadd.f32 %v7171, %v7177
    %v7180 = vadd.f32 %v7172, %v7177
    %s7181 = scalar_lea.vmem [#allocation17], 64
    %v7182 = vld [vmem:[%s7181] sm:$0xff]
    %v7183 = vld [vmem:[%s7181 + $0x8] sm:$0xff]
    %v7184 = vld [vmem:[%s7181 + $0x10] sm:$0xff]
    %v7185 = vld [vmem:[%s7181 + $0x18] sm:$0xff]
    %v7186 = vld [vmem:[%s7181 + $0x20] sm:$0xff]
    %v7187 = vld [vmem:[%s7181 + $0x28] sm:$0xff]
    %v7188 = vld [vmem:[%s7181 + $0x30] sm:$0xff]
    %v7189 = vld [vmem:[%s7181 + $0x38] sm:$0xff]
    %s7190 = scalar_lea.vmem %s20, 1
    %v7191 = vld [vmem:[%s7190] sm:$0x1]
    %v7193 = vlaneseq
    %v7194 = vshrl.u32 %v7193, 7
    %v7195 = vsub.s32 0, %v7194
    %v7196 = vrot.slane %v7191, %v7195
    %v7199 = vsel %vm400, %v7179, 0
    %v7202 = vsel %vm400, %v7180, 0
    %7204 = vmatprep.subr.mxu0 0.0
    %7205 = vmatpush1.msra.mxu0 %v7182
    %7206 = vmatprep.subr.mxu0 0.0
    %7207 = vmatpush1.msra.mxu0 %v7183
    %7208 = vmatprep.subr.mxu0 0.0
    %7209 = vmatpush1.msra.mxu0 %v7184
    %7210 = vmatprep.subr.mxu0 0.0
    %7211 = vmatpush1.msra.mxu0 %v7185
    %7212 = vmatprep.subr.mxu0 0.0
    %7213 = vmatpush1.msra.mxu0 %v7186
    %7214 = vmatprep.subr.mxu0 0.0
    %7215 = vmatpush1.msra.mxu0 %v7187
    %7216 = vmatprep.subr.mxu0 0.0
    %7217 = vmatpush1.msra.mxu0 %v7188
    %7218 = vmatprep.subr.mxu0 0.0
    %7219 = vmatpush1.msra.mxu0 %v7189
    %7220 = vmatprep.subr.mxu0 0.0
    %7221 = vmatpush1.msra.mxu0 0.0
    %7222 = vmatprep.subr.mxu0 0.0
    %7223 = vmatpush1.msra.mxu0 0.0
    %7224 = vmatprep.subr.mxu0 0.0
    %7225 = vmatpush1.msra.mxu0 0.0
    %7226 = vmatprep.subr.mxu0 0.0
    %7227 = vmatpush1.msra.mxu0 0.0
    %7228 = vmatprep.subr.mxu0 0.0
    %7229 = vmatpush1.msra.mxu0 0.0
    %7230 = vmatprep.subr.mxu0 0.0
    %7231 = vmatpush1.msra.mxu0 0.0
    %7232 = vmatprep.subr.mxu0 0.0
    %7233 = vmatpush1.msra.mxu0 0.0
    %7234 = vmatprep.subr.mxu0 0.0
    %7235 = vmatpush1.msra.mxu0 0.0
    %7236 = vmatprep.subr.mxu0 0.0
    %7237 = vmatpush1.msra.mxu0 0.0
    %7238 = vmatprep.subr.mxu0 0.0
    %7239 = vmatpush1.msra.mxu0 0.0
    %7240 = vmatprep.subr.mxu0 0.0
    %7241 = vmatpush1.msra.mxu0 0.0
    %7242 = vmatprep.subr.mxu0 0.0
    %7243 = vmatpush1.msra.mxu0 0.0
    %7244 = vmatprep.subr.mxu0 0.0
    %7245 = vmatpush1.msra.mxu0 0.0
    %7246 = vmatprep.subr.mxu0 0.0
    %7247 = vmatpush1.msra.mxu0 0.0
    %7248 = vmatprep.subr.mxu0 0.0
    %7249 = vmatpush1.msra.mxu0 0.0
    %7250 = vmatprep.subr.mxu0 0.0
    %7251 = vmatpush1.msra.mxu0 0.0
    %7252 = vmatprep.subr.mxu0 0.0
    %7253 = vmatpush1.msra.mxu0 0.0
    %7254 = vmatprep.subr.mxu0 0.0
    %7255 = vmatpush1.msra.mxu0 0.0
    %7256 = vmatprep.subr.mxu0 0.0
    %7257 = vmatpush1.msra.mxu0 0.0
    %7258 = vmatprep.subr.mxu0 0.0
    %7259 = vmatpush1.msra.mxu0 0.0
    %7260 = vmatprep.subr.mxu0 0.0
    %7261 = vmatpush1.msra.mxu0 0.0
    %7262 = vmatprep.subr.mxu0 0.0
    %7263 = vmatpush1.msra.mxu0 0.0
    %7264 = vmatprep.subr.mxu0 0.0
    %7265 = vmatpush1.msra.mxu0 0.0
    %7266 = vmatprep.subr.mxu0 0.0
    %7267 = vmatpush1.msra.mxu0 0.0
    %7268 = vmatprep.mubr.f32.mxu0 0.0
    %7269 = vmatmul.mubr.f32.gmra.mrb[0].mxu0 %v7199
    %v7270 = vpop.f32.mrb[0].mxu0
    %v7271 = vadd.f32 %v7196, %v7270
    %v7272 = vpop.f32.mrb[0].mxu0
    %7273 = vmatprep.mubr.f32.mxu0 0.0
    %7274 = vmatmul.mubr.f32.gmra.mrb[0].mxu0 %v7202
    %v7275 = vpop.f32.mrb[0].mxu0
    %v7276 = vadd.f32 %v7196, %v7275
    %v7277 = vpop.f32.mrb[0].mxu0
    %7278 = vdwg.mxu0
    %v7279 = vmax.f32 %v7271, 0.0
    %v7280 = vmax.f32 %v7276, 0.0
    %s7281 = scalar_lea.vmem %s21, 128
    %v7282 = vld [vmem:[%s7281] sm:$0xff]
    %v7283 = vld [vmem:[%s7281 + $0x8] sm:$0xff]
    %v7284 = vld [vmem:[%s7281 + $0x10] sm:$0xff]
    %v7285 = vld [vmem:[%s7281 + $0x18] sm:$0xff]
    %v7286 = vld [vmem:[%s7281 + $0x20] sm:$0xff]
    %v7287 = vld [vmem:[%s7281 + $0x28] sm:$0xff]
    %v7288 = vld [vmem:[%s7281 + $0x30] sm:$0xff]
    %v7289 = vld [vmem:[%s7281 + $0x38] sm:$0xff]
    %v7290 = vld [vmem:[%s7281 + $0x40] sm:$0xff]
    %v7291 = vld [vmem:[%s7281 + $0x48] sm:$0xff]
    %v7292 = vld [vmem:[%s7281 + $0x50] sm:$0xff]
    %v7293 = vld [vmem:[%s7281 + $0x58] sm:$0xff]
    %v7294 = vld [vmem:[%s7281 + $0x60] sm:$0xff]
    %v7295 = vld [vmem:[%s7281 + $0x68] sm:$0xff]
    %v7296 = vld [vmem:[%s7281 + $0x70] sm:$0xff]
    %v7297 = vld [vmem:[%s7281 + $0x78] sm:$0xff]
    %s7298 = scalar_lea.vmem %s22, 1
    %v7299 = vld [vmem:[%s7298] sm:$0x1]
    %v7301 = vlaneseq
    %v7302 = vshrl.u32 %v7301, 7
    %v7303 = vsub.s32 0, %v7302
    %v7304 = vrot.slane %v7299, %v7303
    %7306 = vmatprep.subr.mxu0 0.0
    %7307 = vmatpush1.msra.mxu0 %v7282
    %7308 = vmatprep.subr.mxu0 0.0
    %7309 = vmatpush1.msra.mxu0 %v7283
    %7310 = vmatprep.subr.mxu0 0.0
    %7311 = vmatpush1.msra.mxu0 %v7284
    %7312 = vmatprep.subr.mxu0 0.0
    %7313 = vmatpush1.msra.mxu0 %v7285
    %7314 = vmatprep.subr.mxu0 0.0
    %7315 = vmatpush1.msra.mxu0 %v7286
    %7316 = vmatprep.subr.mxu0 0.0
    %7317 = vmatpush1.msra.mxu0 %v7287
    %7318 = vmatprep.subr.mxu0 0.0
    %7319 = vmatpush1.msra.mxu0 %v7288
    %7320 = vmatprep.subr.mxu0 0.0
    %7321 = vmatpush1.msra.mxu0 %v7289
    %7322 = vmatprep.subr.mxu0 0.0
    %7323 = vmatpush1.msra.mxu0 %v7290
    %7324 = vmatprep.subr.mxu0 0.0
    %7325 = vmatpush1.msra.mxu0 %v7291
    %7326 = vmatprep.subr.mxu0 0.0
    %7327 = vmatpush1.msra.mxu0 %v7292
    %7328 = vmatprep.subr.mxu0 0.0
    %7329 = vmatpush1.msra.mxu0 %v7293
    %7330 = vmatprep.subr.mxu0 0.0
    %7331 = vmatpush1.msra.mxu0 %v7294
    %7332 = vmatprep.subr.mxu0 0.0
    %7333 = vmatpush1.msra.mxu0 %v7295
    %7334 = vmatprep.subr.mxu0 0.0
    %7335 = vmatpush1.msra.mxu0 %v7296
    %7336 = vmatprep.subr.mxu0 0.0
    %7337 = vmatpush1.msra.mxu0 %v7297
    %7338 = vmatprep.subr.mxu0 0.0
    %7339 = vmatpush1.msra.mxu0 0.0
    %7340 = vmatprep.subr.mxu0 0.0
    %7341 = vmatpush1.msra.mxu0 0.0
    %7342 = vmatprep.subr.mxu0 0.0
    %7343 = vmatpush1.msra.mxu0 0.0
    %7344 = vmatprep.subr.mxu0 0.0
    %7345 = vmatpush1.msra.mxu0 0.0
    %7346 = vmatprep.subr.mxu0 0.0
    %7347 = vmatpush1.msra.mxu0 0.0
    %7348 = vmatprep.subr.mxu0 0.0
    %7349 = vmatpush1.msra.mxu0 0.0
    %7350 = vmatprep.subr.mxu0 0.0
    %7351 = vmatpush1.msra.mxu0 0.0
    %7352 = vmatprep.subr.mxu0 0.0
    %7353 = vmatpush1.msra.mxu0 0.0
    %7354 = vmatprep.subr.mxu0 0.0
    %7355 = vmatpush1.msra.mxu0 0.0
    %7356 = vmatprep.subr.mxu0 0.0
    %7357 = vmatpush1.msra.mxu0 0.0
    %7358 = vmatprep.subr.mxu0 0.0
    %7359 = vmatpush1.msra.mxu0 0.0
    %7360 = vmatprep.subr.mxu0 0.0
    %7361 = vmatpush1.msra.mxu0 0.0
    %7362 = vmatprep.subr.mxu0 0.0
    %7363 = vmatpush1.msra.mxu0 0.0
    %7364 = vmatprep.subr.mxu0 0.0
    %7365 = vmatpush1.msra.mxu0 0.0
    %7366 = vmatprep.subr.mxu0 0.0
    %7367 = vmatpush1.msra.mxu0 0.0
    %7368 = vmatprep.subr.mxu0 0.0
    %7369 = vmatpush1.msra.mxu0 0.0
    %7370 = vmatprep.mubr.f32.mxu0 0.0
    %7371 = vmatmul.mubr.f32.gmra.mrb[0].mxu0 %v7279
    %v7372 = vpop.f32.mrb[0].mxu0
    %v7373 = vadd.f32 %v7304, %v7372
    %v7374 = vpop.f32.mrb[0].mxu0
    %7375 = vmatprep.mubr.f32.mxu0 0.0
    %7376 = vmatmul.mubr.f32.gmra.mrb[0].mxu0 %v7280
    %v7377 = vpop.f32.mrb[0].mxu0
    %v7378 = vadd.f32 %v7304, %v7377
    %v7379 = vpop.f32.mrb[0].mxu0
    %7380 = vdwg.mxu0
    %v7381 = vadd.f32 %v7179, %v7373
    %v7382 = vadd.f32 %v7180, %v7378
    %s7383 = scalar_lea.vmem %s23, 1
    %v7384 = vld [vmem:[%s7383] sm:$0x1]
    %s7385 = scalar_lea.vmem %s24, 1
    %v7386 = vld [vmem:[%s7385] sm:$0x1]
    %v7387 = vsel %vm400, %v7381, 0.0
    %7388 = vadd.xlane.f32.xlu0 %v7387
    %v7389 = vpop.xlane.xlu0 %7388
    %v7390 = vsel %vm400, %v7382, 0.0
    %7391 = vadd.xlane.f32.xlu0 %v7390
    %v7392 = vpop.xlane.xlu0 %7391
    %v7393 = vmul.f32 %v7389, %v1937
    %v7394 = vmul.f32 %v7392, %v1937
    %v7395 = vsub.f32 %v7381, %v7393
    %v7396 = vsub.f32 %v7382, %v7394
    %v7397 = vmul.f32 %v7395, %v7395
    %v7398 = vmul.f32 %v7396, %v7396
    %v7399 = vsel %vm400, %v7397, 0.0
    %7400 = vadd.xlane.f32.xlu0 %v7399
    %v7401 = vpop.xlane.xlu0 %7400
    %v7402 = vsel %vm400, %v7398, 0.0
    %7403 = vadd.xlane.f32.xlu0 %v7402
    %v7404 = vpop.xlane.xlu0 %7403
    %v7405 = vmul.f32 %v7401, %v1937
    %v7406 = vmul.f32 %v7404, %v1937
    %v7407 = vadd.f32 %v7405, 1e-05
    %v7408 = vadd.f32 %v7406, 1e-05
    %v7409 = vrsqrt.pop %v7407
    %v7410 = vrsqrt.pop %v7408
    %v7411 = vmul.f32 %v7395, %v7409
    %v7412 = vmul.f32 %v7396, %v7410
    %v7414 = vlaneseq
    %v7415 = vshrl.u32 %v7414, 7
    %v7416 = vsub.s32 0, %v7415
    %v7417 = vrot.slane %v7384, %v7416
    %v7419 = vmul.f32 %v7411, %v7417
    %v7420 = vmul.f32 %v7412, %v7417
    %v7422 = vlaneseq
    %v7423 = vshrl.u32 %v7422, 7
    %v7424 = vsub.s32 0, %v7423
    %v7425 = vrot.slane %v7386, %v7424
    %v7427 = vadd.f32 %v7419, %v7425
    %v7428 = vadd.f32 %v7420, %v7425
    %v7429 = vld [vmem:[#allocation19] sm:$0xff]
    %v7430 = vld [vmem:[#allocation19 + $0x8] sm:$0xff]
    %v7431 = vld [vmem:[#allocation19 + $0x10] sm:$0xff]
    %v7432 = vld [vmem:[#allocation19 + $0x18] sm:$0xff]
    %v7433 = vld [vmem:[#allocation19 + $0x20] sm:$0xff]
    %v7434 = vld [vmem:[#allocation19 + $0x28] sm:$0xff]
    %v7435 = vld [vmem:[#allocation19 + $0x30] sm:$0xff]
    %v7436 = vld [vmem:[#allocation19 + $0x38] sm:$0xff]
    %v7437 = vld [vmem:[%s26] sm:$0x1]
    %v7439 = vlaneseq
    %v7440 = vshrl.u32 %v7439, 7
    %v7441 = vsub.s32 0, %v7440
    %v7442 = vrot.slane %v7437, %v7441
    %v7445 = vsel %vm400, %v7427, 0
    %v7448 = vsel %vm400, %v7428, 0
    %7450 = vmatprep.subr.mxu0 0.0
    %7451 = vmatpush1.msra.mxu0 %v7429
    %7452 = vmatprep.subr.mxu0 0.0
    %7453 = vmatpush1.msra.mxu0 %v7430
    %7454 = vmatprep.subr.mxu0 0.0
    %7455 = vmatpush1.msra.mxu0 %v7431
    %7456 = vmatprep.subr.mxu0 0.0
    %7457 = vmatpush1.msra.mxu0 %v7432
    %7458 = vmatprep.subr.mxu0 0.0
    %7459 = vmatpush1.msra.mxu0 %v7433
    %7460 = vmatprep.subr.mxu0 0.0
    %7461 = vmatpush1.msra.mxu0 %v7434
    %7462 = vmatprep.subr.mxu0 0.0
    %7463 = vmatpush1.msra.mxu0 %v7435
    %7464 = vmatprep.subr.mxu0 0.0
    %7465 = vmatpush1.msra.mxu0 %v7436
    %7466 = vmatprep.subr.mxu0 0.0
    %7467 = vmatpush1.msra.mxu0 0.0
    %7468 = vmatprep.subr.mxu0 0.0
    %7469 = vmatpush1.msra.mxu0 0.0
    %7470 = vmatprep.subr.mxu0 0.0
    %7471 = vmatpush1.msra.mxu0 0.0
    %7472 = vmatprep.subr.mxu0 0.0
    %7473 = vmatpush1.msra.mxu0 0.0
    %7474 = vmatprep.subr.mxu0 0.0
    %7475 = vmatpush1.msra.mxu0 0.0
    %7476 = vmatprep.subr.mxu0 0.0
    %7477 = vmatpush1.msra.mxu0 0.0
    %7478 = vmatprep.subr.mxu0 0.0
    %7479 = vmatpush1.msra.mxu0 0.0
    %7480 = vmatprep.subr.mxu0 0.0
    %7481 = vmatpush1.msra.mxu0 0.0
    %7482 = vmatprep.subr.mxu0 0.0
    %7483 = vmatpush1.msra.mxu0 0.0
    %7484 = vmatprep.subr.mxu0 0.0
    %7485 = vmatpush1.msra.mxu0 0.0
    %7486 = vmatprep.subr.mxu0 0.0
    %7487 = vmatpush1.msra.mxu0 0.0
    %7488 = vmatprep.subr.mxu0 0.0
    %7489 = vmatpush1.msra.mxu0 0.0
    %7490 = vmatprep.subr.mxu0 0.0
    %7491 = vmatpush1.msra.mxu0 0.0
    %7492 = vmatprep.subr.mxu0 0.0
    %7493 = vmatpush1.msra.mxu0 0.0
    %7494 = vmatprep.subr.mxu0 0.0
    %7495 = vmatpush1.msra.mxu0 0.0
    %7496 = vmatprep.subr.mxu0 0.0
    %7497 = vmatpush1.msra.mxu0 0.0
    %7498 = vmatprep.subr.mxu0 0.0
    %7499 = vmatpush1.msra.mxu0 0.0
    %7500 = vmatprep.subr.mxu0 0.0
    %7501 = vmatpush1.msra.mxu0 0.0
    %7502 = vmatprep.subr.mxu0 0.0
    %7503 = vmatpush1.msra.mxu0 0.0
    %7504 = vmatprep.subr.mxu0 0.0
    %7505 = vmatpush1.msra.mxu0 0.0
    %7506 = vmatprep.subr.mxu0 0.0
    %7507 = vmatpush1.msra.mxu0 0.0
    %7508 = vmatprep.subr.mxu0 0.0
    %7509 = vmatpush1.msra.mxu0 0.0
    %7510 = vmatprep.subr.mxu0 0.0
    %7511 = vmatpush1.msra.mxu0 0.0
    %7512 = vmatprep.subr.mxu0 0.0
    %7513 = vmatpush1.msra.mxu0 0.0
    %7514 = vmatprep.mubr.f32.mxu0 0.0
    %7515 = vmatmul.mubr.f32.gmra.mrb[0].mxu0 %v7445
    %v7516 = vpop.f32.mrb[0].mxu0
    %v7517 = vadd.f32 %v7442, %v7516
    %v7518 = vpop.f32.mrb[0].mxu0
    %7519 = vmatprep.mubr.f32.mxu0 0.0
    %7520 = vmatmul.mubr.f32.gmra.mrb[0].mxu0 %v7448
    %v7521 = vpop.f32.mrb[0].mxu0
    %v7522 = vadd.f32 %v7442, %v7521
    %v7523 = vpop.f32.mrb[0].mxu0
    %7524 = vdwg.mxu0
    %7525 = vst [vmem:[#allocation20] sm:$0xff] %v7517
    %7526 = vst [vmem:[#allocation20 + $0x8] sm:$0xff] %v7522
    // Predicated region
    $region154: #{tpu_custom_call.1} parent=1 // pred_check
      _
    $region155: #{tpu_custom_call.1} parent=1 // pred_check_branch
      %7528 = sbr.rel (0) target = $region157
    $region156: #{tpu_custom_call.1} parent=1 // pred_region
      %s7530 = ssub.s32 256, 256
      %7531 = vsyncadd [#allocation4], %s7530
      %s7532 = sshll.u32 [#allocation20], 4
      %s7533 = int_to_ptr.vmem [resolvable:$true] %s7532
      %7538 = dma.vmem_to_hbm [thread:$0]  %s7533, 256, %s27, [#allocation4], 128, 128, 8
    $region157: #{tpu_custom_call.1} parent=1 // pred_fallthru
      _
    // Predicated region
    $region158: #{tpu_custom_call.1} parent=1 // pred_check
      _
    $region159: #{tpu_custom_call.1} parent=1 // pred_check_branch
      %7540 = sbr.rel (0) target = $region161
    $region160: #{tpu_custom_call.1} parent=1 // pred_region
      %7541 = dma.done [#allocation4], 256
    $region161: #{tpu_custom_call.1} parent=1 // pred_fallthru
      _
    %7542 = vsyncpa [#allocation3], 1
    %7543 = vsyncpa [#allocation6], 1
    %7544 = vsyncpa [#allocation9], 1
    %7545 = vsyncpa [#allocation12], 1
    %7546 = vsyncpa [#allocation15], 1
    %7547 = vsyncpa [#allocation18], 1
    %7548 = vsyncpa [#allocation4], 1

</llo_original>
